<compile_context>
chip_gen: v7x
topology: tpu7x:2x2x1
jax: 0.10.0
libtpu: 0.0.40
codegen_flags: <defaults>
</compile_context>

<pallas_src>
import functools

import numpy as np

import jax
import jax.numpy as jnp
from jax.experimental import pallas as pl
from jax.experimental.pallas import tpu as pltpu

LEAKY_SLOPE = 0.1  # nn.LeakyReLU(0.1) in the reference (use_leaky=True)


# ----------------------------------------------------------------------------
# Pallas kernel: fused (feature-MLP -> weightnet-MLP -> weighted sum over K)
# ----------------------------------------------------------------------------
def _cost_volume_kernel(*refs, n_mlp, n_wn, has_pts):
    idx = 0
    feat_ref = refs[idx]; idx += 1          # (K, Cf, tile_n)  bf16
    dir_ref = refs[idx]; idx += 1           # (K, 3,  tile_n)  bf16
    if has_pts:
        pts_ref = refs[idx]; idx += 1       # (Dp, tile_n)     bf16
        w1p_ref = refs[idx]; idx += 1       # (C1, Dp)         bf16
    mlp_refs = refs[idx: idx + 2 * n_mlp]; idx += 2 * n_mlp
    wn_refs = refs[idx: idx + 2 * n_wn]; idx += 2 * n_wn
    out_ref = refs[idx]                     # (c_out, tile_n)

    K = feat_ref.shape[0]

    # Hoist all weight / bias loads out of the K loop (read once per grid step).
    mlp_w = [mlp_refs[2 * i][...] for i in range(n_mlp)]       # bf16 (Cout, Cin)
    mlp_b = [mlp_refs[2 * i + 1][...] for i in range(n_mlp)]   # f32  (Cout, 1)
    wn_w = [wn_refs[2 * i][...] for i in range(n_wn)]
    wn_b = [wn_refs[2 * i + 1][...] for i in range(n_wn)]

    # Per-point (K-independent) part of the first MLP layer: computed once per
    # grid step and broadcast over the K neighbors (points1 never K-broadcast).
    if has_pts:
        pts_term = jnp.dot(w1p_ref[...], pts_ref[...],
                           preferred_element_type=jnp.float32)  # (C1, tile_n) f32

    acc = jnp.zeros(out_ref.shape, jnp.float32)
    # K is a small static neighborhood size -> unrolled.  feat_ref[k] slices a
    # leading (untiled) dim, so it is relayout-free; all activations keep
    # tile_n on lanes (lane-dense) and the K-reduction is a pure VALU add.
    for k in range(K):
        # ---- feature branch: 1x1 Conv2d == channels-first matmul, LeakyReLU.
        if n_mlp > 0:
            x = jnp.dot(mlp_w[0], feat_ref[k],
                        preferred_element_type=jnp.float32) + mlp_b[0]
            if has_pts:
                x = x + pts_term
            x = jnp.maximum(x, LEAKY_SLOPE * x)                 # LeakyReLU(0.1)
            for li in range(1, n_mlp):
                x = jnp.dot(mlp_w[li], x.astype(jnp.bfloat16),
                            preferred_element_type=jnp.float32) + mlp_b[li]
                x = jnp.maximum(x, LEAKY_SLOPE * x)
        else:
            x = feat_ref[k].astype(jnp.float32)

        # ---- weightnet branch: Conv2d(1x1) + ReLU MLP on direction vectors.
        d = dir_ref[k]                                          # (3, tile_n) bf16
        for li in range(n_wn):
            d = jnp.dot(wn_w[li], d.astype(jnp.bfloat16),
                        preferred_element_type=jnp.float32) + wn_b[li]
            d = jnp.maximum(d, 0.0)                             # ReLU

        acc = acc + d * x                                       # f32 accumulate over K

    out_ref[...] = acc.astype(out_ref.dtype)                    # lane-dense store


def cost_volume_pallas(feat_cf, dirs_cf, mlp_params, wn_params, pts_cf=None,
                       tile_n=1024, out_dtype=jnp.float32):
    """Fused cost volume.

    feat_cf: (B, K, Cf, N)  grouped neighbor features, channels-first.
    dirs_cf: (B, K, 3,  N)  neighbor direction vectors, channels-first.
    pts_cf : (B, Dp, N) or None -- per-point features; when given (and
             n_mlp > 0) the first MLP weight's first Dp rows apply to it
             (replaces the K-fold broadcast+concat of the reference).
    Returns (B, C_out, N) = sum_K weightnet(dirs) * MLP([pts (bcast K), feat]).
    """
    B, K, Cf, N = feat_cf.shape
    n_mlp, n_wn = len(mlp_params), len(wn_params)
    c_out = wn_params[-1][0].shape[1]
    has_pts = (pts_cf is not None) and (n_mlp > 0)
    if n_mlp == 0:
        assert Cf == c_out, (Cf, c_out)

    tile_n = min(tile_n, N)
    # v7x has 2 TensorCores: keep the total parallel grid extent >= 2.
    if B * (N // tile_n) < 2 and N % 256 == 0:
        tile_n = min(tile_n, N // 2)
    assert N % tile_n == 0
    assert tile_n % 128 == 0 or tile_n == N   # lane-dense blocks / stores

    mlp_list = list(mlp_params)
    extra_inputs, extra_specs = [], []
    if has_pts:
        Dp = pts_cf.shape[1]
        w0, b0 = mlp_list[0]
        w1p = jnp.transpose(w0[:Dp, :]).astype(jnp.bfloat16)     # (C1, Dp)
        mlp_list[0] = (w0[Dp:, :], b0)                           # grouped-channel part
        extra_inputs = [pts_cf.astype(jnp.bfloat16), w1p]
        extra_specs = [pl.BlockSpec((None, Dp, tile_n), lambda n, b: (b, 0, n)),
                       pl.BlockSpec(w1p.shape, lambda n, b: (0, 0))]

    flat_params = []
    for w, b in mlp_list + list(wn_params):
        flat_params += [jnp.transpose(w).astype(jnp.bfloat16),   # (Cout, Cin) bf16
                        b.reshape(-1, 1).astype(jnp.float32)]    # (Cout, 1)   f32

    kernel = functools.partial(_cost_volume_kernel,
                               n_mlp=n_mlp, n_wn=n_wn, has_pts=has_pts)

    # N-tile axis first so the larger parallel extent is leading (megacore split).
    grid = (N // tile_n, B)
    in_specs = [
        pl.BlockSpec((None, K, Cf, tile_n), lambda n, b: (b, 0, 0, n)),
        pl.BlockSpec((None, K, 3, tile_n), lambda n, b: (b, 0, 0, n)),
    ] + extra_specs
    for prm in flat_params:
        in_specs.append(pl.BlockSpec(prm.shape, lambda n, b: (0, 0)))
    out_spec = pl.BlockSpec((None, c_out, tile_n), lambda n, b: (b, 0, n))

    # Advisory cost estimate so XLA can overlap the surrounding kNN / gathers.
    mm_flops = sum(2 * w.shape[0] * w.shape[1]
                   for w, _ in list(mlp_params) + list(wn_params))
    flops = B * N * K * (mm_flops + 4 * c_out)
    bytes_accessed = int(
        feat_cf.size * 2 + dirs_cf.size * 2
        + (pts_cf.size * 2 if has_pts else 0)
        + B * N * c_out * np.dtype(out_dtype).itemsize
        + sum(w.size * 2 + b.size * 4
              for w, b in list(mlp_params) + list(wn_params)))
    cost = pl.CostEstimate(flops=int(flops), transcendentals=0,
                           bytes_accessed=bytes_accessed)

    return pl.pallas_call(
        kernel,
        out_shape=jax.ShapeDtypeStruct((B, c_out, N), out_dtype),
        grid=grid,
        in_specs=in_specs,
        out_specs=out_spec,
        compiler_params=pltpu.CompilerParams(
            dimension_semantics=("parallel", "parallel")),
        cost_estimate=cost,
    )(feat_cf.astype(jnp.bfloat16), dirs_cf.astype(jnp.bfloat16),
      *extra_inputs, *flat_params)


# ----------------------------------------------------------------------------
# Pure-JAX reference (mirrors the kernel's bf16-input / f32-accumulate math)
# ----------------------------------------------------------------------------
def cost_volume_ref(feat_cf, dirs_cf, mlp_params, wn_params, pts_cf=None,
                    out_dtype=jnp.float32):
    def bf(a):
        return a.astype(jnp.bfloat16).astype(jnp.float32)

    B, K, Cf, N = feat_cf.shape
    feat = jnp.transpose(feat_cf, (0, 3, 1, 2)).astype(jnp.float32)   # (B,N,K,Cf)
    dirs = jnp.transpose(dirs_cf, (0, 3, 1, 2)).astype(jnp.float32)   # (B,N,K,3)
    if pts_cf is not None and len(mlp_params) > 0:
        Dp = pts_cf.shape[1]
        pts = jnp.transpose(pts_cf, (0, 2, 1)).astype(jnp.float32)    # (B,N,Dp)
        pts_b = jnp.broadcast_to(pts[:, :, None, :], (B, N, K, Dp))
        x = jnp.concatenate([pts_b, feat], axis=-1)
    else:
        x = feat

    x = bf(x)
    for w, b in mlp_params:
        x = jnp.einsum('bnkc,cd->bnkd', bf(x), bf(w),
                       precision=jax.lax.Precision.HIGHEST) + b.astype(jnp.float32)
        x = jnp.maximum(x, LEAKY_SLOPE * x)
    d = bf(dirs)
    for w, b in wn_params:
        d = jnp.einsum('bnkc,cd->bnkd', bf(d), bf(w),
                       precision=jax.lax.Precision.HIGHEST) + b.astype(jnp.float32)
        d = jnp.maximum(d, 0.0)
    out = jnp.sum(d * x, axis=2)                 # (B, N, C_out)
    return jnp.transpose(out, (0, 2, 1)).astype(out_dtype)   # (B, C_out, N)


# ----------------------------------------------------------------------------
# Plain-JAX glue: kNN + grouping (data-dependent gather)
# ----------------------------------------------------------------------------
def _square_distance(a, b):
    # a: (B,N,3), b: (B,M,3) -> (B,N,M)
    return jnp.sum((a[:, :, None, :] - b[:, None, :, :]) ** 2, axis=-1)


def knn_point(nsample, xyz_db, xyz_q):
    # torch.topk(largest=False, sorted=False) order is unspecified; downstream
    # sum over K is permutation-invariant, so lax.top_k on -dist is equivalent.
    d = _square_distance(xyz_q, xyz_db)
    _, idx = jax.lax.top_k(-d, nsample)
    return idx                                               # (B, Nq, K) int32


def index_points_group(points, idx):
    # points: (B, M, C), idx: (B, N, K) -> (B, N, K, C)
    return jax.vmap(lambda p, i: p[i])(points, idx)


# ----------------------------------------------------------------------------
# Parameter setup (deterministic, synthetic)
# ----------------------------------------------------------------------------
def _init_linear(key, c_in, c_out):
    kw, kb = jax.random.split(key)
    w = 0.1 * jax.random.normal(kw, (c_in, c_out), jnp.float32)
    b = 0.01 * jax.random.normal(kb, (c_out,), jnp.float32)
    return w, b


def init_feature_correlator_params(key, in_channel, mlp, wn_hidden=(8, 8)):
    params = {"mlp": [], "wn1": [], "wn2": []}
    last = in_channel
    for c_out in mlp:
        key, sub = jax.random.split(key)
        params["mlp"].append(_init_linear(sub, last, c_out))
        last = c_out
    for name in ("wn1", "wn2"):
        c_in = 3
        for h in list(wn_hidden) + [last]:
            key, sub = jax.random.split(key)
            params[name].append(_init_linear(sub, c_in, h))
            c_in = h
    return params


# ----------------------------------------------------------------------------
# Forward pass (matches FeatureCorrelator.forward semantics, bn=False)
# ----------------------------------------------------------------------------
def feature_correlator_forward(params, xyz1, xyz2, points1, points2, nsample,
                               tile_n=1024, cost_fn=None):
    # xyz1: (B,3,N1), xyz2: (B,3,N2), points1: (B,D1,N1), points2: (B,D2,N2)
    if cost_fn is None:
        cost_fn = functools.partial(cost_volume_pallas, tile_n=tile_n)
    B, _, N1 = xyz1.shape
    xyz1_t = jnp.transpose(xyz1, (0, 2, 1))
    xyz2_t = jnp.transpose(xyz2, (0, 2, 1))
    pts2_t = jnp.transpose(points2, (0, 2, 1))

    # --- point-to-patch cost ---
    knn1 = knn_point(nsample, xyz2_t, xyz1_t)                        # (B,N1,K)
    neighbor_xyz = index_points_group(xyz2_t, knn1)                  # (B,N1,K,3)
    direction_xyz = neighbor_xyz - xyz1_t[:, :, None, :]
    grouped_pts2 = index_points_group(pts2_t, knn1)                  # (B,N1,K,D2)
    # Channels-first, K-leading layout (B,K,C,N1) -> lane-dense DMA rows.
    # points1 is NOT K-broadcast; it is streamed once as (B,D1,N1).
    feat_cf = jnp.transpose(
        jnp.concatenate([grouped_pts2, direction_xyz], axis=-1), (0, 2, 3, 1))
    dirs_cf = jnp.transpose(direction_xyz, (0, 2, 3, 1))             # (B,K,3,N1)

    p2p_cost_cf = cost_fn(feat_cf, dirs_cf, params["mlp"], params["wn1"],
                          pts_cf=points1, out_dtype=jnp.bfloat16)    # (B,Cout,N1)

    # --- patch-to-patch cost ---
    knn2 = knn_point(nsample, xyz1_t, xyz1_t)
    neighbor_xyz2 = index_points_group(xyz1_t, knn2)
    direction_xyz2 = neighbor_xyz2 - xyz1_t[:, :, None, :]           # (B,N1,K,3)
    grouped_cost = index_points_group(
        jnp.transpose(p2p_cost_cf, (0, 2, 1)), knn2)                 # (B,N1,K,Cout)
    grouped_cost_cf = jnp.transpose(grouped_cost, (0, 2, 3, 1))      # (B,K,Cout,N1)
    dirs2_cf = jnp.transpose(direction_xyz2, (0, 2, 3, 1))           # (B,K,3,N1)

    patch_cost = cost_fn(grouped_cost_cf, dirs2_cf, [], params["wn2"],
                         out_dtype=jnp.float32)                      # (B,Cout,N1)
    return patch_cost                                                # channels-first


if __name__ == "__main__":
    key = jax.random.PRNGKey(0)
    B, N1, N2, D1, D2, nsample = 2, 256, 256, 8, 8, 8
    mlp = [16, 16]
    in_channel = D1 + D2 + 3  # grouped_points1 ++ grouped_points2 ++ direction_xyz

    k_p, k_x1, k_x2, k_p1, k_p2 = jax.random.split(key, 5)
    params = init_feature_correlator_params(k_p, in_channel, mlp)

    xyz1 = jax.random.normal(k_x1, (B, 3, N1), jnp.float32)
    xyz2 = jax.random.normal(k_x2, (B, 3, N2), jnp.float32)
    points1 = jax.random.normal(k_p1, (B, D1, N1), jnp.float32)
    points2 = jax.random.normal(k_p2, (B, D2, N2), jnp.float32)

    fwd = jax.jit(functools.partial(feature_correlator_forward, nsample=nsample))
    out = jax.block_until_ready(fwd(params, xyz1, xyz2, points1, points2))

    assert out.shape == (B, mlp[-1], N1), out.shape
    assert bool(jnp.all(jnp.isfinite(out)))

    ref = feature_correlator_forward(params, xyz1, xyz2, points1, points2,
                                     nsample, cost_fn=cost_volume_ref)
    assert bool(jnp.allclose(out, ref, rtol=2e-2, atol=2e-2)), (
        float(jnp.max(jnp.abs(out - ref))))
    print("KERNEL_OK")
</pallas_src>

<mosaic_0001>
module attributes {stable_mosaic.version = 11 : i64} {
  func.func @_cost_volume_kernel(%arg0: i32, %arg1: i32, %arg2: memref<1x8x11x256xbf16, #tpu.memory_space<vmem>>, %arg3: memref<1x8x3x256xbf16, #tpu.memory_space<vmem>>, %arg4: memref<1x8x256xbf16, #tpu.memory_space<vmem>>, %arg5: memref<16x8xbf16, #tpu.memory_space<vmem>>, %arg6: memref<16x11xbf16, #tpu.memory_space<vmem>>, %arg7: memref<16x1xf32, #tpu.memory_space<vmem>>, %arg8: memref<16x16xbf16, #tpu.memory_space<vmem>>, %arg9: memref<16x1xf32, #tpu.memory_space<vmem>>, %arg10: memref<8x3xbf16, #tpu.memory_space<vmem>>, %arg11: memref<8x1xf32, #tpu.memory_space<vmem>>, %arg12: memref<8x8xbf16, #tpu.memory_space<vmem>>, %arg13: memref<8x1xf32, #tpu.memory_space<vmem>>, %arg14: memref<16x8xbf16, #tpu.memory_space<vmem>>, %arg15: memref<16x1xf32, #tpu.memory_space<vmem>>, %arg16: memref<1x16x256xbf16, #tpu.memory_space<vmem>>) attributes {dimension_semantics = [#tpu.dimension_semantics<parallel>, #tpu.dimension_semantics<parallel>], iteration_bounds = array<i64: 1, 2>, scalar_prefetch = 0 : i64, scratch_operands = 0 : i64, tpu.core_type = #tpu.core_type<tc>, window_params = [{transform_indices = @transform_0, window_bounds = array<i64: 1, 8, 11, 256>}, {transform_indices = @transform_1, window_bounds = array<i64: 1, 8, 3, 256>}, {transform_indices = @transform_2, window_bounds = array<i64: 1, 8, 256>}, {pipeline_mode = #tpu.pipeline_mode<synchronous>, transform_indices = @transform_3, window_bounds = array<i64: 16, 8>}, {pipeline_mode = #tpu.pipeline_mode<synchronous>, transform_indices = @transform_4, window_bounds = array<i64: 16, 11>}, {pipeline_mode = #tpu.pipeline_mode<synchronous>, transform_indices = @transform_5, window_bounds = array<i64: 16, 1>}, {pipeline_mode = #tpu.pipeline_mode<synchronous>, transform_indices = @transform_6, window_bounds = array<i64: 16, 16>}, {pipeline_mode = #tpu.pipeline_mode<synchronous>, transform_indices = @transform_7, window_bounds = array<i64: 16, 1>}, {pipeline_mode = #tpu.pipeline_mode<synchronous>, transform_indices = @transform_8, window_bounds = array<i64: 8, 3>}, {pipeline_mode = #tpu.pipeline_mode<synchronous>, transform_indices = @transform_9, window_bounds = array<i64: 8, 1>}, {pipeline_mode = #tpu.pipeline_mode<synchronous>, transform_indices = @transform_10, window_bounds = array<i64: 8, 8>}, {pipeline_mode = #tpu.pipeline_mode<synchronous>, transform_indices = @transform_11, window_bounds = array<i64: 8, 1>}, {pipeline_mode = #tpu.pipeline_mode<synchronous>, transform_indices = @transform_12, window_bounds = array<i64: 16, 8>}, {pipeline_mode = #tpu.pipeline_mode<synchronous>, transform_indices = @transform_13, window_bounds = array<i64: 16, 1>}, {transform_indices = @transform_14, window_bounds = array<i64: 1, 16, 256>}]} {
    %c0 = arith.constant 0 : index
    %c0_0 = arith.constant 0 : index
    %0 = vector.load %arg6[%c0, %c0_0] : memref<16x11xbf16, #tpu.memory_space<vmem>>, vector<16x11xbf16>
    %c0_1 = arith.constant 0 : index
    %c0_2 = arith.constant 0 : index
    %1 = vector.load %arg8[%c0_1, %c0_2] : memref<16x16xbf16, #tpu.memory_space<vmem>>, vector<16x16xbf16>
    %c0_3 = arith.constant 0 : index
    %c0_4 = arith.constant 0 : index
    %2 = vector.load %arg7[%c0_3, %c0_4] : memref<16x1xf32, #tpu.memory_space<vmem>>, vector<16x1xf32>
    %c0_5 = arith.constant 0 : index
    %c0_6 = arith.constant 0 : index
    %3 = vector.load %arg9[%c0_5, %c0_6] : memref<16x1xf32, #tpu.memory_space<vmem>>, vector<16x1xf32>
    %c0_7 = arith.constant 0 : index
    %c0_8 = arith.constant 0 : index
    %4 = vector.load %arg10[%c0_7, %c0_8] : memref<8x3xbf16, #tpu.memory_space<vmem>>, vector<8x3xbf16>
    %c0_9 = arith.constant 0 : index
    %c0_10 = arith.constant 0 : index
    %5 = vector.load %arg12[%c0_9, %c0_10] : memref<8x8xbf16, #tpu.memory_space<vmem>>, vector<8x8xbf16>
    %c0_11 = arith.constant 0 : index
    %c0_12 = arith.constant 0 : index
    %6 = vector.load %arg14[%c0_11, %c0_12] : memref<16x8xbf16, #tpu.memory_space<vmem>>, vector<16x8xbf16>
    %c0_13 = arith.constant 0 : index
    %c0_14 = arith.constant 0 : index
    %7 = vector.load %arg11[%c0_13, %c0_14] : memref<8x1xf32, #tpu.memory_space<vmem>>, vector<8x1xf32>
    %c0_15 = arith.constant 0 : index
    %c0_16 = arith.constant 0 : index
    %8 = vector.load %arg13[%c0_15, %c0_16] : memref<8x1xf32, #tpu.memory_space<vmem>>, vector<8x1xf32>
    %c0_17 = arith.constant 0 : index
    %c0_18 = arith.constant 0 : index
    %9 = vector.load %arg15[%c0_17, %c0_18] : memref<16x1xf32, #tpu.memory_space<vmem>>, vector<16x1xf32>
    %c0_19 = arith.constant 0 : index
    %c0_20 = arith.constant 0 : index
    %10 = vector.load %arg5[%c0_19, %c0_20] : memref<16x8xbf16, #tpu.memory_space<vmem>>, vector<16x8xbf16>
    %c0_21 = arith.constant 0 : index
    %c0_22 = arith.constant 0 : index
    %c0_23 = arith.constant 0 : index
    %11 = vector.load %arg4[%c0_21, %c0_22, %c0_23] : memref<1x8x256xbf16, #tpu.memory_space<vmem>>, vector<1x8x256xbf16>
    %12 = vector.shape_cast %11 : vector<1x8x256xbf16> to vector<8x256xbf16>
    %cst = arith.constant dense<0.000000e+00> : vector<16x256xf32>
    %13 = tpu.matmul %10, %12, %cst {dimension_numbers = #tpu.dot_dimension_numbers<[1], [0], [0], [1], [0, 0, 1, 1], [], []>} : vector<16x8xbf16>, vector<8x256xbf16>, vector<16x256xf32> -> vector<16x256xf32>
    %cst_24 = arith.constant 0.000000e+00 : f32
    %14 = vector.broadcast %cst_24 : f32 to vector<16x256xf32>
    %c0_25 = arith.constant 0 : index
    %c0_26 = arith.constant 0 : index
    %c0_27 = arith.constant 0 : index
    %c0_28 = arith.constant 0 : index
    %15 = vector.load %arg2[%c0_25, %c0_26, %c0_27, %c0_28] : memref<1x8x11x256xbf16, #tpu.memory_space<vmem>>, vector<1x1x11x256xbf16>
    %16 = vector.shape_cast %15 : vector<1x1x11x256xbf16> to vector<11x256xbf16>
    %cst_29 = arith.constant dense<0.000000e+00> : vector<16x256xf32>
    %17 = tpu.matmul %0, %16, %cst_29 {dimension_numbers = #tpu.dot_dimension_numbers<[1], [0], [0], [1], [0, 0, 1, 1], [], []>} : vector<16x11xbf16>, vector<11x256xbf16>, vector<16x256xf32> -> vector<16x256xf32>
    %18 = vector.broadcast %2 : vector<16x1xf32> to vector<16x256xf32>
    %19 = arith.addf %17, %18 : vector<16x256xf32>
    %20 = arith.addf %19, %13 : vector<16x256xf32>
    %cst_30 = arith.constant 1.000000e-01 : f32
    %21 = vector.broadcast %cst_30 : f32 to vector<16x256xf32>
    %22 = arith.mulf %21, %20 : vector<16x256xf32>
    %23 = arith.maximumf %20, %22 : vector<16x256xf32>
    %24 = arith.truncf %23 : vector<16x256xf32> to vector<16x256xbf16>
    %cst_31 = arith.constant dense<0.000000e+00> : vector<16x256xf32>
    %25 = tpu.matmul %1, %24, %cst_31 {dimension_numbers = #tpu.dot_dimension_numbers<[1], [0], [0], [1], [0, 0, 1, 1], [], []>} : vector<16x16xbf16>, vector<16x256xbf16>, vector<16x256xf32> -> vector<16x256xf32>
    %26 = vector.broadcast %3 : vector<16x1xf32> to vector<16x256xf32>
    %27 = arith.addf %25, %26 : vector<16x256xf32>
    %cst_32 = arith.constant 1.000000e-01 : f32
    %28 = vector.broadcast %cst_32 : f32 to vector<16x256xf32>
    %29 = arith.mulf %28, %27 : vector<16x256xf32>
    %30 = arith.maximumf %27, %29 : vector<16x256xf32>
    %c0_33 = arith.constant 0 : index
    %c0_34 = arith.constant 0 : index
    %c0_35 = arith.constant 0 : index
    %c0_36 = arith.constant 0 : index
    %31 = vector.load %arg3[%c0_33, %c0_34, %c0_35, %c0_36] : memref<1x8x3x256xbf16, #tpu.memory_space<vmem>>, vector<1x1x3x256xbf16>
    %32 = vector.shape_cast %31 : vector<1x1x3x256xbf16> to vector<3x256xbf16>
    %cst_37 = arith.constant dense<0.000000e+00> : vector<8x256xf32>
    %33 = tpu.matmul %4, %32, %cst_37 {dimension_numbers = #tpu.dot_dimension_numbers<[1], [0], [0], [1], [0, 0, 1, 1], [], []>} : vector<8x3xbf16>, vector<3x256xbf16>, vector<8x256xf32> -> vector<8x256xf32>
    %34 = vector.broadcast %7 : vector<8x1xf32> to vector<8x256xf32>
    %35 = arith.addf %33, %34 : vector<8x256xf32>
    %cst_38 = arith.constant 0.000000e+00 : f32
    %36 = vector.broadcast %cst_38 : f32 to vector<8x256xf32>
    %37 = arith.maximumf %35, %36 : vector<8x256xf32>
    %38 = arith.truncf %37 : vector<8x256xf32> to vector<8x256xbf16>
    %cst_39 = arith.constant dense<0.000000e+00> : vector<8x256xf32>
    %39 = tpu.matmul %5, %38, %cst_39 {dimension_numbers = #tpu.dot_dimension_numbers<[1], [0], [0], [1], [0, 0, 1, 1], [], []>} : vector<8x8xbf16>, vector<8x256xbf16>, vector<8x256xf32> -> vector<8x256xf32>
    %40 = vector.broadcast %8 : vector<8x1xf32> to vector<8x256xf32>
    %41 = arith.addf %39, %40 : vector<8x256xf32>
    %cst_40 = arith.constant 0.000000e+00 : f32
    %42 = vector.broadcast %cst_40 : f32 to vector<8x256xf32>
    %43 = arith.maximumf %41, %42 : vector<8x256xf32>
    %44 = arith.truncf %43 : vector<8x256xf32> to vector<8x256xbf16>
    %cst_41 = arith.constant dense<0.000000e+00> : vector<16x256xf32>
    %45 = tpu.matmul %6, %44, %cst_41 {dimension_numbers = #tpu.dot_dimension_numbers<[1], [0], [0], [1], [0, 0, 1, 1], [], []>} : vector<16x8xbf16>, vector<8x256xbf16>, vector<16x256xf32> -> vector<16x256xf32>
    %46 = vector.broadcast %9 : vector<16x1xf32> to vector<16x256xf32>
    %47 = arith.addf %45, %46 : vector<16x256xf32>
    %cst_42 = arith.constant 0.000000e+00 : f32
    %48 = vector.broadcast %cst_42 : f32 to vector<16x256xf32>
    %49 = arith.maximumf %47, %48 : vector<16x256xf32>
    %50 = arith.mulf %49, %30 : vector<16x256xf32>
    %51 = arith.addf %14, %50 : vector<16x256xf32>
    %c0_43 = arith.constant 0 : index
    %c1 = arith.constant 1 : index
    %c0_44 = arith.constant 0 : index
    %c0_45 = arith.constant 0 : index
    %52 = vector.load %arg2[%c0_43, %c1, %c0_44, %c0_45] : memref<1x8x11x256xbf16, #tpu.memory_space<vmem>>, vector<1x1x11x256xbf16>
    %53 = vector.shape_cast %52 : vector<1x1x11x256xbf16> to vector<11x256xbf16>
    %cst_46 = arith.constant dense<0.000000e+00> : vector<16x256xf32>
    %54 = tpu.matmul %0, %53, %cst_46 {dimension_numbers = #tpu.dot_dimension_numbers<[1], [0], [0], [1], [0, 0, 1, 1], [], []>} : vector<16x11xbf16>, vector<11x256xbf16>, vector<16x256xf32> -> vector<16x256xf32>
    %55 = vector.broadcast %2 : vector<16x1xf32> to vector<16x256xf32>
    %56 = arith.addf %54, %55 : vector<16x256xf32>
    %57 = arith.addf %56, %13 : vector<16x256xf32>
    %cst_47 = arith.constant 1.000000e-01 : f32
    %58 = vector.broadcast %cst_47 : f32 to vector<16x256xf32>
    %59 = arith.mulf %58, %57 : vector<16x256xf32>
    %60 = arith.maximumf %57, %59 : vector<16x256xf32>
    %61 = arith.truncf %60 : vector<16x256xf32> to vector<16x256xbf16>
    %cst_48 = arith.constant dense<0.000000e+00> : vector<16x256xf32>
    %62 = tpu.matmul %1, %61, %cst_48 {dimension_numbers = #tpu.dot_dimension_numbers<[1], [0], [0], [1], [0, 0, 1, 1], [], []>} : vector<16x16xbf16>, vector<16x256xbf16>, vector<16x256xf32> -> vector<16x256xf32>
    %63 = vector.broadcast %3 : vector<16x1xf32> to vector<16x256xf32>
    %64 = arith.addf %62, %63 : vector<16x256xf32>
    %cst_49 = arith.constant 1.000000e-01 : f32
    %65 = vector.broadcast %cst_49 : f32 to vector<16x256xf32>
    %66 = arith.mulf %65, %64 : vector<16x256xf32>
    %67 = arith.maximumf %64, %66 : vector<16x256xf32>
    %c0_50 = arith.constant 0 : index
    %c1_51 = arith.constant 1 : index
    %c0_52 = arith.constant 0 : index
    %c0_53 = arith.constant 0 : index
    %68 = vector.load %arg3[%c0_50, %c1_51, %c0_52, %c0_53] : memref<1x8x3x256xbf16, #tpu.memory_space<vmem>>, vector<1x1x3x256xbf16>
    %69 = vector.shape_cast %68 : vector<1x1x3x256xbf16> to vector<3x256xbf16>
    %cst_54 = arith.constant dense<0.000000e+00> : vector<8x256xf32>
    %70 = tpu.matmul %4, %69, %cst_54 {dimension_numbers = #tpu.dot_dimension_numbers<[1], [0], [0], [1], [0, 0, 1, 1], [], []>} : vector<8x3xbf16>, vector<3x256xbf16>, vector<8x256xf32> -> vector<8x256xf32>
    %71 = vector.broadcast %7 : vector<8x1xf32> to vector<8x256xf32>
    %72 = arith.addf %70, %71 : vector<8x256xf32>
    %cst_55 = arith.constant 0.000000e+00 : f32
    %73 = vector.broadcast %cst_55 : f32 to vector<8x256xf32>
    %74 = arith.maximumf %72, %73 : vector<8x256xf32>
    %75 = arith.truncf %74 : vector<8x256xf32> to vector<8x256xbf16>
    %cst_56 = arith.constant dense<0.000000e+00> : vector<8x256xf32>
    %76 = tpu.matmul %5, %75, %cst_56 {dimension_numbers = #tpu.dot_dimension_numbers<[1], [0], [0], [1], [0, 0, 1, 1], [], []>} : vector<8x8xbf16>, vector<8x256xbf16>, vector<8x256xf32> -> vector<8x256xf32>
    %77 = vector.broadcast %8 : vector<8x1xf32> to vector<8x256xf32>
    %78 = arith.addf %76, %77 : vector<8x256xf32>
    %cst_57 = arith.constant 0.000000e+00 : f32
    %79 = vector.broadcast %cst_57 : f32 to vector<8x256xf32>
    %80 = arith.maximumf %78, %79 : vector<8x256xf32>
    %81 = arith.truncf %80 : vector<8x256xf32> to vector<8x256xbf16>
    %cst_58 = arith.constant dense<0.000000e+00> : vector<16x256xf32>
    %82 = tpu.matmul %6, %81, %cst_58 {dimension_numbers = #tpu.dot_dimension_numbers<[1], [0], [0], [1], [0, 0, 1, 1], [], []>} : vector<16x8xbf16>, vector<8x256xbf16>, vector<16x256xf32> -> vector<16x256xf32>
    %83 = vector.broadcast %9 : vector<16x1xf32> to vector<16x256xf32>
    %84 = arith.addf %82, %83 : vector<16x256xf32>
    %cst_59 = arith.constant 0.000000e+00 : f32
    %85 = vector.broadcast %cst_59 : f32 to vector<16x256xf32>
    %86 = arith.maximumf %84, %85 : vector<16x256xf32>
    %87 = arith.mulf %86, %67 : vector<16x256xf32>
    %88 = arith.addf %51, %87 : vector<16x256xf32>
    %c0_60 = arith.constant 0 : index
    %c2 = arith.constant 2 : index
    %c0_61 = arith.constant 0 : index
    %c0_62 = arith.constant 0 : index
    %89 = vector.load %arg2[%c0_60, %c2, %c0_61, %c0_62] : memref<1x8x11x256xbf16, #tpu.memory_space<vmem>>, vector<1x1x11x256xbf16>
    %90 = vector.shape_cast %89 : vector<1x1x11x256xbf16> to vector<11x256xbf16>
    %cst_63 = arith.constant dense<0.000000e+00> : vector<16x256xf32>
    %91 = tpu.matmul %0, %90, %cst_63 {dimension_numbers = #tpu.dot_dimension_numbers<[1], [0], [0], [1], [0, 0, 1, 1], [], []>} : vector<16x11xbf16>, vector<11x256xbf16>, vector<16x256xf32> -> vector<16x256xf32>
    %92 = vector.broadcast %2 : vector<16x1xf32> to vector<16x256xf32>
    %93 = arith.addf %91, %92 : vector<16x256xf32>
    %94 = arith.addf %93, %13 : vector<16x256xf32>
    %cst_64 = arith.constant 1.000000e-01 : f32
    %95 = vector.broadcast %cst_64 : f32 to vector<16x256xf32>
    %96 = arith.mulf %95, %94 : vector<16x256xf32>
    %97 = arith.maximumf %94, %96 : vector<16x256xf32>
    %98 = arith.truncf %97 : vector<16x256xf32> to vector<16x256xbf16>
    %cst_65 = arith.constant dense<0.000000e+00> : vector<16x256xf32>
    %99 = tpu.matmul %1, %98, %cst_65 {dimension_numbers = #tpu.dot_dimension_numbers<[1], [0], [0], [1], [0, 0, 1, 1], [], []>} : vector<16x16xbf16>, vector<16x256xbf16>, vector<16x256xf32> -> vector<16x256xf32>
    %100 = vector.broadcast %3 : vector<16x1xf32> to vector<16x256xf32>
    %101 = arith.addf %99, %100 : vector<16x256xf32>
    %cst_66 = arith.constant 1.000000e-01 : f32
    %102 = vector.broadcast %cst_66 : f32 to vector<16x256xf32>
    %103 = arith.mulf %102, %101 : vector<16x256xf32>
    %104 = arith.maximumf %101, %103 : vector<16x256xf32>
    %c0_67 = arith.constant 0 : index
    %c2_68 = arith.constant 2 : index
    %c0_69 = arith.constant 0 : index
    %c0_70 = arith.constant 0 : index
    %105 = vector.load %arg3[%c0_67, %c2_68, %c0_69, %c0_70] : memref<1x8x3x256xbf16, #tpu.memory_space<vmem>>, vector<1x1x3x256xbf16>
    %106 = vector.shape_cast %105 : vector<1x1x3x256xbf16> to vector<3x256xbf16>
    %cst_71 = arith.constant dense<0.000000e+00> : vector<8x256xf32>
    %107 = tpu.matmul %4, %106, %cst_71 {dimension_numbers = #tpu.dot_dimension_numbers<[1], [0], [0], [1], [0, 0, 1, 1], [], []>} : vector<8x3xbf16>, vector<3x256xbf16>, vector<8x256xf32> -> vector<8x256xf32>
    %108 = vector.broadcast %7 : vector<8x1xf32> to vector<8x256xf32>
    %109 = arith.addf %107, %108 : vector<8x256xf32>
    %cst_72 = arith.constant 0.000000e+00 : f32
    %110 = vector.broadcast %cst_72 : f32 to vector<8x256xf32>
    %111 = arith.maximumf %109, %110 : vector<8x256xf32>
    %112 = arith.truncf %111 : vector<8x256xf32> to vector<8x256xbf16>
    %cst_73 = arith.constant dense<0.000000e+00> : vector<8x256xf32>
    %113 = tpu.matmul %5, %112, %cst_73 {dimension_numbers = #tpu.dot_dimension_numbers<[1], [0], [0], [1], [0, 0, 1, 1], [], []>} : vector<8x8xbf16>, vector<8x256xbf16>, vector<8x256xf32> -> vector<8x256xf32>
    %114 = vector.broadcast %8 : vector<8x1xf32> to vector<8x256xf32>
    %115 = arith.addf %113, %114 : vector<8x256xf32>
    %cst_74 = arith.constant 0.000000e+00 : f32
    %116 = vector.broadcast %cst_74 : f32 to vector<8x256xf32>
    %117 = arith.maximumf %115, %116 : vector<8x256xf32>
    %118 = arith.truncf %117 : vector<8x256xf32> to vector<8x256xbf16>
    %cst_75 = arith.constant dense<0.000000e+00> : vector<16x256xf32>
    %119 = tpu.matmul %6, %118, %cst_75 {dimension_numbers = #tpu.dot_dimension_numbers<[1], [0], [0], [1], [0, 0, 1, 1], [], []>} : vector<16x8xbf16>, vector<8x256xbf16>, vector<16x256xf32> -> vector<16x256xf32>
    %120 = vector.broadcast %9 : vector<16x1xf32> to vector<16x256xf32>
    %121 = arith.addf %119, %120 : vector<16x256xf32>
    %cst_76 = arith.constant 0.000000e+00 : f32
    %122 = vector.broadcast %cst_76 : f32 to vector<16x256xf32>
    %123 = arith.maximumf %121, %122 : vector<16x256xf32>
    %124 = arith.mulf %123, %104 : vector<16x256xf32>
    %125 = arith.addf %88, %124 : vector<16x256xf32>
    %c0_77 = arith.constant 0 : index
    %c3 = arith.constant 3 : index
    %c0_78 = arith.constant 0 : index
    %c0_79 = arith.constant 0 : index
    %126 = vector.load %arg2[%c0_77, %c3, %c0_78, %c0_79] : memref<1x8x11x256xbf16, #tpu.memory_space<vmem>>, vector<1x1x11x256xbf16>
    %127 = vector.shape_cast %126 : vector<1x1x11x256xbf16> to vector<11x256xbf16>
    %cst_80 = arith.constant dense<0.000000e+00> : vector<16x256xf32>
    %128 = tpu.matmul %0, %127, %cst_80 {dimension_numbers = #tpu.dot_dimension_numbers<[1], [0], [0], [1], [0, 0, 1, 1], [], []>} : vector<16x11xbf16>, vector<11x256xbf16>, vector<16x256xf32> -> vector<16x256xf32>
    %129 = vector.broadcast %2 : vector<16x1xf32> to vector<16x256xf32>
    %130 = arith.addf %128, %129 : vector<16x256xf32>
    %131 = arith.addf %130, %13 : vector<16x256xf32>
    %cst_81 = arith.constant 1.000000e-01 : f32
    %132 = vector.broadcast %cst_81 : f32 to vector<16x256xf32>
    %133 = arith.mulf %132, %131 : vector<16x256xf32>
    %134 = arith.maximumf %131, %133 : vector<16x256xf32>
    %135 = arith.truncf %134 : vector<16x256xf32> to vector<16x256xbf16>
    %cst_82 = arith.constant dense<0.000000e+00> : vector<16x256xf32>
    %136 = tpu.matmul %1, %135, %cst_82 {dimension_numbers = #tpu.dot_dimension_numbers<[1], [0], [0], [1], [0, 0, 1, 1], [], []>} : vector<16x16xbf16>, vector<16x256xbf16>, vector<16x256xf32> -> vector<16x256xf32>
    %137 = vector.broadcast %3 : vector<16x1xf32> to vector<16x256xf32>
    %138 = arith.addf %136, %137 : vector<16x256xf32>
    %cst_83 = arith.constant 1.000000e-01 : f32
    %139 = vector.broadcast %cst_83 : f32 to vector<16x256xf32>
    %140 = arith.mulf %139, %138 : vector<16x256xf32>
    %141 = arith.maximumf %138, %140 : vector<16x256xf32>
    %c0_84 = arith.constant 0 : index
    %c3_85 = arith.constant 3 : index
    %c0_86 = arith.constant 0 : index
    %c0_87 = arith.constant 0 : index
    %142 = vector.load %arg3[%c0_84, %c3_85, %c0_86, %c0_87] : memref<1x8x3x256xbf16, #tpu.memory_space<vmem>>, vector<1x1x3x256xbf16>
    %143 = vector.shape_cast %142 : vector<1x1x3x256xbf16> to vector<3x256xbf16>
    %cst_88 = arith.constant dense<0.000000e+00> : vector<8x256xf32>
    %144 = tpu.matmul %4, %143, %cst_88 {dimension_numbers = #tpu.dot_dimension_numbers<[1], [0], [0], [1], [0, 0, 1, 1], [], []>} : vector<8x3xbf16>, vector<3x256xbf16>, vector<8x256xf32> -> vector<8x256xf32>
    %145 = vector.broadcast %7 : vector<8x1xf32> to vector<8x256xf32>
    %146 = arith.addf %144, %145 : vector<8x256xf32>
    %cst_89 = arith.constant 0.000000e+00 : f32
    %147 = vector.broadcast %cst_89 : f32 to vector<8x256xf32>
    %148 = arith.maximumf %146, %147 : vector<8x256xf32>
    %149 = arith.truncf %148 : vector<8x256xf32> to vector<8x256xbf16>
    %cst_90 = arith.constant dense<0.000000e+00> : vector<8x256xf32>
    %150 = tpu.matmul %5, %149, %cst_90 {dimension_numbers = #tpu.dot_dimension_numbers<[1], [0], [0], [1], [0, 0, 1, 1], [], []>} : vector<8x8xbf16>, vector<8x256xbf16>, vector<8x256xf32> -> vector<8x256xf32>
    %151 = vector.broadcast %8 : vector<8x1xf32> to vector<8x256xf32>
    %152 = arith.addf %150, %151 : vector<8x256xf32>
    %cst_91 = arith.constant 0.000000e+00 : f32
    %153 = vector.broadcast %cst_91 : f32 to vector<8x256xf32>
    %154 = arith.maximumf %152, %153 : vector<8x256xf32>
    %155 = arith.truncf %154 : vector<8x256xf32> to vector<8x256xbf16>
    %cst_92 = arith.constant dense<0.000000e+00> : vector<16x256xf32>
    %156 = tpu.matmul %6, %155, %cst_92 {dimension_numbers = #tpu.dot_dimension_numbers<[1], [0], [0], [1], [0, 0, 1, 1], [], []>} : vector<16x8xbf16>, vector<8x256xbf16>, vector<16x256xf32> -> vector<16x256xf32>
    %157 = vector.broadcast %9 : vector<16x1xf32> to vector<16x256xf32>
    %158 = arith.addf %156, %157 : vector<16x256xf32>
    %cst_93 = arith.constant 0.000000e+00 : f32
    %159 = vector.broadcast %cst_93 : f32 to vector<16x256xf32>
    %160 = arith.maximumf %158, %159 : vector<16x256xf32>
    %161 = arith.mulf %160, %141 : vector<16x256xf32>
    %162 = arith.addf %125, %161 : vector<16x256xf32>
    %c0_94 = arith.constant 0 : index
    %c4 = arith.constant 4 : index
    %c0_95 = arith.constant 0 : index
    %c0_96 = arith.constant 0 : index
    %163 = vector.load %arg2[%c0_94, %c4, %c0_95, %c0_96] : memref<1x8x11x256xbf16, #tpu.memory_space<vmem>>, vector<1x1x11x256xbf16>
    %164 = vector.shape_cast %163 : vector<1x1x11x256xbf16> to vector<11x256xbf16>
    %cst_97 = arith.constant dense<0.000000e+00> : vector<16x256xf32>
    %165 = tpu.matmul %0, %164, %cst_97 {dimension_numbers = #tpu.dot_dimension_numbers<[1], [0], [0], [1], [0, 0, 1, 1], [], []>} : vector<16x11xbf16>, vector<11x256xbf16>, vector<16x256xf32> -> vector<16x256xf32>
    %166 = vector.broadcast %2 : vector<16x1xf32> to vector<16x256xf32>
    %167 = arith.addf %165, %166 : vector<16x256xf32>
    %168 = arith.addf %167, %13 : vector<16x256xf32>
    %cst_98 = arith.constant 1.000000e-01 : f32
    %169 = vector.broadcast %cst_98 : f32 to vector<16x256xf32>
    %170 = arith.mulf %169, %168 : vector<16x256xf32>
    %171 = arith.maximumf %168, %170 : vector<16x256xf32>
    %172 = arith.truncf %171 : vector<16x256xf32> to vector<16x256xbf16>
    %cst_99 = arith.constant dense<0.000000e+00> : vector<16x256xf32>
    %173 = tpu.matmul %1, %172, %cst_99 {dimension_numbers = #tpu.dot_dimension_numbers<[1], [0], [0], [1], [0, 0, 1, 1], [], []>} : vector<16x16xbf16>, vector<16x256xbf16>, vector<16x256xf32> -> vector<16x256xf32>
    %174 = vector.broadcast %3 : vector<16x1xf32> to vector<16x256xf32>
    %175 = arith.addf %173, %174 : vector<16x256xf32>
    %cst_100 = arith.constant 1.000000e-01 : f32
    %176 = vector.broadcast %cst_100 : f32 to vector<16x256xf32>
    %177 = arith.mulf %176, %175 : vector<16x256xf32>
    %178 = arith.maximumf %175, %177 : vector<16x256xf32>
    %c0_101 = arith.constant 0 : index
    %c4_102 = arith.constant 4 : index
    %c0_103 = arith.constant 0 : index
    %c0_104 = arith.constant 0 : index
    %179 = vector.load %arg3[%c0_101, %c4_102, %c0_103, %c0_104] : memref<1x8x3x256xbf16, #tpu.memory_space<vmem>>, vector<1x1x3x256xbf16>
    %180 = vector.shape_cast %179 : vector<1x1x3x256xbf16> to vector<3x256xbf16>
    %cst_105 = arith.constant dense<0.000000e+00> : vector<8x256xf32>
    %181 = tpu.matmul %4, %180, %cst_105 {dimension_numbers = #tpu.dot_dimension_numbers<[1], [0], [0], [1], [0, 0, 1, 1], [], []>} : vector<8x3xbf16>, vector<3x256xbf16>, vector<8x256xf32> -> vector<8x256xf32>
    %182 = vector.broadcast %7 : vector<8x1xf32> to vector<8x256xf32>
    %183 = arith.addf %181, %182 : vector<8x256xf32>
    %cst_106 = arith.constant 0.000000e+00 : f32
    %184 = vector.broadcast %cst_106 : f32 to vector<8x256xf32>
    %185 = arith.maximumf %183, %184 : vector<8x256xf32>
    %186 = arith.truncf %185 : vector<8x256xf32> to vector<8x256xbf16>
    %cst_107 = arith.constant dense<0.000000e+00> : vector<8x256xf32>
    %187 = tpu.matmul %5, %186, %cst_107 {dimension_numbers = #tpu.dot_dimension_numbers<[1], [0], [0], [1], [0, 0, 1, 1], [], []>} : vector<8x8xbf16>, vector<8x256xbf16>, vector<8x256xf32> -> vector<8x256xf32>
    %188 = vector.broadcast %8 : vector<8x1xf32> to vector<8x256xf32>
    %189 = arith.addf %187, %188 : vector<8x256xf32>
    %cst_108 = arith.constant 0.000000e+00 : f32
    %190 = vector.broadcast %cst_108 : f32 to vector<8x256xf32>
    %191 = arith.maximumf %189, %190 : vector<8x256xf32>
    %192 = arith.truncf %191 : vector<8x256xf32> to vector<8x256xbf16>
    %cst_109 = arith.constant dense<0.000000e+00> : vector<16x256xf32>
    %193 = tpu.matmul %6, %192, %cst_109 {dimension_numbers = #tpu.dot_dimension_numbers<[1], [0], [0], [1], [0, 0, 1, 1], [], []>} : vector<16x8xbf16>, vector<8x256xbf16>, vector<16x256xf32> -> vector<16x256xf32>
    %194 = vector.broadcast %9 : vector<16x1xf32> to vector<16x256xf32>
    %195 = arith.addf %193, %194 : vector<16x256xf32>
    %cst_110 = arith.constant 0.000000e+00 : f32
    %196 = vector.broadcast %cst_110 : f32 to vector<16x256xf32>
    %197 = arith.maximumf %195, %196 : vector<16x256xf32>
    %198 = arith.mulf %197, %178 : vector<16x256xf32>
    %199 = arith.addf %162, %198 : vector<16x256xf32>
    %c0_111 = arith.constant 0 : index
    %c5 = arith.constant 5 : index
    %c0_112 = arith.constant 0 : index
    %c0_113 = arith.constant 0 : index
    %200 = vector.load %arg2[%c0_111, %c5, %c0_112, %c0_113] : memref<1x8x11x256xbf16, #tpu.memory_space<vmem>>, vector<1x1x11x256xbf16>
    %201 = vector.shape_cast %200 : vector<1x1x11x256xbf16> to vector<11x256xbf16>
    %cst_114 = arith.constant dense<0.000000e+00> : vector<16x256xf32>
    %202 = tpu.matmul %0, %201, %cst_114 {dimension_numbers = #tpu.dot_dimension_numbers<[1], [0], [0], [1], [0, 0, 1, 1], [], []>} : vector<16x11xbf16>, vector<11x256xbf16>, vector<16x256xf32> -> vector<16x256xf32>
    %203 = vector.broadcast %2 : vector<16x1xf32> to vector<16x256xf32>
    %204 = arith.addf %202, %203 : vector<16x256xf32>
    %205 = arith.addf %204, %13 : vector<16x256xf32>
    %cst_115 = arith.constant 1.000000e-01 : f32
    %206 = vector.broadcast %cst_115 : f32 to vector<16x256xf32>
    %207 = arith.mulf %206, %205 : vector<16x256xf32>
    %208 = arith.maximumf %205, %207 : vector<16x256xf32>
    %209 = arith.truncf %208 : vector<16x256xf32> to vector<16x256xbf16>
    %cst_116 = arith.constant dense<0.000000e+00> : vector<16x256xf32>
    %210 = tpu.matmul %1, %209, %cst_116 {dimension_numbers = #tpu.dot_dimension_numbers<[1], [0], [0], [1], [0, 0, 1, 1], [], []>} : vector<16x16xbf16>, vector<16x256xbf16>, vector<16x256xf32> -> vector<16x256xf32>
    %211 = vector.broadcast %3 : vector<16x1xf32> to vector<16x256xf32>
    %212 = arith.addf %210, %211 : vector<16x256xf32>
    %cst_117 = arith.constant 1.000000e-01 : f32
    %213 = vector.broadcast %cst_117 : f32 to vector<16x256xf32>
    %214 = arith.mulf %213, %212 : vector<16x256xf32>
    %215 = arith.maximumf %212, %214 : vector<16x256xf32>
    %c0_118 = arith.constant 0 : index
    %c5_119 = arith.constant 5 : index
    %c0_120 = arith.constant 0 : index
    %c0_121 = arith.constant 0 : index
    %216 = vector.load %arg3[%c0_118, %c5_119, %c0_120, %c0_121] : memref<1x8x3x256xbf16, #tpu.memory_space<vmem>>, vector<1x1x3x256xbf16>
    %217 = vector.shape_cast %216 : vector<1x1x3x256xbf16> to vector<3x256xbf16>
    %cst_122 = arith.constant dense<0.000000e+00> : vector<8x256xf32>
    %218 = tpu.matmul %4, %217, %cst_122 {dimension_numbers = #tpu.dot_dimension_numbers<[1], [0], [0], [1], [0, 0, 1, 1], [], []>} : vector<8x3xbf16>, vector<3x256xbf16>, vector<8x256xf32> -> vector<8x256xf32>
    %219 = vector.broadcast %7 : vector<8x1xf32> to vector<8x256xf32>
    %220 = arith.addf %218, %219 : vector<8x256xf32>
    %cst_123 = arith.constant 0.000000e+00 : f32
    %221 = vector.broadcast %cst_123 : f32 to vector<8x256xf32>
    %222 = arith.maximumf %220, %221 : vector<8x256xf32>
    %223 = arith.truncf %222 : vector<8x256xf32> to vector<8x256xbf16>
    %cst_124 = arith.constant dense<0.000000e+00> : vector<8x256xf32>
    %224 = tpu.matmul %5, %223, %cst_124 {dimension_numbers = #tpu.dot_dimension_numbers<[1], [0], [0], [1], [0, 0, 1, 1], [], []>} : vector<8x8xbf16>, vector<8x256xbf16>, vector<8x256xf32> -> vector<8x256xf32>
    %225 = vector.broadcast %8 : vector<8x1xf32> to vector<8x256xf32>
    %226 = arith.addf %224, %225 : vector<8x256xf32>
    %cst_125 = arith.constant 0.000000e+00 : f32
    %227 = vector.broadcast %cst_125 : f32 to vector<8x256xf32>
    %228 = arith.maximumf %226, %227 : vector<8x256xf32>
    %229 = arith.truncf %228 : vector<8x256xf32> to vector<8x256xbf16>
    %cst_126 = arith.constant dense<0.000000e+00> : vector<16x256xf32>
    %230 = tpu.matmul %6, %229, %cst_126 {dimension_numbers = #tpu.dot_dimension_numbers<[1], [0], [0], [1], [0, 0, 1, 1], [], []>} : vector<16x8xbf16>, vector<8x256xbf16>, vector<16x256xf32> -> vector<16x256xf32>
    %231 = vector.broadcast %9 : vector<16x1xf32> to vector<16x256xf32>
    %232 = arith.addf %230, %231 : vector<16x256xf32>
    %cst_127 = arith.constant 0.000000e+00 : f32
    %233 = vector.broadcast %cst_127 : f32 to vector<16x256xf32>
    %234 = arith.maximumf %232, %233 : vector<16x256xf32>
    %235 = arith.mulf %234, %215 : vector<16x256xf32>
    %236 = arith.addf %199, %235 : vector<16x256xf32>
    %c0_128 = arith.constant 0 : index
    %c6 = arith.constant 6 : index
    %c0_129 = arith.constant 0 : index
    %c0_130 = arith.constant 0 : index
    %237 = vector.load %arg2[%c0_128, %c6, %c0_129, %c0_130] : memref<1x8x11x256xbf16, #tpu.memory_space<vmem>>, vector<1x1x11x256xbf16>
    %238 = vector.shape_cast %237 : vector<1x1x11x256xbf16> to vector<11x256xbf16>
    %cst_131 = arith.constant dense<0.000000e+00> : vector<16x256xf32>
    %239 = tpu.matmul %0, %238, %cst_131 {dimension_numbers = #tpu.dot_dimension_numbers<[1], [0], [0], [1], [0, 0, 1, 1], [], []>} : vector<16x11xbf16>, vector<11x256xbf16>, vector<16x256xf32> -> vector<16x256xf32>
    %240 = vector.broadcast %2 : vector<16x1xf32> to vector<16x256xf32>
    %241 = arith.addf %239, %240 : vector<16x256xf32>
    %242 = arith.addf %241, %13 : vector<16x256xf32>
    %cst_132 = arith.constant 1.000000e-01 : f32
    %243 = vector.broadcast %cst_132 : f32 to vector<16x256xf32>
    %244 = arith.mulf %243, %242 : vector<16x256xf32>
    %245 = arith.maximumf %242, %244 : vector<16x256xf32>
    %246 = arith.truncf %245 : vector<16x256xf32> to vector<16x256xbf16>
    %cst_133 = arith.constant dense<0.000000e+00> : vector<16x256xf32>
    %247 = tpu.matmul %1, %246, %cst_133 {dimension_numbers = #tpu.dot_dimension_numbers<[1], [0], [0], [1], [0, 0, 1, 1], [], []>} : vector<16x16xbf16>, vector<16x256xbf16>, vector<16x256xf32> -> vector<16x256xf32>
    %248 = vector.broadcast %3 : vector<16x1xf32> to vector<16x256xf32>
    %249 = arith.addf %247, %248 : vector<16x256xf32>
    %cst_134 = arith.constant 1.000000e-01 : f32
    %250 = vector.broadcast %cst_134 : f32 to vector<16x256xf32>
    %251 = arith.mulf %250, %249 : vector<16x256xf32>
    %252 = arith.maximumf %249, %251 : vector<16x256xf32>
    %c0_135 = arith.constant 0 : index
    %c6_136 = arith.constant 6 : index
    %c0_137 = arith.constant 0 : index
    %c0_138 = arith.constant 0 : index
    %253 = vector.load %arg3[%c0_135, %c6_136, %c0_137, %c0_138] : memref<1x8x3x256xbf16, #tpu.memory_space<vmem>>, vector<1x1x3x256xbf16>
    %254 = vector.shape_cast %253 : vector<1x1x3x256xbf16> to vector<3x256xbf16>
    %cst_139 = arith.constant dense<0.000000e+00> : vector<8x256xf32>
    %255 = tpu.matmul %4, %254, %cst_139 {dimension_numbers = #tpu.dot_dimension_numbers<[1], [0], [0], [1], [0, 0, 1, 1], [], []>} : vector<8x3xbf16>, vector<3x256xbf16>, vector<8x256xf32> -> vector<8x256xf32>
    %256 = vector.broadcast %7 : vector<8x1xf32> to vector<8x256xf32>
    %257 = arith.addf %255, %256 : vector<8x256xf32>
    %cst_140 = arith.constant 0.000000e+00 : f32
    %258 = vector.broadcast %cst_140 : f32 to vector<8x256xf32>
    %259 = arith.maximumf %257, %258 : vector<8x256xf32>
    %260 = arith.truncf %259 : vector<8x256xf32> to vector<8x256xbf16>
    %cst_141 = arith.constant dense<0.000000e+00> : vector<8x256xf32>
    %261 = tpu.matmul %5, %260, %cst_141 {dimension_numbers = #tpu.dot_dimension_numbers<[1], [0], [0], [1], [0, 0, 1, 1], [], []>} : vector<8x8xbf16>, vector<8x256xbf16>, vector<8x256xf32> -> vector<8x256xf32>
    %262 = vector.broadcast %8 : vector<8x1xf32> to vector<8x256xf32>
    %263 = arith.addf %261, %262 : vector<8x256xf32>
    %cst_142 = arith.constant 0.000000e+00 : f32
    %264 = vector.broadcast %cst_142 : f32 to vector<8x256xf32>
    %265 = arith.maximumf %263, %264 : vector<8x256xf32>
    %266 = arith.truncf %265 : vector<8x256xf32> to vector<8x256xbf16>
    %cst_143 = arith.constant dense<0.000000e+00> : vector<16x256xf32>
    %267 = tpu.matmul %6, %266, %cst_143 {dimension_numbers = #tpu.dot_dimension_numbers<[1], [0], [0], [1], [0, 0, 1, 1], [], []>} : vector<16x8xbf16>, vector<8x256xbf16>, vector<16x256xf32> -> vector<16x256xf32>
    %268 = vector.broadcast %9 : vector<16x1xf32> to vector<16x256xf32>
    %269 = arith.addf %267, %268 : vector<16x256xf32>
    %cst_144 = arith.constant 0.000000e+00 : f32
    %270 = vector.broadcast %cst_144 : f32 to vector<16x256xf32>
    %271 = arith.maximumf %269, %270 : vector<16x256xf32>
    %272 = arith.mulf %271, %252 : vector<16x256xf32>
    %273 = arith.addf %236, %272 : vector<16x256xf32>
    %c0_145 = arith.constant 0 : index
    %c7 = arith.constant 7 : index
    %c0_146 = arith.constant 0 : index
    %c0_147 = arith.constant 0 : index
    %274 = vector.load %arg2[%c0_145, %c7, %c0_146, %c0_147] : memref<1x8x11x256xbf16, #tpu.memory_space<vmem>>, vector<1x1x11x256xbf16>
    %275 = vector.shape_cast %274 : vector<1x1x11x256xbf16> to vector<11x256xbf16>
    %cst_148 = arith.constant dense<0.000000e+00> : vector<16x256xf32>
    %276 = tpu.matmul %0, %275, %cst_148 {dimension_numbers = #tpu.dot_dimension_numbers<[1], [0], [0], [1], [0, 0, 1, 1], [], []>} : vector<16x11xbf16>, vector<11x256xbf16>, vector<16x256xf32> -> vector<16x256xf32>
    %277 = vector.broadcast %2 : vector<16x1xf32> to vector<16x256xf32>
    %278 = arith.addf %276, %277 : vector<16x256xf32>
    %279 = arith.addf %278, %13 : vector<16x256xf32>
    %cst_149 = arith.constant 1.000000e-01 : f32
    %280 = vector.broadcast %cst_149 : f32 to vector<16x256xf32>
    %281 = arith.mulf %280, %279 : vector<16x256xf32>
    %282 = arith.maximumf %279, %281 : vector<16x256xf32>
    %283 = arith.truncf %282 : vector<16x256xf32> to vector<16x256xbf16>
    %cst_150 = arith.constant dense<0.000000e+00> : vector<16x256xf32>
    %284 = tpu.matmul %1, %283, %cst_150 {dimension_numbers = #tpu.dot_dimension_numbers<[1], [0], [0], [1], [0, 0, 1, 1], [], []>} : vector<16x16xbf16>, vector<16x256xbf16>, vector<16x256xf32> -> vector<16x256xf32>
    %285 = vector.broadcast %3 : vector<16x1xf32> to vector<16x256xf32>
    %286 = arith.addf %284, %285 : vector<16x256xf32>
    %cst_151 = arith.constant 1.000000e-01 : f32
    %287 = vector.broadcast %cst_151 : f32 to vector<16x256xf32>
    %288 = arith.mulf %287, %286 : vector<16x256xf32>
    %289 = arith.maximumf %286, %288 : vector<16x256xf32>
    %c0_152 = arith.constant 0 : index
    %c7_153 = arith.constant 7 : index
    %c0_154 = arith.constant 0 : index
    %c0_155 = arith.constant 0 : index
    %290 = vector.load %arg3[%c0_152, %c7_153, %c0_154, %c0_155] : memref<1x8x3x256xbf16, #tpu.memory_space<vmem>>, vector<1x1x3x256xbf16>
    %291 = vector.shape_cast %290 : vector<1x1x3x256xbf16> to vector<3x256xbf16>
    %cst_156 = arith.constant dense<0.000000e+00> : vector<8x256xf32>
    %292 = tpu.matmul %4, %291, %cst_156 {dimension_numbers = #tpu.dot_dimension_numbers<[1], [0], [0], [1], [0, 0, 1, 1], [], []>} : vector<8x3xbf16>, vector<3x256xbf16>, vector<8x256xf32> -> vector<8x256xf32>
    %293 = vector.broadcast %7 : vector<8x1xf32> to vector<8x256xf32>
    %294 = arith.addf %292, %293 : vector<8x256xf32>
    %cst_157 = arith.constant 0.000000e+00 : f32
    %295 = vector.broadcast %cst_157 : f32 to vector<8x256xf32>
    %296 = arith.maximumf %294, %295 : vector<8x256xf32>
    %297 = arith.truncf %296 : vector<8x256xf32> to vector<8x256xbf16>
    %cst_158 = arith.constant dense<0.000000e+00> : vector<8x256xf32>
    %298 = tpu.matmul %5, %297, %cst_158 {dimension_numbers = #tpu.dot_dimension_numbers<[1], [0], [0], [1], [0, 0, 1, 1], [], []>} : vector<8x8xbf16>, vector<8x256xbf16>, vector<8x256xf32> -> vector<8x256xf32>
    %299 = vector.broadcast %8 : vector<8x1xf32> to vector<8x256xf32>
    %300 = arith.addf %298, %299 : vector<8x256xf32>
    %cst_159 = arith.constant 0.000000e+00 : f32
    %301 = vector.broadcast %cst_159 : f32 to vector<8x256xf32>
    %302 = arith.maximumf %300, %301 : vector<8x256xf32>
    %303 = arith.truncf %302 : vector<8x256xf32> to vector<8x256xbf16>
    %cst_160 = arith.constant dense<0.000000e+00> : vector<16x256xf32>
    %304 = tpu.matmul %6, %303, %cst_160 {dimension_numbers = #tpu.dot_dimension_numbers<[1], [0], [0], [1], [0, 0, 1, 1], [], []>} : vector<16x8xbf16>, vector<8x256xbf16>, vector<16x256xf32> -> vector<16x256xf32>
    %305 = vector.broadcast %9 : vector<16x1xf32> to vector<16x256xf32>
    %306 = arith.addf %304, %305 : vector<16x256xf32>
    %cst_161 = arith.constant 0.000000e+00 : f32
    %307 = vector.broadcast %cst_161 : f32 to vector<16x256xf32>
    %308 = arith.maximumf %306, %307 : vector<16x256xf32>
    %309 = arith.mulf %308, %289 : vector<16x256xf32>
    %310 = arith.addf %273, %309 : vector<16x256xf32>
    %311 = arith.truncf %310 : vector<16x256xf32> to vector<16x256xbf16>
    %c0_162 = arith.constant 0 : index
    %c0_163 = arith.constant 0 : index
    %c0_164 = arith.constant 0 : index
    %312 = vector.load %arg16[%c0_162, %c0_163, %c0_164] : memref<1x16x256xbf16, #tpu.memory_space<vmem>>, vector<1x16x256xbf16>
    %313 = vector.shape_cast %312 : vector<1x16x256xbf16> to vector<16x256xbf16>
    %314 = vector.shape_cast %311 : vector<16x256xbf16> to vector<1x16x256xbf16>
    tpu.vector_store %arg16[%c0_162, %c0_163, %c0_164], %314 {strides = array<i32>} : memref<1x16x256xbf16, #tpu.memory_space<vmem>>, vector<1x16x256xbf16>,
    return
  }
  func.func @transform_0(%arg0: i32, %arg1: i32) -> (i32, i32, i32, i32) {
    %c0_i32 = arith.constant 0 : i32
    %c0_i32_0 = arith.constant 0 : i32
    %c0_i32_1 = arith.constant 0 : i32
    return %arg1, %c0_i32, %c0_i32_0, %arg0 : i32, i32, i32, i32
  }
  func.func @transform_1(%arg0: i32, %arg1: i32) -> (i32, i32, i32, i32) {
    %c0_i32 = arith.constant 0 : i32
    %c0_i32_0 = arith.constant 0 : i32
    %c0_i32_1 = arith.constant 0 : i32
    return %arg1, %c0_i32, %c0_i32_0, %arg0 : i32, i32, i32, i32
  }
  func.func @transform_2(%arg0: i32, %arg1: i32) -> (i32, i32, i32) {
    %c0_i32 = arith.constant 0 : i32
    %c0_i32_0 = arith.constant 0 : i32
    return %arg1, %c0_i32, %arg0 : i32, i32, i32
  }
  func.func @transform_3(%arg0: i32, %arg1: i32) -> (i32, i32) {
    %c0_i32 = arith.constant 0 : i32
    %c0_i32_0 = arith.constant 0 : i32
    %c0_i32_1 = arith.constant 0 : i32
    return %c0_i32, %c0_i32_0 : i32, i32
  }
  func.func @transform_4(%arg0: i32, %arg1: i32) -> (i32, i32) {
    %c0_i32 = arith.constant 0 : i32
    %c0_i32_0 = arith.constant 0 : i32
    %c0_i32_1 = arith.constant 0 : i32
    return %c0_i32, %c0_i32_0 : i32, i32
  }
  func.func @transform_5(%arg0: i32, %arg1: i32) -> (i32, i32) {
    %c0_i32 = arith.constant 0 : i32
    %c0_i32_0 = arith.constant 0 : i32
    %c0_i32_1 = arith.constant 0 : i32
    return %c0_i32, %c0_i32_0 : i32, i32
  }
  func.func @transform_6(%arg0: i32, %arg1: i32) -> (i32, i32) {
    %c0_i32 = arith.constant 0 : i32
    %c0_i32_0 = arith.constant 0 : i32
    %c0_i32_1 = arith.constant 0 : i32
    return %c0_i32, %c0_i32_0 : i32, i32
  }
  func.func @transform_7(%arg0: i32, %arg1: i32) -> (i32, i32) {
    %c0_i32 = arith.constant 0 : i32
    %c0_i32_0 = arith.constant 0 : i32
    %c0_i32_1 = arith.constant 0 : i32
    return %c0_i32, %c0_i32_0 : i32, i32
  }
  func.func @transform_8(%arg0: i32, %arg1: i32) -> (i32, i32) {
    %c0_i32 = arith.constant 0 : i32
    %c0_i32_0 = arith.constant 0 : i32
    %c0_i32_1 = arith.constant 0 : i32
    return %c0_i32, %c0_i32_0 : i32, i32
  }
  func.func @transform_9(%arg0: i32, %arg1: i32) -> (i32, i32) {
    %c0_i32 = arith.constant 0 : i32
    %c0_i32_0 = arith.constant 0 : i32
    %c0_i32_1 = arith.constant 0 : i32
    return %c0_i32, %c0_i32_0 : i32, i32
  }
  func.func @transform_10(%arg0: i32, %arg1: i32) -> (i32, i32) {
    %c0_i32 = arith.constant 0 : i32
    %c0_i32_0 = arith.constant 0 : i32
    %c0_i32_1 = arith.constant 0 : i32
    return %c0_i32, %c0_i32_0 : i32, i32
  }
  func.func @transform_11(%arg0: i32, %arg1: i32) -> (i32, i32) {
    %c0_i32 = arith.constant 0 : i32
    %c0_i32_0 = arith.constant 0 : i32
    %c0_i32_1 = arith.constant 0 : i32
    return %c0_i32, %c0_i32_0 : i32, i32
  }
  func.func @transform_12(%arg0: i32, %arg1: i32) -> (i32, i32) {
    %c0_i32 = arith.constant 0 : i32
    %c0_i32_0 = arith.constant 0 : i32
    %c0_i32_1 = arith.constant 0 : i32
    return %c0_i32, %c0_i32_0 : i32, i32
  }
  func.func @transform_13(%arg0: i32, %arg1: i32) -> (i32, i32) {
    %c0_i32 = arith.constant 0 : i32
    %c0_i32_0 = arith.constant 0 : i32
    %c0_i32_1 = arith.constant 0 : i32
    return %c0_i32, %c0_i32_0 : i32, i32
  }
  func.func @transform_14(%arg0: i32, %arg1: i32) -> (i32, i32, i32) {
    %c0_i32 = arith.constant 0 : i32
    %c0_i32_0 = arith.constant 0 : i32
    return %arg1, %c0_i32, %arg0 : i32, i32, i32
  }
}

module attributes {stable_mosaic.version = 11 : i64} {
  func.func @_cost_volume_kernel(%arg0: i32, %arg1: i32, %arg2: memref<1x8x16x256xbf16, #tpu.memory_space<vmem>>, %arg3: memref<1x8x3x256xbf16, #tpu.memory_space<vmem>>, %arg4: memref<8x3xbf16, #tpu.memory_space<vmem>>, %arg5: memref<8x1xf32, #tpu.memory_space<vmem>>, %arg6: memref<8x8xbf16, #tpu.memory_space<vmem>>, %arg7: memref<8x1xf32, #tpu.memory_space<vmem>>, %arg8: memref<16x8xbf16, #tpu.memory_space<vmem>>, %arg9: memref<16x1xf32, #tpu.memory_space<vmem>>, %arg10: memref<1x16x256xf32, #tpu.memory_space<vmem>>) attributes {dimension_semantics = [#tpu.dimension_semantics<parallel>, #tpu.dimension_semantics<parallel>], iteration_bounds = array<i64: 1, 2>, scalar_prefetch = 0 : i64, scratch_operands = 0 : i64, tpu.core_type = #tpu.core_type<tc>, window_params = [{transform_indices = @transform_0, window_bounds = array<i64: 1, 8, 16, 256>}, {transform_indices = @transform_1, window_bounds = array<i64: 1, 8, 3, 256>}, {pipeline_mode = #tpu.pipeline_mode<synchronous>, transform_indices = @transform_2, window_bounds = array<i64: 8, 3>}, {pipeline_mode = #tpu.pipeline_mode<synchronous>, transform_indices = @transform_3, window_bounds = array<i64: 8, 1>}, {pipeline_mode = #tpu.pipeline_mode<synchronous>, transform_indices = @transform_4, window_bounds = array<i64: 8, 8>}, {pipeline_mode = #tpu.pipeline_mode<synchronous>, transform_indices = @transform_5, window_bounds = array<i64: 8, 1>}, {pipeline_mode = #tpu.pipeline_mode<synchronous>, transform_indices = @transform_6, window_bounds = array<i64: 16, 8>}, {pipeline_mode = #tpu.pipeline_mode<synchronous>, transform_indices = @transform_7, window_bounds = array<i64: 16, 1>}, {transform_indices = @transform_8, window_bounds = array<i64: 1, 16, 256>}]} {
    %c0 = arith.constant 0 : index
    %c0_0 = arith.constant 0 : index
    %0 = vector.load %arg4[%c0, %c0_0] : memref<8x3xbf16, #tpu.memory_space<vmem>>, vector<8x3xbf16>
    %c0_1 = arith.constant 0 : index
    %c0_2 = arith.constant 0 : index
    %1 = vector.load %arg6[%c0_1, %c0_2] : memref<8x8xbf16, #tpu.memory_space<vmem>>, vector<8x8xbf16>
    %c0_3 = arith.constant 0 : index
    %c0_4 = arith.constant 0 : index
    %2 = vector.load %arg8[%c0_3, %c0_4] : memref<16x8xbf16, #tpu.memory_space<vmem>>, vector<16x8xbf16>
    %c0_5 = arith.constant 0 : index
    %c0_6 = arith.constant 0 : index
    %3 = vector.load %arg5[%c0_5, %c0_6] : memref<8x1xf32, #tpu.memory_space<vmem>>, vector<8x1xf32>
    %c0_7 = arith.constant 0 : index
    %c0_8 = arith.constant 0 : index
    %4 = vector.load %arg7[%c0_7, %c0_8] : memref<8x1xf32, #tpu.memory_space<vmem>>, vector<8x1xf32>
    %c0_9 = arith.constant 0 : index
    %c0_10 = arith.constant 0 : index
    %5 = vector.load %arg9[%c0_9, %c0_10] : memref<16x1xf32, #tpu.memory_space<vmem>>, vector<16x1xf32>
    %cst = arith.constant 0.000000e+00 : f32
    %6 = vector.broadcast %cst : f32 to vector<16x256xf32>
    %c0_11 = arith.constant 0 : index
    %c0_12 = arith.constant 0 : index
    %c0_13 = arith.constant 0 : index
    %c0_14 = arith.constant 0 : index
    %7 = vector.load %arg2[%c0_11, %c0_12, %c0_13, %c0_14] : memref<1x8x16x256xbf16, #tpu.memory_space<vmem>>, vector<1x1x16x256xbf16>
    %8 = vector.shape_cast %7 : vector<1x1x16x256xbf16> to vector<16x256xbf16>
    %9 = arith.extf %8 : vector<16x256xbf16> to vector<16x256xf32>
    %c0_15 = arith.constant 0 : index
    %c0_16 = arith.constant 0 : index
    %c0_17 = arith.constant 0 : index
    %c0_18 = arith.constant 0 : index
    %10 = vector.load %arg3[%c0_15, %c0_16, %c0_17, %c0_18] : memref<1x8x3x256xbf16, #tpu.memory_space<vmem>>, vector<1x1x3x256xbf16>
    %11 = vector.shape_cast %10 : vector<1x1x3x256xbf16> to vector<3x256xbf16>
    %cst_19 = arith.constant dense<0.000000e+00> : vector<8x256xf32>
    %12 = tpu.matmul %0, %11, %cst_19 {dimension_numbers = #tpu.dot_dimension_numbers<[1], [0], [0], [1], [0, 0, 1, 1], [], []>} : vector<8x3xbf16>, vector<3x256xbf16>, vector<8x256xf32> -> vector<8x256xf32>
    %13 = vector.broadcast %3 : vector<8x1xf32> to vector<8x256xf32>
    %14 = arith.addf %12, %13 : vector<8x256xf32>
    %cst_20 = arith.constant 0.000000e+00 : f32
    %15 = vector.broadcast %cst_20 : f32 to vector<8x256xf32>
    %16 = arith.maximumf %14, %15 : vector<8x256xf32>
    %17 = arith.truncf %16 : vector<8x256xf32> to vector<8x256xbf16>
    %cst_21 = arith.constant dense<0.000000e+00> : vector<8x256xf32>
    %18 = tpu.matmul %1, %17, %cst_21 {dimension_numbers = #tpu.dot_dimension_numbers<[1], [0], [0], [1], [0, 0, 1, 1], [], []>} : vector<8x8xbf16>, vector<8x256xbf16>, vector<8x256xf32> -> vector<8x256xf32>
    %19 = vector.broadcast %4 : vector<8x1xf32> to vector<8x256xf32>
    %20 = arith.addf %18, %19 : vector<8x256xf32>
    %cst_22 = arith.constant 0.000000e+00 : f32
    %21 = vector.broadcast %cst_22 : f32 to vector<8x256xf32>
    %22 = arith.maximumf %20, %21 : vector<8x256xf32>
    %23 = arith.truncf %22 : vector<8x256xf32> to vector<8x256xbf16>
    %cst_23 = arith.constant dense<0.000000e+00> : vector<16x256xf32>
    %24 = tpu.matmul %2, %23, %cst_23 {dimension_numbers = #tpu.dot_dimension_numbers<[1], [0], [0], [1], [0, 0, 1, 1], [], []>} : vector<16x8xbf16>, vector<8x256xbf16>, vector<16x256xf32> -> vector<16x256xf32>
    %25 = vector.broadcast %5 : vector<16x1xf32> to vector<16x256xf32>
    %26 = arith.addf %24, %25 : vector<16x256xf32>
    %cst_24 = arith.constant 0.000000e+00 : f32
    %27 = vector.broadcast %cst_24 : f32 to vector<16x256xf32>
    %28 = arith.maximumf %26, %27 : vector<16x256xf32>
    %29 = arith.mulf %28, %9 : vector<16x256xf32>
    %30 = arith.addf %6, %29 : vector<16x256xf32>
    %c0_25 = arith.constant 0 : index
    %c1 = arith.constant 1 : index
    %c0_26 = arith.constant 0 : index
    %c0_27 = arith.constant 0 : index
    %31 = vector.load %arg2[%c0_25, %c1, %c0_26, %c0_27] : memref<1x8x16x256xbf16, #tpu.memory_space<vmem>>, vector<1x1x16x256xbf16>
    %32 = vector.shape_cast %31 : vector<1x1x16x256xbf16> to vector<16x256xbf16>
    %33 = arith.extf %32 : vector<16x256xbf16> to vector<16x256xf32>
    %c0_28 = arith.constant 0 : index
    %c1_29 = arith.constant 1 : index
    %c0_30 = arith.constant 0 : index
    %c0_31 = arith.constant 0 : index
    %34 = vector.load %arg3[%c0_28, %c1_29, %c0_30, %c0_31] : memref<1x8x3x256xbf16, #tpu.memory_space<vmem>>, vector<1x1x3x256xbf16>
    %35 = vector.shape_cast %34 : vector<1x1x3x256xbf16> to vector<3x256xbf16>
    %cst_32 = arith.constant dense<0.000000e+00> : vector<8x256xf32>
    %36 = tpu.matmul %0, %35, %cst_32 {dimension_numbers = #tpu.dot_dimension_numbers<[1], [0], [0], [1], [0, 0, 1, 1], [], []>} : vector<8x3xbf16>, vector<3x256xbf16>, vector<8x256xf32> -> vector<8x256xf32>
    %37 = vector.broadcast %3 : vector<8x1xf32> to vector<8x256xf32>
    %38 = arith.addf %36, %37 : vector<8x256xf32>
    %cst_33 = arith.constant 0.000000e+00 : f32
    %39 = vector.broadcast %cst_33 : f32 to vector<8x256xf32>
    %40 = arith.maximumf %38, %39 : vector<8x256xf32>
    %41 = arith.truncf %40 : vector<8x256xf32> to vector<8x256xbf16>
    %cst_34 = arith.constant dense<0.000000e+00> : vector<8x256xf32>
    %42 = tpu.matmul %1, %41, %cst_34 {dimension_numbers = #tpu.dot_dimension_numbers<[1], [0], [0], [1], [0, 0, 1, 1], [], []>} : vector<8x8xbf16>, vector<8x256xbf16>, vector<8x256xf32> -> vector<8x256xf32>
    %43 = vector.broadcast %4 : vector<8x1xf32> to vector<8x256xf32>
    %44 = arith.addf %42, %43 : vector<8x256xf32>
    %cst_35 = arith.constant 0.000000e+00 : f32
    %45 = vector.broadcast %cst_35 : f32 to vector<8x256xf32>
    %46 = arith.maximumf %44, %45 : vector<8x256xf32>
    %47 = arith.truncf %46 : vector<8x256xf32> to vector<8x256xbf16>
    %cst_36 = arith.constant dense<0.000000e+00> : vector<16x256xf32>
    %48 = tpu.matmul %2, %47, %cst_36 {dimension_numbers = #tpu.dot_dimension_numbers<[1], [0], [0], [1], [0, 0, 1, 1], [], []>} : vector<16x8xbf16>, vector<8x256xbf16>, vector<16x256xf32> -> vector<16x256xf32>
    %49 = vector.broadcast %5 : vector<16x1xf32> to vector<16x256xf32>
    %50 = arith.addf %48, %49 : vector<16x256xf32>
    %cst_37 = arith.constant 0.000000e+00 : f32
    %51 = vector.broadcast %cst_37 : f32 to vector<16x256xf32>
    %52 = arith.maximumf %50, %51 : vector<16x256xf32>
    %53 = arith.mulf %52, %33 : vector<16x256xf32>
    %54 = arith.addf %30, %53 : vector<16x256xf32>
    %c0_38 = arith.constant 0 : index
    %c2 = arith.constant 2 : index
    %c0_39 = arith.constant 0 : index
    %c0_40 = arith.constant 0 : index
    %55 = vector.load %arg2[%c0_38, %c2, %c0_39, %c0_40] : memref<1x8x16x256xbf16, #tpu.memory_space<vmem>>, vector<1x1x16x256xbf16>
    %56 = vector.shape_cast %55 : vector<1x1x16x256xbf16> to vector<16x256xbf16>
    %57 = arith.extf %56 : vector<16x256xbf16> to vector<16x256xf32>
    %c0_41 = arith.constant 0 : index
    %c2_42 = arith.constant 2 : index
    %c0_43 = arith.constant 0 : index
    %c0_44 = arith.constant 0 : index
    %58 = vector.load %arg3[%c0_41, %c2_42, %c0_43, %c0_44] : memref<1x8x3x256xbf16, #tpu.memory_space<vmem>>, vector<1x1x3x256xbf16>
    %59 = vector.shape_cast %58 : vector<1x1x3x256xbf16> to vector<3x256xbf16>
    %cst_45 = arith.constant dense<0.000000e+00> : vector<8x256xf32>
    %60 = tpu.matmul %0, %59, %cst_45 {dimension_numbers = #tpu.dot_dimension_numbers<[1], [0], [0], [1], [0, 0, 1, 1], [], []>} : vector<8x3xbf16>, vector<3x256xbf16>, vector<8x256xf32> -> vector<8x256xf32>
    %61 = vector.broadcast %3 : vector<8x1xf32> to vector<8x256xf32>
    %62 = arith.addf %60, %61 : vector<8x256xf32>
    %cst_46 = arith.constant 0.000000e+00 : f32
    %63 = vector.broadcast %cst_46 : f32 to vector<8x256xf32>
    %64 = arith.maximumf %62, %63 : vector<8x256xf32>
    %65 = arith.truncf %64 : vector<8x256xf32> to vector<8x256xbf16>
    %cst_47 = arith.constant dense<0.000000e+00> : vector<8x256xf32>
    %66 = tpu.matmul %1, %65, %cst_47 {dimension_numbers = #tpu.dot_dimension_numbers<[1], [0], [0], [1], [0, 0, 1, 1], [], []>} : vector<8x8xbf16>, vector<8x256xbf16>, vector<8x256xf32> -> vector<8x256xf32>
    %67 = vector.broadcast %4 : vector<8x1xf32> to vector<8x256xf32>
    %68 = arith.addf %66, %67 : vector<8x256xf32>
    %cst_48 = arith.constant 0.000000e+00 : f32
    %69 = vector.broadcast %cst_48 : f32 to vector<8x256xf32>
    %70 = arith.maximumf %68, %69 : vector<8x256xf32>
    %71 = arith.truncf %70 : vector<8x256xf32> to vector<8x256xbf16>
    %cst_49 = arith.constant dense<0.000000e+00> : vector<16x256xf32>
    %72 = tpu.matmul %2, %71, %cst_49 {dimension_numbers = #tpu.dot_dimension_numbers<[1], [0], [0], [1], [0, 0, 1, 1], [], []>} : vector<16x8xbf16>, vector<8x256xbf16>, vector<16x256xf32> -> vector<16x256xf32>
    %73 = vector.broadcast %5 : vector<16x1xf32> to vector<16x256xf32>
    %74 = arith.addf %72, %73 : vector<16x256xf32>
    %cst_50 = arith.constant 0.000000e+00 : f32
    %75 = vector.broadcast %cst_50 : f32 to vector<16x256xf32>
    %76 = arith.maximumf %74, %75 : vector<16x256xf32>
    %77 = arith.mulf %76, %57 : vector<16x256xf32>
    %78 = arith.addf %54, %77 : vector<16x256xf32>
    %c0_51 = arith.constant 0 : index
    %c3 = arith.constant 3 : index
    %c0_52 = arith.constant 0 : index
    %c0_53 = arith.constant 0 : index
    %79 = vector.load %arg2[%c0_51, %c3, %c0_52, %c0_53] : memref<1x8x16x256xbf16, #tpu.memory_space<vmem>>, vector<1x1x16x256xbf16>
    %80 = vector.shape_cast %79 : vector<1x1x16x256xbf16> to vector<16x256xbf16>
    %81 = arith.extf %80 : vector<16x256xbf16> to vector<16x256xf32>
    %c0_54 = arith.constant 0 : index
    %c3_55 = arith.constant 3 : index
    %c0_56 = arith.constant 0 : index
    %c0_57 = arith.constant 0 : index
    %82 = vector.load %arg3[%c0_54, %c3_55, %c0_56, %c0_57] : memref<1x8x3x256xbf16, #tpu.memory_space<vmem>>, vector<1x1x3x256xbf16>
    %83 = vector.shape_cast %82 : vector<1x1x3x256xbf16> to vector<3x256xbf16>
    %cst_58 = arith.constant dense<0.000000e+00> : vector<8x256xf32>
    %84 = tpu.matmul %0, %83, %cst_58 {dimension_numbers = #tpu.dot_dimension_numbers<[1], [0], [0], [1], [0, 0, 1, 1], [], []>} : vector<8x3xbf16>, vector<3x256xbf16>, vector<8x256xf32> -> vector<8x256xf32>
    %85 = vector.broadcast %3 : vector<8x1xf32> to vector<8x256xf32>
    %86 = arith.addf %84, %85 : vector<8x256xf32>
    %cst_59 = arith.constant 0.000000e+00 : f32
    %87 = vector.broadcast %cst_59 : f32 to vector<8x256xf32>
    %88 = arith.maximumf %86, %87 : vector<8x256xf32>
    %89 = arith.truncf %88 : vector<8x256xf32> to vector<8x256xbf16>
    %cst_60 = arith.constant dense<0.000000e+00> : vector<8x256xf32>
    %90 = tpu.matmul %1, %89, %cst_60 {dimension_numbers = #tpu.dot_dimension_numbers<[1], [0], [0], [1], [0, 0, 1, 1], [], []>} : vector<8x8xbf16>, vector<8x256xbf16>, vector<8x256xf32> -> vector<8x256xf32>
    %91 = vector.broadcast %4 : vector<8x1xf32> to vector<8x256xf32>
    %92 = arith.addf %90, %91 : vector<8x256xf32>
    %cst_61 = arith.constant 0.000000e+00 : f32
    %93 = vector.broadcast %cst_61 : f32 to vector<8x256xf32>
    %94 = arith.maximumf %92, %93 : vector<8x256xf32>
    %95 = arith.truncf %94 : vector<8x256xf32> to vector<8x256xbf16>
    %cst_62 = arith.constant dense<0.000000e+00> : vector<16x256xf32>
    %96 = tpu.matmul %2, %95, %cst_62 {dimension_numbers = #tpu.dot_dimension_numbers<[1], [0], [0], [1], [0, 0, 1, 1], [], []>} : vector<16x8xbf16>, vector<8x256xbf16>, vector<16x256xf32> -> vector<16x256xf32>
    %97 = vector.broadcast %5 : vector<16x1xf32> to vector<16x256xf32>
    %98 = arith.addf %96, %97 : vector<16x256xf32>
    %cst_63 = arith.constant 0.000000e+00 : f32
    %99 = vector.broadcast %cst_63 : f32 to vector<16x256xf32>
    %100 = arith.maximumf %98, %99 : vector<16x256xf32>
    %101 = arith.mulf %100, %81 : vector<16x256xf32>
    %102 = arith.addf %78, %101 : vector<16x256xf32>
    %c0_64 = arith.constant 0 : index
    %c4 = arith.constant 4 : index
    %c0_65 = arith.constant 0 : index
    %c0_66 = arith.constant 0 : index
    %103 = vector.load %arg2[%c0_64, %c4, %c0_65, %c0_66] : memref<1x8x16x256xbf16, #tpu.memory_space<vmem>>, vector<1x1x16x256xbf16>
    %104 = vector.shape_cast %103 : vector<1x1x16x256xbf16> to vector<16x256xbf16>
    %105 = arith.extf %104 : vector<16x256xbf16> to vector<16x256xf32>
    %c0_67 = arith.constant 0 : index
    %c4_68 = arith.constant 4 : index
    %c0_69 = arith.constant 0 : index
    %c0_70 = arith.constant 0 : index
    %106 = vector.load %arg3[%c0_67, %c4_68, %c0_69, %c0_70] : memref<1x8x3x256xbf16, #tpu.memory_space<vmem>>, vector<1x1x3x256xbf16>
    %107 = vector.shape_cast %106 : vector<1x1x3x256xbf16> to vector<3x256xbf16>
    %cst_71 = arith.constant dense<0.000000e+00> : vector<8x256xf32>
    %108 = tpu.matmul %0, %107, %cst_71 {dimension_numbers = #tpu.dot_dimension_numbers<[1], [0], [0], [1], [0, 0, 1, 1], [], []>} : vector<8x3xbf16>, vector<3x256xbf16>, vector<8x256xf32> -> vector<8x256xf32>
    %109 = vector.broadcast %3 : vector<8x1xf32> to vector<8x256xf32>
    %110 = arith.addf %108, %109 : vector<8x256xf32>
    %cst_72 = arith.constant 0.000000e+00 : f32
    %111 = vector.broadcast %cst_72 : f32 to vector<8x256xf32>
    %112 = arith.maximumf %110, %111 : vector<8x256xf32>
    %113 = arith.truncf %112 : vector<8x256xf32> to vector<8x256xbf16>
    %cst_73 = arith.constant dense<0.000000e+00> : vector<8x256xf32>
    %114 = tpu.matmul %1, %113, %cst_73 {dimension_numbers = #tpu.dot_dimension_numbers<[1], [0], [0], [1], [0, 0, 1, 1], [], []>} : vector<8x8xbf16>, vector<8x256xbf16>, vector<8x256xf32> -> vector<8x256xf32>
    %115 = vector.broadcast %4 : vector<8x1xf32> to vector<8x256xf32>
    %116 = arith.addf %114, %115 : vector<8x256xf32>
    %cst_74 = arith.constant 0.000000e+00 : f32
    %117 = vector.broadcast %cst_74 : f32 to vector<8x256xf32>
    %118 = arith.maximumf %116, %117 : vector<8x256xf32>
    %119 = arith.truncf %118 : vector<8x256xf32> to vector<8x256xbf16>
    %cst_75 = arith.constant dense<0.000000e+00> : vector<16x256xf32>
    %120 = tpu.matmul %2, %119, %cst_75 {dimension_numbers = #tpu.dot_dimension_numbers<[1], [0], [0], [1], [0, 0, 1, 1], [], []>} : vector<16x8xbf16>, vector<8x256xbf16>, vector<16x256xf32> -> vector<16x256xf32>
    %121 = vector.broadcast %5 : vector<16x1xf32> to vector<16x256xf32>
    %122 = arith.addf %120, %121 : vector<16x256xf32>
    %cst_76 = arith.constant 0.000000e+00 : f32
    %123 = vector.broadcast %cst_76 : f32 to vector<16x256xf32>
    %124 = arith.maximumf %122, %123 : vector<16x256xf32>
    %125 = arith.mulf %124, %105 : vector<16x256xf32>
    %126 = arith.addf %102, %125 : vector<16x256xf32>
    %c0_77 = arith.constant 0 : index
    %c5 = arith.constant 5 : index
    %c0_78 = arith.constant 0 : index
    %c0_79 = arith.constant 0 : index
    %127 = vector.load %arg2[%c0_77, %c5, %c0_78, %c0_79] : memref<1x8x16x256xbf16, #tpu.memory_space<vmem>>, vector<1x1x16x256xbf16>
    %128 = vector.shape_cast %127 : vector<1x1x16x256xbf16> to vector<16x256xbf16>
    %129 = arith.extf %128 : vector<16x256xbf16> to vector<16x256xf32>
    %c0_80 = arith.constant 0 : index
    %c5_81 = arith.constant 5 : index
    %c0_82 = arith.constant 0 : index
    %c0_83 = arith.constant 0 : index
    %130 = vector.load %arg3[%c0_80, %c5_81, %c0_82, %c0_83] : memref<1x8x3x256xbf16, #tpu.memory_space<vmem>>, vector<1x1x3x256xbf16>
    %131 = vector.shape_cast %130 : vector<1x1x3x256xbf16> to vector<3x256xbf16>
    %cst_84 = arith.constant dense<0.000000e+00> : vector<8x256xf32>
    %132 = tpu.matmul %0, %131, %cst_84 {dimension_numbers = #tpu.dot_dimension_numbers<[1], [0], [0], [1], [0, 0, 1, 1], [], []>} : vector<8x3xbf16>, vector<3x256xbf16>, vector<8x256xf32> -> vector<8x256xf32>
    %133 = vector.broadcast %3 : vector<8x1xf32> to vector<8x256xf32>
    %134 = arith.addf %132, %133 : vector<8x256xf32>
    %cst_85 = arith.constant 0.000000e+00 : f32
    %135 = vector.broadcast %cst_85 : f32 to vector<8x256xf32>
    %136 = arith.maximumf %134, %135 : vector<8x256xf32>
    %137 = arith.truncf %136 : vector<8x256xf32> to vector<8x256xbf16>
    %cst_86 = arith.constant dense<0.000000e+00> : vector<8x256xf32>
    %138 = tpu.matmul %1, %137, %cst_86 {dimension_numbers = #tpu.dot_dimension_numbers<[1], [0], [0], [1], [0, 0, 1, 1], [], []>} : vector<8x8xbf16>, vector<8x256xbf16>, vector<8x256xf32> -> vector<8x256xf32>
    %139 = vector.broadcast %4 : vector<8x1xf32> to vector<8x256xf32>
    %140 = arith.addf %138, %139 : vector<8x256xf32>
    %cst_87 = arith.constant 0.000000e+00 : f32
    %141 = vector.broadcast %cst_87 : f32 to vector<8x256xf32>
    %142 = arith.maximumf %140, %141 : vector<8x256xf32>
    %143 = arith.truncf %142 : vector<8x256xf32> to vector<8x256xbf16>
    %cst_88 = arith.constant dense<0.000000e+00> : vector<16x256xf32>
    %144 = tpu.matmul %2, %143, %cst_88 {dimension_numbers = #tpu.dot_dimension_numbers<[1], [0], [0], [1], [0, 0, 1, 1], [], []>} : vector<16x8xbf16>, vector<8x256xbf16>, vector<16x256xf32> -> vector<16x256xf32>
    %145 = vector.broadcast %5 : vector<16x1xf32> to vector<16x256xf32>
    %146 = arith.addf %144, %145 : vector<16x256xf32>
    %cst_89 = arith.constant 0.000000e+00 : f32
    %147 = vector.broadcast %cst_89 : f32 to vector<16x256xf32>
    %148 = arith.maximumf %146, %147 : vector<16x256xf32>
    %149 = arith.mulf %148, %129 : vector<16x256xf32>
    %150 = arith.addf %126, %149 : vector<16x256xf32>
    %c0_90 = arith.constant 0 : index
    %c6 = arith.constant 6 : index
    %c0_91 = arith.constant 0 : index
    %c0_92 = arith.constant 0 : index
    %151 = vector.load %arg2[%c0_90, %c6, %c0_91, %c0_92] : memref<1x8x16x256xbf16, #tpu.memory_space<vmem>>, vector<1x1x16x256xbf16>
    %152 = vector.shape_cast %151 : vector<1x1x16x256xbf16> to vector<16x256xbf16>
    %153 = arith.extf %152 : vector<16x256xbf16> to vector<16x256xf32>
    %c0_93 = arith.constant 0 : index
    %c6_94 = arith.constant 6 : index
    %c0_95 = arith.constant 0 : index
    %c0_96 = arith.constant 0 : index
    %154 = vector.load %arg3[%c0_93, %c6_94, %c0_95, %c0_96] : memref<1x8x3x256xbf16, #tpu.memory_space<vmem>>, vector<1x1x3x256xbf16>
    %155 = vector.shape_cast %154 : vector<1x1x3x256xbf16> to vector<3x256xbf16>
    %cst_97 = arith.constant dense<0.000000e+00> : vector<8x256xf32>
    %156 = tpu.matmul %0, %155, %cst_97 {dimension_numbers = #tpu.dot_dimension_numbers<[1], [0], [0], [1], [0, 0, 1, 1], [], []>} : vector<8x3xbf16>, vector<3x256xbf16>, vector<8x256xf32> -> vector<8x256xf32>
    %157 = vector.broadcast %3 : vector<8x1xf32> to vector<8x256xf32>
    %158 = arith.addf %156, %157 : vector<8x256xf32>
    %cst_98 = arith.constant 0.000000e+00 : f32
    %159 = vector.broadcast %cst_98 : f32 to vector<8x256xf32>
    %160 = arith.maximumf %158, %159 : vector<8x256xf32>
    %161 = arith.truncf %160 : vector<8x256xf32> to vector<8x256xbf16>
    %cst_99 = arith.constant dense<0.000000e+00> : vector<8x256xf32>
    %162 = tpu.matmul %1, %161, %cst_99 {dimension_numbers = #tpu.dot_dimension_numbers<[1], [0], [0], [1], [0, 0, 1, 1], [], []>} : vector<8x8xbf16>, vector<8x256xbf16>, vector<8x256xf32> -> vector<8x256xf32>
    %163 = vector.broadcast %4 : vector<8x1xf32> to vector<8x256xf32>
    %164 = arith.addf %162, %163 : vector<8x256xf32>
    %cst_100 = arith.constant 0.000000e+00 : f32
    %165 = vector.broadcast %cst_100 : f32 to vector<8x256xf32>
    %166 = arith.maximumf %164, %165 : vector<8x256xf32>
    %167 = arith.truncf %166 : vector<8x256xf32> to vector<8x256xbf16>
    %cst_101 = arith.constant dense<0.000000e+00> : vector<16x256xf32>
    %168 = tpu.matmul %2, %167, %cst_101 {dimension_numbers = #tpu.dot_dimension_numbers<[1], [0], [0], [1], [0, 0, 1, 1], [], []>} : vector<16x8xbf16>, vector<8x256xbf16>, vector<16x256xf32> -> vector<16x256xf32>
    %169 = vector.broadcast %5 : vector<16x1xf32> to vector<16x256xf32>
    %170 = arith.addf %168, %169 : vector<16x256xf32>
    %cst_102 = arith.constant 0.000000e+00 : f32
    %171 = vector.broadcast %cst_102 : f32 to vector<16x256xf32>
    %172 = arith.maximumf %170, %171 : vector<16x256xf32>
    %173 = arith.mulf %172, %153 : vector<16x256xf32>
    %174 = arith.addf %150, %173 : vector<16x256xf32>
    %c0_103 = arith.constant 0 : index
    %c7 = arith.constant 7 : index
    %c0_104 = arith.constant 0 : index
    %c0_105 = arith.constant 0 : index
    %175 = vector.load %arg2[%c0_103, %c7, %c0_104, %c0_105] : memref<1x8x16x256xbf16, #tpu.memory_space<vmem>>, vector<1x1x16x256xbf16>
    %176 = vector.shape_cast %175 : vector<1x1x16x256xbf16> to vector<16x256xbf16>
    %177 = arith.extf %176 : vector<16x256xbf16> to vector<16x256xf32>
    %c0_106 = arith.constant 0 : index
    %c7_107 = arith.constant 7 : index
    %c0_108 = arith.constant 0 : index
    %c0_109 = arith.constant 0 : index
    %178 = vector.load %arg3[%c0_106, %c7_107, %c0_108, %c0_109] : memref<1x8x3x256xbf16, #tpu.memory_space<vmem>>, vector<1x1x3x256xbf16>
    %179 = vector.shape_cast %178 : vector<1x1x3x256xbf16> to vector<3x256xbf16>
    %cst_110 = arith.constant dense<0.000000e+00> : vector<8x256xf32>
    %180 = tpu.matmul %0, %179, %cst_110 {dimension_numbers = #tpu.dot_dimension_numbers<[1], [0], [0], [1], [0, 0, 1, 1], [], []>} : vector<8x3xbf16>, vector<3x256xbf16>, vector<8x256xf32> -> vector<8x256xf32>
    %181 = vector.broadcast %3 : vector<8x1xf32> to vector<8x256xf32>
    %182 = arith.addf %180, %181 : vector<8x256xf32>
    %cst_111 = arith.constant 0.000000e+00 : f32
    %183 = vector.broadcast %cst_111 : f32 to vector<8x256xf32>
    %184 = arith.maximumf %182, %183 : vector<8x256xf32>
    %185 = arith.truncf %184 : vector<8x256xf32> to vector<8x256xbf16>
    %cst_112 = arith.constant dense<0.000000e+00> : vector<8x256xf32>
    %186 = tpu.matmul %1, %185, %cst_112 {dimension_numbers = #tpu.dot_dimension_numbers<[1], [0], [0], [1], [0, 0, 1, 1], [], []>} : vector<8x8xbf16>, vector<8x256xbf16>, vector<8x256xf32> -> vector<8x256xf32>
    %187 = vector.broadcast %4 : vector<8x1xf32> to vector<8x256xf32>
    %188 = arith.addf %186, %187 : vector<8x256xf32>
    %cst_113 = arith.constant 0.000000e+00 : f32
    %189 = vector.broadcast %cst_113 : f32 to vector<8x256xf32>
    %190 = arith.maximumf %188, %189 : vector<8x256xf32>
    %191 = arith.truncf %190 : vector<8x256xf32> to vector<8x256xbf16>
    %cst_114 = arith.constant dense<0.000000e+00> : vector<16x256xf32>
    %192 = tpu.matmul %2, %191, %cst_114 {dimension_numbers = #tpu.dot_dimension_numbers<[1], [0], [0], [1], [0, 0, 1, 1], [], []>} : vector<16x8xbf16>, vector<8x256xbf16>, vector<16x256xf32> -> vector<16x256xf32>
    %193 = vector.broadcast %5 : vector<16x1xf32> to vector<16x256xf32>
    %194 = arith.addf %192, %193 : vector<16x256xf32>
    %cst_115 = arith.constant 0.000000e+00 : f32
    %195 = vector.broadcast %cst_115 : f32 to vector<16x256xf32>
    %196 = arith.maximumf %194, %195 : vector<16x256xf32>
    %197 = arith.mulf %196, %177 : vector<16x256xf32>
    %198 = arith.addf %174, %197 : vector<16x256xf32>
    %c0_116 = arith.constant 0 : index
    %c0_117 = arith.constant 0 : index
    %c0_118 = arith.constant 0 : index
    %199 = vector.load %arg10[%c0_116, %c0_117, %c0_118] : memref<1x16x256xf32, #tpu.memory_space<vmem>>, vector<1x16x256xf32>
    %200 = vector.shape_cast %199 : vector<1x16x256xf32> to vector<16x256xf32>
    %201 = vector.shape_cast %198 : vector<16x256xf32> to vector<1x16x256xf32>
    tpu.vector_store %arg10[%c0_116, %c0_117, %c0_118], %201 {strides = array<i32>} : memref<1x16x256xf32, #tpu.memory_space<vmem>>, vector<1x16x256xf32>,
    return
  }
  func.func @transform_0(%arg0: i32, %arg1: i32) -> (i32, i32, i32, i32) {
    %c0_i32 = arith.constant 0 : i32
    %c0_i32_0 = arith.constant 0 : i32
    %c0_i32_1 = arith.constant 0 : i32
    return %arg1, %c0_i32, %c0_i32_0, %arg0 : i32, i32, i32, i32
  }
  func.func @transform_1(%arg0: i32, %arg1: i32) -> (i32, i32, i32, i32) {
    %c0_i32 = arith.constant 0 : i32
    %c0_i32_0 = arith.constant 0 : i32
    %c0_i32_1 = arith.constant 0 : i32
    return %arg1, %c0_i32, %c0_i32_0, %arg0 : i32, i32, i32, i32
  }
  func.func @transform_2(%arg0: i32, %arg1: i32) -> (i32, i32) {
    %c0_i32 = arith.constant 0 : i32
    %c0_i32_0 = arith.constant 0 : i32
    %c0_i32_1 = arith.constant 0 : i32
    return %c0_i32, %c0_i32_0 : i32, i32
  }
  func.func @transform_3(%arg0: i32, %arg1: i32) -> (i32, i32) {
    %c0_i32 = arith.constant 0 : i32
    %c0_i32_0 = arith.constant 0 : i32
    %c0_i32_1 = arith.constant 0 : i32
    return %c0_i32, %c0_i32_0 : i32, i32
  }
  func.func @transform_4(%arg0: i32, %arg1: i32) -> (i32, i32) {
    %c0_i32 = arith.constant 0 : i32
    %c0_i32_0 = arith.constant 0 : i32
    %c0_i32_1 = arith.constant 0 : i32
    return %c0_i32, %c0_i32_0 : i32, i32
  }
  func.func @transform_5(%arg0: i32, %arg1: i32) -> (i32, i32) {
    %c0_i32 = arith.constant 0 : i32
    %c0_i32_0 = arith.constant 0 : i32
    %c0_i32_1 = arith.constant 0 : i32
    return %c0_i32, %c0_i32_0 : i32, i32
  }
  func.func @transform_6(%arg0: i32, %arg1: i32) -> (i32, i32) {
    %c0_i32 = arith.constant 0 : i32
    %c0_i32_0 = arith.constant 0 : i32
    %c0_i32_1 = arith.constant 0 : i32
    return %c0_i32, %c0_i32_0 : i32, i32
  }
  func.func @transform_7(%arg0: i32, %arg1: i32) -> (i32, i32) {
    %c0_i32 = arith.constant 0 : i32
    %c0_i32_0 = arith.constant 0 : i32
    %c0_i32_1 = arith.constant 0 : i32
    return %c0_i32, %c0_i32_0 : i32, i32
  }
  func.func @transform_8(%arg0: i32, %arg1: i32) -> (i32, i32, i32) {
    %c0_i32 = arith.constant 0 : i32
    %c0_i32_0 = arith.constant 0 : i32
    return %arg1, %c0_i32, %arg0 : i32, i32, i32
  }
}

</mosaic_0001>

<llo_original>
// kernel: neg.3
$region0: #{neg.3}
  #allocation0 [shape = 's32[1]{0}', space=sflag, size = 0x4, scoped, tag = 'scoped memory for neg.3']
  %s0 = inlined_call_operand.vmem [shape: f32[2,256,256], index: 0, kind: input, shape index: {}]
  %s1 = inlined_call_operand.vmem [shape: f32[2,256,256], index: 1, kind: output, shape index: {}]
  %v2 = vld [vmem:[%s0] sm:$0xff]
  %3 = xla_tuple %v2
  %4 = xla_tuple %3
  %v5 = vxor.u32 %v2, 2147483648
  %6 = xla_tuple %v5
  %7 = vst [vmem:[%s1] sm:$0xff] %v5
  %s8 = scalar_lea.vmem %s0, 512
  %v9 = vld [vmem:[%s8] sm:$0xff]
  %10 = xla_tuple %v9
  %11 = xla_tuple %10
  %v12 = vxor.u32 %v9, 2147483648
  %13 = xla_tuple %v12
  %s14 = scalar_lea.vmem %s1, 512
  %15 = vst [vmem:[%s14] sm:$0xff] %v12
  %s16 = scalar_lea.vmem %s0, 16
  %v17 = vld [vmem:[%s16] sm:$0xff]
  %18 = xla_tuple %v17
  %19 = xla_tuple %18
  %v20 = vxor.u32 %v17, 2147483648
  %21 = xla_tuple %v20
  %s22 = scalar_lea.vmem %s1, 16
  %23 = vst [vmem:[%s22] sm:$0xff] %v20
  %s24 = scalar_lea.vmem %s0, 528
  %v25 = vld [vmem:[%s24] sm:$0xff]
  %26 = xla_tuple %v25
  %27 = xla_tuple %26
  %v28 = vxor.u32 %v25, 2147483648
  %29 = xla_tuple %v28
  %s30 = scalar_lea.vmem %s1, 528
  %31 = vst [vmem:[%s30] sm:$0xff] %v28
  %s32 = scalar_lea.vmem %s0, 32
  %v33 = vld [vmem:[%s32] sm:$0xff]
  %34 = xla_tuple %v33
  %35 = xla_tuple %34
  %v36 = vxor.u32 %v33, 2147483648
  %37 = xla_tuple %v36
  %s38 = scalar_lea.vmem %s1, 32
  %39 = vst [vmem:[%s38] sm:$0xff] %v36
  %s40 = scalar_lea.vmem %s0, 544
  %v41 = vld [vmem:[%s40] sm:$0xff]
  %42 = xla_tuple %v41
  %43 = xla_tuple %42
  %v44 = vxor.u32 %v41, 2147483648
  %45 = xla_tuple %v44
  %s46 = scalar_lea.vmem %s1, 544
  %47 = vst [vmem:[%s46] sm:$0xff] %v44
  %s48 = scalar_lea.vmem %s0, 48
  %v49 = vld [vmem:[%s48] sm:$0xff]
  %50 = xla_tuple %v49
  %51 = xla_tuple %50
  %v52 = vxor.u32 %v49, 2147483648
  %53 = xla_tuple %v52
  %s54 = scalar_lea.vmem %s1, 48
  %55 = vst [vmem:[%s54] sm:$0xff] %v52
  %s56 = scalar_lea.vmem %s0, 560
  %v57 = vld [vmem:[%s56] sm:$0xff]
  %58 = xla_tuple %v57
  %59 = xla_tuple %58
  %v60 = vxor.u32 %v57, 2147483648
  %61 = xla_tuple %v60
  %s62 = scalar_lea.vmem %s1, 560
  %63 = vst [vmem:[%s62] sm:$0xff] %v60
  %s64 = scalar_lea.vmem %s0, 64
  %v65 = vld [vmem:[%s64] sm:$0xff]
  %66 = xla_tuple %v65
  %67 = xla_tuple %66
  %v68 = vxor.u32 %v65, 2147483648
  %69 = xla_tuple %v68
  %s70 = scalar_lea.vmem %s1, 64
  %71 = vst [vmem:[%s70] sm:$0xff] %v68
  %s72 = scalar_lea.vmem %s0, 576
  %v73 = vld [vmem:[%s72] sm:$0xff]
  %74 = xla_tuple %v73
  %75 = xla_tuple %74
  %v76 = vxor.u32 %v73, 2147483648
  %77 = xla_tuple %v76
  %s78 = scalar_lea.vmem %s1, 576
  %79 = vst [vmem:[%s78] sm:$0xff] %v76
  %s80 = scalar_lea.vmem %s0, 80
  %v81 = vld [vmem:[%s80] sm:$0xff]
  %82 = xla_tuple %v81
  %83 = xla_tuple %82
  %v84 = vxor.u32 %v81, 2147483648
  %85 = xla_tuple %v84
  %s86 = scalar_lea.vmem %s1, 80
  %87 = vst [vmem:[%s86] sm:$0xff] %v84
  %s88 = scalar_lea.vmem %s0, 592
  %v89 = vld [vmem:[%s88] sm:$0xff]
  %90 = xla_tuple %v89
  %91 = xla_tuple %90
  %v92 = vxor.u32 %v89, 2147483648
  %93 = xla_tuple %v92
  %s94 = scalar_lea.vmem %s1, 592
  %95 = vst [vmem:[%s94] sm:$0xff] %v92
  %s96 = scalar_lea.vmem %s0, 96
  %v97 = vld [vmem:[%s96] sm:$0xff]
  %98 = xla_tuple %v97
  %99 = xla_tuple %98
  %v100 = vxor.u32 %v97, 2147483648
  %101 = xla_tuple %v100
  %s102 = scalar_lea.vmem %s1, 96
  %103 = vst [vmem:[%s102] sm:$0xff] %v100
  %s104 = scalar_lea.vmem %s0, 608
  %v105 = vld [vmem:[%s104] sm:$0xff]
  %106 = xla_tuple %v105
  %107 = xla_tuple %106
  %v108 = vxor.u32 %v105, 2147483648
  %109 = xla_tuple %v108
  %s110 = scalar_lea.vmem %s1, 608
  %111 = vst [vmem:[%s110] sm:$0xff] %v108
  %s112 = scalar_lea.vmem %s0, 112
  %v113 = vld [vmem:[%s112] sm:$0xff]
  %114 = xla_tuple %v113
  %115 = xla_tuple %114
  %v116 = vxor.u32 %v113, 2147483648
  %117 = xla_tuple %v116
  %s118 = scalar_lea.vmem %s1, 112
  %119 = vst [vmem:[%s118] sm:$0xff] %v116
  %s120 = scalar_lea.vmem %s0, 624
  %v121 = vld [vmem:[%s120] sm:$0xff]
  %122 = xla_tuple %v121
  %123 = xla_tuple %122
  %v124 = vxor.u32 %v121, 2147483648
  %125 = xla_tuple %v124
  %s126 = scalar_lea.vmem %s1, 624
  %127 = vst [vmem:[%s126] sm:$0xff] %v124
  %s128 = scalar_lea.vmem %s0, 128
  %v129 = vld [vmem:[%s128] sm:$0xff]
  %130 = xla_tuple %v129
  %131 = xla_tuple %130
  %v132 = vxor.u32 %v129, 2147483648
  %133 = xla_tuple %v132
  %s134 = scalar_lea.vmem %s1, 128
  %135 = vst [vmem:[%s134] sm:$0xff] %v132
  %s136 = scalar_lea.vmem %s0, 640
  %v137 = vld [vmem:[%s136] sm:$0xff]
  %138 = xla_tuple %v137
  %139 = xla_tuple %138
  %v140 = vxor.u32 %v137, 2147483648
  %141 = xla_tuple %v140
  %s142 = scalar_lea.vmem %s1, 640
  %143 = vst [vmem:[%s142] sm:$0xff] %v140
  %s144 = scalar_lea.vmem %s0, 144
  %v145 = vld [vmem:[%s144] sm:$0xff]
  %146 = xla_tuple %v145
  %147 = xla_tuple %146
  %v148 = vxor.u32 %v145, 2147483648
  %149 = xla_tuple %v148
  %s150 = scalar_lea.vmem %s1, 144
  %151 = vst [vmem:[%s150] sm:$0xff] %v148
  %s152 = scalar_lea.vmem %s0, 656
  %v153 = vld [vmem:[%s152] sm:$0xff]
  %154 = xla_tuple %v153
  %155 = xla_tuple %154
  %v156 = vxor.u32 %v153, 2147483648
  %157 = xla_tuple %v156
  %s158 = scalar_lea.vmem %s1, 656
  %159 = vst [vmem:[%s158] sm:$0xff] %v156
  %s160 = scalar_lea.vmem %s0, 160
  %v161 = vld [vmem:[%s160] sm:$0xff]
  %162 = xla_tuple %v161
  %163 = xla_tuple %162
  %v164 = vxor.u32 %v161, 2147483648
  %165 = xla_tuple %v164
  %s166 = scalar_lea.vmem %s1, 160
  %167 = vst [vmem:[%s166] sm:$0xff] %v164
  %s168 = scalar_lea.vmem %s0, 672
  %v169 = vld [vmem:[%s168] sm:$0xff]
  %170 = xla_tuple %v169
  %171 = xla_tuple %170
  %v172 = vxor.u32 %v169, 2147483648
  %173 = xla_tuple %v172
  %s174 = scalar_lea.vmem %s1, 672
  %175 = vst [vmem:[%s174] sm:$0xff] %v172
  %s176 = scalar_lea.vmem %s0, 176
  %v177 = vld [vmem:[%s176] sm:$0xff]
  %178 = xla_tuple %v177
  %179 = xla_tuple %178
  %v180 = vxor.u32 %v177, 2147483648
  %181 = xla_tuple %v180
  %s182 = scalar_lea.vmem %s1, 176
  %183 = vst [vmem:[%s182] sm:$0xff] %v180
  %s184 = scalar_lea.vmem %s0, 688
  %v185 = vld [vmem:[%s184] sm:$0xff]
  %186 = xla_tuple %v185
  %187 = xla_tuple %186
  %v188 = vxor.u32 %v185, 2147483648
  %189 = xla_tuple %v188
  %s190 = scalar_lea.vmem %s1, 688
  %191 = vst [vmem:[%s190] sm:$0xff] %v188
  %s192 = scalar_lea.vmem %s0, 192
  %v193 = vld [vmem:[%s192] sm:$0xff]
  %194 = xla_tuple %v193
  %195 = xla_tuple %194
  %v196 = vxor.u32 %v193, 2147483648
  %197 = xla_tuple %v196
  %s198 = scalar_lea.vmem %s1, 192
  %199 = vst [vmem:[%s198] sm:$0xff] %v196
  %s200 = scalar_lea.vmem %s0, 704
  %v201 = vld [vmem:[%s200] sm:$0xff]
  %202 = xla_tuple %v201
  %203 = xla_tuple %202
  %v204 = vxor.u32 %v201, 2147483648
  %205 = xla_tuple %v204
  %s206 = scalar_lea.vmem %s1, 704
  %207 = vst [vmem:[%s206] sm:$0xff] %v204
  %s208 = scalar_lea.vmem %s0, 208
  %v209 = vld [vmem:[%s208] sm:$0xff]
  %210 = xla_tuple %v209
  %211 = xla_tuple %210
  %v212 = vxor.u32 %v209, 2147483648
  %213 = xla_tuple %v212
  %s214 = scalar_lea.vmem %s1, 208
  %215 = vst [vmem:[%s214] sm:$0xff] %v212
  %s216 = scalar_lea.vmem %s0, 720
  %v217 = vld [vmem:[%s216] sm:$0xff]
  %218 = xla_tuple %v217
  %219 = xla_tuple %218
  %v220 = vxor.u32 %v217, 2147483648
  %221 = xla_tuple %v220
  %s222 = scalar_lea.vmem %s1, 720
  %223 = vst [vmem:[%s222] sm:$0xff] %v220
  %s224 = scalar_lea.vmem %s0, 224
  %v225 = vld [vmem:[%s224] sm:$0xff]
  %226 = xla_tuple %v225
  %227 = xla_tuple %226
  %v228 = vxor.u32 %v225, 2147483648
  %229 = xla_tuple %v228
  %s230 = scalar_lea.vmem %s1, 224
  %231 = vst [vmem:[%s230] sm:$0xff] %v228
  %s232 = scalar_lea.vmem %s0, 736
  %v233 = vld [vmem:[%s232] sm:$0xff]
  %234 = xla_tuple %v233
  %235 = xla_tuple %234
  %v236 = vxor.u32 %v233, 2147483648
  %237 = xla_tuple %v236
  %s238 = scalar_lea.vmem %s1, 736
  %239 = vst [vmem:[%s238] sm:$0xff] %v236
  %s240 = scalar_lea.vmem %s0, 240
  %v241 = vld [vmem:[%s240] sm:$0xff]
  %242 = xla_tuple %v241
  %243 = xla_tuple %242
  %v244 = vxor.u32 %v241, 2147483648
  %245 = xla_tuple %v244
  %s246 = scalar_lea.vmem %s1, 240
  %247 = vst [vmem:[%s246] sm:$0xff] %v244
  %s248 = scalar_lea.vmem %s0, 752
  %v249 = vld [vmem:[%s248] sm:$0xff]
  %250 = xla_tuple %v249
  %251 = xla_tuple %250
  %v252 = vxor.u32 %v249, 2147483648
  %253 = xla_tuple %v252
  %s254 = scalar_lea.vmem %s1, 752
  %255 = vst [vmem:[%s254] sm:$0xff] %v252
  %s256 = scalar_lea.vmem %s0, 256
  %v257 = vld [vmem:[%s256] sm:$0xff]
  %258 = xla_tuple %v257
  %259 = xla_tuple %258
  %v260 = vxor.u32 %v257, 2147483648
  %261 = xla_tuple %v260
  %s262 = scalar_lea.vmem %s1, 256
  %263 = vst [vmem:[%s262] sm:$0xff] %v260
  %s264 = scalar_lea.vmem %s0, 768
  %v265 = vld [vmem:[%s264] sm:$0xff]
  %266 = xla_tuple %v265
  %267 = xla_tuple %266
  %v268 = vxor.u32 %v265, 2147483648
  %269 = xla_tuple %v268
  %s270 = scalar_lea.vmem %s1, 768
  %271 = vst [vmem:[%s270] sm:$0xff] %v268
  %s272 = scalar_lea.vmem %s0, 272
  %v273 = vld [vmem:[%s272] sm:$0xff]
  %274 = xla_tuple %v273
  %275 = xla_tuple %274
  %v276 = vxor.u32 %v273, 2147483648
  %277 = xla_tuple %v276
  %s278 = scalar_lea.vmem %s1, 272
  %279 = vst [vmem:[%s278] sm:$0xff] %v276
  %s280 = scalar_lea.vmem %s0, 784
  %v281 = vld [vmem:[%s280] sm:$0xff]
  %282 = xla_tuple %v281
  %283 = xla_tuple %282
  %v284 = vxor.u32 %v281, 2147483648
  %285 = xla_tuple %v284
  %s286 = scalar_lea.vmem %s1, 784
  %287 = vst [vmem:[%s286] sm:$0xff] %v284
  %s288 = scalar_lea.vmem %s0, 288
  %v289 = vld [vmem:[%s288] sm:$0xff]
  %290 = xla_tuple %v289
  %291 = xla_tuple %290
  %v292 = vxor.u32 %v289, 2147483648
  %293 = xla_tuple %v292
  %s294 = scalar_lea.vmem %s1, 288
  %295 = vst [vmem:[%s294] sm:$0xff] %v292
  %s296 = scalar_lea.vmem %s0, 800
  %v297 = vld [vmem:[%s296] sm:$0xff]
  %298 = xla_tuple %v297
  %299 = xla_tuple %298
  %v300 = vxor.u32 %v297, 2147483648
  %301 = xla_tuple %v300
  %s302 = scalar_lea.vmem %s1, 800
  %303 = vst [vmem:[%s302] sm:$0xff] %v300
  %s304 = scalar_lea.vmem %s0, 304
  %v305 = vld [vmem:[%s304] sm:$0xff]
  %306 = xla_tuple %v305
  %307 = xla_tuple %306
  %v308 = vxor.u32 %v305, 2147483648
  %309 = xla_tuple %v308
  %s310 = scalar_lea.vmem %s1, 304
  %311 = vst [vmem:[%s310] sm:$0xff] %v308
  %s312 = scalar_lea.vmem %s0, 816
  %v313 = vld [vmem:[%s312] sm:$0xff]
  %314 = xla_tuple %v313
  %315 = xla_tuple %314
  %v316 = vxor.u32 %v313, 2147483648
  %317 = xla_tuple %v316
  %s318 = scalar_lea.vmem %s1, 816
  %319 = vst [vmem:[%s318] sm:$0xff] %v316
  %s320 = scalar_lea.vmem %s0, 320
  %v321 = vld [vmem:[%s320] sm:$0xff]
  %322 = xla_tuple %v321
  %323 = xla_tuple %322
  %v324 = vxor.u32 %v321, 2147483648
  %325 = xla_tuple %v324
  %s326 = scalar_lea.vmem %s1, 320
  %327 = vst [vmem:[%s326] sm:$0xff] %v324
  %s328 = scalar_lea.vmem %s0, 832
  %v329 = vld [vmem:[%s328] sm:$0xff]
  %330 = xla_tuple %v329
  %331 = xla_tuple %330
  %v332 = vxor.u32 %v329, 2147483648
  %333 = xla_tuple %v332
  %s334 = scalar_lea.vmem %s1, 832
  %335 = vst [vmem:[%s334] sm:$0xff] %v332
  %s336 = scalar_lea.vmem %s0, 336
  %v337 = vld [vmem:[%s336] sm:$0xff]
  %338 = xla_tuple %v337
  %339 = xla_tuple %338
  %v340 = vxor.u32 %v337, 2147483648
  %341 = xla_tuple %v340
  %s342 = scalar_lea.vmem %s1, 336
  %343 = vst [vmem:[%s342] sm:$0xff] %v340
  %s344 = scalar_lea.vmem %s0, 848
  %v345 = vld [vmem:[%s344] sm:$0xff]
  %346 = xla_tuple %v345
  %347 = xla_tuple %346
  %v348 = vxor.u32 %v345, 2147483648
  %349 = xla_tuple %v348
  %s350 = scalar_lea.vmem %s1, 848
  %351 = vst [vmem:[%s350] sm:$0xff] %v348
  %s352 = scalar_lea.vmem %s0, 352
  %v353 = vld [vmem:[%s352] sm:$0xff]
  %354 = xla_tuple %v353
  %355 = xla_tuple %354
  %v356 = vxor.u32 %v353, 2147483648
  %357 = xla_tuple %v356
  %s358 = scalar_lea.vmem %s1, 352
  %359 = vst [vmem:[%s358] sm:$0xff] %v356
  %s360 = scalar_lea.vmem %s0, 864
  %v361 = vld [vmem:[%s360] sm:$0xff]
  %362 = xla_tuple %v361
  %363 = xla_tuple %362
  %v364 = vxor.u32 %v361, 2147483648
  %365 = xla_tuple %v364
  %s366 = scalar_lea.vmem %s1, 864
  %367 = vst [vmem:[%s366] sm:$0xff] %v364
  %s368 = scalar_lea.vmem %s0, 368
  %v369 = vld [vmem:[%s368] sm:$0xff]
  %370 = xla_tuple %v369
  %371 = xla_tuple %370
  %v372 = vxor.u32 %v369, 2147483648
  %373 = xla_tuple %v372
  %s374 = scalar_lea.vmem %s1, 368
  %375 = vst [vmem:[%s374] sm:$0xff] %v372
  %s376 = scalar_lea.vmem %s0, 880
  %v377 = vld [vmem:[%s376] sm:$0xff]
  %378 = xla_tuple %v377
  %379 = xla_tuple %378
  %v380 = vxor.u32 %v377, 2147483648
  %381 = xla_tuple %v380
  %s382 = scalar_lea.vmem %s1, 880
  %383 = vst [vmem:[%s382] sm:$0xff] %v380
  %s384 = scalar_lea.vmem %s0, 384
  %v385 = vld [vmem:[%s384] sm:$0xff]
  %386 = xla_tuple %v385
  %387 = xla_tuple %386
  %v388 = vxor.u32 %v385, 2147483648
  %389 = xla_tuple %v388
  %s390 = scalar_lea.vmem %s1, 384
  %391 = vst [vmem:[%s390] sm:$0xff] %v388
  %s392 = scalar_lea.vmem %s0, 896
  %v393 = vld [vmem:[%s392] sm:$0xff]
  %394 = xla_tuple %v393
  %395 = xla_tuple %394
  %v396 = vxor.u32 %v393, 2147483648
  %397 = xla_tuple %v396
  %s398 = scalar_lea.vmem %s1, 896
  %399 = vst [vmem:[%s398] sm:$0xff] %v396
  %s400 = scalar_lea.vmem %s0, 400
  %v401 = vld [vmem:[%s400] sm:$0xff]
  %402 = xla_tuple %v401
  %403 = xla_tuple %402
  %v404 = vxor.u32 %v401, 2147483648
  %405 = xla_tuple %v404
  %s406 = scalar_lea.vmem %s1, 400
  %407 = vst [vmem:[%s406] sm:$0xff] %v404
  %s408 = scalar_lea.vmem %s0, 912
  %v409 = vld [vmem:[%s408] sm:$0xff]
  %410 = xla_tuple %v409
  %411 = xla_tuple %410
  %v412 = vxor.u32 %v409, 2147483648
  %413 = xla_tuple %v412
  %s414 = scalar_lea.vmem %s1, 912
  %415 = vst [vmem:[%s414] sm:$0xff] %v412
  %s416 = scalar_lea.vmem %s0, 416
  %v417 = vld [vmem:[%s416] sm:$0xff]
  %418 = xla_tuple %v417
  %419 = xla_tuple %418
  %v420 = vxor.u32 %v417, 2147483648
  %421 = xla_tuple %v420
  %s422 = scalar_lea.vmem %s1, 416
  %423 = vst [vmem:[%s422] sm:$0xff] %v420
  %s424 = scalar_lea.vmem %s0, 928
  %v425 = vld [vmem:[%s424] sm:$0xff]
  %426 = xla_tuple %v425
  %427 = xla_tuple %426
  %v428 = vxor.u32 %v425, 2147483648
  %429 = xla_tuple %v428
  %s430 = scalar_lea.vmem %s1, 928
  %431 = vst [vmem:[%s430] sm:$0xff] %v428
  %s432 = scalar_lea.vmem %s0, 432
  %v433 = vld [vmem:[%s432] sm:$0xff]
  %434 = xla_tuple %v433
  %435 = xla_tuple %434
  %v436 = vxor.u32 %v433, 2147483648
  %437 = xla_tuple %v436
  %s438 = scalar_lea.vmem %s1, 432
  %439 = vst [vmem:[%s438] sm:$0xff] %v436
  %s440 = scalar_lea.vmem %s0, 944
  %v441 = vld [vmem:[%s440] sm:$0xff]
  %442 = xla_tuple %v441
  %443 = xla_tuple %442
  %v444 = vxor.u32 %v441, 2147483648
  %445 = xla_tuple %v444
  %s446 = scalar_lea.vmem %s1, 944
  %447 = vst [vmem:[%s446] sm:$0xff] %v444
  %s448 = scalar_lea.vmem %s0, 448
  %v449 = vld [vmem:[%s448] sm:$0xff]
  %450 = xla_tuple %v449
  %451 = xla_tuple %450
  %v452 = vxor.u32 %v449, 2147483648
  %453 = xla_tuple %v452
  %s454 = scalar_lea.vmem %s1, 448
  %455 = vst [vmem:[%s454] sm:$0xff] %v452
  %s456 = scalar_lea.vmem %s0, 960
  %v457 = vld [vmem:[%s456] sm:$0xff]
  %458 = xla_tuple %v457
  %459 = xla_tuple %458
  %v460 = vxor.u32 %v457, 2147483648
  %461 = xla_tuple %v460
  %s462 = scalar_lea.vmem %s1, 960
  %463 = vst [vmem:[%s462] sm:$0xff] %v460
  %s464 = scalar_lea.vmem %s0, 464
  %v465 = vld [vmem:[%s464] sm:$0xff]
  %466 = xla_tuple %v465
  %467 = xla_tuple %466
  %v468 = vxor.u32 %v465, 2147483648
  %469 = xla_tuple %v468
  %s470 = scalar_lea.vmem %s1, 464
  %471 = vst [vmem:[%s470] sm:$0xff] %v468
  %s472 = scalar_lea.vmem %s0, 976
  %v473 = vld [vmem:[%s472] sm:$0xff]
  %474 = xla_tuple %v473
  %475 = xla_tuple %474
  %v476 = vxor.u32 %v473, 2147483648
  %477 = xla_tuple %v476
  %s478 = scalar_lea.vmem %s1, 976
  %479 = vst [vmem:[%s478] sm:$0xff] %v476
  %s480 = scalar_lea.vmem %s0, 480
  %v481 = vld [vmem:[%s480] sm:$0xff]
  %482 = xla_tuple %v481
  %483 = xla_tuple %482
  %v484 = vxor.u32 %v481, 2147483648
  %485 = xla_tuple %v484
  %s486 = scalar_lea.vmem %s1, 480
  %487 = vst [vmem:[%s486] sm:$0xff] %v484
  %s488 = scalar_lea.vmem %s0, 992
  %v489 = vld [vmem:[%s488] sm:$0xff]
  %490 = xla_tuple %v489
  %491 = xla_tuple %490
  %v492 = vxor.u32 %v489, 2147483648
  %493 = xla_tuple %v492
  %s494 = scalar_lea.vmem %s1, 992
  %495 = vst [vmem:[%s494] sm:$0xff] %v492
  %s496 = scalar_lea.vmem %s0, 496
  %v497 = vld [vmem:[%s496] sm:$0xff]
  %498 = xla_tuple %v497
  %499 = xla_tuple %498
  %v500 = vxor.u32 %v497, 2147483648
  %501 = xla_tuple %v500
  %s502 = scalar_lea.vmem %s1, 496
  %503 = vst [vmem:[%s502] sm:$0xff] %v500
  %s504 = scalar_lea.vmem %s0, 1008
  %v505 = vld [vmem:[%s504] sm:$0xff]
  %506 = xla_tuple %v505
  %507 = xla_tuple %506
  %v508 = vxor.u32 %v505, 2147483648
  %509 = xla_tuple %v508
  %s510 = scalar_lea.vmem %s1, 1008
  %511 = vst [vmem:[%s510] sm:$0xff] %v508
  %s512 = scalar_lea.vmem %s0, 8
  %v513 = vld [vmem:[%s512] sm:$0xff]
  %514 = xla_tuple %v513
  %515 = xla_tuple %514
  %v516 = vxor.u32 %v513, 2147483648
  %517 = xla_tuple %v516
  %s518 = scalar_lea.vmem %s1, 8
  %519 = vst [vmem:[%s518] sm:$0xff] %v516
  %s520 = scalar_lea.vmem %s0, 520
  %v521 = vld [vmem:[%s520] sm:$0xff]
  %522 = xla_tuple %v521
  %523 = xla_tuple %522
  %v524 = vxor.u32 %v521, 2147483648
  %525 = xla_tuple %v524
  %s526 = scalar_lea.vmem %s1, 520
  %527 = vst [vmem:[%s526] sm:$0xff] %v524
  %s528 = scalar_lea.vmem %s0, 24
  %v529 = vld [vmem:[%s528] sm:$0xff]
  %530 = xla_tuple %v529
  %531 = xla_tuple %530
  %v532 = vxor.u32 %v529, 2147483648
  %533 = xla_tuple %v532
  %s534 = scalar_lea.vmem %s1, 24
  %535 = vst [vmem:[%s534] sm:$0xff] %v532
  %s536 = scalar_lea.vmem %s0, 536
  %v537 = vld [vmem:[%s536] sm:$0xff]
  %538 = xla_tuple %v537
  %539 = xla_tuple %538
  %v540 = vxor.u32 %v537, 2147483648
  %541 = xla_tuple %v540
  %s542 = scalar_lea.vmem %s1, 536
  %543 = vst [vmem:[%s542] sm:$0xff] %v540
  %s544 = scalar_lea.vmem %s0, 40
  %v545 = vld [vmem:[%s544] sm:$0xff]
  %546 = xla_tuple %v545
  %547 = xla_tuple %546
  %v548 = vxor.u32 %v545, 2147483648
  %549 = xla_tuple %v548
  %s550 = scalar_lea.vmem %s1, 40
  %551 = vst [vmem:[%s550] sm:$0xff] %v548
  %s552 = scalar_lea.vmem %s0, 552
  %v553 = vld [vmem:[%s552] sm:$0xff]
  %554 = xla_tuple %v553
  %555 = xla_tuple %554
  %v556 = vxor.u32 %v553, 2147483648
  %557 = xla_tuple %v556
  %s558 = scalar_lea.vmem %s1, 552
  %559 = vst [vmem:[%s558] sm:$0xff] %v556
  %s560 = scalar_lea.vmem %s0, 56
  %v561 = vld [vmem:[%s560] sm:$0xff]
  %562 = xla_tuple %v561
  %563 = xla_tuple %562
  %v564 = vxor.u32 %v561, 2147483648
  %565 = xla_tuple %v564
  %s566 = scalar_lea.vmem %s1, 56
  %567 = vst [vmem:[%s566] sm:$0xff] %v564
  %s568 = scalar_lea.vmem %s0, 568
  %v569 = vld [vmem:[%s568] sm:$0xff]
  %570 = xla_tuple %v569
  %571 = xla_tuple %570
  %v572 = vxor.u32 %v569, 2147483648
  %573 = xla_tuple %v572
  %s574 = scalar_lea.vmem %s1, 568
  %575 = vst [vmem:[%s574] sm:$0xff] %v572
  %s576 = scalar_lea.vmem %s0, 72
  %v577 = vld [vmem:[%s576] sm:$0xff]
  %578 = xla_tuple %v577
  %579 = xla_tuple %578
  %v580 = vxor.u32 %v577, 2147483648
  %581 = xla_tuple %v580
  %s582 = scalar_lea.vmem %s1, 72
  %583 = vst [vmem:[%s582] sm:$0xff] %v580
  %s584 = scalar_lea.vmem %s0, 584
  %v585 = vld [vmem:[%s584] sm:$0xff]
  %586 = xla_tuple %v585
  %587 = xla_tuple %586
  %v588 = vxor.u32 %v585, 2147483648
  %589 = xla_tuple %v588
  %s590 = scalar_lea.vmem %s1, 584
  %591 = vst [vmem:[%s590] sm:$0xff] %v588
  %s592 = scalar_lea.vmem %s0, 88
  %v593 = vld [vmem:[%s592] sm:$0xff]
  %594 = xla_tuple %v593
  %595 = xla_tuple %594
  %v596 = vxor.u32 %v593, 2147483648
  %597 = xla_tuple %v596
  %s598 = scalar_lea.vmem %s1, 88
  %599 = vst [vmem:[%s598] sm:$0xff] %v596
  %s600 = scalar_lea.vmem %s0, 600
  %v601 = vld [vmem:[%s600] sm:$0xff]
  %602 = xla_tuple %v601
  %603 = xla_tuple %602
  %v604 = vxor.u32 %v601, 2147483648
  %605 = xla_tuple %v604
  %s606 = scalar_lea.vmem %s1, 600
  %607 = vst [vmem:[%s606] sm:$0xff] %v604
  %s608 = scalar_lea.vmem %s0, 104
  %v609 = vld [vmem:[%s608] sm:$0xff]
  %610 = xla_tuple %v609
  %611 = xla_tuple %610
  %v612 = vxor.u32 %v609, 2147483648
  %613 = xla_tuple %v612
  %s614 = scalar_lea.vmem %s1, 104
  %615 = vst [vmem:[%s614] sm:$0xff] %v612
  %s616 = scalar_lea.vmem %s0, 616
  %v617 = vld [vmem:[%s616] sm:$0xff]
  %618 = xla_tuple %v617
  %619 = xla_tuple %618
  %v620 = vxor.u32 %v617, 2147483648
  %621 = xla_tuple %v620
  %s622 = scalar_lea.vmem %s1, 616
  %623 = vst [vmem:[%s622] sm:$0xff] %v620
  %s624 = scalar_lea.vmem %s0, 120
  %v625 = vld [vmem:[%s624] sm:$0xff]
  %626 = xla_tuple %v625
  %627 = xla_tuple %626
  %v628 = vxor.u32 %v625, 2147483648
  %629 = xla_tuple %v628
  %s630 = scalar_lea.vmem %s1, 120
  %631 = vst [vmem:[%s630] sm:$0xff] %v628
  %s632 = scalar_lea.vmem %s0, 632
  %v633 = vld [vmem:[%s632] sm:$0xff]
  %634 = xla_tuple %v633
  %635 = xla_tuple %634
  %v636 = vxor.u32 %v633, 2147483648
  %637 = xla_tuple %v636
  %s638 = scalar_lea.vmem %s1, 632
  %639 = vst [vmem:[%s638] sm:$0xff] %v636
  %s640 = scalar_lea.vmem %s0, 136
  %v641 = vld [vmem:[%s640] sm:$0xff]
  %642 = xla_tuple %v641
  %643 = xla_tuple %642
  %v644 = vxor.u32 %v641, 2147483648
  %645 = xla_tuple %v644
  %s646 = scalar_lea.vmem %s1, 136
  %647 = vst [vmem:[%s646] sm:$0xff] %v644
  %s648 = scalar_lea.vmem %s0, 648
  %v649 = vld [vmem:[%s648] sm:$0xff]
  %650 = xla_tuple %v649
  %651 = xla_tuple %650
  %v652 = vxor.u32 %v649, 2147483648
  %653 = xla_tuple %v652
  %s654 = scalar_lea.vmem %s1, 648
  %655 = vst [vmem:[%s654] sm:$0xff] %v652
  %s656 = scalar_lea.vmem %s0, 152
  %v657 = vld [vmem:[%s656] sm:$0xff]
  %658 = xla_tuple %v657
  %659 = xla_tuple %658
  %v660 = vxor.u32 %v657, 2147483648
  %661 = xla_tuple %v660
  %s662 = scalar_lea.vmem %s1, 152
  %663 = vst [vmem:[%s662] sm:$0xff] %v660
  %s664 = scalar_lea.vmem %s0, 664
  %v665 = vld [vmem:[%s664] sm:$0xff]
  %666 = xla_tuple %v665
  %667 = xla_tuple %666
  %v668 = vxor.u32 %v665, 2147483648
  %669 = xla_tuple %v668
  %s670 = scalar_lea.vmem %s1, 664
  %671 = vst [vmem:[%s670] sm:$0xff] %v668
  %s672 = scalar_lea.vmem %s0, 168
  %v673 = vld [vmem:[%s672] sm:$0xff]
  %674 = xla_tuple %v673
  %675 = xla_tuple %674
  %v676 = vxor.u32 %v673, 2147483648
  %677 = xla_tuple %v676
  %s678 = scalar_lea.vmem %s1, 168
  %679 = vst [vmem:[%s678] sm:$0xff] %v676
  %s680 = scalar_lea.vmem %s0, 680
  %v681 = vld [vmem:[%s680] sm:$0xff]
  %682 = xla_tuple %v681
  %683 = xla_tuple %682
  %v684 = vxor.u32 %v681, 2147483648
  %685 = xla_tuple %v684
  %s686 = scalar_lea.vmem %s1, 680
  %687 = vst [vmem:[%s686] sm:$0xff] %v684
  %s688 = scalar_lea.vmem %s0, 184
  %v689 = vld [vmem:[%s688] sm:$0xff]
  %690 = xla_tuple %v689
  %691 = xla_tuple %690
  %v692 = vxor.u32 %v689, 2147483648
  %693 = xla_tuple %v692
  %s694 = scalar_lea.vmem %s1, 184
  %695 = vst [vmem:[%s694] sm:$0xff] %v692
  %s696 = scalar_lea.vmem %s0, 696
  %v697 = vld [vmem:[%s696] sm:$0xff]
  %698 = xla_tuple %v697
  %699 = xla_tuple %698
  %v700 = vxor.u32 %v697, 2147483648
  %701 = xla_tuple %v700
  %s702 = scalar_lea.vmem %s1, 696
  %703 = vst [vmem:[%s702] sm:$0xff] %v700
  %s704 = scalar_lea.vmem %s0, 200
  %v705 = vld [vmem:[%s704] sm:$0xff]
  %706 = xla_tuple %v705
  %707 = xla_tuple %706
  %v708 = vxor.u32 %v705, 2147483648
  %709 = xla_tuple %v708
  %s710 = scalar_lea.vmem %s1, 200
  %711 = vst [vmem:[%s710] sm:$0xff] %v708
  %s712 = scalar_lea.vmem %s0, 712
  %v713 = vld [vmem:[%s712] sm:$0xff]
  %714 = xla_tuple %v713
  %715 = xla_tuple %714
  %v716 = vxor.u32 %v713, 2147483648
  %717 = xla_tuple %v716
  %s718 = scalar_lea.vmem %s1, 712
  %719 = vst [vmem:[%s718] sm:$0xff] %v716
  %s720 = scalar_lea.vmem %s0, 216
  %v721 = vld [vmem:[%s720] sm:$0xff]
  %722 = xla_tuple %v721
  %723 = xla_tuple %722
  %v724 = vxor.u32 %v721, 2147483648
  %725 = xla_tuple %v724
  %s726 = scalar_lea.vmem %s1, 216
  %727 = vst [vmem:[%s726] sm:$0xff] %v724
  %s728 = scalar_lea.vmem %s0, 728
  %v729 = vld [vmem:[%s728] sm:$0xff]
  %730 = xla_tuple %v729
  %731 = xla_tuple %730
  %v732 = vxor.u32 %v729, 2147483648
  %733 = xla_tuple %v732
  %s734 = scalar_lea.vmem %s1, 728
  %735 = vst [vmem:[%s734] sm:$0xff] %v732
  %s736 = scalar_lea.vmem %s0, 232
  %v737 = vld [vmem:[%s736] sm:$0xff]
  %738 = xla_tuple %v737
  %739 = xla_tuple %738
  %v740 = vxor.u32 %v737, 2147483648
  %741 = xla_tuple %v740
  %s742 = scalar_lea.vmem %s1, 232
  %743 = vst [vmem:[%s742] sm:$0xff] %v740
  %s744 = scalar_lea.vmem %s0, 744
  %v745 = vld [vmem:[%s744] sm:$0xff]
  %746 = xla_tuple %v745
  %747 = xla_tuple %746
  %v748 = vxor.u32 %v745, 2147483648
  %749 = xla_tuple %v748
  %s750 = scalar_lea.vmem %s1, 744
  %751 = vst [vmem:[%s750] sm:$0xff] %v748
  %s752 = scalar_lea.vmem %s0, 248
  %v753 = vld [vmem:[%s752] sm:$0xff]
  %754 = xla_tuple %v753
  %755 = xla_tuple %754
  %v756 = vxor.u32 %v753, 2147483648
  %757 = xla_tuple %v756
  %s758 = scalar_lea.vmem %s1, 248
  %759 = vst [vmem:[%s758] sm:$0xff] %v756
  %s760 = scalar_lea.vmem %s0, 760
  %v761 = vld [vmem:[%s760] sm:$0xff]
  %762 = xla_tuple %v761
  %763 = xla_tuple %762
  %v764 = vxor.u32 %v761, 2147483648
  %765 = xla_tuple %v764
  %s766 = scalar_lea.vmem %s1, 760
  %767 = vst [vmem:[%s766] sm:$0xff] %v764
  %s768 = scalar_lea.vmem %s0, 264
  %v769 = vld [vmem:[%s768] sm:$0xff]
  %770 = xla_tuple %v769
  %771 = xla_tuple %770
  %v772 = vxor.u32 %v769, 2147483648
  %773 = xla_tuple %v772
  %s774 = scalar_lea.vmem %s1, 264
  %775 = vst [vmem:[%s774] sm:$0xff] %v772
  %s776 = scalar_lea.vmem %s0, 776
  %v777 = vld [vmem:[%s776] sm:$0xff]
  %778 = xla_tuple %v777
  %779 = xla_tuple %778
  %v780 = vxor.u32 %v777, 2147483648
  %781 = xla_tuple %v780
  %s782 = scalar_lea.vmem %s1, 776
  %783 = vst [vmem:[%s782] sm:$0xff] %v780
  %s784 = scalar_lea.vmem %s0, 280
  %v785 = vld [vmem:[%s784] sm:$0xff]
  %786 = xla_tuple %v785
  %787 = xla_tuple %786
  %v788 = vxor.u32 %v785, 2147483648
  %789 = xla_tuple %v788
  %s790 = scalar_lea.vmem %s1, 280
  %791 = vst [vmem:[%s790] sm:$0xff] %v788
  %s792 = scalar_lea.vmem %s0, 792
  %v793 = vld [vmem:[%s792] sm:$0xff]
  %794 = xla_tuple %v793
  %795 = xla_tuple %794
  %v796 = vxor.u32 %v793, 2147483648
  %797 = xla_tuple %v796
  %s798 = scalar_lea.vmem %s1, 792
  %799 = vst [vmem:[%s798] sm:$0xff] %v796
  %s800 = scalar_lea.vmem %s0, 296
  %v801 = vld [vmem:[%s800] sm:$0xff]
  %802 = xla_tuple %v801
  %803 = xla_tuple %802
  %v804 = vxor.u32 %v801, 2147483648
  %805 = xla_tuple %v804
  %s806 = scalar_lea.vmem %s1, 296
  %807 = vst [vmem:[%s806] sm:$0xff] %v804
  %s808 = scalar_lea.vmem %s0, 808
  %v809 = vld [vmem:[%s808] sm:$0xff]
  %810 = xla_tuple %v809
  %811 = xla_tuple %810
  %v812 = vxor.u32 %v809, 2147483648
  %813 = xla_tuple %v812
  %s814 = scalar_lea.vmem %s1, 808
  %815 = vst [vmem:[%s814] sm:$0xff] %v812
  %s816 = scalar_lea.vmem %s0, 312
  %v817 = vld [vmem:[%s816] sm:$0xff]
  %818 = xla_tuple %v817
  %819 = xla_tuple %818
  %v820 = vxor.u32 %v817, 2147483648
  %821 = xla_tuple %v820
  %s822 = scalar_lea.vmem %s1, 312
  %823 = vst [vmem:[%s822] sm:$0xff] %v820
  %s824 = scalar_lea.vmem %s0, 824
  %v825 = vld [vmem:[%s824] sm:$0xff]
  %826 = xla_tuple %v825
  %827 = xla_tuple %826
  %v828 = vxor.u32 %v825, 2147483648
  %829 = xla_tuple %v828
  %s830 = scalar_lea.vmem %s1, 824
  %831 = vst [vmem:[%s830] sm:$0xff] %v828
  %s832 = scalar_lea.vmem %s0, 328
  %v833 = vld [vmem:[%s832] sm:$0xff]
  %834 = xla_tuple %v833
  %835 = xla_tuple %834
  %v836 = vxor.u32 %v833, 2147483648
  %837 = xla_tuple %v836
  %s838 = scalar_lea.vmem %s1, 328
  %839 = vst [vmem:[%s838] sm:$0xff] %v836
  %s840 = scalar_lea.vmem %s0, 840
  %v841 = vld [vmem:[%s840] sm:$0xff]
  %842 = xla_tuple %v841
  %843 = xla_tuple %842
  %v844 = vxor.u32 %v841, 2147483648
  %845 = xla_tuple %v844
  %s846 = scalar_lea.vmem %s1, 840
  %847 = vst [vmem:[%s846] sm:$0xff] %v844
  %s848 = scalar_lea.vmem %s0, 344
  %v849 = vld [vmem:[%s848] sm:$0xff]
  %850 = xla_tuple %v849
  %851 = xla_tuple %850
  %v852 = vxor.u32 %v849, 2147483648
  %853 = xla_tuple %v852
  %s854 = scalar_lea.vmem %s1, 344
  %855 = vst [vmem:[%s854] sm:$0xff] %v852
  %s856 = scalar_lea.vmem %s0, 856
  %v857 = vld [vmem:[%s856] sm:$0xff]
  %858 = xla_tuple %v857
  %859 = xla_tuple %858
  %v860 = vxor.u32 %v857, 2147483648
  %861 = xla_tuple %v860
  %s862 = scalar_lea.vmem %s1, 856
  %863 = vst [vmem:[%s862] sm:$0xff] %v860
  %s864 = scalar_lea.vmem %s0, 360
  %v865 = vld [vmem:[%s864] sm:$0xff]
  %866 = xla_tuple %v865
  %867 = xla_tuple %866
  %v868 = vxor.u32 %v865, 2147483648
  %869 = xla_tuple %v868
  %s870 = scalar_lea.vmem %s1, 360
  %871 = vst [vmem:[%s870] sm:$0xff] %v868
  %s872 = scalar_lea.vmem %s0, 872
  %v873 = vld [vmem:[%s872] sm:$0xff]
  %874 = xla_tuple %v873
  %875 = xla_tuple %874
  %v876 = vxor.u32 %v873, 2147483648
  %877 = xla_tuple %v876
  %s878 = scalar_lea.vmem %s1, 872
  %879 = vst [vmem:[%s878] sm:$0xff] %v876
  %s880 = scalar_lea.vmem %s0, 376
  %v881 = vld [vmem:[%s880] sm:$0xff]
  %882 = xla_tuple %v881
  %883 = xla_tuple %882
  %v884 = vxor.u32 %v881, 2147483648
  %885 = xla_tuple %v884
  %s886 = scalar_lea.vmem %s1, 376
  %887 = vst [vmem:[%s886] sm:$0xff] %v884
  %s888 = scalar_lea.vmem %s0, 888
  %v889 = vld [vmem:[%s888] sm:$0xff]
  %890 = xla_tuple %v889
  %891 = xla_tuple %890
  %v892 = vxor.u32 %v889, 2147483648
  %893 = xla_tuple %v892
  %s894 = scalar_lea.vmem %s1, 888
  %895 = vst [vmem:[%s894] sm:$0xff] %v892
  %s896 = scalar_lea.vmem %s0, 392
  %v897 = vld [vmem:[%s896] sm:$0xff]
  %898 = xla_tuple %v897
  %899 = xla_tuple %898
  %v900 = vxor.u32 %v897, 2147483648
  %901 = xla_tuple %v900
  %s902 = scalar_lea.vmem %s1, 392
  %903 = vst [vmem:[%s902] sm:$0xff] %v900
  %s904 = scalar_lea.vmem %s0, 904
  %v905 = vld [vmem:[%s904] sm:$0xff]
  %906 = xla_tuple %v905
  %907 = xla_tuple %906
  %v908 = vxor.u32 %v905, 2147483648
  %909 = xla_tuple %v908
  %s910 = scalar_lea.vmem %s1, 904
  %911 = vst [vmem:[%s910] sm:$0xff] %v908
  %s912 = scalar_lea.vmem %s0, 408
  %v913 = vld [vmem:[%s912] sm:$0xff]
  %914 = xla_tuple %v913
  %915 = xla_tuple %914
  %v916 = vxor.u32 %v913, 2147483648
  %917 = xla_tuple %v916
  %s918 = scalar_lea.vmem %s1, 408
  %919 = vst [vmem:[%s918] sm:$0xff] %v916
  %s920 = scalar_lea.vmem %s0, 920
  %v921 = vld [vmem:[%s920] sm:$0xff]
  %922 = xla_tuple %v921
  %923 = xla_tuple %922
  %v924 = vxor.u32 %v921, 2147483648
  %925 = xla_tuple %v924
  %s926 = scalar_lea.vmem %s1, 920
  %927 = vst [vmem:[%s926] sm:$0xff] %v924
  %s928 = scalar_lea.vmem %s0, 424
  %v929 = vld [vmem:[%s928] sm:$0xff]
  %930 = xla_tuple %v929
  %931 = xla_tuple %930
  %v932 = vxor.u32 %v929, 2147483648
  %933 = xla_tuple %v932
  %s934 = scalar_lea.vmem %s1, 424
  %935 = vst [vmem:[%s934] sm:$0xff] %v932
  %s936 = scalar_lea.vmem %s0, 936
  %v937 = vld [vmem:[%s936] sm:$0xff]
  %938 = xla_tuple %v937
  %939 = xla_tuple %938
  %v940 = vxor.u32 %v937, 2147483648
  %941 = xla_tuple %v940
  %s942 = scalar_lea.vmem %s1, 936
  %943 = vst [vmem:[%s942] sm:$0xff] %v940
  %s944 = scalar_lea.vmem %s0, 440
  %v945 = vld [vmem:[%s944] sm:$0xff]
  %946 = xla_tuple %v945
  %947 = xla_tuple %946
  %v948 = vxor.u32 %v945, 2147483648
  %949 = xla_tuple %v948
  %s950 = scalar_lea.vmem %s1, 440
  %951 = vst [vmem:[%s950] sm:$0xff] %v948
  %s952 = scalar_lea.vmem %s0, 952
  %v953 = vld [vmem:[%s952] sm:$0xff]
  %954 = xla_tuple %v953
  %955 = xla_tuple %954
  %v956 = vxor.u32 %v953, 2147483648
  %957 = xla_tuple %v956
  %s958 = scalar_lea.vmem %s1, 952
  %959 = vst [vmem:[%s958] sm:$0xff] %v956
  %s960 = scalar_lea.vmem %s0, 456
  %v961 = vld [vmem:[%s960] sm:$0xff]
  %962 = xla_tuple %v961
  %963 = xla_tuple %962
  %v964 = vxor.u32 %v961, 2147483648
  %965 = xla_tuple %v964
  %s966 = scalar_lea.vmem %s1, 456
  %967 = vst [vmem:[%s966] sm:$0xff] %v964
  %s968 = scalar_lea.vmem %s0, 968
  %v969 = vld [vmem:[%s968] sm:$0xff]
  %970 = xla_tuple %v969
  %971 = xla_tuple %970
  %v972 = vxor.u32 %v969, 2147483648
  %973 = xla_tuple %v972
  %s974 = scalar_lea.vmem %s1, 968
  %975 = vst [vmem:[%s974] sm:$0xff] %v972
  %s976 = scalar_lea.vmem %s0, 472
  %v977 = vld [vmem:[%s976] sm:$0xff]
  %978 = xla_tuple %v977
  %979 = xla_tuple %978
  %v980 = vxor.u32 %v977, 2147483648
  %981 = xla_tuple %v980
  %s982 = scalar_lea.vmem %s1, 472
  %983 = vst [vmem:[%s982] sm:$0xff] %v980
  %s984 = scalar_lea.vmem %s0, 984
  %v985 = vld [vmem:[%s984] sm:$0xff]
  %986 = xla_tuple %v985
  %987 = xla_tuple %986
  %v988 = vxor.u32 %v985, 2147483648
  %989 = xla_tuple %v988
  %s990 = scalar_lea.vmem %s1, 984
  %991 = vst [vmem:[%s990] sm:$0xff] %v988
  %s992 = scalar_lea.vmem %s0, 488
  %v993 = vld [vmem:[%s992] sm:$0xff]
  %994 = xla_tuple %v993
  %995 = xla_tuple %994
  %v996 = vxor.u32 %v993, 2147483648
  %997 = xla_tuple %v996
  %s998 = scalar_lea.vmem %s1, 488
  %999 = vst [vmem:[%s998] sm:$0xff] %v996
  %s1000 = scalar_lea.vmem %s0, 1000
  %v1001 = vld [vmem:[%s1000] sm:$0xff]
  %1002 = xla_tuple %v1001
  %1003 = xla_tuple %1002
  %v1004 = vxor.u32 %v1001, 2147483648
  %1005 = xla_tuple %v1004
  %s1006 = scalar_lea.vmem %s1, 1000
  %1007 = vst [vmem:[%s1006] sm:$0xff] %v1004
  %s1008 = scalar_lea.vmem %s0, 504
  %v1009 = vld [vmem:[%s1008] sm:$0xff]
  %1010 = xla_tuple %v1009
  %1011 = xla_tuple %1010
  %v1012 = vxor.u32 %v1009, 2147483648
  %1013 = xla_tuple %v1012
  %s1014 = scalar_lea.vmem %s1, 504
  %1015 = vst [vmem:[%s1014] sm:$0xff] %v1012
  %s1016 = scalar_lea.vmem %s0, 1016
  %v1017 = vld [vmem:[%s1016] sm:$0xff]
  %1018 = xla_tuple %v1017
  %1019 = xla_tuple %1018
  %v1020 = vxor.u32 %v1017, 2147483648
  %1021 = xla_tuple %v1020
  %s1022 = scalar_lea.vmem %s1, 1016
  %1023 = vst [vmem:[%s1022] sm:$0xff] %v1020

// kernel: feature_correlator_forward.2
$region0: #{feature_correlator_forward.2}
  #allocation0 [shape = 'u32[]', space=smem, size = 0x4, offset = 0x4, fixed_abs, tag = 'smem constant byte address 0x4 - core index']
  #allocation1 [shape = 'u32[144,128]{1,0:T(1,128)}', space=vmem, size = 0x12000, scoped, tag = 'internal scratch']
  %s0 = inlined_call_operand.vmem [shape: bf16[2,8,11,256], index: 0, kind: input, shape index: {}]
  %s1 = inlined_call_operand.vmem [shape: bf16[2,8,3,256], index: 1, kind: input, shape index: {}]
  %s2 = inlined_call_operand.vmem [shape: bf16[2,8,256], index: 2, kind: input, shape index: {}]
  %s3 = inlined_call_operand.vmem [shape: bf16[16,8], index: 3, kind: input, shape index: {}]
  %s4 = inlined_call_operand.vmem [shape: bf16[16,11], index: 4, kind: input, shape index: {}]
  %s5 = inlined_call_operand.vmem [shape: f32[16,1], index: 5, kind: input, shape index: {}]
  %s6 = inlined_call_operand.vmem [shape: bf16[16,16], index: 6, kind: input, shape index: {}]
  %s7 = inlined_call_operand.vmem [shape: f32[16,1], index: 7, kind: input, shape index: {}]
  %s8 = inlined_call_operand.vmem [shape: bf16[8,3], index: 8, kind: input, shape index: {}]
  %s9 = inlined_call_operand.vmem [shape: f32[8,1], index: 9, kind: input, shape index: {}]
  %s10 = inlined_call_operand.vmem [shape: bf16[8,8], index: 10, kind: input, shape index: {}]
  %s11 = inlined_call_operand.vmem [shape: f32[8,1], index: 11, kind: input, shape index: {}]
  %s12 = inlined_call_operand.vmem [shape: bf16[16,8], index: 12, kind: input, shape index: {}]
  %s13 = inlined_call_operand.vmem [shape: f32[16,1], index: 13, kind: input, shape index: {}]
  %s14 = inlined_call_operand.vmem [shape: bf16[2,16,256], index: 14, kind: output, shape index: {}]
  %s15 = sld [smem:[#allocation0]]
  $region89: #{feature_correlator_forward.2} parent=0
    _
  %s17 = ssub.s32 1, %s15
  %s18 = scalar_select 0, %s17, %s15
  loop: start=0, step=1, limit=4
  $region2: #{feature_correlator_forward.2} parent=0 // loop_pre_header
    _
  $region3: #{feature_correlator_forward.2} parent=0 // loop_header
    %s20 = sphi 0, %s24
    %p21 = scmp.ge.s32.totalorder %s20, 4
    %s27 = sphi 0, %s39
    %s28 = sphi 0, %s35
    %s29 = sphi 0, %s27
    %s30 = sphi 0, %s28
    %s31 = sphi 0, %s29
    %s32 = sphi 0, %s30
    %s44 = sphi 0, %s46
    %s47 = sphi 0, %s44
    %s48 = sphi 0, %s47
    %s64 = sphi 0, %s48
    %s72 = sphi 0, %s74
    %s75 = sphi 0, %s72
    %s76 = sphi 0, %s75
    %s92 = sphi 0, %s76
    %s100 = sphi 0, %s102
    %s103 = sphi 0, %s100
    %s104 = sphi 0, %s103
    %s120 = sphi 0, %s104
    %s124 = sphi 0, %s124
    %s126 = sphi 0, %s124
    %s127 = sphi 0, %s126
    %s141 = sphi 0, %s127
    %s145 = sphi 0, %s145
    %s147 = sphi 0, %s145
    %s148 = sphi 0, %s147
    %s162 = sphi 0, %s148
    %s166 = sphi 0, %s166
    %s168 = sphi 0, %s166
    %s169 = sphi 0, %s168
    %s183 = sphi 0, %s169
    %s187 = sphi 0, %s187
    %s189 = sphi 0, %s187
    %s190 = sphi 0, %s189
    %s204 = sphi 0, %s190
    %s208 = sphi 0, %s208
    %s210 = sphi 0, %s208
    %s211 = sphi 0, %s210
    %s225 = sphi 0, %s211
    %s229 = sphi 0, %s229
    %s231 = sphi 0, %s229
    %s232 = sphi 0, %s231
    %s246 = sphi 0, %s232
    %s250 = sphi 0, %s250
    %s252 = sphi 0, %s250
    %s253 = sphi 0, %s252
    %s267 = sphi 0, %s253
    %s271 = sphi 0, %s271
    %s273 = sphi 0, %s271
    %s274 = sphi 0, %s273
    %s288 = sphi 0, %s274
    %s292 = sphi 0, %s292
    %s294 = sphi 0, %s292
    %s295 = sphi 0, %s294
    %s309 = sphi 0, %s295
    %s313 = sphi 0, %s313
    %s315 = sphi 0, %s313
    %s316 = sphi 0, %s315
    %s330 = sphi 0, %s316
    %s334 = sphi 0, %s334
    %s336 = sphi 0, %s334
    %s337 = sphi 0, %s336
    %s351 = sphi 0, %s337
    %s359 = sphi 0, %s361
    %s362 = sphi 0, %s359
    %s363 = sphi 0, %s362
    %s379 = sphi 0, %s363
  $region4: #{feature_correlator_forward.2} parent=0 // loop_header_branch
    %23 = sbr.rel (%p21) target = $region8
  $region5: #{feature_correlator_forward.2} parent=0 // loop_body
    %s25 = ssub.s32 %s20, 1
    %s26 = ssub.s32 %s20, 2
    %s33 = sadd.s32 1, %s28
    %p34 = scmp.ge.s32.totalorder %s33, 2
    %s35 = scalar_select %p34, 0, %s33
    %s36 = sadd.s32 1, %s27
    %s37 = scalar_select %p34, %s36, %s27
    %p38 = scmp.ge.s32.totalorder %s37, 1
    %s39 = scalar_select %p38, 0, %s37
    %s40 = ssub.s32 %s28, %s35
    %s41 = ssub.s32 %s27, %s39
    %s42 = sor.u32 %s40, %s41
    %p43 = scmp.eq.s32.totalorder %s42, 0
    %s45 = sadd.s32 %s44, 1
    %s46 = scalar_select %p43, %s44, %s45
    %p49 = pneg %p43
    %p50 = scmp.eq.s32.totalorder %s20, 1
    %p51 = por %p49, %p50
    %p52 = scmp.ne.s32.totalorder %s44, %s47
    %p53 = scmp.eq.s32.totalorder %s20, 0
    %p54 = por %p52, %p53
    %p55 = scmp.ne.s32.totalorder %s44, %s47
    %p56 = scmp.eq.s32.totalorder %s25, 1
    %p57 = por %p55, %p56
    %p58 = scmp.ne.s32.totalorder %s47, %s48
    %p59 = scmp.eq.s32.totalorder %s25, 0
    %p60 = por %p58, %p59
    %p61 = scmp.ne.s32.totalorder %s47, %s48
    %p62 = scmp.eq.s32.totalorder %s26, 1
    %p63 = por %p61, %p62
    %p65 = scmp.ne.s32.totalorder %s48, %s64
    %p66 = scmp.eq.s32.totalorder %s26, 0
    %p67 = por %p65, %p66
    %s68 = ssub.s32 %s28, %s35
    %s69 = ssub.s32 %s27, %s39
    %s70 = sor.u32 %s68, %s69
    %p71 = scmp.eq.s32.totalorder %s70, 0
    %s73 = sadd.s32 %s72, 1
    %s74 = scalar_select %p71, %s72, %s73
    %p77 = pneg %p71
    %p78 = scmp.eq.s32.totalorder %s20, 1
    %p79 = por %p77, %p78
    %p80 = scmp.ne.s32.totalorder %s72, %s75
    %p81 = scmp.eq.s32.totalorder %s20, 0
    %p82 = por %p80, %p81
    %p83 = scmp.ne.s32.totalorder %s72, %s75
    %p84 = scmp.eq.s32.totalorder %s25, 1
    %p85 = por %p83, %p84
    %p86 = scmp.ne.s32.totalorder %s75, %s76
    %p87 = scmp.eq.s32.totalorder %s25, 0
    %p88 = por %p86, %p87
    %p89 = scmp.ne.s32.totalorder %s75, %s76
    %p90 = scmp.eq.s32.totalorder %s26, 1
    %p91 = por %p89, %p90
    %p93 = scmp.ne.s32.totalorder %s76, %s92
    %p94 = scmp.eq.s32.totalorder %s26, 0
    %p95 = por %p93, %p94
    %s96 = ssub.s32 %s28, %s35
    %s97 = ssub.s32 %s27, %s39
    %s98 = sor.u32 %s96, %s97
    %p99 = scmp.eq.s32.totalorder %s98, 0
    %s101 = sadd.s32 %s100, 1
    %s102 = scalar_select %p99, %s100, %s101
    %p105 = pneg %p99
    %p106 = scmp.eq.s32.totalorder %s20, 1
    %p107 = por %p105, %p106
    %p108 = scmp.ne.s32.totalorder %s100, %s103
    %p109 = scmp.eq.s32.totalorder %s20, 0
    %p110 = por %p108, %p109
    %p111 = scmp.ne.s32.totalorder %s100, %s103
    %p112 = scmp.eq.s32.totalorder %s25, 1
    %p113 = por %p111, %p112
    %p114 = scmp.ne.s32.totalorder %s103, %s104
    %p115 = scmp.eq.s32.totalorder %s25, 0
    %p116 = por %p114, %p115
    %p117 = scmp.ne.s32.totalorder %s103, %s104
    %p118 = scmp.eq.s32.totalorder %s26, 1
    %p119 = por %p117, %p118
    %p121 = scmp.ne.s32.totalorder %s104, %s120
    %p122 = scmp.eq.s32.totalorder %s26, 0
    %p123 = por %p121, %p122
    %s125 = sadd.s32 %s124, 1
    %p128 = scmp.eq.s32.totalorder %s20, 1
    %p129 = scmp.ne.s32.totalorder %s124, %s126
    %p130 = scmp.eq.s32.totalorder %s20, 0
    %p131 = por %p129, %p130
    %p132 = scmp.ne.s32.totalorder %s124, %s126
    %p133 = scmp.eq.s32.totalorder %s25, 1
    %p134 = por %p132, %p133
    %p135 = scmp.ne.s32.totalorder %s126, %s127
    %p136 = scmp.eq.s32.totalorder %s25, 0
    %p137 = por %p135, %p136
    %p138 = scmp.ne.s32.totalorder %s126, %s127
    %p139 = scmp.eq.s32.totalorder %s26, 1
    %p140 = por %p138, %p139
    %p142 = scmp.ne.s32.totalorder %s127, %s141
    %p143 = scmp.eq.s32.totalorder %s26, 0
    %p144 = por %p142, %p143
    %s146 = sadd.s32 %s145, 1
    %p149 = scmp.eq.s32.totalorder %s20, 1
    %p150 = scmp.ne.s32.totalorder %s145, %s147
    %p151 = scmp.eq.s32.totalorder %s20, 0
    %p152 = por %p150, %p151
    %p153 = scmp.ne.s32.totalorder %s145, %s147
    %p154 = scmp.eq.s32.totalorder %s25, 1
    %p155 = por %p153, %p154
    %p156 = scmp.ne.s32.totalorder %s147, %s148
    %p157 = scmp.eq.s32.totalorder %s25, 0
    %p158 = por %p156, %p157
    %p159 = scmp.ne.s32.totalorder %s147, %s148
    %p160 = scmp.eq.s32.totalorder %s26, 1
    %p161 = por %p159, %p160
    %p163 = scmp.ne.s32.totalorder %s148, %s162
    %p164 = scmp.eq.s32.totalorder %s26, 0
    %p165 = por %p163, %p164
    %s167 = sadd.s32 %s166, 1
    %p170 = scmp.eq.s32.totalorder %s20, 1
    %p171 = scmp.ne.s32.totalorder %s166, %s168
    %p172 = scmp.eq.s32.totalorder %s20, 0
    %p173 = por %p171, %p172
    %p174 = scmp.ne.s32.totalorder %s166, %s168
    %p175 = scmp.eq.s32.totalorder %s25, 1
    %p176 = por %p174, %p175
    %p177 = scmp.ne.s32.totalorder %s168, %s169
    %p178 = scmp.eq.s32.totalorder %s25, 0
    %p179 = por %p177, %p178
    %p180 = scmp.ne.s32.totalorder %s168, %s169
    %p181 = scmp.eq.s32.totalorder %s26, 1
    %p182 = por %p180, %p181
    %p184 = scmp.ne.s32.totalorder %s169, %s183
    %p185 = scmp.eq.s32.totalorder %s26, 0
    %p186 = por %p184, %p185
    %s188 = sadd.s32 %s187, 1
    %p191 = scmp.eq.s32.totalorder %s20, 1
    %p192 = scmp.ne.s32.totalorder %s187, %s189
    %p193 = scmp.eq.s32.totalorder %s20, 0
    %p194 = por %p192, %p193
    %p195 = scmp.ne.s32.totalorder %s187, %s189
    %p196 = scmp.eq.s32.totalorder %s25, 1
    %p197 = por %p195, %p196
    %p198 = scmp.ne.s32.totalorder %s189, %s190
    %p199 = scmp.eq.s32.totalorder %s25, 0
    %p200 = por %p198, %p199
    %p201 = scmp.ne.s32.totalorder %s189, %s190
    %p202 = scmp.eq.s32.totalorder %s26, 1
    %p203 = por %p201, %p202
    %p205 = scmp.ne.s32.totalorder %s190, %s204
    %p206 = scmp.eq.s32.totalorder %s26, 0
    %p207 = por %p205, %p206
    %s209 = sadd.s32 %s208, 1
    %p212 = scmp.eq.s32.totalorder %s20, 1
    %p213 = scmp.ne.s32.totalorder %s208, %s210
    %p214 = scmp.eq.s32.totalorder %s20, 0
    %p215 = por %p213, %p214
    %p216 = scmp.ne.s32.totalorder %s208, %s210
    %p217 = scmp.eq.s32.totalorder %s25, 1
    %p218 = por %p216, %p217
    %p219 = scmp.ne.s32.totalorder %s210, %s211
    %p220 = scmp.eq.s32.totalorder %s25, 0
    %p221 = por %p219, %p220
    %p222 = scmp.ne.s32.totalorder %s210, %s211
    %p223 = scmp.eq.s32.totalorder %s26, 1
    %p224 = por %p222, %p223
    %p226 = scmp.ne.s32.totalorder %s211, %s225
    %p227 = scmp.eq.s32.totalorder %s26, 0
    %p228 = por %p226, %p227
    %s230 = sadd.s32 %s229, 1
    %p233 = scmp.eq.s32.totalorder %s20, 1
    %p234 = scmp.ne.s32.totalorder %s229, %s231
    %p235 = scmp.eq.s32.totalorder %s20, 0
    %p236 = por %p234, %p235
    %p237 = scmp.ne.s32.totalorder %s229, %s231
    %p238 = scmp.eq.s32.totalorder %s25, 1
    %p239 = por %p237, %p238
    %p240 = scmp.ne.s32.totalorder %s231, %s232
    %p241 = scmp.eq.s32.totalorder %s25, 0
    %p242 = por %p240, %p241
    %p243 = scmp.ne.s32.totalorder %s231, %s232
    %p244 = scmp.eq.s32.totalorder %s26, 1
    %p245 = por %p243, %p244
    %p247 = scmp.ne.s32.totalorder %s232, %s246
    %p248 = scmp.eq.s32.totalorder %s26, 0
    %p249 = por %p247, %p248
    %s251 = sadd.s32 %s250, 1
    %p254 = scmp.eq.s32.totalorder %s20, 1
    %p255 = scmp.ne.s32.totalorder %s250, %s252
    %p256 = scmp.eq.s32.totalorder %s20, 0
    %p257 = por %p255, %p256
    %p258 = scmp.ne.s32.totalorder %s250, %s252
    %p259 = scmp.eq.s32.totalorder %s25, 1
    %p260 = por %p258, %p259
    %p261 = scmp.ne.s32.totalorder %s252, %s253
    %p262 = scmp.eq.s32.totalorder %s25, 0
    %p263 = por %p261, %p262
    %p264 = scmp.ne.s32.totalorder %s252, %s253
    %p265 = scmp.eq.s32.totalorder %s26, 1
    %p266 = por %p264, %p265
    %p268 = scmp.ne.s32.totalorder %s253, %s267
    %p269 = scmp.eq.s32.totalorder %s26, 0
    %p270 = por %p268, %p269
    %s272 = sadd.s32 %s271, 1
    %p275 = scmp.eq.s32.totalorder %s20, 1
    %p276 = scmp.ne.s32.totalorder %s271, %s273
    %p277 = scmp.eq.s32.totalorder %s20, 0
    %p278 = por %p276, %p277
    %p279 = scmp.ne.s32.totalorder %s271, %s273
    %p280 = scmp.eq.s32.totalorder %s25, 1
    %p281 = por %p279, %p280
    %p282 = scmp.ne.s32.totalorder %s273, %s274
    %p283 = scmp.eq.s32.totalorder %s25, 0
    %p284 = por %p282, %p283
    %p285 = scmp.ne.s32.totalorder %s273, %s274
    %p286 = scmp.eq.s32.totalorder %s26, 1
    %p287 = por %p285, %p286
    %p289 = scmp.ne.s32.totalorder %s274, %s288
    %p290 = scmp.eq.s32.totalorder %s26, 0
    %p291 = por %p289, %p290
    %s293 = sadd.s32 %s292, 1
    %p296 = scmp.eq.s32.totalorder %s20, 1
    %p297 = scmp.ne.s32.totalorder %s292, %s294
    %p298 = scmp.eq.s32.totalorder %s20, 0
    %p299 = por %p297, %p298
    %p300 = scmp.ne.s32.totalorder %s292, %s294
    %p301 = scmp.eq.s32.totalorder %s25, 1
    %p302 = por %p300, %p301
    %p303 = scmp.ne.s32.totalorder %s294, %s295
    %p304 = scmp.eq.s32.totalorder %s25, 0
    %p305 = por %p303, %p304
    %p306 = scmp.ne.s32.totalorder %s294, %s295
    %p307 = scmp.eq.s32.totalorder %s26, 1
    %p308 = por %p306, %p307
    %p310 = scmp.ne.s32.totalorder %s295, %s309
    %p311 = scmp.eq.s32.totalorder %s26, 0
    %p312 = por %p310, %p311
    %s314 = sadd.s32 %s313, 1
    %p317 = scmp.eq.s32.totalorder %s20, 1
    %p318 = scmp.ne.s32.totalorder %s313, %s315
    %p319 = scmp.eq.s32.totalorder %s20, 0
    %p320 = por %p318, %p319
    %p321 = scmp.ne.s32.totalorder %s313, %s315
    %p322 = scmp.eq.s32.totalorder %s25, 1
    %p323 = por %p321, %p322
    %p324 = scmp.ne.s32.totalorder %s315, %s316
    %p325 = scmp.eq.s32.totalorder %s25, 0
    %p326 = por %p324, %p325
    %p327 = scmp.ne.s32.totalorder %s315, %s316
    %p328 = scmp.eq.s32.totalorder %s26, 1
    %p329 = por %p327, %p328
    %p331 = scmp.ne.s32.totalorder %s316, %s330
    %p332 = scmp.eq.s32.totalorder %s26, 0
    %p333 = por %p331, %p332
    %s335 = sadd.s32 %s334, 1
    %p338 = scmp.eq.s32.totalorder %s20, 1
    %p339 = scmp.ne.s32.totalorder %s334, %s336
    %p340 = scmp.eq.s32.totalorder %s20, 0
    %p341 = por %p339, %p340
    %p342 = scmp.ne.s32.totalorder %s334, %s336
    %p343 = scmp.eq.s32.totalorder %s25, 1
    %p344 = por %p342, %p343
    %p345 = scmp.ne.s32.totalorder %s336, %s337
    %p346 = scmp.eq.s32.totalorder %s25, 0
    %p347 = por %p345, %p346
    %p348 = scmp.ne.s32.totalorder %s336, %s337
    %p349 = scmp.eq.s32.totalorder %s26, 1
    %p350 = por %p348, %p349
    %p352 = scmp.ne.s32.totalorder %s337, %s351
    %p353 = scmp.eq.s32.totalorder %s26, 0
    %p354 = por %p352, %p353
    %s355 = ssub.s32 %s28, %s35
    %s356 = ssub.s32 %s27, %s39
    %s357 = sor.u32 %s355, %s356
    %p358 = scmp.eq.s32.totalorder %s357, 0
    %s360 = sadd.s32 %s359, 1
    %s361 = scalar_select %p358, %s359, %s360
    %p364 = pneg %p358
    %p365 = scmp.eq.s32.totalorder %s20, 1
    %p366 = por %p364, %p365
    %p367 = scmp.ne.s32.totalorder %s359, %s362
    %p368 = scmp.eq.s32.totalorder %s20, 0
    %p369 = por %p367, %p368
    %p370 = scmp.ne.s32.totalorder %s359, %s362
    %p371 = scmp.eq.s32.totalorder %s25, 1
    %p372 = por %p370, %p371
    %p373 = scmp.ne.s32.totalorder %s362, %s363
    %p374 = scmp.eq.s32.totalorder %s25, 0
    %p375 = por %p373, %p374
    %p376 = scmp.ne.s32.totalorder %s362, %s363
    %p377 = scmp.eq.s32.totalorder %s26, 1
    %p378 = por %p376, %p377
    %p380 = scmp.ne.s32.totalorder %s363, %s379
    %p381 = scmp.eq.s32.totalorder %s26, 0
    %p382 = por %p380, %p381
    %p383 = scmp.le.s32.totalorder 1, %s20
    %p384 = scmp.lt.s32.totalorder %s20, 3
    %p385 = pnand %p383, %p384
    %p386 = pneg %p385
    // Predicated region
    $region9: #{feature_correlator_forward.2} parent=5 // pred_check
      _
    $region10: #{feature_correlator_forward.2} parent=5 // pred_check_branch
      %388 = sbr.rel (%p385) target = $region12
    $region11: #{feature_correlator_forward.2} parent=5 // pred_region
      %s389 = ssub.s32 %s20, 1
      // Predicated region
      $region13: #{feature_correlator_forward.2} parent=11 // pred_check
        %p390 = pneg %p137
      $region14: #{feature_correlator_forward.2} parent=11 // pred_check_branch
        %392 = sbr.rel (%p390) target = $region16
      $region15: #{feature_correlator_forward.2} parent=11 // pred_region
        _
      $region16: #{feature_correlator_forward.2} parent=11 // pred_fallthru
        _
      // Predicated region
      $region17: #{feature_correlator_forward.2} parent=11 // pred_check
        %p393 = pneg %p158
      $region18: #{feature_correlator_forward.2} parent=11 // pred_check_branch
        %395 = sbr.rel (%p393) target = $region20
      $region19: #{feature_correlator_forward.2} parent=11 // pred_region
        _
      $region20: #{feature_correlator_forward.2} parent=11 // pred_fallthru
        _
      // Predicated region
      $region21: #{feature_correlator_forward.2} parent=11 // pred_check
        %p396 = pneg %p179
      $region22: #{feature_correlator_forward.2} parent=11 // pred_check_branch
        %398 = sbr.rel (%p396) target = $region24
      $region23: #{feature_correlator_forward.2} parent=11 // pred_region
        _
      $region24: #{feature_correlator_forward.2} parent=11 // pred_fallthru
        _
      // Predicated region
      $region25: #{feature_correlator_forward.2} parent=11 // pred_check
        %p399 = pneg %p200
      $region26: #{feature_correlator_forward.2} parent=11 // pred_check_branch
        %401 = sbr.rel (%p399) target = $region28
      $region27: #{feature_correlator_forward.2} parent=11 // pred_region
        _
      $region28: #{feature_correlator_forward.2} parent=11 // pred_fallthru
        _
      // Predicated region
      $region29: #{feature_correlator_forward.2} parent=11 // pred_check
        %p402 = pneg %p221
      $region30: #{feature_correlator_forward.2} parent=11 // pred_check_branch
        %404 = sbr.rel (%p402) target = $region32
      $region31: #{feature_correlator_forward.2} parent=11 // pred_region
        _
      $region32: #{feature_correlator_forward.2} parent=11 // pred_fallthru
        _
      // Predicated region
      $region33: #{feature_correlator_forward.2} parent=11 // pred_check
        %p405 = pneg %p242
      $region34: #{feature_correlator_forward.2} parent=11 // pred_check_branch
        %407 = sbr.rel (%p405) target = $region36
      $region35: #{feature_correlator_forward.2} parent=11 // pred_region
        _
      $region36: #{feature_correlator_forward.2} parent=11 // pred_fallthru
        _
      // Predicated region
      $region37: #{feature_correlator_forward.2} parent=11 // pred_check
        %p408 = pneg %p263
      $region38: #{feature_correlator_forward.2} parent=11 // pred_check_branch
        %410 = sbr.rel (%p408) target = $region40
      $region39: #{feature_correlator_forward.2} parent=11 // pred_region
        _
      $region40: #{feature_correlator_forward.2} parent=11 // pred_fallthru
        _
      // Predicated region
      $region41: #{feature_correlator_forward.2} parent=11 // pred_check
        %p411 = pneg %p284
      $region42: #{feature_correlator_forward.2} parent=11 // pred_check_branch
        %413 = sbr.rel (%p411) target = $region44
      $region43: #{feature_correlator_forward.2} parent=11 // pred_region
        _
      $region44: #{feature_correlator_forward.2} parent=11 // pred_fallthru
        _
      // Predicated region
      $region45: #{feature_correlator_forward.2} parent=11 // pred_check
        %p414 = pneg %p305
      $region46: #{feature_correlator_forward.2} parent=11 // pred_check_branch
        %416 = sbr.rel (%p414) target = $region48
      $region47: #{feature_correlator_forward.2} parent=11 // pred_region
        _
      $region48: #{feature_correlator_forward.2} parent=11 // pred_fallthru
        _
      // Predicated region
      $region49: #{feature_correlator_forward.2} parent=11 // pred_check
        %p417 = pneg %p326
      $region50: #{feature_correlator_forward.2} parent=11 // pred_check_branch
        %419 = sbr.rel (%p417) target = $region52
      $region51: #{feature_correlator_forward.2} parent=11 // pred_region
        _
      $region52: #{feature_correlator_forward.2} parent=11 // pred_fallthru
        _
      // Predicated region
      $region53: #{feature_correlator_forward.2} parent=11 // pred_check
        %p420 = pneg %p347
      $region54: #{feature_correlator_forward.2} parent=11 // pred_check_branch
        %422 = sbr.rel (%p420) target = $region56
      $region55: #{feature_correlator_forward.2} parent=11 // pred_region
        _
      $region56: #{feature_correlator_forward.2} parent=11 // pred_fallthru
        _
    $region12: #{feature_correlator_forward.2} parent=5 // pred_fallthru
      _
    %p423 = scmp.lt.s32.totalorder %s20, 2
    // Predicated region
    $region57: #{feature_correlator_forward.2} parent=5 // pred_check
      %p424 = pneg %p423
    $region58: #{feature_correlator_forward.2} parent=5 // pred_check_branch
      %426 = sbr.rel (%p424) target = $region60
    $region59: #{feature_correlator_forward.2} parent=5 // pred_region
      // Predicated region
      $region61: #{feature_correlator_forward.2} parent=59 // pred_check
        %p427 = pneg %p54
      $region62: #{feature_correlator_forward.2} parent=59 // pred_check_branch
        %429 = sbr.rel (%p427) target = $region64
      $region63: #{feature_correlator_forward.2} parent=59 // pred_region
        %s430 = smul.u32 2, %s27
        %p431 = scmp.lt.s32.totalorder %s28, 1
        %s432 = scalar_select %p431, %s28, 1
        %p433 = scmp.lt.s32.totalorder %s430, 1
        %s434 = scalar_select %p433, %s430, 1
        %s435 = smul.addr %s432, 32
        %s436 = sadd.s32 %s434, %s435
        %s437 = smul.addr %s436, 4
        %s438 = scalar_lea.vmem %s0, %s437
        %s439 = smul.u32 2, %s27
      $region64: #{feature_correlator_forward.2} parent=59 // pred_fallthru
        _
      // Predicated region
      $region65: #{feature_correlator_forward.2} parent=59 // pred_check
        %p440 = pneg %p82
      $region66: #{feature_correlator_forward.2} parent=59 // pred_check_branch
        %442 = sbr.rel (%p440) target = $region68
      $region67: #{feature_correlator_forward.2} parent=59 // pred_region
        %s443 = smul.u32 2, %s27
        %p444 = scmp.lt.s32.totalorder %s28, 1
        %s445 = scalar_select %p444, %s28, 1
        %p446 = scmp.lt.s32.totalorder %s443, 1
        %s447 = scalar_select %p446, %s443, 1
        %s448 = smul.addr %s445, 16
        %s449 = sadd.s32 %s447, %s448
        %s450 = smul.addr %s449, 2
        %s451 = scalar_lea.vmem %s1, %s450
        %s452 = smul.u32 2, %s27
      $region68: #{feature_correlator_forward.2} parent=59 // pred_fallthru
        _
      // Predicated region
      $region69: #{feature_correlator_forward.2} parent=59 // pred_check
        %p453 = pneg %p110
      $region70: #{feature_correlator_forward.2} parent=59 // pred_check_branch
        %455 = sbr.rel (%p453) target = $region72
      $region71: #{feature_correlator_forward.2} parent=59 // pred_region
        %s456 = smul.u32 2, %s27
        %p457 = scmp.lt.s32.totalorder %s28, 1
        %s458 = scalar_select %p457, %s28, 1
        %p459 = scmp.lt.s32.totalorder %s456, 1
        %s460 = scalar_select %p459, %s456, 1
        %s461 = smul.addr %s458, 2
        %s462 = sadd.s32 %s460, %s461
        %s463 = smul.addr %s462, 4
        %s464 = scalar_lea.vmem %s2, %s463
        %s465 = smul.u32 2, %s27
      $region72: #{feature_correlator_forward.2} parent=59 // pred_fallthru
        _
    $region60: #{feature_correlator_forward.2} parent=5 // pred_fallthru
      _
    %p466 = scmp.le.s32.totalorder 1, %s20
    %p467 = scmp.lt.s32.totalorder %s20, 3
    %p468 = pnand %p466, %p467
    %p469 = pneg %p468
    // Predicated region
    $region73: #{feature_correlator_forward.2} parent=5 // pred_check
      _
    $region74: #{feature_correlator_forward.2} parent=5 // pred_check_branch
      %471 = sbr.rel (%p468) target = $region76
    $region75: #{feature_correlator_forward.2} parent=5 // pred_region
      %s472 = ssub.s32 %s20, 1
      %s473 = smul.u32 2, %s29
      %p474 = scmp.lt.s32.totalorder %s30, 1
      %s475 = scalar_select %p474, %s30, 1
      %p476 = scmp.lt.s32.totalorder %s473, 1
      %s477 = scalar_select %p476, %s473, 1
      %s478 = smul.addr %s475, 32
      %s479 = sadd.s32 %s477, %s478
      %s480 = smul.addr %s479, 4
      %s481 = scalar_lea.vmem %s0, %s480
      %p482 = pneg %p60
      %p483 = pneg %p57
      %s484 = smul.u32 2, %s29
      %p485 = scmp.lt.s32.totalorder %s30, 1
      %s486 = scalar_select %p485, %s30, 1
      %p487 = scmp.lt.s32.totalorder %s484, 1
      %s488 = scalar_select %p487, %s484, 1
      %s489 = smul.addr %s486, 16
      %s490 = sadd.s32 %s488, %s489
      %s491 = smul.addr %s490, 2
      %s492 = scalar_lea.vmem %s1, %s491
      %p493 = pneg %p88
      %p494 = pneg %p85
      %s495 = smul.u32 2, %s29
      %p496 = scmp.lt.s32.totalorder %s30, 1
      %s497 = scalar_select %p496, %s30, 1
      %p498 = scmp.lt.s32.totalorder %s495, 1
      %s499 = scalar_select %p498, %s495, 1
      %s500 = smul.addr %s497, 2
      %s501 = sadd.s32 %s499, %s500
      %s502 = smul.addr %s501, 4
      %s503 = scalar_lea.vmem %s2, %s502
      %p504 = pneg %p116
      %p505 = pneg %p113
      %p506 = pneg %p137
      %p507 = pneg %p134
      %p508 = pneg %p158
      %p509 = pneg %p155
      %p510 = pneg %p179
      %p511 = pneg %p176
      %p512 = pneg %p200
      %p513 = pneg %p197
      %p514 = pneg %p221
      %p515 = pneg %p218
      %p516 = pneg %p242
      %p517 = pneg %p239
      %p518 = pneg %p263
      %p519 = pneg %p260
      %p520 = pneg %p284
      %p521 = pneg %p281
      %p522 = pneg %p305
      %p523 = pneg %p302
      %p524 = pneg %p326
      %p525 = pneg %p323
      %p526 = pneg %p347
      %p527 = pneg %p344
      %p528 = pneg %p375
      %p529 = pneg %p372
      %s530 = smul.u32 2, %s29
      %p531 = scmp.lt.s32.totalorder %s30, 1
      %s532 = scalar_select %p531, %s30, 1
      %p533 = scmp.lt.s32.totalorder %s530, 1
      %s534 = scalar_select %p533, %s530, 1
      %s535 = smul.addr %s532, 4
      %s536 = sadd.s32 %s534, %s535
      %s537 = smul.addr %s536, 4
      %s538 = scalar_lea.vmem %s14, %s537
      %s539 = smul.u32 2, %s29
      %p540 = scmp.lt.s32.totalorder %s30, 1
      %s541 = scalar_select %p540, %s30, 1
      %p542 = scmp.lt.s32.totalorder %s539, 1
      %s543 = scalar_select %p542, %s539, 1
      %s544 = smul.addr %s541, 32
      %s545 = sadd.s32 %s543, %s544
      %s546 = smul.addr %s545, 4
      %s547 = scalar_lea.vmem %s0, %s546
      %s548 = smul.u32 2, %s29
      %s549 = smul.u32 2, %s29
      %p550 = scmp.lt.s32.totalorder %s30, 1
      %s551 = scalar_select %p550, %s30, 1
      %p552 = scmp.lt.s32.totalorder %s549, 1
      %s553 = scalar_select %p552, %s549, 1
      %s554 = smul.addr %s551, 16
      %s555 = sadd.s32 %s553, %s554
      %s556 = smul.addr %s555, 2
      %s557 = scalar_lea.vmem %s1, %s556
      %s558 = smul.u32 2, %s29
      %s559 = smul.u32 2, %s29
      %p560 = scmp.lt.s32.totalorder %s30, 1
      %s561 = scalar_select %p560, %s30, 1
      %p562 = scmp.lt.s32.totalorder %s559, 1
      %s563 = scalar_select %p562, %s559, 1
      %s564 = smul.addr %s561, 2
      %s565 = sadd.s32 %s563, %s564
      %s566 = smul.addr %s565, 4
      %s567 = scalar_lea.vmem %s2, %s566
      %s568 = smul.u32 2, %s29
      %s569 = smul.u32 2, %s29
      %p570 = scmp.lt.s32.totalorder %s30, 1
      %s571 = scalar_select %p570, %s30, 1
      %p572 = scmp.lt.s32.totalorder %s569, 1
      %s573 = scalar_select %p572, %s569, 1
      %s574 = smul.addr %s571, 4
      %s575 = sadd.s32 %s573, %s574
      %s576 = smul.addr %s575, 4
      %s577 = scalar_lea.vmem %s14, %s576
      %s578 = smul.u32 2, %s29
      %v580 = vld [vmem:[%s4] sm:$0xf]
      %v581 = vld [vmem:[%s4 + $0x4] sm:$0xf]
      %v582 = vld [vmem:[%s6] sm:$0xf]
      %v583 = vld [vmem:[%s6 + $0x4] sm:$0xf]
      %v584 = vld [vmem:[%s5] sm:$0xff]
      %v585 = vld [vmem:[%s5 + $0x8] sm:$0xff]
      %v586 = vld [vmem:[%s7] sm:$0xff]
      %v587 = vld [vmem:[%s7 + $0x8] sm:$0xff]
      %v588 = vld [vmem:[%s8] sm:$0xf]
      %v589 = vld [vmem:[%s10] sm:$0xf]
      %v590 = vld [vmem:[%s12] sm:$0xf]
      %v591 = vld [vmem:[%s12 + $0x4] sm:$0xf]
      %v592 = vld [vmem:[%s9] sm:$0xff]
      %v593 = vld [vmem:[%s11] sm:$0xff]
      %v594 = vld [vmem:[%s13] sm:$0xff]
      %v595 = vld [vmem:[%s13 + $0x8] sm:$0xff]
      %v596 = vld [vmem:[%s3] sm:$0xf]
      %v597 = vld [vmem:[%s3 + $0x4] sm:$0xf]
      %v598 = vld [vmem:[%s567] sm:$0xff]
      %v601 = vunpack.c.l.b16 %v596
      %v602 = vunpack.c.l.b16 %v597
      %v603 = vpack.c.b16 %v602, %v601
      %v605 = vunpack.c.l.b16 %v598
      %v606 = vunpack.c.h.b16 %v598
      %v607 = vpack.c.b16 %v605, %v605
      %v608 = vpack.c.b16 %v606, %v606
      %vm609 = vcmask 64512
      %v611 = vsel %vm609, %v603, 0
      %vm613 = vcmask 1043456
      %v615 = vsel %vm613, %v607, 0
      %v618 = vsel %vm613, %v608, 0
      %620 = vmatprep.subr.bf16.mxu0 %v618
      %621 = vmatpush1.bf16.msra.mxu0 %v615
      %622 = vmatprep.subr.bf16.mxu0 0
      %623 = vmatpush1.bf16.msra.mxu0 0
      %624 = vmatprep.subr.bf16.mxu0 0
      %625 = vmatpush1.bf16.msra.mxu0 0
      %626 = vmatprep.subr.bf16.mxu0 0
      %627 = vmatpush1.bf16.msra.mxu0 0
      %628 = vmatprep.subr.bf16.mxu0 0
      %629 = vmatpush1.bf16.msra.mxu0 0
      %630 = vmatprep.subr.bf16.mxu0 0
      %631 = vmatpush1.bf16.msra.mxu0 0
      %632 = vmatprep.subr.bf16.mxu0 0
      %633 = vmatpush1.bf16.msra.mxu0 0
      %634 = vmatprep.subr.bf16.mxu0 0
      %635 = vmatpush1.bf16.msra.mxu0 0
      %636 = vmatprep.subr.bf16.mxu0 0
      %637 = vmatpush1.bf16.msra.mxu0 0
      %638 = vmatprep.subr.bf16.mxu0 0
      %639 = vmatpush1.bf16.msra.mxu0 0
      %640 = vmatprep.subr.bf16.mxu0 0
      %641 = vmatpush1.bf16.msra.mxu0 0
      %642 = vmatprep.subr.bf16.mxu0 0
      %643 = vmatpush1.bf16.msra.mxu0 0
      %644 = vmatprep.subr.bf16.mxu0 0
      %645 = vmatpush1.bf16.msra.mxu0 0
      %646 = vmatprep.subr.bf16.mxu0 0
      %647 = vmatpush1.bf16.msra.mxu0 0
      %648 = vmatprep.subr.bf16.mxu0 0
      %649 = vmatpush1.bf16.msra.mxu0 0
      %650 = vmatprep.subr.bf16.mxu0 0
      %651 = vmatpush1.bf16.msra.mxu0 0
      %652 = vmatprep.mubr.bf16.mxu0 0
      %653 = vmatmul.mubr.bf16.gmra.mrb[0].mxu0 %v611
      %v654 = vpop.f32.mrb[0].mxu0
      %v655 = vadd.f32 0.0, %v654
      %v656 = vpop.f32.mrb[0].mxu0
      %v657 = vadd.f32 0.0, %v656
      %v658 = vpop.f32.mrb[0].mxu0
      %v659 = vadd.f32 0.0, %v658
      %v660 = vpop.f32.mrb[0].mxu0
      %v661 = vadd.f32 0.0, %v660
      %662 = vdwg.mxu0
      %v663 = vld [vmem:[%s547] sm:$0xff]
      %v664 = vld [vmem:[%s547 + $0x8] sm:$0x33]
      %666 = vset.pattern.permute.xlu0 0
      %667 = vperm.xlu0 %666, %v584
      %v668 = vpop.permute.xlu0 %667
      %671 = vset.pattern.permute.xlu0 0
      %672 = vperm.xlu0 %671, %v585
      %v673 = vpop.permute.xlu0 %672
      %v677 = vunpack.c.l.b16 %v580
      %v678 = vunpack.c.l.b16 %v581
      %v679 = vpack.c.b16 %v678, %v677
      %v682 = vunpack.c.l.b16 %v663
      %v683 = vunpack.c.h.b16 %v663
      %v684 = vunpack.c.l.b16 %v664
      %v685 = vunpack.c.h.b16 %v664
      %v686 = vpack.c.b16 %v684, %v682
      %v687 = vpack.c.b16 %v685, %v683
      %vm688 = vcmask 89088
      %v690 = vsel %vm688, %v679, 0
      %vm692 = vcmask 1044480
      %vm693 = vcmask 1045504
      %v694 = vsel %vm692, 4294967295, 65535
      %v695 = vsel %vm693, %v694, 0
      %v697 = vand.u32 %v686, %v695
      %v700 = vand.u32 %v687, %v695
      %702 = vmatprep.subr.bf16.mxu0 %v700
      %703 = vmatpush1.bf16.msra.mxu0 %v697
      %704 = vmatprep.subr.bf16.mxu0 0
      %705 = vmatpush1.bf16.msra.mxu0 0
      %706 = vmatprep.subr.bf16.mxu0 0
      %707 = vmatpush1.bf16.msra.mxu0 0
      %708 = vmatprep.subr.bf16.mxu0 0
      %709 = vmatpush1.bf16.msra.mxu0 0
      %710 = vmatprep.subr.bf16.mxu0 0
      %711 = vmatpush1.bf16.msra.mxu0 0
      %712 = vmatprep.subr.bf16.mxu0 0
      %713 = vmatpush1.bf16.msra.mxu0 0
      %714 = vmatprep.subr.bf16.mxu0 0
      %715 = vmatpush1.bf16.msra.mxu0 0
      %716 = vmatprep.subr.bf16.mxu0 0
      %717 = vmatpush1.bf16.msra.mxu0 0
      %718 = vmatprep.subr.bf16.mxu0 0
      %719 = vmatpush1.bf16.msra.mxu0 0
      %720 = vmatprep.subr.bf16.mxu0 0
      %721 = vmatpush1.bf16.msra.mxu0 0
      %722 = vmatprep.subr.bf16.mxu0 0
      %723 = vmatpush1.bf16.msra.mxu0 0
      %724 = vmatprep.subr.bf16.mxu0 0
      %725 = vmatpush1.bf16.msra.mxu0 0
      %726 = vmatprep.subr.bf16.mxu0 0
      %727 = vmatpush1.bf16.msra.mxu0 0
      %728 = vmatprep.subr.bf16.mxu0 0
      %729 = vmatpush1.bf16.msra.mxu0 0
      %730 = vmatprep.subr.bf16.mxu0 0
      %731 = vmatpush1.bf16.msra.mxu0 0
      %732 = vmatprep.subr.bf16.mxu0 0
      %733 = vmatpush1.bf16.msra.mxu0 0
      %734 = vmatprep.mubr.bf16.mxu0 0
      %735 = vmatmul.mubr.bf16.gmra.mrb[0].mxu0 %v690
      %v736 = vpop.f32.mrb[0].mxu0
      %v737 = vadd.f32 %v668, %v736
      %v738 = vpop.f32.mrb[0].mxu0
      %v739 = vadd.f32 %v668, %v738
      %v740 = vpop.f32.mrb[0].mxu0
      %v741 = vadd.f32 %v673, %v740
      %v742 = vpop.f32.mrb[0].mxu0
      %v743 = vadd.f32 %v673, %v742
      %744 = vdwg.mxu0
      %v745 = vadd.f32 %v737, %v655
      %v746 = vadd.f32 %v739, %v657
      %v747 = vadd.f32 %v741, %v659
      %v748 = vadd.f32 %v743, %v661
      %v749 = vmul.f32 %v745, 0.1
      %v750 = vmul.f32 %v746, 0.1
      %v751 = vmul.f32 %v747, 0.1
      %v752 = vmul.f32 %v748, 0.1
      %v753 = vmax.f32 %v745, %v749
      %v754 = vmax.f32 %v746, %v750
      %v755 = vmax.f32 %v747, %v751
      %v756 = vmax.f32 %v748, %v752
      %v757 = vpack.c.bf16 %v755, %v753
      %v758 = vpack.c.bf16 %v756, %v754
      %760 = vset.pattern.permute.xlu0 0
      %761 = vperm.xlu0 %760, %v586
      %v762 = vpop.permute.xlu0 %761
      %765 = vset.pattern.permute.xlu0 0
      %766 = vperm.xlu0 %765, %v587
      %v767 = vpop.permute.xlu0 %766
      %v771 = vunpack.c.l.b16 %v582
      %v772 = vunpack.c.l.b16 %v583
      %v773 = vpack.c.b16 %v772, %v771
      %vm774 = vcmask 130048
      %v776 = vsel %vm774, %v773, 0
      %778 = vmatprep.subr.bf16.mxu0 %v758
      %779 = vmatpush1.bf16.msra.mxu0 %v757
      %780 = vmatprep.subr.bf16.mxu0 0
      %781 = vmatpush1.bf16.msra.mxu0 0
      %782 = vmatprep.subr.bf16.mxu0 0
      %783 = vmatpush1.bf16.msra.mxu0 0
      %784 = vmatprep.subr.bf16.mxu0 0
      %785 = vmatpush1.bf16.msra.mxu0 0
      %786 = vmatprep.subr.bf16.mxu0 0
      %787 = vmatpush1.bf16.msra.mxu0 0
      %788 = vmatprep.subr.bf16.mxu0 0
      %789 = vmatpush1.bf16.msra.mxu0 0
      %790 = vmatprep.subr.bf16.mxu0 0
      %791 = vmatpush1.bf16.msra.mxu0 0
      %792 = vmatprep.subr.bf16.mxu0 0
      %793 = vmatpush1.bf16.msra.mxu0 0
      %794 = vmatprep.subr.bf16.mxu0 0
      %795 = vmatpush1.bf16.msra.mxu0 0
      %796 = vmatprep.subr.bf16.mxu0 0
      %797 = vmatpush1.bf16.msra.mxu0 0
      %798 = vmatprep.subr.bf16.mxu0 0
      %799 = vmatpush1.bf16.msra.mxu0 0
      %800 = vmatprep.subr.bf16.mxu0 0
      %801 = vmatpush1.bf16.msra.mxu0 0
      %802 = vmatprep.subr.bf16.mxu0 0
      %803 = vmatpush1.bf16.msra.mxu0 0
      %804 = vmatprep.subr.bf16.mxu0 0
      %805 = vmatpush1.bf16.msra.mxu0 0
      %806 = vmatprep.subr.bf16.mxu0 0
      %807 = vmatpush1.bf16.msra.mxu0 0
      %808 = vmatprep.subr.bf16.mxu0 0
      %809 = vmatpush1.bf16.msra.mxu0 0
      %810 = vmatprep.mubr.bf16.mxu0 0
      %811 = vmatmul.mubr.bf16.gmra.mrb[0].mxu0 %v776
      %v812 = vpop.f32.mrb[0].mxu0
      %v813 = vadd.f32 %v762, %v812
      %v814 = vpop.f32.mrb[0].mxu0
      %v815 = vadd.f32 %v762, %v814
      %v816 = vpop.f32.mrb[0].mxu0
      %v817 = vadd.f32 %v767, %v816
      %v818 = vpop.f32.mrb[0].mxu0
      %v819 = vadd.f32 %v767, %v818
      %820 = vdwg.mxu0
      %v821 = vmul.f32 %v813, 0.1
      %v822 = vmul.f32 %v815, 0.1
      %v823 = vmul.f32 %v817, 0.1
      %v824 = vmul.f32 %v819, 0.1
      %v825 = vmax.f32 %v813, %v821
      %v826 = vmax.f32 %v815, %v822
      %v827 = vmax.f32 %v817, %v823
      %v828 = vmax.f32 %v819, %v824
      %v829 = vld [vmem:[%s557] sm:$0xf]
      %831 = vset.pattern.permute.xlu0 0
      %832 = vperm.xlu0 %831, %v592
      %v833 = vpop.permute.xlu0 %832
      %v837 = vunpack.c.l.s4 1983009808
      %v838 = vunpack.c.0.s8 %v837
      %v839 = vlaneseq
      %v840 = vshrl.u32 %v839, 7
      %v841 = vsub.s32 %v838, %v840
      %v842 = vrot.slane %v829, %v841
      %v843 = vcombine.high %v842, %v842
      %vm844 = vcmask 23552
      %v846 = vsel %vm844, %v588, 0
      %vm848 = vcmask 1040384
      %vm849 = vcmask 1041408
      %v850 = vsel %vm848, 4294967295, 65535
      %v851 = vsel %vm849, %v850, 0
      %v853 = vand.u32 %v842, %v851
      %v856 = vand.u32 %v843, %v851
      %858 = vmatprep.subr.bf16.mxu0 %v856
      %859 = vmatpush1.bf16.msra.mxu0 %v853
      %860 = vmatprep.subr.bf16.mxu0 0
      %861 = vmatpush1.bf16.msra.mxu0 0
      %862 = vmatprep.subr.bf16.mxu0 0
      %863 = vmatpush1.bf16.msra.mxu0 0
      %864 = vmatprep.subr.bf16.mxu0 0
      %865 = vmatpush1.bf16.msra.mxu0 0
      %866 = vmatprep.subr.bf16.mxu0 0
      %867 = vmatpush1.bf16.msra.mxu0 0
      %868 = vmatprep.subr.bf16.mxu0 0
      %869 = vmatpush1.bf16.msra.mxu0 0
      %870 = vmatprep.subr.bf16.mxu0 0
      %871 = vmatpush1.bf16.msra.mxu0 0
      %872 = vmatprep.subr.bf16.mxu0 0
      %873 = vmatpush1.bf16.msra.mxu0 0
      %874 = vmatprep.subr.bf16.mxu0 0
      %875 = vmatpush1.bf16.msra.mxu0 0
      %876 = vmatprep.subr.bf16.mxu0 0
      %877 = vmatpush1.bf16.msra.mxu0 0
      %878 = vmatprep.subr.bf16.mxu0 0
      %879 = vmatpush1.bf16.msra.mxu0 0
      %880 = vmatprep.subr.bf16.mxu0 0
      %881 = vmatpush1.bf16.msra.mxu0 0
      %882 = vmatprep.subr.bf16.mxu0 0
      %883 = vmatpush1.bf16.msra.mxu0 0
      %884 = vmatprep.subr.bf16.mxu0 0
      %885 = vmatpush1.bf16.msra.mxu0 0
      %886 = vmatprep.subr.bf16.mxu0 0
      %887 = vmatpush1.bf16.msra.mxu0 0
      %888 = vmatprep.subr.bf16.mxu0 0
      %889 = vmatpush1.bf16.msra.mxu0 0
      %890 = vmatprep.mubr.bf16.mxu0 0
      %891 = vmatmul.mubr.bf16.gmra.mrb[0].mxu0 %v846
      %v892 = vpop.f32.mrb[0].mxu0
      %v893 = vadd.f32 %v833, %v892
      %v894 = vpop.f32.mrb[0].mxu0
      %v895 = vadd.f32 %v833, %v894
      %v896 = vpop.f32.mrb[0].mxu0
      %v897 = vpop.f32.mrb[0].mxu0
      %898 = vdwg.mxu0
      %v899 = vmax.f32 %v893, 0.0
      %v900 = vmax.f32 %v895, 0.0
      %v901 = vpack.c.bf16 %v899, %v899
      %v902 = vpack.c.bf16 %v900, %v900
      %904 = vset.pattern.permute.xlu0 0
      %905 = vperm.xlu0 %904, %v593
      %v906 = vpop.permute.xlu0 %905
      %v909 = vsel %vm609, %v589, 0
      %v912 = vsel %vm613, %v901, 0
      %v915 = vsel %vm613, %v902, 0
      %917 = vmatprep.subr.bf16.mxu0 %v915
      %918 = vmatpush1.bf16.msra.mxu0 %v912
      %919 = vmatprep.subr.bf16.mxu0 0
      %920 = vmatpush1.bf16.msra.mxu0 0
      %921 = vmatprep.subr.bf16.mxu0 0
      %922 = vmatpush1.bf16.msra.mxu0 0
      %923 = vmatprep.subr.bf16.mxu0 0
      %924 = vmatpush1.bf16.msra.mxu0 0
      %925 = vmatprep.subr.bf16.mxu0 0
      %926 = vmatpush1.bf16.msra.mxu0 0
      %927 = vmatprep.subr.bf16.mxu0 0
      %928 = vmatpush1.bf16.msra.mxu0 0
      %929 = vmatprep.subr.bf16.mxu0 0
      %930 = vmatpush1.bf16.msra.mxu0 0
      %931 = vmatprep.subr.bf16.mxu0 0
      %932 = vmatpush1.bf16.msra.mxu0 0
      %933 = vmatprep.subr.bf16.mxu0 0
      %934 = vmatpush1.bf16.msra.mxu0 0
      %935 = vmatprep.subr.bf16.mxu0 0
      %936 = vmatpush1.bf16.msra.mxu0 0
      %937 = vmatprep.subr.bf16.mxu0 0
      %938 = vmatpush1.bf16.msra.mxu0 0
      %939 = vmatprep.subr.bf16.mxu0 0
      %940 = vmatpush1.bf16.msra.mxu0 0
      %941 = vmatprep.subr.bf16.mxu0 0
      %942 = vmatpush1.bf16.msra.mxu0 0
      %943 = vmatprep.subr.bf16.mxu0 0
      %944 = vmatpush1.bf16.msra.mxu0 0
      %945 = vmatprep.subr.bf16.mxu0 0
      %946 = vmatpush1.bf16.msra.mxu0 0
      %947 = vmatprep.subr.bf16.mxu0 0
      %948 = vmatpush1.bf16.msra.mxu0 0
      %949 = vmatprep.mubr.bf16.mxu0 0
      %950 = vmatmul.mubr.bf16.gmra.mrb[0].mxu0 %v909
      %v951 = vpop.f32.mrb[0].mxu0
      %v952 = vadd.f32 %v906, %v951
      %v953 = vpop.f32.mrb[0].mxu0
      %v954 = vadd.f32 %v906, %v953
      %v955 = vpop.f32.mrb[0].mxu0
      %v956 = vpop.f32.mrb[0].mxu0
      %957 = vdwg.mxu0
      %v958 = vmax.f32 %v952, 0.0
      %v959 = vmax.f32 %v954, 0.0
      %v960 = vpack.c.bf16 %v958, %v958
      %v961 = vpack.c.bf16 %v959, %v959
      %963 = vset.pattern.permute.xlu0 0
      %964 = vperm.xlu0 %963, %v594
      %v965 = vpop.permute.xlu0 %964
      %968 = vset.pattern.permute.xlu0 0
      %969 = vperm.xlu0 %968, %v595
      %v970 = vpop.permute.xlu0 %969
      %v974 = vunpack.c.l.b16 %v590
      %v975 = vunpack.c.l.b16 %v591
      %v976 = vpack.c.b16 %v975, %v974
      %v978 = vsel %vm609, %v976, 0
      %v981 = vsel %vm613, %v960, 0
      %v984 = vsel %vm613, %v961, 0
      %986 = vmatprep.subr.bf16.mxu0 %v984
      %987 = vmatpush1.bf16.msra.mxu0 %v981
      %988 = vmatprep.subr.bf16.mxu0 0
      %989 = vmatpush1.bf16.msra.mxu0 0
      %990 = vmatprep.subr.bf16.mxu0 0
      %991 = vmatpush1.bf16.msra.mxu0 0
      %992 = vmatprep.subr.bf16.mxu0 0
      %993 = vmatpush1.bf16.msra.mxu0 0
      %994 = vmatprep.subr.bf16.mxu0 0
      %995 = vmatpush1.bf16.msra.mxu0 0
      %996 = vmatprep.subr.bf16.mxu0 0
      %997 = vmatpush1.bf16.msra.mxu0 0
      %998 = vmatprep.subr.bf16.mxu0 0
      %999 = vmatpush1.bf16.msra.mxu0 0
      %1000 = vmatprep.subr.bf16.mxu0 0
      %1001 = vmatpush1.bf16.msra.mxu0 0
      %1002 = vmatprep.subr.bf16.mxu0 0
      %1003 = vmatpush1.bf16.msra.mxu0 0
      %1004 = vmatprep.subr.bf16.mxu0 0
      %1005 = vmatpush1.bf16.msra.mxu0 0
      %1006 = vmatprep.subr.bf16.mxu0 0
      %1007 = vmatpush1.bf16.msra.mxu0 0
      %1008 = vmatprep.subr.bf16.mxu0 0
      %1009 = vmatpush1.bf16.msra.mxu0 0
      %1010 = vmatprep.subr.bf16.mxu0 0
      %1011 = vmatpush1.bf16.msra.mxu0 0
      %1012 = vmatprep.subr.bf16.mxu0 0
      %1013 = vmatpush1.bf16.msra.mxu0 0
      %1014 = vmatprep.subr.bf16.mxu0 0
      %1015 = vmatpush1.bf16.msra.mxu0 0
      %1016 = vmatprep.subr.bf16.mxu0 0
      %1017 = vmatpush1.bf16.msra.mxu0 0
      %1018 = vmatprep.mubr.bf16.mxu0 0
      %1019 = vmatmul.mubr.bf16.gmra.mrb[0].mxu0 %v978
      %v1020 = vpop.f32.mrb[0].mxu0
      %v1021 = vadd.f32 %v965, %v1020
      %v1022 = vpop.f32.mrb[0].mxu0
      %v1023 = vadd.f32 %v965, %v1022
      %v1024 = vpop.f32.mrb[0].mxu0
      %v1025 = vadd.f32 %v970, %v1024
      %v1026 = vpop.f32.mrb[0].mxu0
      %v1027 = vadd.f32 %v970, %v1026
      %1028 = vdwg.mxu0
      %v1029 = vmax.f32 %v1021, 0.0
      %v1030 = vmax.f32 %v1023, 0.0
      %v1031 = vmax.f32 %v1025, 0.0
      %v1032 = vmax.f32 %v1027, 0.0
      %v1033 = vmul.f32 %v1029, %v825
      %v1034 = vmul.f32 %v1030, %v826
      %v1035 = vmul.f32 %v1031, %v827
      %v1036 = vmul.f32 %v1032, %v828
      %v1037 = vadd.f32 %v1033, 0.0
      %v1038 = vadd.f32 %v1034, 0.0
      %v1039 = vadd.f32 %v1035, 0.0
      %v1040 = vadd.f32 %v1036, 0.0
      %s1041 = scalar_lea.vmem %s547, 16
      %v1042 = vld [vmem:[%s1041] sm:$0xff]
      %v1043 = vld [vmem:[%s1041 + $0x8] sm:$0x33]
      %v1046 = vunpack.c.l.b16 %v1042
      %v1047 = vunpack.c.h.b16 %v1042
      %v1048 = vunpack.c.l.b16 %v1043
      %v1049 = vunpack.c.h.b16 %v1043
      %v1050 = vpack.c.b16 %v1048, %v1046
      %v1051 = vpack.c.b16 %v1049, %v1047
      %v1053 = vand.u32 %v1050, %v695
      %v1056 = vand.u32 %v1051, %v695
      %1058 = vmatprep.subr.bf16.mxu0 %v1056
      %1059 = vmatpush1.bf16.msra.mxu0 %v1053
      %1060 = vmatprep.subr.bf16.mxu0 0
      %1061 = vmatpush1.bf16.msra.mxu0 0
      %1062 = vmatprep.subr.bf16.mxu0 0
      %1063 = vmatpush1.bf16.msra.mxu0 0
      %1064 = vmatprep.subr.bf16.mxu0 0
      %1065 = vmatpush1.bf16.msra.mxu0 0
      %1066 = vmatprep.subr.bf16.mxu0 0
      %1067 = vmatpush1.bf16.msra.mxu0 0
      %1068 = vmatprep.subr.bf16.mxu0 0
      %1069 = vmatpush1.bf16.msra.mxu0 0
      %1070 = vmatprep.subr.bf16.mxu0 0
      %1071 = vmatpush1.bf16.msra.mxu0 0
      %1072 = vmatprep.subr.bf16.mxu0 0
      %1073 = vmatpush1.bf16.msra.mxu0 0
      %1074 = vmatprep.subr.bf16.mxu0 0
      %1075 = vmatpush1.bf16.msra.mxu0 0
      %1076 = vmatprep.subr.bf16.mxu0 0
      %1077 = vmatpush1.bf16.msra.mxu0 0
      %1078 = vmatprep.subr.bf16.mxu0 0
      %1079 = vmatpush1.bf16.msra.mxu0 0
      %1080 = vmatprep.subr.bf16.mxu0 0
      %1081 = vmatpush1.bf16.msra.mxu0 0
      %1082 = vmatprep.subr.bf16.mxu0 0
      %1083 = vmatpush1.bf16.msra.mxu0 0
      %1084 = vmatprep.subr.bf16.mxu0 0
      %1085 = vmatpush1.bf16.msra.mxu0 0
      %1086 = vmatprep.subr.bf16.mxu0 0
      %1087 = vmatpush1.bf16.msra.mxu0 0
      %1088 = vmatprep.subr.bf16.mxu0 0
      %1089 = vmatpush1.bf16.msra.mxu0 0
      %1090 = vmatprep.mubr.bf16.mxu0 0
      %1091 = vmatmul.mubr.bf16.gmra.mrb[0].mxu0 %v690
      %v1092 = vpop.f32.mrb[0].mxu0
      %v1093 = vadd.f32 %v668, %v1092
      %v1094 = vpop.f32.mrb[0].mxu0
      %v1095 = vadd.f32 %v668, %v1094
      %v1096 = vpop.f32.mrb[0].mxu0
      %v1097 = vadd.f32 %v673, %v1096
      %v1098 = vpop.f32.mrb[0].mxu0
      %v1099 = vadd.f32 %v673, %v1098
      %1100 = vdwg.mxu0
      %v1101 = vadd.f32 %v1093, %v655
      %v1102 = vadd.f32 %v1095, %v657
      %v1103 = vadd.f32 %v1097, %v659
      %v1104 = vadd.f32 %v1099, %v661
      %v1105 = vmul.f32 %v1101, 0.1
      %v1106 = vmul.f32 %v1102, 0.1
      %v1107 = vmul.f32 %v1103, 0.1
      %v1108 = vmul.f32 %v1104, 0.1
      %v1109 = vmax.f32 %v1101, %v1105
      %v1110 = vmax.f32 %v1102, %v1106
      %v1111 = vmax.f32 %v1103, %v1107
      %v1112 = vmax.f32 %v1104, %v1108
      %v1113 = vpack.c.bf16 %v1111, %v1109
      %v1114 = vpack.c.bf16 %v1112, %v1110
      %1115 = vmatprep.subr.bf16.mxu0 %v1114
      %1116 = vmatpush1.bf16.msra.mxu0 %v1113
      %1117 = vmatprep.subr.bf16.mxu0 0
      %1118 = vmatpush1.bf16.msra.mxu0 0
      %1119 = vmatprep.subr.bf16.mxu0 0
      %1120 = vmatpush1.bf16.msra.mxu0 0
      %1121 = vmatprep.subr.bf16.mxu0 0
      %1122 = vmatpush1.bf16.msra.mxu0 0
      %1123 = vmatprep.subr.bf16.mxu0 0
      %1124 = vmatpush1.bf16.msra.mxu0 0
      %1125 = vmatprep.subr.bf16.mxu0 0
      %1126 = vmatpush1.bf16.msra.mxu0 0
      %1127 = vmatprep.subr.bf16.mxu0 0
      %1128 = vmatpush1.bf16.msra.mxu0 0
      %1129 = vmatprep.subr.bf16.mxu0 0
      %1130 = vmatpush1.bf16.msra.mxu0 0
      %1131 = vmatprep.subr.bf16.mxu0 0
      %1132 = vmatpush1.bf16.msra.mxu0 0
      %1133 = vmatprep.subr.bf16.mxu0 0
      %1134 = vmatpush1.bf16.msra.mxu0 0
      %1135 = vmatprep.subr.bf16.mxu0 0
      %1136 = vmatpush1.bf16.msra.mxu0 0
      %1137 = vmatprep.subr.bf16.mxu0 0
      %1138 = vmatpush1.bf16.msra.mxu0 0
      %1139 = vmatprep.subr.bf16.mxu0 0
      %1140 = vmatpush1.bf16.msra.mxu0 0
      %1141 = vmatprep.subr.bf16.mxu0 0
      %1142 = vmatpush1.bf16.msra.mxu0 0
      %1143 = vmatprep.subr.bf16.mxu0 0
      %1144 = vmatpush1.bf16.msra.mxu0 0
      %1145 = vmatprep.subr.bf16.mxu0 0
      %1146 = vmatpush1.bf16.msra.mxu0 0
      %1147 = vmatprep.mubr.bf16.mxu0 0
      %1148 = vmatmul.mubr.bf16.gmra.mrb[0].mxu0 %v776
      %v1149 = vpop.f32.mrb[0].mxu0
      %v1150 = vadd.f32 %v762, %v1149
      %v1151 = vpop.f32.mrb[0].mxu0
      %v1152 = vadd.f32 %v762, %v1151
      %v1153 = vpop.f32.mrb[0].mxu0
      %v1154 = vadd.f32 %v767, %v1153
      %v1155 = vpop.f32.mrb[0].mxu0
      %v1156 = vadd.f32 %v767, %v1155
      %1157 = vdwg.mxu0
      %v1158 = vmul.f32 %v1150, 0.1
      %v1159 = vmul.f32 %v1152, 0.1
      %v1160 = vmul.f32 %v1154, 0.1
      %v1161 = vmul.f32 %v1156, 0.1
      %v1162 = vmax.f32 %v1150, %v1158
      %v1163 = vmax.f32 %v1152, %v1159
      %v1164 = vmax.f32 %v1154, %v1160
      %v1165 = vmax.f32 %v1156, %v1161
      %s1166 = scalar_lea.vmem %s557, 4
      %v1167 = vld [vmem:[%s1166] sm:$0xf]
      %v1170 = vunpack.c.l.s4 1983009808
      %v1171 = vunpack.c.0.s8 %v1170
      %v1172 = vlaneseq
      %v1173 = vshrl.u32 %v1172, 7
      %v1174 = vsub.s32 %v1171, %v1173
      %v1175 = vrot.slane %v1167, %v1174
      %v1176 = vcombine.high %v1175, %v1175
      %v1178 = vand.u32 %v1175, %v851
      %v1181 = vand.u32 %v1176, %v851
      %1183 = vmatprep.subr.bf16.mxu0 %v1181
      %1184 = vmatpush1.bf16.msra.mxu0 %v1178
      %1185 = vmatprep.subr.bf16.mxu0 0
      %1186 = vmatpush1.bf16.msra.mxu0 0
      %1187 = vmatprep.subr.bf16.mxu0 0
      %1188 = vmatpush1.bf16.msra.mxu0 0
      %1189 = vmatprep.subr.bf16.mxu0 0
      %1190 = vmatpush1.bf16.msra.mxu0 0
      %1191 = vmatprep.subr.bf16.mxu0 0
      %1192 = vmatpush1.bf16.msra.mxu0 0
      %1193 = vmatprep.subr.bf16.mxu0 0
      %1194 = vmatpush1.bf16.msra.mxu0 0
      %1195 = vmatprep.subr.bf16.mxu0 0
      %1196 = vmatpush1.bf16.msra.mxu0 0
      %1197 = vmatprep.subr.bf16.mxu0 0
      %1198 = vmatpush1.bf16.msra.mxu0 0
      %1199 = vmatprep.subr.bf16.mxu0 0
      %1200 = vmatpush1.bf16.msra.mxu0 0
      %1201 = vmatprep.subr.bf16.mxu0 0
      %1202 = vmatpush1.bf16.msra.mxu0 0
      %1203 = vmatprep.subr.bf16.mxu0 0
      %1204 = vmatpush1.bf16.msra.mxu0 0
      %1205 = vmatprep.subr.bf16.mxu0 0
      %1206 = vmatpush1.bf16.msra.mxu0 0
      %1207 = vmatprep.subr.bf16.mxu0 0
      %1208 = vmatpush1.bf16.msra.mxu0 0
      %1209 = vmatprep.subr.bf16.mxu0 0
      %1210 = vmatpush1.bf16.msra.mxu0 0
      %1211 = vmatprep.subr.bf16.mxu0 0
      %1212 = vmatpush1.bf16.msra.mxu0 0
      %1213 = vmatprep.subr.bf16.mxu0 0
      %1214 = vmatpush1.bf16.msra.mxu0 0
      %1215 = vmatprep.mubr.bf16.mxu0 0
      %1216 = vmatmul.mubr.bf16.gmra.mrb[0].mxu0 %v846
      %v1217 = vpop.f32.mrb[0].mxu0
      %v1218 = vadd.f32 %v833, %v1217
      %v1219 = vpop.f32.mrb[0].mxu0
      %v1220 = vadd.f32 %v833, %v1219
      %v1221 = vpop.f32.mrb[0].mxu0
      %v1222 = vpop.f32.mrb[0].mxu0
      %1223 = vdwg.mxu0
      %v1224 = vmax.f32 %v1218, 0.0
      %v1225 = vmax.f32 %v1220, 0.0
      %v1226 = vpack.c.bf16 %v1224, %v1224
      %v1227 = vpack.c.bf16 %v1225, %v1225
      %v1229 = vsel %vm613, %v1226, 0
      %v1232 = vsel %vm613, %v1227, 0
      %1234 = vmatprep.subr.bf16.mxu0 %v1232
      %1235 = vmatpush1.bf16.msra.mxu0 %v1229
      %1236 = vmatprep.subr.bf16.mxu0 0
      %1237 = vmatpush1.bf16.msra.mxu0 0
      %1238 = vmatprep.subr.bf16.mxu0 0
      %1239 = vmatpush1.bf16.msra.mxu0 0
      %1240 = vmatprep.subr.bf16.mxu0 0
      %1241 = vmatpush1.bf16.msra.mxu0 0
      %1242 = vmatprep.subr.bf16.mxu0 0
      %1243 = vmatpush1.bf16.msra.mxu0 0
      %1244 = vmatprep.subr.bf16.mxu0 0
      %1245 = vmatpush1.bf16.msra.mxu0 0
      %1246 = vmatprep.subr.bf16.mxu0 0
      %1247 = vmatpush1.bf16.msra.mxu0 0
      %1248 = vmatprep.subr.bf16.mxu0 0
      %1249 = vmatpush1.bf16.msra.mxu0 0
      %1250 = vmatprep.subr.bf16.mxu0 0
      %1251 = vmatpush1.bf16.msra.mxu0 0
      %1252 = vmatprep.subr.bf16.mxu0 0
      %1253 = vmatpush1.bf16.msra.mxu0 0
      %1254 = vmatprep.subr.bf16.mxu0 0
      %1255 = vmatpush1.bf16.msra.mxu0 0
      %1256 = vmatprep.subr.bf16.mxu0 0
      %1257 = vmatpush1.bf16.msra.mxu0 0
      %1258 = vmatprep.subr.bf16.mxu0 0
      %1259 = vmatpush1.bf16.msra.mxu0 0
      %1260 = vmatprep.subr.bf16.mxu0 0
      %1261 = vmatpush1.bf16.msra.mxu0 0
      %1262 = vmatprep.subr.bf16.mxu0 0
      %1263 = vmatpush1.bf16.msra.mxu0 0
      %1264 = vmatprep.subr.bf16.mxu0 0
      %1265 = vmatpush1.bf16.msra.mxu0 0
      %1266 = vmatprep.mubr.bf16.mxu0 0
      %1267 = vmatmul.mubr.bf16.gmra.mrb[0].mxu0 %v909
      %v1268 = vpop.f32.mrb[0].mxu0
      %v1269 = vadd.f32 %v906, %v1268
      %v1270 = vpop.f32.mrb[0].mxu0
      %v1271 = vadd.f32 %v906, %v1270
      %v1272 = vpop.f32.mrb[0].mxu0
      %v1273 = vpop.f32.mrb[0].mxu0
      %1274 = vdwg.mxu0
      %v1275 = vmax.f32 %v1269, 0.0
      %v1276 = vmax.f32 %v1271, 0.0
      %v1277 = vpack.c.bf16 %v1275, %v1275
      %v1278 = vpack.c.bf16 %v1276, %v1276
      %v1280 = vsel %vm613, %v1277, 0
      %v1283 = vsel %vm613, %v1278, 0
      %1285 = vmatprep.subr.bf16.mxu0 %v1283
      %1286 = vmatpush1.bf16.msra.mxu0 %v1280
      %1287 = vmatprep.subr.bf16.mxu0 0
      %1288 = vmatpush1.bf16.msra.mxu0 0
      %1289 = vmatprep.subr.bf16.mxu0 0
      %1290 = vmatpush1.bf16.msra.mxu0 0
      %1291 = vmatprep.subr.bf16.mxu0 0
      %1292 = vmatpush1.bf16.msra.mxu0 0
      %1293 = vmatprep.subr.bf16.mxu0 0
      %1294 = vmatpush1.bf16.msra.mxu0 0
      %1295 = vmatprep.subr.bf16.mxu0 0
      %1296 = vmatpush1.bf16.msra.mxu0 0
      %1297 = vmatprep.subr.bf16.mxu0 0
      %1298 = vmatpush1.bf16.msra.mxu0 0
      %1299 = vmatprep.subr.bf16.mxu0 0
      %1300 = vmatpush1.bf16.msra.mxu0 0
      %1301 = vmatprep.subr.bf16.mxu0 0
      %1302 = vmatpush1.bf16.msra.mxu0 0
      %1303 = vmatprep.subr.bf16.mxu0 0
      %1304 = vmatpush1.bf16.msra.mxu0 0
      %1305 = vmatprep.subr.bf16.mxu0 0
      %1306 = vmatpush1.bf16.msra.mxu0 0
      %1307 = vmatprep.subr.bf16.mxu0 0
      %1308 = vmatpush1.bf16.msra.mxu0 0
      %1309 = vmatprep.subr.bf16.mxu0 0
      %1310 = vmatpush1.bf16.msra.mxu0 0
      %1311 = vmatprep.subr.bf16.mxu0 0
      %1312 = vmatpush1.bf16.msra.mxu0 0
      %1313 = vmatprep.subr.bf16.mxu0 0
      %1314 = vmatpush1.bf16.msra.mxu0 0
      %1315 = vmatprep.subr.bf16.mxu0 0
      %1316 = vmatpush1.bf16.msra.mxu0 0
      %1317 = vmatprep.mubr.bf16.mxu0 0
      %1318 = vmatmul.mubr.bf16.gmra.mrb[0].mxu0 %v978
      %v1319 = vpop.f32.mrb[0].mxu0
      %v1320 = vadd.f32 %v965, %v1319
      %v1321 = vpop.f32.mrb[0].mxu0
      %v1322 = vadd.f32 %v965, %v1321
      %v1323 = vpop.f32.mrb[0].mxu0
      %v1324 = vadd.f32 %v970, %v1323
      %v1325 = vpop.f32.mrb[0].mxu0
      %v1326 = vadd.f32 %v970, %v1325
      %1327 = vdwg.mxu0
      %v1328 = vmax.f32 %v1320, 0.0
      %v1329 = vmax.f32 %v1322, 0.0
      %v1330 = vmax.f32 %v1324, 0.0
      %v1331 = vmax.f32 %v1326, 0.0
      %v1332 = vmul.f32 %v1328, %v1162
      %v1333 = vmul.f32 %v1329, %v1163
      %v1334 = vmul.f32 %v1330, %v1164
      %v1335 = vmul.f32 %v1331, %v1165
      %v1336 = vadd.f32 %v1037, %v1332
      %v1337 = vadd.f32 %v1038, %v1333
      %v1338 = vadd.f32 %v1039, %v1334
      %v1339 = vadd.f32 %v1040, %v1335
      %s1340 = scalar_lea.vmem %s547, 32
      %v1341 = vld [vmem:[%s1340] sm:$0xff]
      %v1342 = vld [vmem:[%s1340 + $0x8] sm:$0x33]
      %v1345 = vunpack.c.l.b16 %v1341
      %v1346 = vunpack.c.h.b16 %v1341
      %v1347 = vunpack.c.l.b16 %v1342
      %v1348 = vunpack.c.h.b16 %v1342
      %v1349 = vpack.c.b16 %v1347, %v1345
      %v1350 = vpack.c.b16 %v1348, %v1346
      %v1352 = vand.u32 %v1349, %v695
      %v1355 = vand.u32 %v1350, %v695
      %1357 = vmatprep.subr.bf16.mxu0 %v1355
      %1358 = vmatpush1.bf16.msra.mxu0 %v1352
      %1359 = vmatprep.subr.bf16.mxu0 0
      %1360 = vmatpush1.bf16.msra.mxu0 0
      %1361 = vmatprep.subr.bf16.mxu0 0
      %1362 = vmatpush1.bf16.msra.mxu0 0
      %1363 = vmatprep.subr.bf16.mxu0 0
      %1364 = vmatpush1.bf16.msra.mxu0 0
      %1365 = vmatprep.subr.bf16.mxu0 0
      %1366 = vmatpush1.bf16.msra.mxu0 0
      %1367 = vmatprep.subr.bf16.mxu0 0
      %1368 = vmatpush1.bf16.msra.mxu0 0
      %1369 = vmatprep.subr.bf16.mxu0 0
      %1370 = vmatpush1.bf16.msra.mxu0 0
      %1371 = vmatprep.subr.bf16.mxu0 0
      %1372 = vmatpush1.bf16.msra.mxu0 0
      %1373 = vmatprep.subr.bf16.mxu0 0
      %1374 = vmatpush1.bf16.msra.mxu0 0
      %1375 = vmatprep.subr.bf16.mxu0 0
      %1376 = vmatpush1.bf16.msra.mxu0 0
      %1377 = vmatprep.subr.bf16.mxu0 0
      %1378 = vmatpush1.bf16.msra.mxu0 0
      %1379 = vmatprep.subr.bf16.mxu0 0
      %1380 = vmatpush1.bf16.msra.mxu0 0
      %1381 = vmatprep.subr.bf16.mxu0 0
      %1382 = vmatpush1.bf16.msra.mxu0 0
      %1383 = vmatprep.subr.bf16.mxu0 0
      %1384 = vmatpush1.bf16.msra.mxu0 0
      %1385 = vmatprep.subr.bf16.mxu0 0
      %1386 = vmatpush1.bf16.msra.mxu0 0
      %1387 = vmatprep.subr.bf16.mxu0 0
      %1388 = vmatpush1.bf16.msra.mxu0 0
      %1389 = vmatprep.mubr.bf16.mxu0 0
      %1390 = vmatmul.mubr.bf16.gmra.mrb[0].mxu0 %v690
      %v1391 = vpop.f32.mrb[0].mxu0
      %v1392 = vadd.f32 %v668, %v1391
      %v1393 = vpop.f32.mrb[0].mxu0
      %v1394 = vadd.f32 %v668, %v1393
      %v1395 = vpop.f32.mrb[0].mxu0
      %v1396 = vadd.f32 %v673, %v1395
      %v1397 = vpop.f32.mrb[0].mxu0
      %v1398 = vadd.f32 %v673, %v1397
      %1399 = vdwg.mxu0
      %v1400 = vadd.f32 %v1392, %v655
      %v1401 = vadd.f32 %v1394, %v657
      %v1402 = vadd.f32 %v1396, %v659
      %v1403 = vadd.f32 %v1398, %v661
      %v1404 = vmul.f32 %v1400, 0.1
      %v1405 = vmul.f32 %v1401, 0.1
      %v1406 = vmul.f32 %v1402, 0.1
      %v1407 = vmul.f32 %v1403, 0.1
      %v1408 = vmax.f32 %v1400, %v1404
      %v1409 = vmax.f32 %v1401, %v1405
      %v1410 = vmax.f32 %v1402, %v1406
      %v1411 = vmax.f32 %v1403, %v1407
      %v1412 = vpack.c.bf16 %v1410, %v1408
      %v1413 = vpack.c.bf16 %v1411, %v1409
      %1414 = vmatprep.subr.bf16.mxu0 %v1413
      %1415 = vmatpush1.bf16.msra.mxu0 %v1412
      %1416 = vmatprep.subr.bf16.mxu0 0
      %1417 = vmatpush1.bf16.msra.mxu0 0
      %1418 = vmatprep.subr.bf16.mxu0 0
      %1419 = vmatpush1.bf16.msra.mxu0 0
      %1420 = vmatprep.subr.bf16.mxu0 0
      %1421 = vmatpush1.bf16.msra.mxu0 0
      %1422 = vmatprep.subr.bf16.mxu0 0
      %1423 = vmatpush1.bf16.msra.mxu0 0
      %1424 = vmatprep.subr.bf16.mxu0 0
      %1425 = vmatpush1.bf16.msra.mxu0 0
      %1426 = vmatprep.subr.bf16.mxu0 0
      %1427 = vmatpush1.bf16.msra.mxu0 0
      %1428 = vmatprep.subr.bf16.mxu0 0
      %1429 = vmatpush1.bf16.msra.mxu0 0
      %1430 = vmatprep.subr.bf16.mxu0 0
      %1431 = vmatpush1.bf16.msra.mxu0 0
      %1432 = vmatprep.subr.bf16.mxu0 0
      %1433 = vmatpush1.bf16.msra.mxu0 0
      %1434 = vmatprep.subr.bf16.mxu0 0
      %1435 = vmatpush1.bf16.msra.mxu0 0
      %1436 = vmatprep.subr.bf16.mxu0 0
      %1437 = vmatpush1.bf16.msra.mxu0 0
      %1438 = vmatprep.subr.bf16.mxu0 0
      %1439 = vmatpush1.bf16.msra.mxu0 0
      %1440 = vmatprep.subr.bf16.mxu0 0
      %1441 = vmatpush1.bf16.msra.mxu0 0
      %1442 = vmatprep.subr.bf16.mxu0 0
      %1443 = vmatpush1.bf16.msra.mxu0 0
      %1444 = vmatprep.subr.bf16.mxu0 0
      %1445 = vmatpush1.bf16.msra.mxu0 0
      %1446 = vmatprep.mubr.bf16.mxu0 0
      %1447 = vmatmul.mubr.bf16.gmra.mrb[0].mxu0 %v776
      %v1448 = vpop.f32.mrb[0].mxu0
      %v1449 = vadd.f32 %v762, %v1448
      %v1450 = vpop.f32.mrb[0].mxu0
      %v1451 = vadd.f32 %v762, %v1450
      %v1452 = vpop.f32.mrb[0].mxu0
      %v1453 = vadd.f32 %v767, %v1452
      %v1454 = vpop.f32.mrb[0].mxu0
      %v1455 = vadd.f32 %v767, %v1454
      %1456 = vdwg.mxu0
      %v1457 = vmul.f32 %v1449, 0.1
      %v1458 = vmul.f32 %v1451, 0.1
      %v1459 = vmul.f32 %v1453, 0.1
      %v1460 = vmul.f32 %v1455, 0.1
      %v1461 = vmax.f32 %v1449, %v1457
      %v1462 = vmax.f32 %v1451, %v1458
      %v1463 = vmax.f32 %v1453, %v1459
      %v1464 = vmax.f32 %v1455, %v1460
      %s1465 = scalar_lea.vmem %s557, 8
      %v1466 = vld [vmem:[%s1465] sm:$0xf]
      %v1469 = vunpack.c.l.s4 1983009808
      %v1470 = vunpack.c.0.s8 %v1469
      %v1471 = vlaneseq
      %v1472 = vshrl.u32 %v1471, 7
      %v1473 = vsub.s32 %v1470, %v1472
      %v1474 = vrot.slane %v1466, %v1473
      %v1475 = vcombine.high %v1474, %v1474
      %v1477 = vand.u32 %v1474, %v851
      %v1480 = vand.u32 %v1475, %v851
      %1482 = vmatprep.subr.bf16.mxu0 %v1480
      %1483 = vmatpush1.bf16.msra.mxu0 %v1477
      %1484 = vmatprep.subr.bf16.mxu0 0
      %1485 = vmatpush1.bf16.msra.mxu0 0
      %1486 = vmatprep.subr.bf16.mxu0 0
      %1487 = vmatpush1.bf16.msra.mxu0 0
      %1488 = vmatprep.subr.bf16.mxu0 0
      %1489 = vmatpush1.bf16.msra.mxu0 0
      %1490 = vmatprep.subr.bf16.mxu0 0
      %1491 = vmatpush1.bf16.msra.mxu0 0
      %1492 = vmatprep.subr.bf16.mxu0 0
      %1493 = vmatpush1.bf16.msra.mxu0 0
      %1494 = vmatprep.subr.bf16.mxu0 0
      %1495 = vmatpush1.bf16.msra.mxu0 0
      %1496 = vmatprep.subr.bf16.mxu0 0
      %1497 = vmatpush1.bf16.msra.mxu0 0
      %1498 = vmatprep.subr.bf16.mxu0 0
      %1499 = vmatpush1.bf16.msra.mxu0 0
      %1500 = vmatprep.subr.bf16.mxu0 0
      %1501 = vmatpush1.bf16.msra.mxu0 0
      %1502 = vmatprep.subr.bf16.mxu0 0
      %1503 = vmatpush1.bf16.msra.mxu0 0
      %1504 = vmatprep.subr.bf16.mxu0 0
      %1505 = vmatpush1.bf16.msra.mxu0 0
      %1506 = vmatprep.subr.bf16.mxu0 0
      %1507 = vmatpush1.bf16.msra.mxu0 0
      %1508 = vmatprep.subr.bf16.mxu0 0
      %1509 = vmatpush1.bf16.msra.mxu0 0
      %1510 = vmatprep.subr.bf16.mxu0 0
      %1511 = vmatpush1.bf16.msra.mxu0 0
      %1512 = vmatprep.subr.bf16.mxu0 0
      %1513 = vmatpush1.bf16.msra.mxu0 0
      %1514 = vmatprep.mubr.bf16.mxu0 0
      %1515 = vmatmul.mubr.bf16.gmra.mrb[0].mxu0 %v846
      %v1516 = vpop.f32.mrb[0].mxu0
      %v1517 = vadd.f32 %v833, %v1516
      %v1518 = vpop.f32.mrb[0].mxu0
      %v1519 = vadd.f32 %v833, %v1518
      %v1520 = vpop.f32.mrb[0].mxu0
      %v1521 = vpop.f32.mrb[0].mxu0
      %1522 = vdwg.mxu0
      %v1523 = vmax.f32 %v1517, 0.0
      %v1524 = vmax.f32 %v1519, 0.0
      %v1525 = vpack.c.bf16 %v1523, %v1523
      %v1526 = vpack.c.bf16 %v1524, %v1524
      %v1528 = vsel %vm613, %v1525, 0
      %v1531 = vsel %vm613, %v1526, 0
      %1533 = vmatprep.subr.bf16.mxu0 %v1531
      %1534 = vmatpush1.bf16.msra.mxu0 %v1528
      %1535 = vmatprep.subr.bf16.mxu0 0
      %1536 = vmatpush1.bf16.msra.mxu0 0
      %1537 = vmatprep.subr.bf16.mxu0 0
      %1538 = vmatpush1.bf16.msra.mxu0 0
      %1539 = vmatprep.subr.bf16.mxu0 0
      %1540 = vmatpush1.bf16.msra.mxu0 0
      %1541 = vmatprep.subr.bf16.mxu0 0
      %1542 = vmatpush1.bf16.msra.mxu0 0
      %1543 = vmatprep.subr.bf16.mxu0 0
      %1544 = vmatpush1.bf16.msra.mxu0 0
      %1545 = vmatprep.subr.bf16.mxu0 0
      %1546 = vmatpush1.bf16.msra.mxu0 0
      %1547 = vmatprep.subr.bf16.mxu0 0
      %1548 = vmatpush1.bf16.msra.mxu0 0
      %1549 = vmatprep.subr.bf16.mxu0 0
      %1550 = vmatpush1.bf16.msra.mxu0 0
      %1551 = vmatprep.subr.bf16.mxu0 0
      %1552 = vmatpush1.bf16.msra.mxu0 0
      %1553 = vmatprep.subr.bf16.mxu0 0
      %1554 = vmatpush1.bf16.msra.mxu0 0
      %1555 = vmatprep.subr.bf16.mxu0 0
      %1556 = vmatpush1.bf16.msra.mxu0 0
      %1557 = vmatprep.subr.bf16.mxu0 0
      %1558 = vmatpush1.bf16.msra.mxu0 0
      %1559 = vmatprep.subr.bf16.mxu0 0
      %1560 = vmatpush1.bf16.msra.mxu0 0
      %1561 = vmatprep.subr.bf16.mxu0 0
      %1562 = vmatpush1.bf16.msra.mxu0 0
      %1563 = vmatprep.subr.bf16.mxu0 0
      %1564 = vmatpush1.bf16.msra.mxu0 0
      %1565 = vmatprep.mubr.bf16.mxu0 0
      %1566 = vmatmul.mubr.bf16.gmra.mrb[0].mxu0 %v909
      %v1567 = vpop.f32.mrb[0].mxu0
      %v1568 = vadd.f32 %v906, %v1567
      %v1569 = vpop.f32.mrb[0].mxu0
      %v1570 = vadd.f32 %v906, %v1569
      %v1571 = vpop.f32.mrb[0].mxu0
      %v1572 = vpop.f32.mrb[0].mxu0
      %1573 = vdwg.mxu0
      %v1574 = vmax.f32 %v1568, 0.0
      %v1575 = vmax.f32 %v1570, 0.0
      %v1576 = vpack.c.bf16 %v1574, %v1574
      %v1577 = vpack.c.bf16 %v1575, %v1575
      %v1579 = vsel %vm613, %v1576, 0
      %v1582 = vsel %vm613, %v1577, 0
      %1584 = vmatprep.subr.bf16.mxu0 %v1582
      %1585 = vmatpush1.bf16.msra.mxu0 %v1579
      %1586 = vmatprep.subr.bf16.mxu0 0
      %1587 = vmatpush1.bf16.msra.mxu0 0
      %1588 = vmatprep.subr.bf16.mxu0 0
      %1589 = vmatpush1.bf16.msra.mxu0 0
      %1590 = vmatprep.subr.bf16.mxu0 0
      %1591 = vmatpush1.bf16.msra.mxu0 0
      %1592 = vmatprep.subr.bf16.mxu0 0
      %1593 = vmatpush1.bf16.msra.mxu0 0
      %1594 = vmatprep.subr.bf16.mxu0 0
      %1595 = vmatpush1.bf16.msra.mxu0 0
      %1596 = vmatprep.subr.bf16.mxu0 0
      %1597 = vmatpush1.bf16.msra.mxu0 0
      %1598 = vmatprep.subr.bf16.mxu0 0
      %1599 = vmatpush1.bf16.msra.mxu0 0
      %1600 = vmatprep.subr.bf16.mxu0 0
      %1601 = vmatpush1.bf16.msra.mxu0 0
      %1602 = vmatprep.subr.bf16.mxu0 0
      %1603 = vmatpush1.bf16.msra.mxu0 0
      %1604 = vmatprep.subr.bf16.mxu0 0
      %1605 = vmatpush1.bf16.msra.mxu0 0
      %1606 = vmatprep.subr.bf16.mxu0 0
      %1607 = vmatpush1.bf16.msra.mxu0 0
      %1608 = vmatprep.subr.bf16.mxu0 0
      %1609 = vmatpush1.bf16.msra.mxu0 0
      %1610 = vmatprep.subr.bf16.mxu0 0
      %1611 = vmatpush1.bf16.msra.mxu0 0
      %1612 = vmatprep.subr.bf16.mxu0 0
      %1613 = vmatpush1.bf16.msra.mxu0 0
      %1614 = vmatprep.subr.bf16.mxu0 0
      %1615 = vmatpush1.bf16.msra.mxu0 0
      %1616 = vmatprep.mubr.bf16.mxu0 0
      %1617 = vmatmul.mubr.bf16.gmra.mrb[0].mxu0 %v978
      %v1618 = vpop.f32.mrb[0].mxu0
      %v1619 = vadd.f32 %v965, %v1618
      %v1620 = vpop.f32.mrb[0].mxu0
      %v1621 = vadd.f32 %v965, %v1620
      %v1622 = vpop.f32.mrb[0].mxu0
      %v1623 = vadd.f32 %v970, %v1622
      %v1624 = vpop.f32.mrb[0].mxu0
      %v1625 = vadd.f32 %v970, %v1624
      %1626 = vdwg.mxu0
      %v1627 = vmax.f32 %v1619, 0.0
      %v1628 = vmax.f32 %v1621, 0.0
      %v1629 = vmax.f32 %v1623, 0.0
      %v1630 = vmax.f32 %v1625, 0.0
      %v1631 = vmul.f32 %v1627, %v1461
      %v1632 = vmul.f32 %v1628, %v1462
      %v1633 = vmul.f32 %v1629, %v1463
      %v1634 = vmul.f32 %v1630, %v1464
      %v1635 = vadd.f32 %v1336, %v1631
      %v1636 = vadd.f32 %v1337, %v1632
      %v1637 = vadd.f32 %v1338, %v1633
      %v1638 = vadd.f32 %v1339, %v1634
      %s1639 = scalar_lea.vmem %s547, 48
      %v1640 = vld [vmem:[%s1639] sm:$0xff]
      %v1641 = vld [vmem:[%s1639 + $0x8] sm:$0x33]
      %v1644 = vunpack.c.l.b16 %v1640
      %v1645 = vunpack.c.h.b16 %v1640
      %v1646 = vunpack.c.l.b16 %v1641
      %v1647 = vunpack.c.h.b16 %v1641
      %v1648 = vpack.c.b16 %v1646, %v1644
      %v1649 = vpack.c.b16 %v1647, %v1645
      %v1651 = vand.u32 %v1648, %v695
      %v1654 = vand.u32 %v1649, %v695
      %1656 = vmatprep.subr.bf16.mxu0 %v1654
      %1657 = vmatpush1.bf16.msra.mxu0 %v1651
      %1658 = vmatprep.subr.bf16.mxu0 0
      %1659 = vmatpush1.bf16.msra.mxu0 0
      %1660 = vmatprep.subr.bf16.mxu0 0
      %1661 = vmatpush1.bf16.msra.mxu0 0
      %1662 = vmatprep.subr.bf16.mxu0 0
      %1663 = vmatpush1.bf16.msra.mxu0 0
      %1664 = vmatprep.subr.bf16.mxu0 0
      %1665 = vmatpush1.bf16.msra.mxu0 0
      %1666 = vmatprep.subr.bf16.mxu0 0
      %1667 = vmatpush1.bf16.msra.mxu0 0
      %1668 = vmatprep.subr.bf16.mxu0 0
      %1669 = vmatpush1.bf16.msra.mxu0 0
      %1670 = vmatprep.subr.bf16.mxu0 0
      %1671 = vmatpush1.bf16.msra.mxu0 0
      %1672 = vmatprep.subr.bf16.mxu0 0
      %1673 = vmatpush1.bf16.msra.mxu0 0
      %1674 = vmatprep.subr.bf16.mxu0 0
      %1675 = vmatpush1.bf16.msra.mxu0 0
      %1676 = vmatprep.subr.bf16.mxu0 0
      %1677 = vmatpush1.bf16.msra.mxu0 0
      %1678 = vmatprep.subr.bf16.mxu0 0
      %1679 = vmatpush1.bf16.msra.mxu0 0
      %1680 = vmatprep.subr.bf16.mxu0 0
      %1681 = vmatpush1.bf16.msra.mxu0 0
      %1682 = vmatprep.subr.bf16.mxu0 0
      %1683 = vmatpush1.bf16.msra.mxu0 0
      %1684 = vmatprep.subr.bf16.mxu0 0
      %1685 = vmatpush1.bf16.msra.mxu0 0
      %1686 = vmatprep.subr.bf16.mxu0 0
      %1687 = vmatpush1.bf16.msra.mxu0 0
      %1688 = vmatprep.mubr.bf16.mxu0 0
      %1689 = vmatmul.mubr.bf16.gmra.mrb[0].mxu0 %v690
      %v1690 = vpop.f32.mrb[0].mxu0
      %v1691 = vadd.f32 %v668, %v1690
      %v1692 = vpop.f32.mrb[0].mxu0
      %v1693 = vadd.f32 %v668, %v1692
      %v1694 = vpop.f32.mrb[0].mxu0
      %v1695 = vadd.f32 %v673, %v1694
      %v1696 = vpop.f32.mrb[0].mxu0
      %v1697 = vadd.f32 %v673, %v1696
      %1698 = vdwg.mxu0
      %v1699 = vadd.f32 %v1691, %v655
      %v1700 = vadd.f32 %v1693, %v657
      %v1701 = vadd.f32 %v1695, %v659
      %v1702 = vadd.f32 %v1697, %v661
      %v1703 = vmul.f32 %v1699, 0.1
      %v1704 = vmul.f32 %v1700, 0.1
      %v1705 = vmul.f32 %v1701, 0.1
      %v1706 = vmul.f32 %v1702, 0.1
      %v1707 = vmax.f32 %v1699, %v1703
      %v1708 = vmax.f32 %v1700, %v1704
      %v1709 = vmax.f32 %v1701, %v1705
      %v1710 = vmax.f32 %v1702, %v1706
      %v1711 = vpack.c.bf16 %v1709, %v1707
      %v1712 = vpack.c.bf16 %v1710, %v1708
      %1713 = vmatprep.subr.bf16.mxu0 %v1712
      %1714 = vmatpush1.bf16.msra.mxu0 %v1711
      %1715 = vmatprep.subr.bf16.mxu0 0
      %1716 = vmatpush1.bf16.msra.mxu0 0
      %1717 = vmatprep.subr.bf16.mxu0 0
      %1718 = vmatpush1.bf16.msra.mxu0 0
      %1719 = vmatprep.subr.bf16.mxu0 0
      %1720 = vmatpush1.bf16.msra.mxu0 0
      %1721 = vmatprep.subr.bf16.mxu0 0
      %1722 = vmatpush1.bf16.msra.mxu0 0
      %1723 = vmatprep.subr.bf16.mxu0 0
      %1724 = vmatpush1.bf16.msra.mxu0 0
      %1725 = vmatprep.subr.bf16.mxu0 0
      %1726 = vmatpush1.bf16.msra.mxu0 0
      %1727 = vmatprep.subr.bf16.mxu0 0
      %1728 = vmatpush1.bf16.msra.mxu0 0
      %1729 = vmatprep.subr.bf16.mxu0 0
      %1730 = vmatpush1.bf16.msra.mxu0 0
      %1731 = vmatprep.subr.bf16.mxu0 0
      %1732 = vmatpush1.bf16.msra.mxu0 0
      %1733 = vmatprep.subr.bf16.mxu0 0
      %1734 = vmatpush1.bf16.msra.mxu0 0
      %1735 = vmatprep.subr.bf16.mxu0 0
      %1736 = vmatpush1.bf16.msra.mxu0 0
      %1737 = vmatprep.subr.bf16.mxu0 0
      %1738 = vmatpush1.bf16.msra.mxu0 0
      %1739 = vmatprep.subr.bf16.mxu0 0
      %1740 = vmatpush1.bf16.msra.mxu0 0
      %1741 = vmatprep.subr.bf16.mxu0 0
      %1742 = vmatpush1.bf16.msra.mxu0 0
      %1743 = vmatprep.subr.bf16.mxu0 0
      %1744 = vmatpush1.bf16.msra.mxu0 0
      %1745 = vmatprep.mubr.bf16.mxu0 0
      %1746 = vmatmul.mubr.bf16.gmra.mrb[0].mxu0 %v776
      %v1747 = vpop.f32.mrb[0].mxu0
      %v1748 = vadd.f32 %v762, %v1747
      %v1749 = vpop.f32.mrb[0].mxu0
      %v1750 = vadd.f32 %v762, %v1749
      %v1751 = vpop.f32.mrb[0].mxu0
      %v1752 = vadd.f32 %v767, %v1751
      %v1753 = vpop.f32.mrb[0].mxu0
      %v1754 = vadd.f32 %v767, %v1753
      %1755 = vdwg.mxu0
      %v1756 = vmul.f32 %v1748, 0.1
      %v1757 = vmul.f32 %v1750, 0.1
      %v1758 = vmul.f32 %v1752, 0.1
      %v1759 = vmul.f32 %v1754, 0.1
      %v1760 = vmax.f32 %v1748, %v1756
      %v1761 = vmax.f32 %v1750, %v1757
      %v1762 = vmax.f32 %v1752, %v1758
      %v1763 = vmax.f32 %v1754, %v1759
      %s1764 = scalar_lea.vmem %s557, 12
      %v1765 = vld [vmem:[%s1764] sm:$0xf]
      %v1768 = vunpack.c.l.s4 1983009808
      %v1769 = vunpack.c.0.s8 %v1768
      %v1770 = vlaneseq
      %v1771 = vshrl.u32 %v1770, 7
      %v1772 = vsub.s32 %v1769, %v1771
      %v1773 = vrot.slane %v1765, %v1772
      %v1774 = vcombine.high %v1773, %v1773
      %v1776 = vand.u32 %v1773, %v851
      %v1779 = vand.u32 %v1774, %v851
      %1781 = vmatprep.subr.bf16.mxu0 %v1779
      %1782 = vmatpush1.bf16.msra.mxu0 %v1776
      %1783 = vmatprep.subr.bf16.mxu0 0
      %1784 = vmatpush1.bf16.msra.mxu0 0
      %1785 = vmatprep.subr.bf16.mxu0 0
      %1786 = vmatpush1.bf16.msra.mxu0 0
      %1787 = vmatprep.subr.bf16.mxu0 0
      %1788 = vmatpush1.bf16.msra.mxu0 0
      %1789 = vmatprep.subr.bf16.mxu0 0
      %1790 = vmatpush1.bf16.msra.mxu0 0
      %1791 = vmatprep.subr.bf16.mxu0 0
      %1792 = vmatpush1.bf16.msra.mxu0 0
      %1793 = vmatprep.subr.bf16.mxu0 0
      %1794 = vmatpush1.bf16.msra.mxu0 0
      %1795 = vmatprep.subr.bf16.mxu0 0
      %1796 = vmatpush1.bf16.msra.mxu0 0
      %1797 = vmatprep.subr.bf16.mxu0 0
      %1798 = vmatpush1.bf16.msra.mxu0 0
      %1799 = vmatprep.subr.bf16.mxu0 0
      %1800 = vmatpush1.bf16.msra.mxu0 0
      %1801 = vmatprep.subr.bf16.mxu0 0
      %1802 = vmatpush1.bf16.msra.mxu0 0
      %1803 = vmatprep.subr.bf16.mxu0 0
      %1804 = vmatpush1.bf16.msra.mxu0 0
      %1805 = vmatprep.subr.bf16.mxu0 0
      %1806 = vmatpush1.bf16.msra.mxu0 0
      %1807 = vmatprep.subr.bf16.mxu0 0
      %1808 = vmatpush1.bf16.msra.mxu0 0
      %1809 = vmatprep.subr.bf16.mxu0 0
      %1810 = vmatpush1.bf16.msra.mxu0 0
      %1811 = vmatprep.subr.bf16.mxu0 0
      %1812 = vmatpush1.bf16.msra.mxu0 0
      %1813 = vmatprep.mubr.bf16.mxu0 0
      %1814 = vmatmul.mubr.bf16.gmra.mrb[0].mxu0 %v846
      %v1815 = vpop.f32.mrb[0].mxu0
      %v1816 = vadd.f32 %v833, %v1815
      %v1817 = vpop.f32.mrb[0].mxu0
      %v1818 = vadd.f32 %v833, %v1817
      %v1819 = vpop.f32.mrb[0].mxu0
      %v1820 = vpop.f32.mrb[0].mxu0
      %1821 = vdwg.mxu0
      %v1822 = vmax.f32 %v1816, 0.0
      %v1823 = vmax.f32 %v1818, 0.0
      %v1824 = vpack.c.bf16 %v1822, %v1822
      %v1825 = vpack.c.bf16 %v1823, %v1823
      %v1827 = vsel %vm613, %v1824, 0
      %v1830 = vsel %vm613, %v1825, 0
      %1832 = vmatprep.subr.bf16.mxu0 %v1830
      %1833 = vmatpush1.bf16.msra.mxu0 %v1827
      %1834 = vmatprep.subr.bf16.mxu0 0
      %1835 = vmatpush1.bf16.msra.mxu0 0
      %1836 = vmatprep.subr.bf16.mxu0 0
      %1837 = vmatpush1.bf16.msra.mxu0 0
      %1838 = vmatprep.subr.bf16.mxu0 0
      %1839 = vmatpush1.bf16.msra.mxu0 0
      %1840 = vmatprep.subr.bf16.mxu0 0
      %1841 = vmatpush1.bf16.msra.mxu0 0
      %1842 = vmatprep.subr.bf16.mxu0 0
      %1843 = vmatpush1.bf16.msra.mxu0 0
      %1844 = vmatprep.subr.bf16.mxu0 0
      %1845 = vmatpush1.bf16.msra.mxu0 0
      %1846 = vmatprep.subr.bf16.mxu0 0
      %1847 = vmatpush1.bf16.msra.mxu0 0
      %1848 = vmatprep.subr.bf16.mxu0 0
      %1849 = vmatpush1.bf16.msra.mxu0 0
      %1850 = vmatprep.subr.bf16.mxu0 0
      %1851 = vmatpush1.bf16.msra.mxu0 0
      %1852 = vmatprep.subr.bf16.mxu0 0
      %1853 = vmatpush1.bf16.msra.mxu0 0
      %1854 = vmatprep.subr.bf16.mxu0 0
      %1855 = vmatpush1.bf16.msra.mxu0 0
      %1856 = vmatprep.subr.bf16.mxu0 0
      %1857 = vmatpush1.bf16.msra.mxu0 0
      %1858 = vmatprep.subr.bf16.mxu0 0
      %1859 = vmatpush1.bf16.msra.mxu0 0
      %1860 = vmatprep.subr.bf16.mxu0 0
      %1861 = vmatpush1.bf16.msra.mxu0 0
      %1862 = vmatprep.subr.bf16.mxu0 0
      %1863 = vmatpush1.bf16.msra.mxu0 0
      %1864 = vmatprep.mubr.bf16.mxu0 0
      %1865 = vmatmul.mubr.bf16.gmra.mrb[0].mxu0 %v909
      %v1866 = vpop.f32.mrb[0].mxu0
      %v1867 = vadd.f32 %v906, %v1866
      %v1868 = vpop.f32.mrb[0].mxu0
      %v1869 = vadd.f32 %v906, %v1868
      %v1870 = vpop.f32.mrb[0].mxu0
      %v1871 = vpop.f32.mrb[0].mxu0
      %1872 = vdwg.mxu0
      %v1873 = vmax.f32 %v1867, 0.0
      %v1874 = vmax.f32 %v1869, 0.0
      %v1875 = vpack.c.bf16 %v1873, %v1873
      %v1876 = vpack.c.bf16 %v1874, %v1874
      %v1878 = vsel %vm613, %v1875, 0
      %v1881 = vsel %vm613, %v1876, 0
      %1883 = vmatprep.subr.bf16.mxu0 %v1881
      %1884 = vmatpush1.bf16.msra.mxu0 %v1878
      %1885 = vmatprep.subr.bf16.mxu0 0
      %1886 = vmatpush1.bf16.msra.mxu0 0
      %1887 = vmatprep.subr.bf16.mxu0 0
      %1888 = vmatpush1.bf16.msra.mxu0 0
      %1889 = vmatprep.subr.bf16.mxu0 0
      %1890 = vmatpush1.bf16.msra.mxu0 0
      %1891 = vmatprep.subr.bf16.mxu0 0
      %1892 = vmatpush1.bf16.msra.mxu0 0
      %1893 = vmatprep.subr.bf16.mxu0 0
      %1894 = vmatpush1.bf16.msra.mxu0 0
      %1895 = vmatprep.subr.bf16.mxu0 0
      %1896 = vmatpush1.bf16.msra.mxu0 0
      %1897 = vmatprep.subr.bf16.mxu0 0
      %1898 = vmatpush1.bf16.msra.mxu0 0
      %1899 = vmatprep.subr.bf16.mxu0 0
      %1900 = vmatpush1.bf16.msra.mxu0 0
      %1901 = vmatprep.subr.bf16.mxu0 0
      %1902 = vmatpush1.bf16.msra.mxu0 0
      %1903 = vmatprep.subr.bf16.mxu0 0
      %1904 = vmatpush1.bf16.msra.mxu0 0
      %1905 = vmatprep.subr.bf16.mxu0 0
      %1906 = vmatpush1.bf16.msra.mxu0 0
      %1907 = vmatprep.subr.bf16.mxu0 0
      %1908 = vmatpush1.bf16.msra.mxu0 0
      %1909 = vmatprep.subr.bf16.mxu0 0
      %1910 = vmatpush1.bf16.msra.mxu0 0
      %1911 = vmatprep.subr.bf16.mxu0 0
      %1912 = vmatpush1.bf16.msra.mxu0 0
      %1913 = vmatprep.subr.bf16.mxu0 0
      %1914 = vmatpush1.bf16.msra.mxu0 0
      %1915 = vmatprep.mubr.bf16.mxu0 0
      %1916 = vmatmul.mubr.bf16.gmra.mrb[0].mxu0 %v978
      %v1917 = vpop.f32.mrb[0].mxu0
      %v1918 = vadd.f32 %v965, %v1917
      %v1919 = vpop.f32.mrb[0].mxu0
      %v1920 = vadd.f32 %v965, %v1919
      %v1921 = vpop.f32.mrb[0].mxu0
      %v1922 = vadd.f32 %v970, %v1921
      %v1923 = vpop.f32.mrb[0].mxu0
      %v1924 = vadd.f32 %v970, %v1923
      %1925 = vdwg.mxu0
      %v1926 = vmax.f32 %v1918, 0.0
      %v1927 = vmax.f32 %v1920, 0.0
      %v1928 = vmax.f32 %v1922, 0.0
      %v1929 = vmax.f32 %v1924, 0.0
      %v1930 = vmul.f32 %v1926, %v1760
      %v1931 = vmul.f32 %v1927, %v1761
      %v1932 = vmul.f32 %v1928, %v1762
      %v1933 = vmul.f32 %v1929, %v1763
      %v1934 = vadd.f32 %v1635, %v1930
      %v1935 = vadd.f32 %v1636, %v1931
      %v1936 = vadd.f32 %v1637, %v1932
      %v1937 = vadd.f32 %v1638, %v1933
      %s1938 = scalar_lea.vmem %s547, 64
      %v1939 = vld [vmem:[%s1938] sm:$0xff]
      %v1940 = vld [vmem:[%s1938 + $0x8] sm:$0x33]
      %v1943 = vunpack.c.l.b16 %v1939
      %v1944 = vunpack.c.h.b16 %v1939
      %v1945 = vunpack.c.l.b16 %v1940
      %v1946 = vunpack.c.h.b16 %v1940
      %v1947 = vpack.c.b16 %v1945, %v1943
      %v1948 = vpack.c.b16 %v1946, %v1944
      %v1950 = vand.u32 %v1947, %v695
      %v1953 = vand.u32 %v1948, %v695
      %1955 = vmatprep.subr.bf16.mxu0 %v1953
      %1956 = vmatpush1.bf16.msra.mxu0 %v1950
      %1957 = vmatprep.subr.bf16.mxu0 0
      %1958 = vmatpush1.bf16.msra.mxu0 0
      %1959 = vmatprep.subr.bf16.mxu0 0
      %1960 = vmatpush1.bf16.msra.mxu0 0
      %1961 = vmatprep.subr.bf16.mxu0 0
      %1962 = vmatpush1.bf16.msra.mxu0 0
      %1963 = vmatprep.subr.bf16.mxu0 0
      %1964 = vmatpush1.bf16.msra.mxu0 0
      %1965 = vmatprep.subr.bf16.mxu0 0
      %1966 = vmatpush1.bf16.msra.mxu0 0
      %1967 = vmatprep.subr.bf16.mxu0 0
      %1968 = vmatpush1.bf16.msra.mxu0 0
      %1969 = vmatprep.subr.bf16.mxu0 0
      %1970 = vmatpush1.bf16.msra.mxu0 0
      %1971 = vmatprep.subr.bf16.mxu0 0
      %1972 = vmatpush1.bf16.msra.mxu0 0
      %1973 = vmatprep.subr.bf16.mxu0 0
      %1974 = vmatpush1.bf16.msra.mxu0 0
      %1975 = vmatprep.subr.bf16.mxu0 0
      %1976 = vmatpush1.bf16.msra.mxu0 0
      %1977 = vmatprep.subr.bf16.mxu0 0
      %1978 = vmatpush1.bf16.msra.mxu0 0
      %1979 = vmatprep.subr.bf16.mxu0 0
      %1980 = vmatpush1.bf16.msra.mxu0 0
      %1981 = vmatprep.subr.bf16.mxu0 0
      %1982 = vmatpush1.bf16.msra.mxu0 0
      %1983 = vmatprep.subr.bf16.mxu0 0
      %1984 = vmatpush1.bf16.msra.mxu0 0
      %1985 = vmatprep.subr.bf16.mxu0 0
      %1986 = vmatpush1.bf16.msra.mxu0 0
      %1987 = vmatprep.mubr.bf16.mxu0 0
      %1988 = vmatmul.mubr.bf16.gmra.mrb[0].mxu0 %v690
      %v1989 = vpop.f32.mrb[0].mxu0
      %v1990 = vadd.f32 %v668, %v1989
      %v1991 = vpop.f32.mrb[0].mxu0
      %v1992 = vadd.f32 %v668, %v1991
      %v1993 = vpop.f32.mrb[0].mxu0
      %v1994 = vadd.f32 %v673, %v1993
      %v1995 = vpop.f32.mrb[0].mxu0
      %v1996 = vadd.f32 %v673, %v1995
      %1997 = vdwg.mxu0
      %v1998 = vadd.f32 %v1990, %v655
      %v1999 = vadd.f32 %v1992, %v657
      %v2000 = vadd.f32 %v1994, %v659
      %v2001 = vadd.f32 %v1996, %v661
      %v2002 = vmul.f32 %v1998, 0.1
      %v2003 = vmul.f32 %v1999, 0.1
      %v2004 = vmul.f32 %v2000, 0.1
      %v2005 = vmul.f32 %v2001, 0.1
      %v2006 = vmax.f32 %v1998, %v2002
      %v2007 = vmax.f32 %v1999, %v2003
      %v2008 = vmax.f32 %v2000, %v2004
      %v2009 = vmax.f32 %v2001, %v2005
      %v2010 = vpack.c.bf16 %v2008, %v2006
      %v2011 = vpack.c.bf16 %v2009, %v2007
      %2012 = vmatprep.subr.bf16.mxu0 %v2011
      %2013 = vmatpush1.bf16.msra.mxu0 %v2010
      %2014 = vmatprep.subr.bf16.mxu0 0
      %2015 = vmatpush1.bf16.msra.mxu0 0
      %2016 = vmatprep.subr.bf16.mxu0 0
      %2017 = vmatpush1.bf16.msra.mxu0 0
      %2018 = vmatprep.subr.bf16.mxu0 0
      %2019 = vmatpush1.bf16.msra.mxu0 0
      %2020 = vmatprep.subr.bf16.mxu0 0
      %2021 = vmatpush1.bf16.msra.mxu0 0
      %2022 = vmatprep.subr.bf16.mxu0 0
      %2023 = vmatpush1.bf16.msra.mxu0 0
      %2024 = vmatprep.subr.bf16.mxu0 0
      %2025 = vmatpush1.bf16.msra.mxu0 0
      %2026 = vmatprep.subr.bf16.mxu0 0
      %2027 = vmatpush1.bf16.msra.mxu0 0
      %2028 = vmatprep.subr.bf16.mxu0 0
      %2029 = vmatpush1.bf16.msra.mxu0 0
      %2030 = vmatprep.subr.bf16.mxu0 0
      %2031 = vmatpush1.bf16.msra.mxu0 0
      %2032 = vmatprep.subr.bf16.mxu0 0
      %2033 = vmatpush1.bf16.msra.mxu0 0
      %2034 = vmatprep.subr.bf16.mxu0 0
      %2035 = vmatpush1.bf16.msra.mxu0 0
      %2036 = vmatprep.subr.bf16.mxu0 0
      %2037 = vmatpush1.bf16.msra.mxu0 0
      %2038 = vmatprep.subr.bf16.mxu0 0
      %2039 = vmatpush1.bf16.msra.mxu0 0
      %2040 = vmatprep.subr.bf16.mxu0 0
      %2041 = vmatpush1.bf16.msra.mxu0 0
      %2042 = vmatprep.subr.bf16.mxu0 0
      %2043 = vmatpush1.bf16.msra.mxu0 0
      %2044 = vmatprep.mubr.bf16.mxu0 0
      %2045 = vmatmul.mubr.bf16.gmra.mrb[0].mxu0 %v776
      %v2046 = vpop.f32.mrb[0].mxu0
      %v2047 = vadd.f32 %v762, %v2046
      %v2048 = vpop.f32.mrb[0].mxu0
      %v2049 = vadd.f32 %v762, %v2048
      %v2050 = vpop.f32.mrb[0].mxu0
      %v2051 = vadd.f32 %v767, %v2050
      %v2052 = vpop.f32.mrb[0].mxu0
      %v2053 = vadd.f32 %v767, %v2052
      %2054 = vdwg.mxu0
      %v2055 = vmul.f32 %v2047, 0.1
      %v2056 = vmul.f32 %v2049, 0.1
      %v2057 = vmul.f32 %v2051, 0.1
      %v2058 = vmul.f32 %v2053, 0.1
      %v2059 = vmax.f32 %v2047, %v2055
      %v2060 = vmax.f32 %v2049, %v2056
      %v2061 = vmax.f32 %v2051, %v2057
      %v2062 = vmax.f32 %v2053, %v2058
      %s2063 = scalar_lea.vmem %s557, 16
      %v2064 = vld [vmem:[%s2063] sm:$0xf]
      %v2067 = vunpack.c.l.s4 1983009808
      %v2068 = vunpack.c.0.s8 %v2067
      %v2069 = vlaneseq
      %v2070 = vshrl.u32 %v2069, 7
      %v2071 = vsub.s32 %v2068, %v2070
      %v2072 = vrot.slane %v2064, %v2071
      %v2073 = vcombine.high %v2072, %v2072
      %v2075 = vand.u32 %v2072, %v851
      %v2078 = vand.u32 %v2073, %v851
      %2080 = vmatprep.subr.bf16.mxu0 %v2078
      %2081 = vmatpush1.bf16.msra.mxu0 %v2075
      %2082 = vmatprep.subr.bf16.mxu0 0
      %2083 = vmatpush1.bf16.msra.mxu0 0
      %2084 = vmatprep.subr.bf16.mxu0 0
      %2085 = vmatpush1.bf16.msra.mxu0 0
      %2086 = vmatprep.subr.bf16.mxu0 0
      %2087 = vmatpush1.bf16.msra.mxu0 0
      %2088 = vmatprep.subr.bf16.mxu0 0
      %2089 = vmatpush1.bf16.msra.mxu0 0
      %2090 = vmatprep.subr.bf16.mxu0 0
      %2091 = vmatpush1.bf16.msra.mxu0 0
      %2092 = vmatprep.subr.bf16.mxu0 0
      %2093 = vmatpush1.bf16.msra.mxu0 0
      %2094 = vmatprep.subr.bf16.mxu0 0
      %2095 = vmatpush1.bf16.msra.mxu0 0
      %2096 = vmatprep.subr.bf16.mxu0 0
      %2097 = vmatpush1.bf16.msra.mxu0 0
      %2098 = vmatprep.subr.bf16.mxu0 0
      %2099 = vmatpush1.bf16.msra.mxu0 0
      %2100 = vmatprep.subr.bf16.mxu0 0
      %2101 = vmatpush1.bf16.msra.mxu0 0
      %2102 = vmatprep.subr.bf16.mxu0 0
      %2103 = vmatpush1.bf16.msra.mxu0 0
      %2104 = vmatprep.subr.bf16.mxu0 0
      %2105 = vmatpush1.bf16.msra.mxu0 0
      %2106 = vmatprep.subr.bf16.mxu0 0
      %2107 = vmatpush1.bf16.msra.mxu0 0
      %2108 = vmatprep.subr.bf16.mxu0 0
      %2109 = vmatpush1.bf16.msra.mxu0 0
      %2110 = vmatprep.subr.bf16.mxu0 0
      %2111 = vmatpush1.bf16.msra.mxu0 0
      %2112 = vmatprep.mubr.bf16.mxu0 0
      %2113 = vmatmul.mubr.bf16.gmra.mrb[0].mxu0 %v846
      %v2114 = vpop.f32.mrb[0].mxu0
      %v2115 = vadd.f32 %v833, %v2114
      %v2116 = vpop.f32.mrb[0].mxu0
      %v2117 = vadd.f32 %v833, %v2116
      %v2118 = vpop.f32.mrb[0].mxu0
      %v2119 = vpop.f32.mrb[0].mxu0
      %2120 = vdwg.mxu0
      %v2121 = vmax.f32 %v2115, 0.0
      %v2122 = vmax.f32 %v2117, 0.0
      %v2123 = vpack.c.bf16 %v2121, %v2121
      %v2124 = vpack.c.bf16 %v2122, %v2122
      %v2126 = vsel %vm613, %v2123, 0
      %v2129 = vsel %vm613, %v2124, 0
      %2131 = vmatprep.subr.bf16.mxu0 %v2129
      %2132 = vmatpush1.bf16.msra.mxu0 %v2126
      %2133 = vmatprep.subr.bf16.mxu0 0
      %2134 = vmatpush1.bf16.msra.mxu0 0
      %2135 = vmatprep.subr.bf16.mxu0 0
      %2136 = vmatpush1.bf16.msra.mxu0 0
      %2137 = vmatprep.subr.bf16.mxu0 0
      %2138 = vmatpush1.bf16.msra.mxu0 0
      %2139 = vmatprep.subr.bf16.mxu0 0
      %2140 = vmatpush1.bf16.msra.mxu0 0
      %2141 = vmatprep.subr.bf16.mxu0 0
      %2142 = vmatpush1.bf16.msra.mxu0 0
      %2143 = vmatprep.subr.bf16.mxu0 0
      %2144 = vmatpush1.bf16.msra.mxu0 0
      %2145 = vmatprep.subr.bf16.mxu0 0
      %2146 = vmatpush1.bf16.msra.mxu0 0
      %2147 = vmatprep.subr.bf16.mxu0 0
      %2148 = vmatpush1.bf16.msra.mxu0 0
      %2149 = vmatprep.subr.bf16.mxu0 0
      %2150 = vmatpush1.bf16.msra.mxu0 0
      %2151 = vmatprep.subr.bf16.mxu0 0
      %2152 = vmatpush1.bf16.msra.mxu0 0
      %2153 = vmatprep.subr.bf16.mxu0 0
      %2154 = vmatpush1.bf16.msra.mxu0 0
      %2155 = vmatprep.subr.bf16.mxu0 0
      %2156 = vmatpush1.bf16.msra.mxu0 0
      %2157 = vmatprep.subr.bf16.mxu0 0
      %2158 = vmatpush1.bf16.msra.mxu0 0
      %2159 = vmatprep.subr.bf16.mxu0 0
      %2160 = vmatpush1.bf16.msra.mxu0 0
      %2161 = vmatprep.subr.bf16.mxu0 0
      %2162 = vmatpush1.bf16.msra.mxu0 0
      %2163 = vmatprep.mubr.bf16.mxu0 0
      %2164 = vmatmul.mubr.bf16.gmra.mrb[0].mxu0 %v909
      %v2165 = vpop.f32.mrb[0].mxu0
      %v2166 = vadd.f32 %v906, %v2165
      %v2167 = vpop.f32.mrb[0].mxu0
      %v2168 = vadd.f32 %v906, %v2167
      %v2169 = vpop.f32.mrb[0].mxu0
      %v2170 = vpop.f32.mrb[0].mxu0
      %2171 = vdwg.mxu0
      %v2172 = vmax.f32 %v2166, 0.0
      %v2173 = vmax.f32 %v2168, 0.0
      %v2174 = vpack.c.bf16 %v2172, %v2172
      %v2175 = vpack.c.bf16 %v2173, %v2173
      %v2177 = vsel %vm613, %v2174, 0
      %v2180 = vsel %vm613, %v2175, 0
      %2182 = vmatprep.subr.bf16.mxu0 %v2180
      %2183 = vmatpush1.bf16.msra.mxu0 %v2177
      %2184 = vmatprep.subr.bf16.mxu0 0
      %2185 = vmatpush1.bf16.msra.mxu0 0
      %2186 = vmatprep.subr.bf16.mxu0 0
      %2187 = vmatpush1.bf16.msra.mxu0 0
      %2188 = vmatprep.subr.bf16.mxu0 0
      %2189 = vmatpush1.bf16.msra.mxu0 0
      %2190 = vmatprep.subr.bf16.mxu0 0
      %2191 = vmatpush1.bf16.msra.mxu0 0
      %2192 = vmatprep.subr.bf16.mxu0 0
      %2193 = vmatpush1.bf16.msra.mxu0 0
      %2194 = vmatprep.subr.bf16.mxu0 0
      %2195 = vmatpush1.bf16.msra.mxu0 0
      %2196 = vmatprep.subr.bf16.mxu0 0
      %2197 = vmatpush1.bf16.msra.mxu0 0
      %2198 = vmatprep.subr.bf16.mxu0 0
      %2199 = vmatpush1.bf16.msra.mxu0 0
      %2200 = vmatprep.subr.bf16.mxu0 0
      %2201 = vmatpush1.bf16.msra.mxu0 0
      %2202 = vmatprep.subr.bf16.mxu0 0
      %2203 = vmatpush1.bf16.msra.mxu0 0
      %2204 = vmatprep.subr.bf16.mxu0 0
      %2205 = vmatpush1.bf16.msra.mxu0 0
      %2206 = vmatprep.subr.bf16.mxu0 0
      %2207 = vmatpush1.bf16.msra.mxu0 0
      %2208 = vmatprep.subr.bf16.mxu0 0
      %2209 = vmatpush1.bf16.msra.mxu0 0
      %2210 = vmatprep.subr.bf16.mxu0 0
      %2211 = vmatpush1.bf16.msra.mxu0 0
      %2212 = vmatprep.subr.bf16.mxu0 0
      %2213 = vmatpush1.bf16.msra.mxu0 0
      %2214 = vmatprep.mubr.bf16.mxu0 0
      %2215 = vmatmul.mubr.bf16.gmra.mrb[0].mxu0 %v978
      %v2216 = vpop.f32.mrb[0].mxu0
      %v2217 = vadd.f32 %v965, %v2216
      %v2218 = vpop.f32.mrb[0].mxu0
      %v2219 = vadd.f32 %v965, %v2218
      %v2220 = vpop.f32.mrb[0].mxu0
      %v2221 = vadd.f32 %v970, %v2220
      %v2222 = vpop.f32.mrb[0].mxu0
      %v2223 = vadd.f32 %v970, %v2222
      %2224 = vdwg.mxu0
      %v2225 = vmax.f32 %v2217, 0.0
      %v2226 = vmax.f32 %v2219, 0.0
      %v2227 = vmax.f32 %v2221, 0.0
      %v2228 = vmax.f32 %v2223, 0.0
      %v2229 = vmul.f32 %v2225, %v2059
      %v2230 = vmul.f32 %v2226, %v2060
      %v2231 = vmul.f32 %v2227, %v2061
      %v2232 = vmul.f32 %v2228, %v2062
      %v2233 = vadd.f32 %v1934, %v2229
      %v2234 = vadd.f32 %v1935, %v2230
      %v2235 = vadd.f32 %v1936, %v2231
      %v2236 = vadd.f32 %v1937, %v2232
      %s2237 = scalar_lea.vmem %s547, 80
      %v2238 = vld [vmem:[%s2237] sm:$0xff]
      %v2239 = vld [vmem:[%s2237 + $0x8] sm:$0x33]
      %v2242 = vunpack.c.l.b16 %v2238
      %v2243 = vunpack.c.h.b16 %v2238
      %v2244 = vunpack.c.l.b16 %v2239
      %v2245 = vunpack.c.h.b16 %v2239
      %v2246 = vpack.c.b16 %v2244, %v2242
      %v2247 = vpack.c.b16 %v2245, %v2243
      %v2249 = vand.u32 %v2246, %v695
      %v2252 = vand.u32 %v2247, %v695
      %2254 = vmatprep.subr.bf16.mxu0 %v2252
      %2255 = vmatpush1.bf16.msra.mxu0 %v2249
      %2256 = vmatprep.subr.bf16.mxu0 0
      %2257 = vmatpush1.bf16.msra.mxu0 0
      %2258 = vmatprep.subr.bf16.mxu0 0
      %2259 = vmatpush1.bf16.msra.mxu0 0
      %2260 = vmatprep.subr.bf16.mxu0 0
      %2261 = vmatpush1.bf16.msra.mxu0 0
      %2262 = vmatprep.subr.bf16.mxu0 0
      %2263 = vmatpush1.bf16.msra.mxu0 0
      %2264 = vmatprep.subr.bf16.mxu0 0
      %2265 = vmatpush1.bf16.msra.mxu0 0
      %2266 = vmatprep.subr.bf16.mxu0 0
      %2267 = vmatpush1.bf16.msra.mxu0 0
      %2268 = vmatprep.subr.bf16.mxu0 0
      %2269 = vmatpush1.bf16.msra.mxu0 0
      %2270 = vmatprep.subr.bf16.mxu0 0
      %2271 = vmatpush1.bf16.msra.mxu0 0
      %2272 = vmatprep.subr.bf16.mxu0 0
      %2273 = vmatpush1.bf16.msra.mxu0 0
      %2274 = vmatprep.subr.bf16.mxu0 0
      %2275 = vmatpush1.bf16.msra.mxu0 0
      %2276 = vmatprep.subr.bf16.mxu0 0
      %2277 = vmatpush1.bf16.msra.mxu0 0
      %2278 = vmatprep.subr.bf16.mxu0 0
      %2279 = vmatpush1.bf16.msra.mxu0 0
      %2280 = vmatprep.subr.bf16.mxu0 0
      %2281 = vmatpush1.bf16.msra.mxu0 0
      %2282 = vmatprep.subr.bf16.mxu0 0
      %2283 = vmatpush1.bf16.msra.mxu0 0
      %2284 = vmatprep.subr.bf16.mxu0 0
      %2285 = vmatpush1.bf16.msra.mxu0 0
      %2286 = vmatprep.mubr.bf16.mxu0 0
      %2287 = vmatmul.mubr.bf16.gmra.mrb[0].mxu0 %v690
      %v2288 = vpop.f32.mrb[0].mxu0
      %v2289 = vadd.f32 %v668, %v2288
      %v2290 = vpop.f32.mrb[0].mxu0
      %v2291 = vadd.f32 %v668, %v2290
      %v2292 = vpop.f32.mrb[0].mxu0
      %v2293 = vadd.f32 %v673, %v2292
      %v2294 = vpop.f32.mrb[0].mxu0
      %v2295 = vadd.f32 %v673, %v2294
      %2296 = vdwg.mxu0
      %v2297 = vadd.f32 %v2289, %v655
      %v2298 = vadd.f32 %v2291, %v657
      %v2299 = vadd.f32 %v2293, %v659
      %v2300 = vadd.f32 %v2295, %v661
      %v2301 = vmul.f32 %v2297, 0.1
      %v2302 = vmul.f32 %v2298, 0.1
      %v2303 = vmul.f32 %v2299, 0.1
      %v2304 = vmul.f32 %v2300, 0.1
      %v2305 = vmax.f32 %v2297, %v2301
      %v2306 = vmax.f32 %v2298, %v2302
      %v2307 = vmax.f32 %v2299, %v2303
      %v2308 = vmax.f32 %v2300, %v2304
      %v2309 = vpack.c.bf16 %v2307, %v2305
      %v2310 = vpack.c.bf16 %v2308, %v2306
      %2311 = vmatprep.subr.bf16.mxu0 %v2310
      %2312 = vmatpush1.bf16.msra.mxu0 %v2309
      %2313 = vmatprep.subr.bf16.mxu0 0
      %2314 = vmatpush1.bf16.msra.mxu0 0
      %2315 = vmatprep.subr.bf16.mxu0 0
      %2316 = vmatpush1.bf16.msra.mxu0 0
      %2317 = vmatprep.subr.bf16.mxu0 0
      %2318 = vmatpush1.bf16.msra.mxu0 0
      %2319 = vmatprep.subr.bf16.mxu0 0
      %2320 = vmatpush1.bf16.msra.mxu0 0
      %2321 = vmatprep.subr.bf16.mxu0 0
      %2322 = vmatpush1.bf16.msra.mxu0 0
      %2323 = vmatprep.subr.bf16.mxu0 0
      %2324 = vmatpush1.bf16.msra.mxu0 0
      %2325 = vmatprep.subr.bf16.mxu0 0
      %2326 = vmatpush1.bf16.msra.mxu0 0
      %2327 = vmatprep.subr.bf16.mxu0 0
      %2328 = vmatpush1.bf16.msra.mxu0 0
      %2329 = vmatprep.subr.bf16.mxu0 0
      %2330 = vmatpush1.bf16.msra.mxu0 0
      %2331 = vmatprep.subr.bf16.mxu0 0
      %2332 = vmatpush1.bf16.msra.mxu0 0
      %2333 = vmatprep.subr.bf16.mxu0 0
      %2334 = vmatpush1.bf16.msra.mxu0 0
      %2335 = vmatprep.subr.bf16.mxu0 0
      %2336 = vmatpush1.bf16.msra.mxu0 0
      %2337 = vmatprep.subr.bf16.mxu0 0
      %2338 = vmatpush1.bf16.msra.mxu0 0
      %2339 = vmatprep.subr.bf16.mxu0 0
      %2340 = vmatpush1.bf16.msra.mxu0 0
      %2341 = vmatprep.subr.bf16.mxu0 0
      %2342 = vmatpush1.bf16.msra.mxu0 0
      %2343 = vmatprep.mubr.bf16.mxu0 0
      %2344 = vmatmul.mubr.bf16.gmra.mrb[0].mxu0 %v776
      %v2345 = vpop.f32.mrb[0].mxu0
      %v2346 = vadd.f32 %v762, %v2345
      %v2347 = vpop.f32.mrb[0].mxu0
      %v2348 = vadd.f32 %v762, %v2347
      %v2349 = vpop.f32.mrb[0].mxu0
      %v2350 = vadd.f32 %v767, %v2349
      %v2351 = vpop.f32.mrb[0].mxu0
      %v2352 = vadd.f32 %v767, %v2351
      %2353 = vdwg.mxu0
      %v2354 = vmul.f32 %v2346, 0.1
      %v2355 = vmul.f32 %v2348, 0.1
      %v2356 = vmul.f32 %v2350, 0.1
      %v2357 = vmul.f32 %v2352, 0.1
      %v2358 = vmax.f32 %v2346, %v2354
      %v2359 = vmax.f32 %v2348, %v2355
      %v2360 = vmax.f32 %v2350, %v2356
      %v2361 = vmax.f32 %v2352, %v2357
      %s2362 = scalar_lea.vmem %s557, 20
      %v2363 = vld [vmem:[%s2362] sm:$0xf]
      %v2366 = vunpack.c.l.s4 1983009808
      %v2367 = vunpack.c.0.s8 %v2366
      %v2368 = vlaneseq
      %v2369 = vshrl.u32 %v2368, 7
      %v2370 = vsub.s32 %v2367, %v2369
      %v2371 = vrot.slane %v2363, %v2370
      %v2372 = vcombine.high %v2371, %v2371
      %v2374 = vand.u32 %v2371, %v851
      %v2377 = vand.u32 %v2372, %v851
      %2379 = vmatprep.subr.bf16.mxu0 %v2377
      %2380 = vmatpush1.bf16.msra.mxu0 %v2374
      %2381 = vmatprep.subr.bf16.mxu0 0
      %2382 = vmatpush1.bf16.msra.mxu0 0
      %2383 = vmatprep.subr.bf16.mxu0 0
      %2384 = vmatpush1.bf16.msra.mxu0 0
      %2385 = vmatprep.subr.bf16.mxu0 0
      %2386 = vmatpush1.bf16.msra.mxu0 0
      %2387 = vmatprep.subr.bf16.mxu0 0
      %2388 = vmatpush1.bf16.msra.mxu0 0
      %2389 = vmatprep.subr.bf16.mxu0 0
      %2390 = vmatpush1.bf16.msra.mxu0 0
      %2391 = vmatprep.subr.bf16.mxu0 0
      %2392 = vmatpush1.bf16.msra.mxu0 0
      %2393 = vmatprep.subr.bf16.mxu0 0
      %2394 = vmatpush1.bf16.msra.mxu0 0
      %2395 = vmatprep.subr.bf16.mxu0 0
      %2396 = vmatpush1.bf16.msra.mxu0 0
      %2397 = vmatprep.subr.bf16.mxu0 0
      %2398 = vmatpush1.bf16.msra.mxu0 0
      %2399 = vmatprep.subr.bf16.mxu0 0
      %2400 = vmatpush1.bf16.msra.mxu0 0
      %2401 = vmatprep.subr.bf16.mxu0 0
      %2402 = vmatpush1.bf16.msra.mxu0 0
      %2403 = vmatprep.subr.bf16.mxu0 0
      %2404 = vmatpush1.bf16.msra.mxu0 0
      %2405 = vmatprep.subr.bf16.mxu0 0
      %2406 = vmatpush1.bf16.msra.mxu0 0
      %2407 = vmatprep.subr.bf16.mxu0 0
      %2408 = vmatpush1.bf16.msra.mxu0 0
      %2409 = vmatprep.subr.bf16.mxu0 0
      %2410 = vmatpush1.bf16.msra.mxu0 0
      %2411 = vmatprep.mubr.bf16.mxu0 0
      %2412 = vmatmul.mubr.bf16.gmra.mrb[0].mxu0 %v846
      %v2413 = vpop.f32.mrb[0].mxu0
      %v2414 = vadd.f32 %v833, %v2413
      %v2415 = vpop.f32.mrb[0].mxu0
      %v2416 = vadd.f32 %v833, %v2415
      %v2417 = vpop.f32.mrb[0].mxu0
      %v2418 = vpop.f32.mrb[0].mxu0
      %2419 = vdwg.mxu0
      %v2420 = vmax.f32 %v2414, 0.0
      %v2421 = vmax.f32 %v2416, 0.0
      %v2422 = vpack.c.bf16 %v2420, %v2420
      %v2423 = vpack.c.bf16 %v2421, %v2421
      %v2425 = vsel %vm613, %v2422, 0
      %v2428 = vsel %vm613, %v2423, 0
      %2430 = vmatprep.subr.bf16.mxu0 %v2428
      %2431 = vmatpush1.bf16.msra.mxu0 %v2425
      %2432 = vmatprep.subr.bf16.mxu0 0
      %2433 = vmatpush1.bf16.msra.mxu0 0
      %2434 = vmatprep.subr.bf16.mxu0 0
      %2435 = vmatpush1.bf16.msra.mxu0 0
      %2436 = vmatprep.subr.bf16.mxu0 0
      %2437 = vmatpush1.bf16.msra.mxu0 0
      %2438 = vmatprep.subr.bf16.mxu0 0
      %2439 = vmatpush1.bf16.msra.mxu0 0
      %2440 = vmatprep.subr.bf16.mxu0 0
      %2441 = vmatpush1.bf16.msra.mxu0 0
      %2442 = vmatprep.subr.bf16.mxu0 0
      %2443 = vmatpush1.bf16.msra.mxu0 0
      %2444 = vmatprep.subr.bf16.mxu0 0
      %2445 = vmatpush1.bf16.msra.mxu0 0
      %2446 = vmatprep.subr.bf16.mxu0 0
      %2447 = vmatpush1.bf16.msra.mxu0 0
      %2448 = vmatprep.subr.bf16.mxu0 0
      %2449 = vmatpush1.bf16.msra.mxu0 0
      %2450 = vmatprep.subr.bf16.mxu0 0
      %2451 = vmatpush1.bf16.msra.mxu0 0
      %2452 = vmatprep.subr.bf16.mxu0 0
      %2453 = vmatpush1.bf16.msra.mxu0 0
      %2454 = vmatprep.subr.bf16.mxu0 0
      %2455 = vmatpush1.bf16.msra.mxu0 0
      %2456 = vmatprep.subr.bf16.mxu0 0
      %2457 = vmatpush1.bf16.msra.mxu0 0
      %2458 = vmatprep.subr.bf16.mxu0 0
      %2459 = vmatpush1.bf16.msra.mxu0 0
      %2460 = vmatprep.subr.bf16.mxu0 0
      %2461 = vmatpush1.bf16.msra.mxu0 0
      %2462 = vmatprep.mubr.bf16.mxu0 0
      %2463 = vmatmul.mubr.bf16.gmra.mrb[0].mxu0 %v909
      %v2464 = vpop.f32.mrb[0].mxu0
      %v2465 = vadd.f32 %v906, %v2464
      %v2466 = vpop.f32.mrb[0].mxu0
      %v2467 = vadd.f32 %v906, %v2466
      %v2468 = vpop.f32.mrb[0].mxu0
      %v2469 = vpop.f32.mrb[0].mxu0
      %2470 = vdwg.mxu0
      %v2471 = vmax.f32 %v2465, 0.0
      %v2472 = vmax.f32 %v2467, 0.0
      %v2473 = vpack.c.bf16 %v2471, %v2471
      %v2474 = vpack.c.bf16 %v2472, %v2472
      %v2476 = vsel %vm613, %v2473, 0
      %v2479 = vsel %vm613, %v2474, 0
      %2481 = vmatprep.subr.bf16.mxu0 %v2479
      %2482 = vmatpush1.bf16.msra.mxu0 %v2476
      %2483 = vmatprep.subr.bf16.mxu0 0
      %2484 = vmatpush1.bf16.msra.mxu0 0
      %2485 = vmatprep.subr.bf16.mxu0 0
      %2486 = vmatpush1.bf16.msra.mxu0 0
      %2487 = vmatprep.subr.bf16.mxu0 0
      %2488 = vmatpush1.bf16.msra.mxu0 0
      %2489 = vmatprep.subr.bf16.mxu0 0
      %2490 = vmatpush1.bf16.msra.mxu0 0
      %2491 = vmatprep.subr.bf16.mxu0 0
      %2492 = vmatpush1.bf16.msra.mxu0 0
      %2493 = vmatprep.subr.bf16.mxu0 0
      %2494 = vmatpush1.bf16.msra.mxu0 0
      %2495 = vmatprep.subr.bf16.mxu0 0
      %2496 = vmatpush1.bf16.msra.mxu0 0
      %2497 = vmatprep.subr.bf16.mxu0 0
      %2498 = vmatpush1.bf16.msra.mxu0 0
      %2499 = vmatprep.subr.bf16.mxu0 0
      %2500 = vmatpush1.bf16.msra.mxu0 0
      %2501 = vmatprep.subr.bf16.mxu0 0
      %2502 = vmatpush1.bf16.msra.mxu0 0
      %2503 = vmatprep.subr.bf16.mxu0 0
      %2504 = vmatpush1.bf16.msra.mxu0 0
      %2505 = vmatprep.subr.bf16.mxu0 0
      %2506 = vmatpush1.bf16.msra.mxu0 0
      %2507 = vmatprep.subr.bf16.mxu0 0
      %2508 = vmatpush1.bf16.msra.mxu0 0
      %2509 = vmatprep.subr.bf16.mxu0 0
      %2510 = vmatpush1.bf16.msra.mxu0 0
      %2511 = vmatprep.subr.bf16.mxu0 0
      %2512 = vmatpush1.bf16.msra.mxu0 0
      %2513 = vmatprep.mubr.bf16.mxu0 0
      %2514 = vmatmul.mubr.bf16.gmra.mrb[0].mxu0 %v978
      %v2515 = vpop.f32.mrb[0].mxu0
      %v2516 = vadd.f32 %v965, %v2515
      %v2517 = vpop.f32.mrb[0].mxu0
      %v2518 = vadd.f32 %v965, %v2517
      %v2519 = vpop.f32.mrb[0].mxu0
      %v2520 = vadd.f32 %v970, %v2519
      %v2521 = vpop.f32.mrb[0].mxu0
      %v2522 = vadd.f32 %v970, %v2521
      %2523 = vdwg.mxu0
      %v2524 = vmax.f32 %v2516, 0.0
      %v2525 = vmax.f32 %v2518, 0.0
      %v2526 = vmax.f32 %v2520, 0.0
      %v2527 = vmax.f32 %v2522, 0.0
      %v2528 = vmul.f32 %v2524, %v2358
      %v2529 = vmul.f32 %v2525, %v2359
      %v2530 = vmul.f32 %v2526, %v2360
      %v2531 = vmul.f32 %v2527, %v2361
      %v2532 = vadd.f32 %v2233, %v2528
      %v2533 = vadd.f32 %v2234, %v2529
      %v2534 = vadd.f32 %v2235, %v2530
      %v2535 = vadd.f32 %v2236, %v2531
      %s2536 = scalar_lea.vmem %s547, 96
      %v2537 = vld [vmem:[%s2536] sm:$0xff]
      %v2538 = vld [vmem:[%s2536 + $0x8] sm:$0x33]
      %v2541 = vunpack.c.l.b16 %v2537
      %v2542 = vunpack.c.h.b16 %v2537
      %v2543 = vunpack.c.l.b16 %v2538
      %v2544 = vunpack.c.h.b16 %v2538
      %v2545 = vpack.c.b16 %v2543, %v2541
      %v2546 = vpack.c.b16 %v2544, %v2542
      %v2548 = vand.u32 %v2545, %v695
      %v2551 = vand.u32 %v2546, %v695
      %2553 = vmatprep.subr.bf16.mxu0 %v2551
      %2554 = vmatpush1.bf16.msra.mxu0 %v2548
      %2555 = vmatprep.subr.bf16.mxu0 0
      %2556 = vmatpush1.bf16.msra.mxu0 0
      %2557 = vmatprep.subr.bf16.mxu0 0
      %2558 = vmatpush1.bf16.msra.mxu0 0
      %2559 = vmatprep.subr.bf16.mxu0 0
      %2560 = vmatpush1.bf16.msra.mxu0 0
      %2561 = vmatprep.subr.bf16.mxu0 0
      %2562 = vmatpush1.bf16.msra.mxu0 0
      %2563 = vmatprep.subr.bf16.mxu0 0
      %2564 = vmatpush1.bf16.msra.mxu0 0
      %2565 = vmatprep.subr.bf16.mxu0 0
      %2566 = vmatpush1.bf16.msra.mxu0 0
      %2567 = vmatprep.subr.bf16.mxu0 0
      %2568 = vmatpush1.bf16.msra.mxu0 0
      %2569 = vmatprep.subr.bf16.mxu0 0
      %2570 = vmatpush1.bf16.msra.mxu0 0
      %2571 = vmatprep.subr.bf16.mxu0 0
      %2572 = vmatpush1.bf16.msra.mxu0 0
      %2573 = vmatprep.subr.bf16.mxu0 0
      %2574 = vmatpush1.bf16.msra.mxu0 0
      %2575 = vmatprep.subr.bf16.mxu0 0
      %2576 = vmatpush1.bf16.msra.mxu0 0
      %2577 = vmatprep.subr.bf16.mxu0 0
      %2578 = vmatpush1.bf16.msra.mxu0 0
      %2579 = vmatprep.subr.bf16.mxu0 0
      %2580 = vmatpush1.bf16.msra.mxu0 0
      %2581 = vmatprep.subr.bf16.mxu0 0
      %2582 = vmatpush1.bf16.msra.mxu0 0
      %2583 = vmatprep.subr.bf16.mxu0 0
      %2584 = vmatpush1.bf16.msra.mxu0 0
      %2585 = vmatprep.mubr.bf16.mxu0 0
      %2586 = vmatmul.mubr.bf16.gmra.mrb[0].mxu0 %v690
      %v2587 = vpop.f32.mrb[0].mxu0
      %v2588 = vadd.f32 %v668, %v2587
      %v2589 = vpop.f32.mrb[0].mxu0
      %v2590 = vadd.f32 %v668, %v2589
      %v2591 = vpop.f32.mrb[0].mxu0
      %v2592 = vadd.f32 %v673, %v2591
      %v2593 = vpop.f32.mrb[0].mxu0
      %v2594 = vadd.f32 %v673, %v2593
      %2595 = vdwg.mxu0
      %v2596 = vadd.f32 %v2588, %v655
      %v2597 = vadd.f32 %v2590, %v657
      %v2598 = vadd.f32 %v2592, %v659
      %v2599 = vadd.f32 %v2594, %v661
      %v2600 = vmul.f32 %v2596, 0.1
      %v2601 = vmul.f32 %v2597, 0.1
      %v2602 = vmul.f32 %v2598, 0.1
      %v2603 = vmul.f32 %v2599, 0.1
      %v2604 = vmax.f32 %v2596, %v2600
      %v2605 = vmax.f32 %v2597, %v2601
      %v2606 = vmax.f32 %v2598, %v2602
      %v2607 = vmax.f32 %v2599, %v2603
      %v2608 = vpack.c.bf16 %v2606, %v2604
      %v2609 = vpack.c.bf16 %v2607, %v2605
      %2610 = vmatprep.subr.bf16.mxu0 %v2609
      %2611 = vmatpush1.bf16.msra.mxu0 %v2608
      %2612 = vmatprep.subr.bf16.mxu0 0
      %2613 = vmatpush1.bf16.msra.mxu0 0
      %2614 = vmatprep.subr.bf16.mxu0 0
      %2615 = vmatpush1.bf16.msra.mxu0 0
      %2616 = vmatprep.subr.bf16.mxu0 0
      %2617 = vmatpush1.bf16.msra.mxu0 0
      %2618 = vmatprep.subr.bf16.mxu0 0
      %2619 = vmatpush1.bf16.msra.mxu0 0
      %2620 = vmatprep.subr.bf16.mxu0 0
      %2621 = vmatpush1.bf16.msra.mxu0 0
      %2622 = vmatprep.subr.bf16.mxu0 0
      %2623 = vmatpush1.bf16.msra.mxu0 0
      %2624 = vmatprep.subr.bf16.mxu0 0
      %2625 = vmatpush1.bf16.msra.mxu0 0
      %2626 = vmatprep.subr.bf16.mxu0 0
      %2627 = vmatpush1.bf16.msra.mxu0 0
      %2628 = vmatprep.subr.bf16.mxu0 0
      %2629 = vmatpush1.bf16.msra.mxu0 0
      %2630 = vmatprep.subr.bf16.mxu0 0
      %2631 = vmatpush1.bf16.msra.mxu0 0
      %2632 = vmatprep.subr.bf16.mxu0 0
      %2633 = vmatpush1.bf16.msra.mxu0 0
      %2634 = vmatprep.subr.bf16.mxu0 0
      %2635 = vmatpush1.bf16.msra.mxu0 0
      %2636 = vmatprep.subr.bf16.mxu0 0
      %2637 = vmatpush1.bf16.msra.mxu0 0
      %2638 = vmatprep.subr.bf16.mxu0 0
      %2639 = vmatpush1.bf16.msra.mxu0 0
      %2640 = vmatprep.subr.bf16.mxu0 0
      %2641 = vmatpush1.bf16.msra.mxu0 0
      %2642 = vmatprep.mubr.bf16.mxu0 0
      %2643 = vmatmul.mubr.bf16.gmra.mrb[0].mxu0 %v776
      %v2644 = vpop.f32.mrb[0].mxu0
      %v2645 = vadd.f32 %v762, %v2644
      %v2646 = vpop.f32.mrb[0].mxu0
      %v2647 = vadd.f32 %v762, %v2646
      %v2648 = vpop.f32.mrb[0].mxu0
      %v2649 = vadd.f32 %v767, %v2648
      %v2650 = vpop.f32.mrb[0].mxu0
      %v2651 = vadd.f32 %v767, %v2650
      %2652 = vdwg.mxu0
      %v2653 = vmul.f32 %v2645, 0.1
      %v2654 = vmul.f32 %v2647, 0.1
      %v2655 = vmul.f32 %v2649, 0.1
      %v2656 = vmul.f32 %v2651, 0.1
      %v2657 = vmax.f32 %v2645, %v2653
      %v2658 = vmax.f32 %v2647, %v2654
      %v2659 = vmax.f32 %v2649, %v2655
      %v2660 = vmax.f32 %v2651, %v2656
      %s2661 = scalar_lea.vmem %s557, 24
      %v2662 = vld [vmem:[%s2661] sm:$0xf]
      %v2665 = vunpack.c.l.s4 1983009808
      %v2666 = vunpack.c.0.s8 %v2665
      %v2667 = vlaneseq
      %v2668 = vshrl.u32 %v2667, 7
      %v2669 = vsub.s32 %v2666, %v2668
      %v2670 = vrot.slane %v2662, %v2669
      %v2671 = vcombine.high %v2670, %v2670
      %v2673 = vand.u32 %v2670, %v851
      %v2676 = vand.u32 %v2671, %v851
      %2678 = vmatprep.subr.bf16.mxu0 %v2676
      %2679 = vmatpush1.bf16.msra.mxu0 %v2673
      %2680 = vmatprep.subr.bf16.mxu0 0
      %2681 = vmatpush1.bf16.msra.mxu0 0
      %2682 = vmatprep.subr.bf16.mxu0 0
      %2683 = vmatpush1.bf16.msra.mxu0 0
      %2684 = vmatprep.subr.bf16.mxu0 0
      %2685 = vmatpush1.bf16.msra.mxu0 0
      %2686 = vmatprep.subr.bf16.mxu0 0
      %2687 = vmatpush1.bf16.msra.mxu0 0
      %2688 = vmatprep.subr.bf16.mxu0 0
      %2689 = vmatpush1.bf16.msra.mxu0 0
      %2690 = vmatprep.subr.bf16.mxu0 0
      %2691 = vmatpush1.bf16.msra.mxu0 0
      %2692 = vmatprep.subr.bf16.mxu0 0
      %2693 = vmatpush1.bf16.msra.mxu0 0
      %2694 = vmatprep.subr.bf16.mxu0 0
      %2695 = vmatpush1.bf16.msra.mxu0 0
      %2696 = vmatprep.subr.bf16.mxu0 0
      %2697 = vmatpush1.bf16.msra.mxu0 0
      %2698 = vmatprep.subr.bf16.mxu0 0
      %2699 = vmatpush1.bf16.msra.mxu0 0
      %2700 = vmatprep.subr.bf16.mxu0 0
      %2701 = vmatpush1.bf16.msra.mxu0 0
      %2702 = vmatprep.subr.bf16.mxu0 0
      %2703 = vmatpush1.bf16.msra.mxu0 0
      %2704 = vmatprep.subr.bf16.mxu0 0
      %2705 = vmatpush1.bf16.msra.mxu0 0
      %2706 = vmatprep.subr.bf16.mxu0 0
      %2707 = vmatpush1.bf16.msra.mxu0 0
      %2708 = vmatprep.subr.bf16.mxu0 0
      %2709 = vmatpush1.bf16.msra.mxu0 0
      %2710 = vmatprep.mubr.bf16.mxu0 0
      %2711 = vmatmul.mubr.bf16.gmra.mrb[0].mxu0 %v846
      %v2712 = vpop.f32.mrb[0].mxu0
      %v2713 = vadd.f32 %v833, %v2712
      %v2714 = vpop.f32.mrb[0].mxu0
      %v2715 = vadd.f32 %v833, %v2714
      %v2716 = vpop.f32.mrb[0].mxu0
      %v2717 = vpop.f32.mrb[0].mxu0
      %2718 = vdwg.mxu0
      %v2719 = vmax.f32 %v2713, 0.0
      %v2720 = vmax.f32 %v2715, 0.0
      %v2721 = vpack.c.bf16 %v2719, %v2719
      %v2722 = vpack.c.bf16 %v2720, %v2720
      %v2724 = vsel %vm613, %v2721, 0
      %v2727 = vsel %vm613, %v2722, 0
      %2729 = vmatprep.subr.bf16.mxu0 %v2727
      %2730 = vmatpush1.bf16.msra.mxu0 %v2724
      %2731 = vmatprep.subr.bf16.mxu0 0
      %2732 = vmatpush1.bf16.msra.mxu0 0
      %2733 = vmatprep.subr.bf16.mxu0 0
      %2734 = vmatpush1.bf16.msra.mxu0 0
      %2735 = vmatprep.subr.bf16.mxu0 0
      %2736 = vmatpush1.bf16.msra.mxu0 0
      %2737 = vmatprep.subr.bf16.mxu0 0
      %2738 = vmatpush1.bf16.msra.mxu0 0
      %2739 = vmatprep.subr.bf16.mxu0 0
      %2740 = vmatpush1.bf16.msra.mxu0 0
      %2741 = vmatprep.subr.bf16.mxu0 0
      %2742 = vmatpush1.bf16.msra.mxu0 0
      %2743 = vmatprep.subr.bf16.mxu0 0
      %2744 = vmatpush1.bf16.msra.mxu0 0
      %2745 = vmatprep.subr.bf16.mxu0 0
      %2746 = vmatpush1.bf16.msra.mxu0 0
      %2747 = vmatprep.subr.bf16.mxu0 0
      %2748 = vmatpush1.bf16.msra.mxu0 0
      %2749 = vmatprep.subr.bf16.mxu0 0
      %2750 = vmatpush1.bf16.msra.mxu0 0
      %2751 = vmatprep.subr.bf16.mxu0 0
      %2752 = vmatpush1.bf16.msra.mxu0 0
      %2753 = vmatprep.subr.bf16.mxu0 0
      %2754 = vmatpush1.bf16.msra.mxu0 0
      %2755 = vmatprep.subr.bf16.mxu0 0
      %2756 = vmatpush1.bf16.msra.mxu0 0
      %2757 = vmatprep.subr.bf16.mxu0 0
      %2758 = vmatpush1.bf16.msra.mxu0 0
      %2759 = vmatprep.subr.bf16.mxu0 0
      %2760 = vmatpush1.bf16.msra.mxu0 0
      %2761 = vmatprep.mubr.bf16.mxu0 0
      %2762 = vmatmul.mubr.bf16.gmra.mrb[0].mxu0 %v909
      %v2763 = vpop.f32.mrb[0].mxu0
      %v2764 = vadd.f32 %v906, %v2763
      %v2765 = vpop.f32.mrb[0].mxu0
      %v2766 = vadd.f32 %v906, %v2765
      %v2767 = vpop.f32.mrb[0].mxu0
      %v2768 = vpop.f32.mrb[0].mxu0
      %2769 = vdwg.mxu0
      %v2770 = vmax.f32 %v2764, 0.0
      %v2771 = vmax.f32 %v2766, 0.0
      %v2772 = vpack.c.bf16 %v2770, %v2770
      %v2773 = vpack.c.bf16 %v2771, %v2771
      %v2775 = vsel %vm613, %v2772, 0
      %v2778 = vsel %vm613, %v2773, 0
      %2780 = vmatprep.subr.bf16.mxu0 %v2778
      %2781 = vmatpush1.bf16.msra.mxu0 %v2775
      %2782 = vmatprep.subr.bf16.mxu0 0
      %2783 = vmatpush1.bf16.msra.mxu0 0
      %2784 = vmatprep.subr.bf16.mxu0 0
      %2785 = vmatpush1.bf16.msra.mxu0 0
      %2786 = vmatprep.subr.bf16.mxu0 0
      %2787 = vmatpush1.bf16.msra.mxu0 0
      %2788 = vmatprep.subr.bf16.mxu0 0
      %2789 = vmatpush1.bf16.msra.mxu0 0
      %2790 = vmatprep.subr.bf16.mxu0 0
      %2791 = vmatpush1.bf16.msra.mxu0 0
      %2792 = vmatprep.subr.bf16.mxu0 0
      %2793 = vmatpush1.bf16.msra.mxu0 0
      %2794 = vmatprep.subr.bf16.mxu0 0
      %2795 = vmatpush1.bf16.msra.mxu0 0
      %2796 = vmatprep.subr.bf16.mxu0 0
      %2797 = vmatpush1.bf16.msra.mxu0 0
      %2798 = vmatprep.subr.bf16.mxu0 0
      %2799 = vmatpush1.bf16.msra.mxu0 0
      %2800 = vmatprep.subr.bf16.mxu0 0
      %2801 = vmatpush1.bf16.msra.mxu0 0
      %2802 = vmatprep.subr.bf16.mxu0 0
      %2803 = vmatpush1.bf16.msra.mxu0 0
      %2804 = vmatprep.subr.bf16.mxu0 0
      %2805 = vmatpush1.bf16.msra.mxu0 0
      %2806 = vmatprep.subr.bf16.mxu0 0
      %2807 = vmatpush1.bf16.msra.mxu0 0
      %2808 = vmatprep.subr.bf16.mxu0 0
      %2809 = vmatpush1.bf16.msra.mxu0 0
      %2810 = vmatprep.subr.bf16.mxu0 0
      %2811 = vmatpush1.bf16.msra.mxu0 0
      %2812 = vmatprep.mubr.bf16.mxu0 0
      %2813 = vmatmul.mubr.bf16.gmra.mrb[0].mxu0 %v978
      %v2814 = vpop.f32.mrb[0].mxu0
      %v2815 = vadd.f32 %v965, %v2814
      %v2816 = vpop.f32.mrb[0].mxu0
      %v2817 = vadd.f32 %v965, %v2816
      %v2818 = vpop.f32.mrb[0].mxu0
      %v2819 = vadd.f32 %v970, %v2818
      %v2820 = vpop.f32.mrb[0].mxu0
      %v2821 = vadd.f32 %v970, %v2820
      %2822 = vdwg.mxu0
      %v2823 = vmax.f32 %v2815, 0.0
      %v2824 = vmax.f32 %v2817, 0.0
      %v2825 = vmax.f32 %v2819, 0.0
      %v2826 = vmax.f32 %v2821, 0.0
      %v2827 = vmul.f32 %v2823, %v2657
      %v2828 = vmul.f32 %v2824, %v2658
      %v2829 = vmul.f32 %v2825, %v2659
      %v2830 = vmul.f32 %v2826, %v2660
      %v2831 = vadd.f32 %v2532, %v2827
      %v2832 = vadd.f32 %v2533, %v2828
      %v2833 = vadd.f32 %v2534, %v2829
      %v2834 = vadd.f32 %v2535, %v2830
      %s2835 = scalar_lea.vmem %s547, 112
      %v2836 = vld [vmem:[%s2835] sm:$0xff]
      %v2837 = vld [vmem:[%s2835 + $0x8] sm:$0x33]
      %v2840 = vunpack.c.l.b16 %v2836
      %v2841 = vunpack.c.h.b16 %v2836
      %v2842 = vunpack.c.l.b16 %v2837
      %v2843 = vunpack.c.h.b16 %v2837
      %v2844 = vpack.c.b16 %v2842, %v2840
      %v2845 = vpack.c.b16 %v2843, %v2841
      %v2847 = vand.u32 %v2844, %v695
      %v2850 = vand.u32 %v2845, %v695
      %2852 = vmatprep.subr.bf16.mxu0 %v2850
      %2853 = vmatpush1.bf16.msra.mxu0 %v2847
      %2854 = vmatprep.subr.bf16.mxu0 0
      %2855 = vmatpush1.bf16.msra.mxu0 0
      %2856 = vmatprep.subr.bf16.mxu0 0
      %2857 = vmatpush1.bf16.msra.mxu0 0
      %2858 = vmatprep.subr.bf16.mxu0 0
      %2859 = vmatpush1.bf16.msra.mxu0 0
      %2860 = vmatprep.subr.bf16.mxu0 0
      %2861 = vmatpush1.bf16.msra.mxu0 0
      %2862 = vmatprep.subr.bf16.mxu0 0
      %2863 = vmatpush1.bf16.msra.mxu0 0
      %2864 = vmatprep.subr.bf16.mxu0 0
      %2865 = vmatpush1.bf16.msra.mxu0 0
      %2866 = vmatprep.subr.bf16.mxu0 0
      %2867 = vmatpush1.bf16.msra.mxu0 0
      %2868 = vmatprep.subr.bf16.mxu0 0
      %2869 = vmatpush1.bf16.msra.mxu0 0
      %2870 = vmatprep.subr.bf16.mxu0 0
      %2871 = vmatpush1.bf16.msra.mxu0 0
      %2872 = vmatprep.subr.bf16.mxu0 0
      %2873 = vmatpush1.bf16.msra.mxu0 0
      %2874 = vmatprep.subr.bf16.mxu0 0
      %2875 = vmatpush1.bf16.msra.mxu0 0
      %2876 = vmatprep.subr.bf16.mxu0 0
      %2877 = vmatpush1.bf16.msra.mxu0 0
      %2878 = vmatprep.subr.bf16.mxu0 0
      %2879 = vmatpush1.bf16.msra.mxu0 0
      %2880 = vmatprep.subr.bf16.mxu0 0
      %2881 = vmatpush1.bf16.msra.mxu0 0
      %2882 = vmatprep.subr.bf16.mxu0 0
      %2883 = vmatpush1.bf16.msra.mxu0 0
      %2884 = vmatprep.mubr.bf16.mxu0 0
      %2885 = vmatmul.mubr.bf16.gmra.mrb[0].mxu0 %v690
      %v2886 = vpop.f32.mrb[0].mxu0
      %v2887 = vadd.f32 %v668, %v2886
      %v2888 = vpop.f32.mrb[0].mxu0
      %v2889 = vadd.f32 %v668, %v2888
      %v2890 = vpop.f32.mrb[0].mxu0
      %v2891 = vadd.f32 %v673, %v2890
      %v2892 = vpop.f32.mrb[0].mxu0
      %v2893 = vadd.f32 %v673, %v2892
      %2894 = vdwg.mxu0
      %v2895 = vadd.f32 %v2887, %v655
      %v2896 = vadd.f32 %v2889, %v657
      %v2897 = vadd.f32 %v2891, %v659
      %v2898 = vadd.f32 %v2893, %v661
      %v2899 = vmul.f32 %v2895, 0.1
      %v2900 = vmul.f32 %v2896, 0.1
      %v2901 = vmul.f32 %v2897, 0.1
      %v2902 = vmul.f32 %v2898, 0.1
      %v2903 = vmax.f32 %v2895, %v2899
      %v2904 = vmax.f32 %v2896, %v2900
      %v2905 = vmax.f32 %v2897, %v2901
      %v2906 = vmax.f32 %v2898, %v2902
      %v2907 = vpack.c.bf16 %v2905, %v2903
      %v2908 = vpack.c.bf16 %v2906, %v2904
      %2909 = vmatprep.subr.bf16.mxu0 %v2908
      %2910 = vmatpush1.bf16.msra.mxu0 %v2907
      %2911 = vmatprep.subr.bf16.mxu0 0
      %2912 = vmatpush1.bf16.msra.mxu0 0
      %2913 = vmatprep.subr.bf16.mxu0 0
      %2914 = vmatpush1.bf16.msra.mxu0 0
      %2915 = vmatprep.subr.bf16.mxu0 0
      %2916 = vmatpush1.bf16.msra.mxu0 0
      %2917 = vmatprep.subr.bf16.mxu0 0
      %2918 = vmatpush1.bf16.msra.mxu0 0
      %2919 = vmatprep.subr.bf16.mxu0 0
      %2920 = vmatpush1.bf16.msra.mxu0 0
      %2921 = vmatprep.subr.bf16.mxu0 0
      %2922 = vmatpush1.bf16.msra.mxu0 0
      %2923 = vmatprep.subr.bf16.mxu0 0
      %2924 = vmatpush1.bf16.msra.mxu0 0
      %2925 = vmatprep.subr.bf16.mxu0 0
      %2926 = vmatpush1.bf16.msra.mxu0 0
      %2927 = vmatprep.subr.bf16.mxu0 0
      %2928 = vmatpush1.bf16.msra.mxu0 0
      %2929 = vmatprep.subr.bf16.mxu0 0
      %2930 = vmatpush1.bf16.msra.mxu0 0
      %2931 = vmatprep.subr.bf16.mxu0 0
      %2932 = vmatpush1.bf16.msra.mxu0 0
      %2933 = vmatprep.subr.bf16.mxu0 0
      %2934 = vmatpush1.bf16.msra.mxu0 0
      %2935 = vmatprep.subr.bf16.mxu0 0
      %2936 = vmatpush1.bf16.msra.mxu0 0
      %2937 = vmatprep.subr.bf16.mxu0 0
      %2938 = vmatpush1.bf16.msra.mxu0 0
      %2939 = vmatprep.subr.bf16.mxu0 0
      %2940 = vmatpush1.bf16.msra.mxu0 0
      %2941 = vmatprep.mubr.bf16.mxu0 0
      %2942 = vmatmul.mubr.bf16.gmra.mrb[0].mxu0 %v776
      %v2943 = vpop.f32.mrb[0].mxu0
      %v2944 = vadd.f32 %v762, %v2943
      %v2945 = vpop.f32.mrb[0].mxu0
      %v2946 = vadd.f32 %v762, %v2945
      %v2947 = vpop.f32.mrb[0].mxu0
      %v2948 = vadd.f32 %v767, %v2947
      %v2949 = vpop.f32.mrb[0].mxu0
      %v2950 = vadd.f32 %v767, %v2949
      %2951 = vdwg.mxu0
      %v2952 = vmul.f32 %v2944, 0.1
      %v2953 = vmul.f32 %v2946, 0.1
      %v2954 = vmul.f32 %v2948, 0.1
      %v2955 = vmul.f32 %v2950, 0.1
      %v2956 = vmax.f32 %v2944, %v2952
      %v2957 = vmax.f32 %v2946, %v2953
      %v2958 = vmax.f32 %v2948, %v2954
      %v2959 = vmax.f32 %v2950, %v2955
      %s2960 = scalar_lea.vmem %s557, 28
      %v2961 = vld [vmem:[%s2960] sm:$0xf]
      %v2964 = vunpack.c.l.s4 1983009808
      %v2965 = vunpack.c.0.s8 %v2964
      %v2966 = vlaneseq
      %v2967 = vshrl.u32 %v2966, 7
      %v2968 = vsub.s32 %v2965, %v2967
      %v2969 = vrot.slane %v2961, %v2968
      %v2970 = vcombine.high %v2969, %v2969
      %v2972 = vand.u32 %v2969, %v851
      %v2975 = vand.u32 %v2970, %v851
      %2977 = vmatprep.subr.bf16.mxu0 %v2975
      %2978 = vmatpush1.bf16.msra.mxu0 %v2972
      %2979 = vmatprep.subr.bf16.mxu0 0
      %2980 = vmatpush1.bf16.msra.mxu0 0
      %2981 = vmatprep.subr.bf16.mxu0 0
      %2982 = vmatpush1.bf16.msra.mxu0 0
      %2983 = vmatprep.subr.bf16.mxu0 0
      %2984 = vmatpush1.bf16.msra.mxu0 0
      %2985 = vmatprep.subr.bf16.mxu0 0
      %2986 = vmatpush1.bf16.msra.mxu0 0
      %2987 = vmatprep.subr.bf16.mxu0 0
      %2988 = vmatpush1.bf16.msra.mxu0 0
      %2989 = vmatprep.subr.bf16.mxu0 0
      %2990 = vmatpush1.bf16.msra.mxu0 0
      %2991 = vmatprep.subr.bf16.mxu0 0
      %2992 = vmatpush1.bf16.msra.mxu0 0
      %2993 = vmatprep.subr.bf16.mxu0 0
      %2994 = vmatpush1.bf16.msra.mxu0 0
      %2995 = vmatprep.subr.bf16.mxu0 0
      %2996 = vmatpush1.bf16.msra.mxu0 0
      %2997 = vmatprep.subr.bf16.mxu0 0
      %2998 = vmatpush1.bf16.msra.mxu0 0
      %2999 = vmatprep.subr.bf16.mxu0 0
      %3000 = vmatpush1.bf16.msra.mxu0 0
      %3001 = vmatprep.subr.bf16.mxu0 0
      %3002 = vmatpush1.bf16.msra.mxu0 0
      %3003 = vmatprep.subr.bf16.mxu0 0
      %3004 = vmatpush1.bf16.msra.mxu0 0
      %3005 = vmatprep.subr.bf16.mxu0 0
      %3006 = vmatpush1.bf16.msra.mxu0 0
      %3007 = vmatprep.subr.bf16.mxu0 0
      %3008 = vmatpush1.bf16.msra.mxu0 0
      %3009 = vmatprep.mubr.bf16.mxu0 0
      %3010 = vmatmul.mubr.bf16.gmra.mrb[0].mxu0 %v846
      %v3011 = vpop.f32.mrb[0].mxu0
      %v3012 = vadd.f32 %v833, %v3011
      %v3013 = vpop.f32.mrb[0].mxu0
      %v3014 = vadd.f32 %v833, %v3013
      %v3015 = vpop.f32.mrb[0].mxu0
      %v3016 = vpop.f32.mrb[0].mxu0
      %3017 = vdwg.mxu0
      %v3018 = vmax.f32 %v3012, 0.0
      %v3019 = vmax.f32 %v3014, 0.0
      %v3020 = vpack.c.bf16 %v3018, %v3018
      %v3021 = vpack.c.bf16 %v3019, %v3019
      %v3023 = vsel %vm613, %v3020, 0
      %v3026 = vsel %vm613, %v3021, 0
      %3028 = vmatprep.subr.bf16.mxu0 %v3026
      %3029 = vmatpush1.bf16.msra.mxu0 %v3023
      %3030 = vmatprep.subr.bf16.mxu0 0
      %3031 = vmatpush1.bf16.msra.mxu0 0
      %3032 = vmatprep.subr.bf16.mxu0 0
      %3033 = vmatpush1.bf16.msra.mxu0 0
      %3034 = vmatprep.subr.bf16.mxu0 0
      %3035 = vmatpush1.bf16.msra.mxu0 0
      %3036 = vmatprep.subr.bf16.mxu0 0
      %3037 = vmatpush1.bf16.msra.mxu0 0
      %3038 = vmatprep.subr.bf16.mxu0 0
      %3039 = vmatpush1.bf16.msra.mxu0 0
      %3040 = vmatprep.subr.bf16.mxu0 0
      %3041 = vmatpush1.bf16.msra.mxu0 0
      %3042 = vmatprep.subr.bf16.mxu0 0
      %3043 = vmatpush1.bf16.msra.mxu0 0
      %3044 = vmatprep.subr.bf16.mxu0 0
      %3045 = vmatpush1.bf16.msra.mxu0 0
      %3046 = vmatprep.subr.bf16.mxu0 0
      %3047 = vmatpush1.bf16.msra.mxu0 0
      %3048 = vmatprep.subr.bf16.mxu0 0
      %3049 = vmatpush1.bf16.msra.mxu0 0
      %3050 = vmatprep.subr.bf16.mxu0 0
      %3051 = vmatpush1.bf16.msra.mxu0 0
      %3052 = vmatprep.subr.bf16.mxu0 0
      %3053 = vmatpush1.bf16.msra.mxu0 0
      %3054 = vmatprep.subr.bf16.mxu0 0
      %3055 = vmatpush1.bf16.msra.mxu0 0
      %3056 = vmatprep.subr.bf16.mxu0 0
      %3057 = vmatpush1.bf16.msra.mxu0 0
      %3058 = vmatprep.subr.bf16.mxu0 0
      %3059 = vmatpush1.bf16.msra.mxu0 0
      %3060 = vmatprep.mubr.bf16.mxu0 0
      %3061 = vmatmul.mubr.bf16.gmra.mrb[0].mxu0 %v909
      %v3062 = vpop.f32.mrb[0].mxu0
      %v3063 = vadd.f32 %v906, %v3062
      %v3064 = vpop.f32.mrb[0].mxu0
      %v3065 = vadd.f32 %v906, %v3064
      %v3066 = vpop.f32.mrb[0].mxu0
      %v3067 = vpop.f32.mrb[0].mxu0
      %3068 = vdwg.mxu0
      %v3069 = vmax.f32 %v3063, 0.0
      %v3070 = vmax.f32 %v3065, 0.0
      %v3071 = vpack.c.bf16 %v3069, %v3069
      %v3072 = vpack.c.bf16 %v3070, %v3070
      %v3074 = vsel %vm613, %v3071, 0
      %v3077 = vsel %vm613, %v3072, 0
      %3079 = vmatprep.subr.bf16.mxu0 %v3077
      %3080 = vmatpush1.bf16.msra.mxu0 %v3074
      %3081 = vmatprep.subr.bf16.mxu0 0
      %3082 = vmatpush1.bf16.msra.mxu0 0
      %3083 = vmatprep.subr.bf16.mxu0 0
      %3084 = vmatpush1.bf16.msra.mxu0 0
      %3085 = vmatprep.subr.bf16.mxu0 0
      %3086 = vmatpush1.bf16.msra.mxu0 0
      %3087 = vmatprep.subr.bf16.mxu0 0
      %3088 = vmatpush1.bf16.msra.mxu0 0
      %3089 = vmatprep.subr.bf16.mxu0 0
      %3090 = vmatpush1.bf16.msra.mxu0 0
      %3091 = vmatprep.subr.bf16.mxu0 0
      %3092 = vmatpush1.bf16.msra.mxu0 0
      %3093 = vmatprep.subr.bf16.mxu0 0
      %3094 = vmatpush1.bf16.msra.mxu0 0
      %3095 = vmatprep.subr.bf16.mxu0 0
      %3096 = vmatpush1.bf16.msra.mxu0 0
      %3097 = vmatprep.subr.bf16.mxu0 0
      %3098 = vmatpush1.bf16.msra.mxu0 0
      %3099 = vmatprep.subr.bf16.mxu0 0
      %3100 = vmatpush1.bf16.msra.mxu0 0
      %3101 = vmatprep.subr.bf16.mxu0 0
      %3102 = vmatpush1.bf16.msra.mxu0 0
      %3103 = vmatprep.subr.bf16.mxu0 0
      %3104 = vmatpush1.bf16.msra.mxu0 0
      %3105 = vmatprep.subr.bf16.mxu0 0
      %3106 = vmatpush1.bf16.msra.mxu0 0
      %3107 = vmatprep.subr.bf16.mxu0 0
      %3108 = vmatpush1.bf16.msra.mxu0 0
      %3109 = vmatprep.subr.bf16.mxu0 0
      %3110 = vmatpush1.bf16.msra.mxu0 0
      %3111 = vmatprep.mubr.bf16.mxu0 0
      %3112 = vmatmul.mubr.bf16.gmra.mrb[0].mxu0 %v978
      %v3113 = vpop.f32.mrb[0].mxu0
      %v3114 = vadd.f32 %v965, %v3113
      %v3115 = vpop.f32.mrb[0].mxu0
      %v3116 = vadd.f32 %v965, %v3115
      %v3117 = vpop.f32.mrb[0].mxu0
      %v3118 = vadd.f32 %v970, %v3117
      %v3119 = vpop.f32.mrb[0].mxu0
      %v3120 = vadd.f32 %v970, %v3119
      %3121 = vdwg.mxu0
      %v3122 = vmax.f32 %v3114, 0.0
      %v3123 = vmax.f32 %v3116, 0.0
      %v3124 = vmax.f32 %v3118, 0.0
      %v3125 = vmax.f32 %v3120, 0.0
      %v3126 = vmul.f32 %v3122, %v2956
      %v3127 = vmul.f32 %v3123, %v2957
      %v3128 = vmul.f32 %v3124, %v2958
      %v3129 = vmul.f32 %v3125, %v2959
      %v3130 = vadd.f32 %v2831, %v3126
      %v3131 = vadd.f32 %v2832, %v3127
      %v3132 = vadd.f32 %v2833, %v3128
      %v3133 = vadd.f32 %v2834, %v3129
      %v3134 = vpack.c.bf16 %v3132, %v3130
      %v3135 = vpack.c.bf16 %v3133, %v3131
      %v3138 = vunpack.c.l.b16 %v3134
      %v3139 = vunpack.c.l.b16 %v3135
      %v3140 = vunpack.c.h.b16 %v3134
      %v3141 = vunpack.c.h.b16 %v3135
      %v3142 = vpack.c.b16 %v3139, %v3138
      %v3143 = vpack.c.b16 %v3141, %v3140
      %3146 = vst [vmem:[%s577] sm:$0xff] %v3142
      %3147 = vst [vmem:[%s577 + $0x8] sm:$0xff] %v3143
      %s3148 = smul.u32 2, %s29
      %p3149 = scmp.lt.s32.totalorder %s30, 1
      %s3150 = scalar_select %p3149, %s30, 1
      %p3151 = scmp.lt.s32.totalorder %s3148, 1
      %s3152 = scalar_select %p3151, %s3148, 1
      %s3153 = smul.addr %s3150, 4
      %s3154 = sadd.s32 %s3152, %s3153
      %s3155 = smul.addr %s3154, 4
      %s3156 = scalar_lea.vmem %s14, %s3155
      // Predicated region
      $region77: #{feature_correlator_forward.2} parent=75 // pred_check
        %p3157 = pneg %p372
      $region78: #{feature_correlator_forward.2} parent=75 // pred_check_branch
        %3159 = sbr.rel (%p3157) target = $region80
      $region79: #{feature_correlator_forward.2} parent=75 // pred_region
        %s3160 = smul.u32 2, %s29
      $region80: #{feature_correlator_forward.2} parent=75 // pred_fallthru
        _
    $region76: #{feature_correlator_forward.2} parent=5 // pred_fallthru
      _
    %p3161 = scmp.le.s32.totalorder 2, %s20
    // Predicated region
    $region81: #{feature_correlator_forward.2} parent=5 // pred_check
      %p3162 = pneg %p3161
    $region82: #{feature_correlator_forward.2} parent=5 // pred_check_branch
      %3164 = sbr.rel (%p3162) target = $region84
    $region83: #{feature_correlator_forward.2} parent=5 // pred_region
      %s3165 = ssub.s32 %s20, 2
      // Predicated region
      $region85: #{feature_correlator_forward.2} parent=83 // pred_check
        %p3166 = pneg %p378
      $region86: #{feature_correlator_forward.2} parent=83 // pred_check_branch
        %3168 = sbr.rel (%p3166) target = $region88
      $region87: #{feature_correlator_forward.2} parent=83 // pred_region
        %s3169 = smul.u32 2, %s31
        %p3170 = scmp.lt.s32.totalorder %s32, 1
        %s3171 = scalar_select %p3170, %s32, 1
        %p3172 = scmp.lt.s32.totalorder %s3169, 1
        %s3173 = scalar_select %p3172, %s3169, 1
        %s3174 = smul.addr %s3171, 4
        %s3175 = sadd.s32 %s3173, %s3174
        %s3176 = smul.addr %s3175, 4
        %s3177 = scalar_lea.vmem %s14, %s3176
      $region88: #{feature_correlator_forward.2} parent=83 // pred_fallthru
        _
    $region84: #{feature_correlator_forward.2} parent=5 // pred_fallthru
      _
  $region6: #{feature_correlator_forward.2} parent=0 // loop_footer
    %s24 = sadd.s32 1, %s20
  $region7: #{feature_correlator_forward.2} parent=0 // loop_footer_branch
    %19 = sbr.rel target = $region3
  $region8: #{feature_correlator_forward.2} parent=0 // loop_exit
    _

// kernel: feature_correlator_forward.3
$region0: #{feature_correlator_forward.3}
  #allocation0 [shape = 'u32[]', space=smem, size = 0x4, offset = 0x4, fixed_abs, tag = 'smem constant byte address 0x4 - core index']
  #allocation1 [shape = 'u32[144,128]{1,0:T(1,128)}', space=vmem, size = 0x12000, scoped, tag = 'internal scratch']
  %s0 = inlined_call_operand.vmem [shape: bf16[2,8,16,256], index: 0, kind: input, shape index: {}]
  %s1 = inlined_call_operand.vmem [shape: bf16[2,8,3,256], index: 1, kind: input, shape index: {}]
  %s2 = inlined_call_operand.vmem [shape: bf16[8,3], index: 2, kind: input, shape index: {}]
  %s3 = inlined_call_operand.vmem [shape: f32[8,1], index: 3, kind: input, shape index: {}]
  %s4 = inlined_call_operand.vmem [shape: bf16[8,8], index: 4, kind: input, shape index: {}]
  %s5 = inlined_call_operand.vmem [shape: f32[8,1], index: 5, kind: input, shape index: {}]
  %s6 = inlined_call_operand.vmem [shape: bf16[16,8], index: 6, kind: input, shape index: {}]
  %s7 = inlined_call_operand.vmem [shape: f32[16,1], index: 7, kind: input, shape index: {}]
  %s8 = inlined_call_operand.hbm [shape: f32[2,16,256], index: 8, kind: output, shape index: {}]
  %s9 = sld [smem:[#allocation0]]
  $region65: #{feature_correlator_forward.3} parent=0
    _
  %s11 = ssub.s32 1, %s9
  %s12 = scalar_select 0, %s11, %s9
  $region1: #{feature_correlator_forward.3} parent=0
    #allocation2 [shape = 'u8[32768]{0}', space=vmem, size = 0x8000, scoped, tag = 'output window, operand 0']
    #allocation3 [shape = 's32[2]{0}', space=sflag, size = 0x8, scoped, tag = 'scoped memory for feature_correlator_forward.3']
    %13 = vsyncpa [#allocation3], 0
    %s14 = scalar_lea.sflag [#allocation3], 1
    %15 = vsyncpa %s14, 0
    loop: start=0, step=1, limit=4
    $region2: #{feature_correlator_forward.3} parent=1 // loop_pre_header
      _
    $region3: #{feature_correlator_forward.3} parent=1 // loop_header
      %s17 = sphi 0, %s21
      %p18 = scmp.ge.s32.totalorder %s17, 4
      %s24 = sphi 0, %s36
      %s25 = sphi 0, %s32
      %s26 = sphi 0, %s24
      %s27 = sphi 0, %s25
      %s28 = sphi 0, %s26
      %s29 = sphi 0, %s27
      %s41 = sphi 0, %s43
      %s44 = sphi 0, %s41
      %s45 = sphi 0, %s44
      %s61 = sphi 0, %s45
      %s69 = sphi 0, %s71
      %s72 = sphi 0, %s69
      %s73 = sphi 0, %s72
      %s89 = sphi 0, %s73
      %s93 = sphi 0, %s93
      %s95 = sphi 0, %s93
      %s96 = sphi 0, %s95
      %s110 = sphi 0, %s96
      %s114 = sphi 0, %s114
      %s116 = sphi 0, %s114
      %s117 = sphi 0, %s116
      %s131 = sphi 0, %s117
      %s135 = sphi 0, %s135
      %s137 = sphi 0, %s135
      %s138 = sphi 0, %s137
      %s152 = sphi 0, %s138
      %s156 = sphi 0, %s156
      %s158 = sphi 0, %s156
      %s159 = sphi 0, %s158
      %s173 = sphi 0, %s159
      %s177 = sphi 0, %s177
      %s179 = sphi 0, %s177
      %s180 = sphi 0, %s179
      %s194 = sphi 0, %s180
      %s198 = sphi 0, %s198
      %s200 = sphi 0, %s198
      %s201 = sphi 0, %s200
      %s215 = sphi 0, %s201
      %s223 = sphi 0, %s225
      %s226 = sphi 0, %s223
      %s227 = sphi 0, %s226
      %s243 = sphi 0, %s227
    $region4: #{feature_correlator_forward.3} parent=1 // loop_header_branch
      %20 = sbr.rel (%p18) target = $region8
    $region5: #{feature_correlator_forward.3} parent=1 // loop_body
      %s22 = ssub.s32 %s17, 1
      %s23 = ssub.s32 %s17, 2
      %s30 = sadd.s32 1, %s25
      %p31 = scmp.ge.s32.totalorder %s30, 2
      %s32 = scalar_select %p31, 0, %s30
      %s33 = sadd.s32 1, %s24
      %s34 = scalar_select %p31, %s33, %s24
      %p35 = scmp.ge.s32.totalorder %s34, 1
      %s36 = scalar_select %p35, 0, %s34
      %s37 = ssub.s32 %s25, %s32
      %s38 = ssub.s32 %s24, %s36
      %s39 = sor.u32 %s37, %s38
      %p40 = scmp.eq.s32.totalorder %s39, 0
      %s42 = sadd.s32 %s41, 1
      %s43 = scalar_select %p40, %s41, %s42
      %p46 = pneg %p40
      %p47 = scmp.eq.s32.totalorder %s17, 1
      %p48 = por %p46, %p47
      %p49 = scmp.ne.s32.totalorder %s41, %s44
      %p50 = scmp.eq.s32.totalorder %s17, 0
      %p51 = por %p49, %p50
      %p52 = scmp.ne.s32.totalorder %s41, %s44
      %p53 = scmp.eq.s32.totalorder %s22, 1
      %p54 = por %p52, %p53
      %p55 = scmp.ne.s32.totalorder %s44, %s45
      %p56 = scmp.eq.s32.totalorder %s22, 0
      %p57 = por %p55, %p56
      %p58 = scmp.ne.s32.totalorder %s44, %s45
      %p59 = scmp.eq.s32.totalorder %s23, 1
      %p60 = por %p58, %p59
      %p62 = scmp.ne.s32.totalorder %s45, %s61
      %p63 = scmp.eq.s32.totalorder %s23, 0
      %p64 = por %p62, %p63
      %s65 = ssub.s32 %s25, %s32
      %s66 = ssub.s32 %s24, %s36
      %s67 = sor.u32 %s65, %s66
      %p68 = scmp.eq.s32.totalorder %s67, 0
      %s70 = sadd.s32 %s69, 1
      %s71 = scalar_select %p68, %s69, %s70
      %p74 = pneg %p68
      %p75 = scmp.eq.s32.totalorder %s17, 1
      %p76 = por %p74, %p75
      %p77 = scmp.ne.s32.totalorder %s69, %s72
      %p78 = scmp.eq.s32.totalorder %s17, 0
      %p79 = por %p77, %p78
      %p80 = scmp.ne.s32.totalorder %s69, %s72
      %p81 = scmp.eq.s32.totalorder %s22, 1
      %p82 = por %p80, %p81
      %p83 = scmp.ne.s32.totalorder %s72, %s73
      %p84 = scmp.eq.s32.totalorder %s22, 0
      %p85 = por %p83, %p84
      %p86 = scmp.ne.s32.totalorder %s72, %s73
      %p87 = scmp.eq.s32.totalorder %s23, 1
      %p88 = por %p86, %p87
      %p90 = scmp.ne.s32.totalorder %s73, %s89
      %p91 = scmp.eq.s32.totalorder %s23, 0
      %p92 = por %p90, %p91
      %s94 = sadd.s32 %s93, 1
      %p97 = scmp.eq.s32.totalorder %s17, 1
      %p98 = scmp.ne.s32.totalorder %s93, %s95
      %p99 = scmp.eq.s32.totalorder %s17, 0
      %p100 = por %p98, %p99
      %p101 = scmp.ne.s32.totalorder %s93, %s95
      %p102 = scmp.eq.s32.totalorder %s22, 1
      %p103 = por %p101, %p102
      %p104 = scmp.ne.s32.totalorder %s95, %s96
      %p105 = scmp.eq.s32.totalorder %s22, 0
      %p106 = por %p104, %p105
      %p107 = scmp.ne.s32.totalorder %s95, %s96
      %p108 = scmp.eq.s32.totalorder %s23, 1
      %p109 = por %p107, %p108
      %p111 = scmp.ne.s32.totalorder %s96, %s110
      %p112 = scmp.eq.s32.totalorder %s23, 0
      %p113 = por %p111, %p112
      %s115 = sadd.s32 %s114, 1
      %p118 = scmp.eq.s32.totalorder %s17, 1
      %p119 = scmp.ne.s32.totalorder %s114, %s116
      %p120 = scmp.eq.s32.totalorder %s17, 0
      %p121 = por %p119, %p120
      %p122 = scmp.ne.s32.totalorder %s114, %s116
      %p123 = scmp.eq.s32.totalorder %s22, 1
      %p124 = por %p122, %p123
      %p125 = scmp.ne.s32.totalorder %s116, %s117
      %p126 = scmp.eq.s32.totalorder %s22, 0
      %p127 = por %p125, %p126
      %p128 = scmp.ne.s32.totalorder %s116, %s117
      %p129 = scmp.eq.s32.totalorder %s23, 1
      %p130 = por %p128, %p129
      %p132 = scmp.ne.s32.totalorder %s117, %s131
      %p133 = scmp.eq.s32.totalorder %s23, 0
      %p134 = por %p132, %p133
      %s136 = sadd.s32 %s135, 1
      %p139 = scmp.eq.s32.totalorder %s17, 1
      %p140 = scmp.ne.s32.totalorder %s135, %s137
      %p141 = scmp.eq.s32.totalorder %s17, 0
      %p142 = por %p140, %p141
      %p143 = scmp.ne.s32.totalorder %s135, %s137
      %p144 = scmp.eq.s32.totalorder %s22, 1
      %p145 = por %p143, %p144
      %p146 = scmp.ne.s32.totalorder %s137, %s138
      %p147 = scmp.eq.s32.totalorder %s22, 0
      %p148 = por %p146, %p147
      %p149 = scmp.ne.s32.totalorder %s137, %s138
      %p150 = scmp.eq.s32.totalorder %s23, 1
      %p151 = por %p149, %p150
      %p153 = scmp.ne.s32.totalorder %s138, %s152
      %p154 = scmp.eq.s32.totalorder %s23, 0
      %p155 = por %p153, %p154
      %s157 = sadd.s32 %s156, 1
      %p160 = scmp.eq.s32.totalorder %s17, 1
      %p161 = scmp.ne.s32.totalorder %s156, %s158
      %p162 = scmp.eq.s32.totalorder %s17, 0
      %p163 = por %p161, %p162
      %p164 = scmp.ne.s32.totalorder %s156, %s158
      %p165 = scmp.eq.s32.totalorder %s22, 1
      %p166 = por %p164, %p165
      %p167 = scmp.ne.s32.totalorder %s158, %s159
      %p168 = scmp.eq.s32.totalorder %s22, 0
      %p169 = por %p167, %p168
      %p170 = scmp.ne.s32.totalorder %s158, %s159
      %p171 = scmp.eq.s32.totalorder %s23, 1
      %p172 = por %p170, %p171
      %p174 = scmp.ne.s32.totalorder %s159, %s173
      %p175 = scmp.eq.s32.totalorder %s23, 0
      %p176 = por %p174, %p175
      %s178 = sadd.s32 %s177, 1
      %p181 = scmp.eq.s32.totalorder %s17, 1
      %p182 = scmp.ne.s32.totalorder %s177, %s179
      %p183 = scmp.eq.s32.totalorder %s17, 0
      %p184 = por %p182, %p183
      %p185 = scmp.ne.s32.totalorder %s177, %s179
      %p186 = scmp.eq.s32.totalorder %s22, 1
      %p187 = por %p185, %p186
      %p188 = scmp.ne.s32.totalorder %s179, %s180
      %p189 = scmp.eq.s32.totalorder %s22, 0
      %p190 = por %p188, %p189
      %p191 = scmp.ne.s32.totalorder %s179, %s180
      %p192 = scmp.eq.s32.totalorder %s23, 1
      %p193 = por %p191, %p192
      %p195 = scmp.ne.s32.totalorder %s180, %s194
      %p196 = scmp.eq.s32.totalorder %s23, 0
      %p197 = por %p195, %p196
      %s199 = sadd.s32 %s198, 1
      %p202 = scmp.eq.s32.totalorder %s17, 1
      %p203 = scmp.ne.s32.totalorder %s198, %s200
      %p204 = scmp.eq.s32.totalorder %s17, 0
      %p205 = por %p203, %p204
      %p206 = scmp.ne.s32.totalorder %s198, %s200
      %p207 = scmp.eq.s32.totalorder %s22, 1
      %p208 = por %p206, %p207
      %p209 = scmp.ne.s32.totalorder %s200, %s201
      %p210 = scmp.eq.s32.totalorder %s22, 0
      %p211 = por %p209, %p210
      %p212 = scmp.ne.s32.totalorder %s200, %s201
      %p213 = scmp.eq.s32.totalorder %s23, 1
      %p214 = por %p212, %p213
      %p216 = scmp.ne.s32.totalorder %s201, %s215
      %p217 = scmp.eq.s32.totalorder %s23, 0
      %p218 = por %p216, %p217
      %s219 = ssub.s32 %s25, %s32
      %s220 = ssub.s32 %s24, %s36
      %s221 = sor.u32 %s219, %s220
      %p222 = scmp.eq.s32.totalorder %s221, 0
      %s224 = sadd.s32 %s223, 1
      %s225 = scalar_select %p222, %s223, %s224
      %p228 = pneg %p222
      %p229 = scmp.eq.s32.totalorder %s17, 1
      %p230 = por %p228, %p229
      %p231 = scmp.ne.s32.totalorder %s223, %s226
      %p232 = scmp.eq.s32.totalorder %s17, 0
      %p233 = por %p231, %p232
      %p234 = scmp.ne.s32.totalorder %s223, %s226
      %p235 = scmp.eq.s32.totalorder %s22, 1
      %p236 = por %p234, %p235
      %p237 = scmp.ne.s32.totalorder %s226, %s227
      %p238 = scmp.eq.s32.totalorder %s22, 0
      %p239 = por %p237, %p238
      %p240 = scmp.ne.s32.totalorder %s226, %s227
      %p241 = scmp.eq.s32.totalorder %s23, 1
      %p242 = por %p240, %p241
      %p244 = scmp.ne.s32.totalorder %s227, %s243
      %p245 = scmp.eq.s32.totalorder %s23, 0
      %p246 = por %p244, %p245
      %p247 = scmp.le.s32.totalorder 1, %s17
      %p248 = scmp.lt.s32.totalorder %s17, 3
      %p249 = pnand %p247, %p248
      %p250 = pneg %p249
      // Predicated region
      $region9: #{feature_correlator_forward.3} parent=5 // pred_check
        _
      $region10: #{feature_correlator_forward.3} parent=5 // pred_check_branch
        %252 = sbr.rel (%p249) target = $region12
      $region11: #{feature_correlator_forward.3} parent=5 // pred_region
        %s253 = ssub.s32 %s17, 1
        // Predicated region
        $region13: #{feature_correlator_forward.3} parent=11 // pred_check
          %p254 = pneg %p106
        $region14: #{feature_correlator_forward.3} parent=11 // pred_check_branch
          %256 = sbr.rel (%p254) target = $region16
        $region15: #{feature_correlator_forward.3} parent=11 // pred_region
          _
        $region16: #{feature_correlator_forward.3} parent=11 // pred_fallthru
          _
        // Predicated region
        $region17: #{feature_correlator_forward.3} parent=11 // pred_check
          %p257 = pneg %p127
        $region18: #{feature_correlator_forward.3} parent=11 // pred_check_branch
          %259 = sbr.rel (%p257) target = $region20
        $region19: #{feature_correlator_forward.3} parent=11 // pred_region
          _
        $region20: #{feature_correlator_forward.3} parent=11 // pred_fallthru
          _
        // Predicated region
        $region21: #{feature_correlator_forward.3} parent=11 // pred_check
          %p260 = pneg %p148
        $region22: #{feature_correlator_forward.3} parent=11 // pred_check_branch
          %262 = sbr.rel (%p260) target = $region24
        $region23: #{feature_correlator_forward.3} parent=11 // pred_region
          _
        $region24: #{feature_correlator_forward.3} parent=11 // pred_fallthru
          _
        // Predicated region
        $region25: #{feature_correlator_forward.3} parent=11 // pred_check
          %p263 = pneg %p169
        $region26: #{feature_correlator_forward.3} parent=11 // pred_check_branch
          %265 = sbr.rel (%p263) target = $region28
        $region27: #{feature_correlator_forward.3} parent=11 // pred_region
          _
        $region28: #{feature_correlator_forward.3} parent=11 // pred_fallthru
          _
        // Predicated region
        $region29: #{feature_correlator_forward.3} parent=11 // pred_check
          %p266 = pneg %p190
        $region30: #{feature_correlator_forward.3} parent=11 // pred_check_branch
          %268 = sbr.rel (%p266) target = $region32
        $region31: #{feature_correlator_forward.3} parent=11 // pred_region
          _
        $region32: #{feature_correlator_forward.3} parent=11 // pred_fallthru
          _
        // Predicated region
        $region33: #{feature_correlator_forward.3} parent=11 // pred_check
          %p269 = pneg %p211
        $region34: #{feature_correlator_forward.3} parent=11 // pred_check_branch
          %271 = sbr.rel (%p269) target = $region36
        $region35: #{feature_correlator_forward.3} parent=11 // pred_region
          _
        $region36: #{feature_correlator_forward.3} parent=11 // pred_fallthru
          _
      $region12: #{feature_correlator_forward.3} parent=5 // pred_fallthru
        _
      %p272 = scmp.lt.s32.totalorder %s17, 2
      // Predicated region
      $region37: #{feature_correlator_forward.3} parent=5 // pred_check
        %p273 = pneg %p272
      $region38: #{feature_correlator_forward.3} parent=5 // pred_check_branch
        %275 = sbr.rel (%p273) target = $region40
      $region39: #{feature_correlator_forward.3} parent=5 // pred_region
        // Predicated region
        $region41: #{feature_correlator_forward.3} parent=39 // pred_check
          %p276 = pneg %p51
        $region42: #{feature_correlator_forward.3} parent=39 // pred_check_branch
          %278 = sbr.rel (%p276) target = $region44
        $region43: #{feature_correlator_forward.3} parent=39 // pred_region
          %s279 = smul.u32 2, %s24
          %p280 = scmp.lt.s32.totalorder %s25, 1
          %s281 = scalar_select %p280, %s25, 1
          %p282 = scmp.lt.s32.totalorder %s279, 1
          %s283 = scalar_select %p282, %s279, 1
          %s284 = smul.addr %s281, 32
          %s285 = sadd.s32 %s283, %s284
          %s286 = smul.addr %s285, 4
          %s287 = scalar_lea.vmem %s0, %s286
          %s288 = smul.u32 2, %s24
        $region44: #{feature_correlator_forward.3} parent=39 // pred_fallthru
          _
        // Predicated region
        $region45: #{feature_correlator_forward.3} parent=39 // pred_check
          %p289 = pneg %p79
        $region46: #{feature_correlator_forward.3} parent=39 // pred_check_branch
          %291 = sbr.rel (%p289) target = $region48
        $region47: #{feature_correlator_forward.3} parent=39 // pred_region
          %s292 = smul.u32 2, %s24
          %p293 = scmp.lt.s32.totalorder %s25, 1
          %s294 = scalar_select %p293, %s25, 1
          %p295 = scmp.lt.s32.totalorder %s292, 1
          %s296 = scalar_select %p295, %s292, 1
          %s297 = smul.addr %s294, 16
          %s298 = sadd.s32 %s296, %s297
          %s299 = smul.addr %s298, 2
          %s300 = scalar_lea.vmem %s1, %s299
          %s301 = smul.u32 2, %s24
        $region48: #{feature_correlator_forward.3} parent=39 // pred_fallthru
          _
      $region40: #{feature_correlator_forward.3} parent=5 // pred_fallthru
        _
      %p302 = scmp.le.s32.totalorder 1, %s17
      %p303 = scmp.lt.s32.totalorder %s17, 3
      %p304 = pnand %p302, %p303
      %p305 = pneg %p304
      // Predicated region
      $region49: #{feature_correlator_forward.3} parent=5 // pred_check
        _
      $region50: #{feature_correlator_forward.3} parent=5 // pred_check_branch
        %307 = sbr.rel (%p304) target = $region52
      $region51: #{feature_correlator_forward.3} parent=5 // pred_region
        %s308 = ssub.s32 %s17, 1
        %s309 = smul.u32 2, %s26
        %p310 = scmp.lt.s32.totalorder %s27, 1
        %s311 = scalar_select %p310, %s27, 1
        %p312 = scmp.lt.s32.totalorder %s309, 1
        %s313 = scalar_select %p312, %s309, 1
        %s314 = smul.addr %s311, 32
        %s315 = sadd.s32 %s313, %s314
        %s316 = smul.addr %s315, 4
        %s317 = scalar_lea.vmem %s0, %s316
        %p318 = pneg %p57
        %p319 = pneg %p54
        %s320 = smul.u32 2, %s26
        %p321 = scmp.lt.s32.totalorder %s27, 1
        %s322 = scalar_select %p321, %s27, 1
        %p323 = scmp.lt.s32.totalorder %s320, 1
        %s324 = scalar_select %p323, %s320, 1
        %s325 = smul.addr %s322, 16
        %s326 = sadd.s32 %s324, %s325
        %s327 = smul.addr %s326, 2
        %s328 = scalar_lea.vmem %s1, %s327
        %p329 = pneg %p85
        %p330 = pneg %p82
        %p331 = pneg %p106
        %p332 = pneg %p103
        %p333 = pneg %p127
        %p334 = pneg %p124
        %p335 = pneg %p148
        %p336 = pneg %p145
        %p337 = pneg %p169
        %p338 = pneg %p166
        %p339 = pneg %p190
        %p340 = pneg %p187
        %p341 = pneg %p211
        %p342 = pneg %p208
        %p343 = pneg %p239
        %p344 = pneg %p236
        %s345 = sand.u32 %s226, 1
        %s346 = scalar_lea.sflag [#allocation3], %s345
        %s347 = sand.u32 %s226, 1
        %s348 = smul.addr %s347, 32
        %s349 = scalar_lea.vmem [#allocation2], %s348
        %s350 = smul.u32 2, %s26
        %p351 = scmp.lt.s32.totalorder %s27, 1
        %s352 = scalar_select %p351, %s27, 1
        %p353 = scmp.lt.s32.totalorder %s350, 1
        %s354 = scalar_select %p353, %s350, 1
        %s355 = smul.addr %s352, 32
        %s356 = sadd.s32 %s354, %s355
        %s357 = smul.addr %s356, 4
        %s358 = scalar_lea.vmem %s0, %s357
        %s359 = smul.u32 2, %s26
        %s360 = smul.u32 2, %s26
        %p361 = scmp.lt.s32.totalorder %s27, 1
        %s362 = scalar_select %p361, %s27, 1
        %p363 = scmp.lt.s32.totalorder %s360, 1
        %s364 = scalar_select %p363, %s360, 1
        %s365 = smul.addr %s362, 16
        %s366 = sadd.s32 %s364, %s365
        %s367 = smul.addr %s366, 2
        %s368 = scalar_lea.vmem %s1, %s367
        %s369 = smul.u32 2, %s26
        %s370 = smul.u32 2, %s26
        %v372 = vld [vmem:[%s2] sm:$0xf]
        %v373 = vld [vmem:[%s4] sm:$0xf]
        %v374 = vld [vmem:[%s6] sm:$0xf]
        %v375 = vld [vmem:[%s6 + $0x4] sm:$0xf]
        %v376 = vld [vmem:[%s3] sm:$0xff]
        %v377 = vld [vmem:[%s5] sm:$0xff]
        %v378 = vld [vmem:[%s7] sm:$0xff]
        %v379 = vld [vmem:[%s7 + $0x8] sm:$0xff]
        %v380 = vld [vmem:[%s358] sm:$0xff]
        %v381 = vld [vmem:[%s358 + $0x8] sm:$0xff]
        %v382 = vunpack.c.l.bf16 %v380
        %v383 = vunpack.c.h.bf16 %v380
        %v384 = vunpack.c.l.bf16 %v381
        %v385 = vunpack.c.h.bf16 %v381
        %v386 = vld [vmem:[%s368] sm:$0xf]
        %388 = vset.pattern.permute.xlu0 0
        %389 = vperm.xlu0 %388, %v376
        %v390 = vpop.permute.xlu0 %389
        %v394 = vunpack.c.l.s4 1983009808
        %v395 = vunpack.c.0.s8 %v394
        %v396 = vlaneseq
        %v397 = vshrl.u32 %v396, 7
        %v398 = vsub.s32 %v395, %v397
        %v399 = vrot.slane %v386, %v398
        %v400 = vcombine.high %v399, %v399
        %vm401 = vcmask 23552
        %v403 = vsel %vm401, %v372, 0
        %vm405 = vcmask 1040384
        %vm406 = vcmask 1041408
        %v407 = vsel %vm405, 4294967295, 65535
        %v408 = vsel %vm406, %v407, 0
        %v410 = vand.u32 %v399, %v408
        %v413 = vand.u32 %v400, %v408
        %415 = vmatprep.subr.bf16.mxu0 %v413
        %416 = vmatpush1.bf16.msra.mxu0 %v410
        %417 = vmatprep.subr.bf16.mxu0 0
        %418 = vmatpush1.bf16.msra.mxu0 0
        %419 = vmatprep.subr.bf16.mxu0 0
        %420 = vmatpush1.bf16.msra.mxu0 0
        %421 = vmatprep.subr.bf16.mxu0 0
        %422 = vmatpush1.bf16.msra.mxu0 0
        %423 = vmatprep.subr.bf16.mxu0 0
        %424 = vmatpush1.bf16.msra.mxu0 0
        %425 = vmatprep.subr.bf16.mxu0 0
        %426 = vmatpush1.bf16.msra.mxu0 0
        %427 = vmatprep.subr.bf16.mxu0 0
        %428 = vmatpush1.bf16.msra.mxu0 0
        %429 = vmatprep.subr.bf16.mxu0 0
        %430 = vmatpush1.bf16.msra.mxu0 0
        %431 = vmatprep.subr.bf16.mxu0 0
        %432 = vmatpush1.bf16.msra.mxu0 0
        %433 = vmatprep.subr.bf16.mxu0 0
        %434 = vmatpush1.bf16.msra.mxu0 0
        %435 = vmatprep.subr.bf16.mxu0 0
        %436 = vmatpush1.bf16.msra.mxu0 0
        %437 = vmatprep.subr.bf16.mxu0 0
        %438 = vmatpush1.bf16.msra.mxu0 0
        %439 = vmatprep.subr.bf16.mxu0 0
        %440 = vmatpush1.bf16.msra.mxu0 0
        %441 = vmatprep.subr.bf16.mxu0 0
        %442 = vmatpush1.bf16.msra.mxu0 0
        %443 = vmatprep.subr.bf16.mxu0 0
        %444 = vmatpush1.bf16.msra.mxu0 0
        %445 = vmatprep.subr.bf16.mxu0 0
        %446 = vmatpush1.bf16.msra.mxu0 0
        %447 = vmatprep.mubr.bf16.mxu0 0
        %448 = vmatmul.mubr.bf16.gmra.mrb[0].mxu0 %v403
        %v449 = vpop.f32.mrb[0].mxu0
        %v450 = vadd.f32 %v390, %v449
        %v451 = vpop.f32.mrb[0].mxu0
        %v452 = vadd.f32 %v390, %v451
        %v453 = vpop.f32.mrb[0].mxu0
        %v454 = vpop.f32.mrb[0].mxu0
        %455 = vdwg.mxu0
        %v456 = vmax.f32 %v450, 0.0
        %v457 = vmax.f32 %v452, 0.0
        %v458 = vpack.c.bf16 %v456, %v456
        %v459 = vpack.c.bf16 %v457, %v457
        %461 = vset.pattern.permute.xlu0 0
        %462 = vperm.xlu0 %461, %v377
        %v463 = vpop.permute.xlu0 %462
        %vm465 = vcmask 64512
        %v467 = vsel %vm465, %v373, 0
        %vm469 = vcmask 1043456
        %v471 = vsel %vm469, %v458, 0
        %v474 = vsel %vm469, %v459, 0
        %476 = vmatprep.subr.bf16.mxu0 %v474
        %477 = vmatpush1.bf16.msra.mxu0 %v471
        %478 = vmatprep.subr.bf16.mxu0 0
        %479 = vmatpush1.bf16.msra.mxu0 0
        %480 = vmatprep.subr.bf16.mxu0 0
        %481 = vmatpush1.bf16.msra.mxu0 0
        %482 = vmatprep.subr.bf16.mxu0 0
        %483 = vmatpush1.bf16.msra.mxu0 0
        %484 = vmatprep.subr.bf16.mxu0 0
        %485 = vmatpush1.bf16.msra.mxu0 0
        %486 = vmatprep.subr.bf16.mxu0 0
        %487 = vmatpush1.bf16.msra.mxu0 0
        %488 = vmatprep.subr.bf16.mxu0 0
        %489 = vmatpush1.bf16.msra.mxu0 0
        %490 = vmatprep.subr.bf16.mxu0 0
        %491 = vmatpush1.bf16.msra.mxu0 0
        %492 = vmatprep.subr.bf16.mxu0 0
        %493 = vmatpush1.bf16.msra.mxu0 0
        %494 = vmatprep.subr.bf16.mxu0 0
        %495 = vmatpush1.bf16.msra.mxu0 0
        %496 = vmatprep.subr.bf16.mxu0 0
        %497 = vmatpush1.bf16.msra.mxu0 0
        %498 = vmatprep.subr.bf16.mxu0 0
        %499 = vmatpush1.bf16.msra.mxu0 0
        %500 = vmatprep.subr.bf16.mxu0 0
        %501 = vmatpush1.bf16.msra.mxu0 0
        %502 = vmatprep.subr.bf16.mxu0 0
        %503 = vmatpush1.bf16.msra.mxu0 0
        %504 = vmatprep.subr.bf16.mxu0 0
        %505 = vmatpush1.bf16.msra.mxu0 0
        %506 = vmatprep.subr.bf16.mxu0 0
        %507 = vmatpush1.bf16.msra.mxu0 0
        %508 = vmatprep.mubr.bf16.mxu0 0
        %509 = vmatmul.mubr.bf16.gmra.mrb[0].mxu0 %v467
        %v510 = vpop.f32.mrb[0].mxu0
        %v511 = vadd.f32 %v463, %v510
        %v512 = vpop.f32.mrb[0].mxu0
        %v513 = vadd.f32 %v463, %v512
        %v514 = vpop.f32.mrb[0].mxu0
        %v515 = vpop.f32.mrb[0].mxu0
        %516 = vdwg.mxu0
        %v517 = vmax.f32 %v511, 0.0
        %v518 = vmax.f32 %v513, 0.0
        %v519 = vpack.c.bf16 %v517, %v517
        %v520 = vpack.c.bf16 %v518, %v518
        %522 = vset.pattern.permute.xlu0 0
        %523 = vperm.xlu0 %522, %v378
        %v524 = vpop.permute.xlu0 %523
        %527 = vset.pattern.permute.xlu0 0
        %528 = vperm.xlu0 %527, %v379
        %v529 = vpop.permute.xlu0 %528
        %v533 = vunpack.c.l.b16 %v374
        %v534 = vunpack.c.l.b16 %v375
        %v535 = vpack.c.b16 %v534, %v533
        %v537 = vsel %vm465, %v535, 0
        %v540 = vsel %vm469, %v519, 0
        %v543 = vsel %vm469, %v520, 0
        %545 = vmatprep.subr.bf16.mxu0 %v543
        %546 = vmatpush1.bf16.msra.mxu0 %v540
        %547 = vmatprep.subr.bf16.mxu0 0
        %548 = vmatpush1.bf16.msra.mxu0 0
        %549 = vmatprep.subr.bf16.mxu0 0
        %550 = vmatpush1.bf16.msra.mxu0 0
        %551 = vmatprep.subr.bf16.mxu0 0
        %552 = vmatpush1.bf16.msra.mxu0 0
        %553 = vmatprep.subr.bf16.mxu0 0
        %554 = vmatpush1.bf16.msra.mxu0 0
        %555 = vmatprep.subr.bf16.mxu0 0
        %556 = vmatpush1.bf16.msra.mxu0 0
        %557 = vmatprep.subr.bf16.mxu0 0
        %558 = vmatpush1.bf16.msra.mxu0 0
        %559 = vmatprep.subr.bf16.mxu0 0
        %560 = vmatpush1.bf16.msra.mxu0 0
        %561 = vmatprep.subr.bf16.mxu0 0
        %562 = vmatpush1.bf16.msra.mxu0 0
        %563 = vmatprep.subr.bf16.mxu0 0
        %564 = vmatpush1.bf16.msra.mxu0 0
        %565 = vmatprep.subr.bf16.mxu0 0
        %566 = vmatpush1.bf16.msra.mxu0 0
        %567 = vmatprep.subr.bf16.mxu0 0
        %568 = vmatpush1.bf16.msra.mxu0 0
        %569 = vmatprep.subr.bf16.mxu0 0
        %570 = vmatpush1.bf16.msra.mxu0 0
        %571 = vmatprep.subr.bf16.mxu0 0
        %572 = vmatpush1.bf16.msra.mxu0 0
        %573 = vmatprep.subr.bf16.mxu0 0
        %574 = vmatpush1.bf16.msra.mxu0 0
        %575 = vmatprep.subr.bf16.mxu0 0
        %576 = vmatpush1.bf16.msra.mxu0 0
        %577 = vmatprep.mubr.bf16.mxu0 0
        %578 = vmatmul.mubr.bf16.gmra.mrb[0].mxu0 %v537
        %v579 = vpop.f32.mrb[0].mxu0
        %v580 = vadd.f32 %v524, %v579
        %v581 = vpop.f32.mrb[0].mxu0
        %v582 = vadd.f32 %v524, %v581
        %v583 = vpop.f32.mrb[0].mxu0
        %v584 = vadd.f32 %v529, %v583
        %v585 = vpop.f32.mrb[0].mxu0
        %v586 = vadd.f32 %v529, %v585
        %587 = vdwg.mxu0
        %v588 = vmax.f32 %v580, 0.0
        %v589 = vmax.f32 %v582, 0.0
        %v590 = vmax.f32 %v584, 0.0
        %v591 = vmax.f32 %v586, 0.0
        %v592 = vmul.f32 %v588, %v382
        %v593 = vmul.f32 %v589, %v383
        %v594 = vmul.f32 %v590, %v384
        %v595 = vmul.f32 %v591, %v385
        %v596 = vadd.f32 %v592, 0.0
        %v597 = vadd.f32 %v593, 0.0
        %v598 = vadd.f32 %v594, 0.0
        %v599 = vadd.f32 %v595, 0.0
        %s600 = scalar_lea.vmem %s358, 16
        %v601 = vld [vmem:[%s600] sm:$0xff]
        %v602 = vld [vmem:[%s600 + $0x8] sm:$0xff]
        %v603 = vunpack.c.l.bf16 %v601
        %v604 = vunpack.c.h.bf16 %v601
        %v605 = vunpack.c.l.bf16 %v602
        %v606 = vunpack.c.h.bf16 %v602
        %s607 = scalar_lea.vmem %s368, 4
        %v608 = vld [vmem:[%s607] sm:$0xf]
        %v611 = vunpack.c.l.s4 1983009808
        %v612 = vunpack.c.0.s8 %v611
        %v613 = vlaneseq
        %v614 = vshrl.u32 %v613, 7
        %v615 = vsub.s32 %v612, %v614
        %v616 = vrot.slane %v608, %v615
        %v617 = vcombine.high %v616, %v616
        %v619 = vand.u32 %v616, %v408
        %v622 = vand.u32 %v617, %v408
        %624 = vmatprep.subr.bf16.mxu0 %v622
        %625 = vmatpush1.bf16.msra.mxu0 %v619
        %626 = vmatprep.subr.bf16.mxu0 0
        %627 = vmatpush1.bf16.msra.mxu0 0
        %628 = vmatprep.subr.bf16.mxu0 0
        %629 = vmatpush1.bf16.msra.mxu0 0
        %630 = vmatprep.subr.bf16.mxu0 0
        %631 = vmatpush1.bf16.msra.mxu0 0
        %632 = vmatprep.subr.bf16.mxu0 0
        %633 = vmatpush1.bf16.msra.mxu0 0
        %634 = vmatprep.subr.bf16.mxu0 0
        %635 = vmatpush1.bf16.msra.mxu0 0
        %636 = vmatprep.subr.bf16.mxu0 0
        %637 = vmatpush1.bf16.msra.mxu0 0
        %638 = vmatprep.subr.bf16.mxu0 0
        %639 = vmatpush1.bf16.msra.mxu0 0
        %640 = vmatprep.subr.bf16.mxu0 0
        %641 = vmatpush1.bf16.msra.mxu0 0
        %642 = vmatprep.subr.bf16.mxu0 0
        %643 = vmatpush1.bf16.msra.mxu0 0
        %644 = vmatprep.subr.bf16.mxu0 0
        %645 = vmatpush1.bf16.msra.mxu0 0
        %646 = vmatprep.subr.bf16.mxu0 0
        %647 = vmatpush1.bf16.msra.mxu0 0
        %648 = vmatprep.subr.bf16.mxu0 0
        %649 = vmatpush1.bf16.msra.mxu0 0
        %650 = vmatprep.subr.bf16.mxu0 0
        %651 = vmatpush1.bf16.msra.mxu0 0
        %652 = vmatprep.subr.bf16.mxu0 0
        %653 = vmatpush1.bf16.msra.mxu0 0
        %654 = vmatprep.subr.bf16.mxu0 0
        %655 = vmatpush1.bf16.msra.mxu0 0
        %656 = vmatprep.mubr.bf16.mxu0 0
        %657 = vmatmul.mubr.bf16.gmra.mrb[0].mxu0 %v403
        %v658 = vpop.f32.mrb[0].mxu0
        %v659 = vadd.f32 %v390, %v658
        %v660 = vpop.f32.mrb[0].mxu0
        %v661 = vadd.f32 %v390, %v660
        %v662 = vpop.f32.mrb[0].mxu0
        %v663 = vpop.f32.mrb[0].mxu0
        %664 = vdwg.mxu0
        %v665 = vmax.f32 %v659, 0.0
        %v666 = vmax.f32 %v661, 0.0
        %v667 = vpack.c.bf16 %v665, %v665
        %v668 = vpack.c.bf16 %v666, %v666
        %v670 = vsel %vm469, %v667, 0
        %v673 = vsel %vm469, %v668, 0
        %675 = vmatprep.subr.bf16.mxu0 %v673
        %676 = vmatpush1.bf16.msra.mxu0 %v670
        %677 = vmatprep.subr.bf16.mxu0 0
        %678 = vmatpush1.bf16.msra.mxu0 0
        %679 = vmatprep.subr.bf16.mxu0 0
        %680 = vmatpush1.bf16.msra.mxu0 0
        %681 = vmatprep.subr.bf16.mxu0 0
        %682 = vmatpush1.bf16.msra.mxu0 0
        %683 = vmatprep.subr.bf16.mxu0 0
        %684 = vmatpush1.bf16.msra.mxu0 0
        %685 = vmatprep.subr.bf16.mxu0 0
        %686 = vmatpush1.bf16.msra.mxu0 0
        %687 = vmatprep.subr.bf16.mxu0 0
        %688 = vmatpush1.bf16.msra.mxu0 0
        %689 = vmatprep.subr.bf16.mxu0 0
        %690 = vmatpush1.bf16.msra.mxu0 0
        %691 = vmatprep.subr.bf16.mxu0 0
        %692 = vmatpush1.bf16.msra.mxu0 0
        %693 = vmatprep.subr.bf16.mxu0 0
        %694 = vmatpush1.bf16.msra.mxu0 0
        %695 = vmatprep.subr.bf16.mxu0 0
        %696 = vmatpush1.bf16.msra.mxu0 0
        %697 = vmatprep.subr.bf16.mxu0 0
        %698 = vmatpush1.bf16.msra.mxu0 0
        %699 = vmatprep.subr.bf16.mxu0 0
        %700 = vmatpush1.bf16.msra.mxu0 0
        %701 = vmatprep.subr.bf16.mxu0 0
        %702 = vmatpush1.bf16.msra.mxu0 0
        %703 = vmatprep.subr.bf16.mxu0 0
        %704 = vmatpush1.bf16.msra.mxu0 0
        %705 = vmatprep.subr.bf16.mxu0 0
        %706 = vmatpush1.bf16.msra.mxu0 0
        %707 = vmatprep.mubr.bf16.mxu0 0
        %708 = vmatmul.mubr.bf16.gmra.mrb[0].mxu0 %v467
        %v709 = vpop.f32.mrb[0].mxu0
        %v710 = vadd.f32 %v463, %v709
        %v711 = vpop.f32.mrb[0].mxu0
        %v712 = vadd.f32 %v463, %v711
        %v713 = vpop.f32.mrb[0].mxu0
        %v714 = vpop.f32.mrb[0].mxu0
        %715 = vdwg.mxu0
        %v716 = vmax.f32 %v710, 0.0
        %v717 = vmax.f32 %v712, 0.0
        %v718 = vpack.c.bf16 %v716, %v716
        %v719 = vpack.c.bf16 %v717, %v717
        %v721 = vsel %vm469, %v718, 0
        %v724 = vsel %vm469, %v719, 0
        %726 = vmatprep.subr.bf16.mxu0 %v724
        %727 = vmatpush1.bf16.msra.mxu0 %v721
        %728 = vmatprep.subr.bf16.mxu0 0
        %729 = vmatpush1.bf16.msra.mxu0 0
        %730 = vmatprep.subr.bf16.mxu0 0
        %731 = vmatpush1.bf16.msra.mxu0 0
        %732 = vmatprep.subr.bf16.mxu0 0
        %733 = vmatpush1.bf16.msra.mxu0 0
        %734 = vmatprep.subr.bf16.mxu0 0
        %735 = vmatpush1.bf16.msra.mxu0 0
        %736 = vmatprep.subr.bf16.mxu0 0
        %737 = vmatpush1.bf16.msra.mxu0 0
        %738 = vmatprep.subr.bf16.mxu0 0
        %739 = vmatpush1.bf16.msra.mxu0 0
        %740 = vmatprep.subr.bf16.mxu0 0
        %741 = vmatpush1.bf16.msra.mxu0 0
        %742 = vmatprep.subr.bf16.mxu0 0
        %743 = vmatpush1.bf16.msra.mxu0 0
        %744 = vmatprep.subr.bf16.mxu0 0
        %745 = vmatpush1.bf16.msra.mxu0 0
        %746 = vmatprep.subr.bf16.mxu0 0
        %747 = vmatpush1.bf16.msra.mxu0 0
        %748 = vmatprep.subr.bf16.mxu0 0
        %749 = vmatpush1.bf16.msra.mxu0 0
        %750 = vmatprep.subr.bf16.mxu0 0
        %751 = vmatpush1.bf16.msra.mxu0 0
        %752 = vmatprep.subr.bf16.mxu0 0
        %753 = vmatpush1.bf16.msra.mxu0 0
        %754 = vmatprep.subr.bf16.mxu0 0
        %755 = vmatpush1.bf16.msra.mxu0 0
        %756 = vmatprep.subr.bf16.mxu0 0
        %757 = vmatpush1.bf16.msra.mxu0 0
        %758 = vmatprep.mubr.bf16.mxu0 0
        %759 = vmatmul.mubr.bf16.gmra.mrb[0].mxu0 %v537
        %v760 = vpop.f32.mrb[0].mxu0
        %v761 = vadd.f32 %v524, %v760
        %v762 = vpop.f32.mrb[0].mxu0
        %v763 = vadd.f32 %v524, %v762
        %v764 = vpop.f32.mrb[0].mxu0
        %v765 = vadd.f32 %v529, %v764
        %v766 = vpop.f32.mrb[0].mxu0
        %v767 = vadd.f32 %v529, %v766
        %768 = vdwg.mxu0
        %v769 = vmax.f32 %v761, 0.0
        %v770 = vmax.f32 %v763, 0.0
        %v771 = vmax.f32 %v765, 0.0
        %v772 = vmax.f32 %v767, 0.0
        %v773 = vmul.f32 %v769, %v603
        %v774 = vmul.f32 %v770, %v604
        %v775 = vmul.f32 %v771, %v605
        %v776 = vmul.f32 %v772, %v606
        %v777 = vadd.f32 %v596, %v773
        %v778 = vadd.f32 %v597, %v774
        %v779 = vadd.f32 %v598, %v775
        %v780 = vadd.f32 %v599, %v776
        %s781 = scalar_lea.vmem %s358, 32
        %v782 = vld [vmem:[%s781] sm:$0xff]
        %v783 = vld [vmem:[%s781 + $0x8] sm:$0xff]
        %v784 = vunpack.c.l.bf16 %v782
        %v785 = vunpack.c.h.bf16 %v782
        %v786 = vunpack.c.l.bf16 %v783
        %v787 = vunpack.c.h.bf16 %v783
        %s788 = scalar_lea.vmem %s368, 8
        %v789 = vld [vmem:[%s788] sm:$0xf]
        %v792 = vunpack.c.l.s4 1983009808
        %v793 = vunpack.c.0.s8 %v792
        %v794 = vlaneseq
        %v795 = vshrl.u32 %v794, 7
        %v796 = vsub.s32 %v793, %v795
        %v797 = vrot.slane %v789, %v796
        %v798 = vcombine.high %v797, %v797
        %v800 = vand.u32 %v797, %v408
        %v803 = vand.u32 %v798, %v408
        %805 = vmatprep.subr.bf16.mxu0 %v803
        %806 = vmatpush1.bf16.msra.mxu0 %v800
        %807 = vmatprep.subr.bf16.mxu0 0
        %808 = vmatpush1.bf16.msra.mxu0 0
        %809 = vmatprep.subr.bf16.mxu0 0
        %810 = vmatpush1.bf16.msra.mxu0 0
        %811 = vmatprep.subr.bf16.mxu0 0
        %812 = vmatpush1.bf16.msra.mxu0 0
        %813 = vmatprep.subr.bf16.mxu0 0
        %814 = vmatpush1.bf16.msra.mxu0 0
        %815 = vmatprep.subr.bf16.mxu0 0
        %816 = vmatpush1.bf16.msra.mxu0 0
        %817 = vmatprep.subr.bf16.mxu0 0
        %818 = vmatpush1.bf16.msra.mxu0 0
        %819 = vmatprep.subr.bf16.mxu0 0
        %820 = vmatpush1.bf16.msra.mxu0 0
        %821 = vmatprep.subr.bf16.mxu0 0
        %822 = vmatpush1.bf16.msra.mxu0 0
        %823 = vmatprep.subr.bf16.mxu0 0
        %824 = vmatpush1.bf16.msra.mxu0 0
        %825 = vmatprep.subr.bf16.mxu0 0
        %826 = vmatpush1.bf16.msra.mxu0 0
        %827 = vmatprep.subr.bf16.mxu0 0
        %828 = vmatpush1.bf16.msra.mxu0 0
        %829 = vmatprep.subr.bf16.mxu0 0
        %830 = vmatpush1.bf16.msra.mxu0 0
        %831 = vmatprep.subr.bf16.mxu0 0
        %832 = vmatpush1.bf16.msra.mxu0 0
        %833 = vmatprep.subr.bf16.mxu0 0
        %834 = vmatpush1.bf16.msra.mxu0 0
        %835 = vmatprep.subr.bf16.mxu0 0
        %836 = vmatpush1.bf16.msra.mxu0 0
        %837 = vmatprep.mubr.bf16.mxu0 0
        %838 = vmatmul.mubr.bf16.gmra.mrb[0].mxu0 %v403
        %v839 = vpop.f32.mrb[0].mxu0
        %v840 = vadd.f32 %v390, %v839
        %v841 = vpop.f32.mrb[0].mxu0
        %v842 = vadd.f32 %v390, %v841
        %v843 = vpop.f32.mrb[0].mxu0
        %v844 = vpop.f32.mrb[0].mxu0
        %845 = vdwg.mxu0
        %v846 = vmax.f32 %v840, 0.0
        %v847 = vmax.f32 %v842, 0.0
        %v848 = vpack.c.bf16 %v846, %v846
        %v849 = vpack.c.bf16 %v847, %v847
        %v851 = vsel %vm469, %v848, 0
        %v854 = vsel %vm469, %v849, 0
        %856 = vmatprep.subr.bf16.mxu0 %v854
        %857 = vmatpush1.bf16.msra.mxu0 %v851
        %858 = vmatprep.subr.bf16.mxu0 0
        %859 = vmatpush1.bf16.msra.mxu0 0
        %860 = vmatprep.subr.bf16.mxu0 0
        %861 = vmatpush1.bf16.msra.mxu0 0
        %862 = vmatprep.subr.bf16.mxu0 0
        %863 = vmatpush1.bf16.msra.mxu0 0
        %864 = vmatprep.subr.bf16.mxu0 0
        %865 = vmatpush1.bf16.msra.mxu0 0
        %866 = vmatprep.subr.bf16.mxu0 0
        %867 = vmatpush1.bf16.msra.mxu0 0
        %868 = vmatprep.subr.bf16.mxu0 0
        %869 = vmatpush1.bf16.msra.mxu0 0
        %870 = vmatprep.subr.bf16.mxu0 0
        %871 = vmatpush1.bf16.msra.mxu0 0
        %872 = vmatprep.subr.bf16.mxu0 0
        %873 = vmatpush1.bf16.msra.mxu0 0
        %874 = vmatprep.subr.bf16.mxu0 0
        %875 = vmatpush1.bf16.msra.mxu0 0
        %876 = vmatprep.subr.bf16.mxu0 0
        %877 = vmatpush1.bf16.msra.mxu0 0
        %878 = vmatprep.subr.bf16.mxu0 0
        %879 = vmatpush1.bf16.msra.mxu0 0
        %880 = vmatprep.subr.bf16.mxu0 0
        %881 = vmatpush1.bf16.msra.mxu0 0
        %882 = vmatprep.subr.bf16.mxu0 0
        %883 = vmatpush1.bf16.msra.mxu0 0
        %884 = vmatprep.subr.bf16.mxu0 0
        %885 = vmatpush1.bf16.msra.mxu0 0
        %886 = vmatprep.subr.bf16.mxu0 0
        %887 = vmatpush1.bf16.msra.mxu0 0
        %888 = vmatprep.mubr.bf16.mxu0 0
        %889 = vmatmul.mubr.bf16.gmra.mrb[0].mxu0 %v467
        %v890 = vpop.f32.mrb[0].mxu0
        %v891 = vadd.f32 %v463, %v890
        %v892 = vpop.f32.mrb[0].mxu0
        %v893 = vadd.f32 %v463, %v892
        %v894 = vpop.f32.mrb[0].mxu0
        %v895 = vpop.f32.mrb[0].mxu0
        %896 = vdwg.mxu0
        %v897 = vmax.f32 %v891, 0.0
        %v898 = vmax.f32 %v893, 0.0
        %v899 = vpack.c.bf16 %v897, %v897
        %v900 = vpack.c.bf16 %v898, %v898
        %v902 = vsel %vm469, %v899, 0
        %v905 = vsel %vm469, %v900, 0
        %907 = vmatprep.subr.bf16.mxu0 %v905
        %908 = vmatpush1.bf16.msra.mxu0 %v902
        %909 = vmatprep.subr.bf16.mxu0 0
        %910 = vmatpush1.bf16.msra.mxu0 0
        %911 = vmatprep.subr.bf16.mxu0 0
        %912 = vmatpush1.bf16.msra.mxu0 0
        %913 = vmatprep.subr.bf16.mxu0 0
        %914 = vmatpush1.bf16.msra.mxu0 0
        %915 = vmatprep.subr.bf16.mxu0 0
        %916 = vmatpush1.bf16.msra.mxu0 0
        %917 = vmatprep.subr.bf16.mxu0 0
        %918 = vmatpush1.bf16.msra.mxu0 0
        %919 = vmatprep.subr.bf16.mxu0 0
        %920 = vmatpush1.bf16.msra.mxu0 0
        %921 = vmatprep.subr.bf16.mxu0 0
        %922 = vmatpush1.bf16.msra.mxu0 0
        %923 = vmatprep.subr.bf16.mxu0 0
        %924 = vmatpush1.bf16.msra.mxu0 0
        %925 = vmatprep.subr.bf16.mxu0 0
        %926 = vmatpush1.bf16.msra.mxu0 0
        %927 = vmatprep.subr.bf16.mxu0 0
        %928 = vmatpush1.bf16.msra.mxu0 0
        %929 = vmatprep.subr.bf16.mxu0 0
        %930 = vmatpush1.bf16.msra.mxu0 0
        %931 = vmatprep.subr.bf16.mxu0 0
        %932 = vmatpush1.bf16.msra.mxu0 0
        %933 = vmatprep.subr.bf16.mxu0 0
        %934 = vmatpush1.bf16.msra.mxu0 0
        %935 = vmatprep.subr.bf16.mxu0 0
        %936 = vmatpush1.bf16.msra.mxu0 0
        %937 = vmatprep.subr.bf16.mxu0 0
        %938 = vmatpush1.bf16.msra.mxu0 0
        %939 = vmatprep.mubr.bf16.mxu0 0
        %940 = vmatmul.mubr.bf16.gmra.mrb[0].mxu0 %v537
        %v941 = vpop.f32.mrb[0].mxu0
        %v942 = vadd.f32 %v524, %v941
        %v943 = vpop.f32.mrb[0].mxu0
        %v944 = vadd.f32 %v524, %v943
        %v945 = vpop.f32.mrb[0].mxu0
        %v946 = vadd.f32 %v529, %v945
        %v947 = vpop.f32.mrb[0].mxu0
        %v948 = vadd.f32 %v529, %v947
        %949 = vdwg.mxu0
        %v950 = vmax.f32 %v942, 0.0
        %v951 = vmax.f32 %v944, 0.0
        %v952 = vmax.f32 %v946, 0.0
        %v953 = vmax.f32 %v948, 0.0
        %v954 = vmul.f32 %v950, %v784
        %v955 = vmul.f32 %v951, %v785
        %v956 = vmul.f32 %v952, %v786
        %v957 = vmul.f32 %v953, %v787
        %v958 = vadd.f32 %v777, %v954
        %v959 = vadd.f32 %v778, %v955
        %v960 = vadd.f32 %v779, %v956
        %v961 = vadd.f32 %v780, %v957
        %s962 = scalar_lea.vmem %s358, 48
        %v963 = vld [vmem:[%s962] sm:$0xff]
        %v964 = vld [vmem:[%s962 + $0x8] sm:$0xff]
        %v965 = vunpack.c.l.bf16 %v963
        %v966 = vunpack.c.h.bf16 %v963
        %v967 = vunpack.c.l.bf16 %v964
        %v968 = vunpack.c.h.bf16 %v964
        %s969 = scalar_lea.vmem %s368, 12
        %v970 = vld [vmem:[%s969] sm:$0xf]
        %v973 = vunpack.c.l.s4 1983009808
        %v974 = vunpack.c.0.s8 %v973
        %v975 = vlaneseq
        %v976 = vshrl.u32 %v975, 7
        %v977 = vsub.s32 %v974, %v976
        %v978 = vrot.slane %v970, %v977
        %v979 = vcombine.high %v978, %v978
        %v981 = vand.u32 %v978, %v408
        %v984 = vand.u32 %v979, %v408
        %986 = vmatprep.subr.bf16.mxu0 %v984
        %987 = vmatpush1.bf16.msra.mxu0 %v981
        %988 = vmatprep.subr.bf16.mxu0 0
        %989 = vmatpush1.bf16.msra.mxu0 0
        %990 = vmatprep.subr.bf16.mxu0 0
        %991 = vmatpush1.bf16.msra.mxu0 0
        %992 = vmatprep.subr.bf16.mxu0 0
        %993 = vmatpush1.bf16.msra.mxu0 0
        %994 = vmatprep.subr.bf16.mxu0 0
        %995 = vmatpush1.bf16.msra.mxu0 0
        %996 = vmatprep.subr.bf16.mxu0 0
        %997 = vmatpush1.bf16.msra.mxu0 0
        %998 = vmatprep.subr.bf16.mxu0 0
        %999 = vmatpush1.bf16.msra.mxu0 0
        %1000 = vmatprep.subr.bf16.mxu0 0
        %1001 = vmatpush1.bf16.msra.mxu0 0
        %1002 = vmatprep.subr.bf16.mxu0 0
        %1003 = vmatpush1.bf16.msra.mxu0 0
        %1004 = vmatprep.subr.bf16.mxu0 0
        %1005 = vmatpush1.bf16.msra.mxu0 0
        %1006 = vmatprep.subr.bf16.mxu0 0
        %1007 = vmatpush1.bf16.msra.mxu0 0
        %1008 = vmatprep.subr.bf16.mxu0 0
        %1009 = vmatpush1.bf16.msra.mxu0 0
        %1010 = vmatprep.subr.bf16.mxu0 0
        %1011 = vmatpush1.bf16.msra.mxu0 0
        %1012 = vmatprep.subr.bf16.mxu0 0
        %1013 = vmatpush1.bf16.msra.mxu0 0
        %1014 = vmatprep.subr.bf16.mxu0 0
        %1015 = vmatpush1.bf16.msra.mxu0 0
        %1016 = vmatprep.subr.bf16.mxu0 0
        %1017 = vmatpush1.bf16.msra.mxu0 0
        %1018 = vmatprep.mubr.bf16.mxu0 0
        %1019 = vmatmul.mubr.bf16.gmra.mrb[0].mxu0 %v403
        %v1020 = vpop.f32.mrb[0].mxu0
        %v1021 = vadd.f32 %v390, %v1020
        %v1022 = vpop.f32.mrb[0].mxu0
        %v1023 = vadd.f32 %v390, %v1022
        %v1024 = vpop.f32.mrb[0].mxu0
        %v1025 = vpop.f32.mrb[0].mxu0
        %1026 = vdwg.mxu0
        %v1027 = vmax.f32 %v1021, 0.0
        %v1028 = vmax.f32 %v1023, 0.0
        %v1029 = vpack.c.bf16 %v1027, %v1027
        %v1030 = vpack.c.bf16 %v1028, %v1028
        %v1032 = vsel %vm469, %v1029, 0
        %v1035 = vsel %vm469, %v1030, 0
        %1037 = vmatprep.subr.bf16.mxu0 %v1035
        %1038 = vmatpush1.bf16.msra.mxu0 %v1032
        %1039 = vmatprep.subr.bf16.mxu0 0
        %1040 = vmatpush1.bf16.msra.mxu0 0
        %1041 = vmatprep.subr.bf16.mxu0 0
        %1042 = vmatpush1.bf16.msra.mxu0 0
        %1043 = vmatprep.subr.bf16.mxu0 0
        %1044 = vmatpush1.bf16.msra.mxu0 0
        %1045 = vmatprep.subr.bf16.mxu0 0
        %1046 = vmatpush1.bf16.msra.mxu0 0
        %1047 = vmatprep.subr.bf16.mxu0 0
        %1048 = vmatpush1.bf16.msra.mxu0 0
        %1049 = vmatprep.subr.bf16.mxu0 0
        %1050 = vmatpush1.bf16.msra.mxu0 0
        %1051 = vmatprep.subr.bf16.mxu0 0
        %1052 = vmatpush1.bf16.msra.mxu0 0
        %1053 = vmatprep.subr.bf16.mxu0 0
        %1054 = vmatpush1.bf16.msra.mxu0 0
        %1055 = vmatprep.subr.bf16.mxu0 0
        %1056 = vmatpush1.bf16.msra.mxu0 0
        %1057 = vmatprep.subr.bf16.mxu0 0
        %1058 = vmatpush1.bf16.msra.mxu0 0
        %1059 = vmatprep.subr.bf16.mxu0 0
        %1060 = vmatpush1.bf16.msra.mxu0 0
        %1061 = vmatprep.subr.bf16.mxu0 0
        %1062 = vmatpush1.bf16.msra.mxu0 0
        %1063 = vmatprep.subr.bf16.mxu0 0
        %1064 = vmatpush1.bf16.msra.mxu0 0
        %1065 = vmatprep.subr.bf16.mxu0 0
        %1066 = vmatpush1.bf16.msra.mxu0 0
        %1067 = vmatprep.subr.bf16.mxu0 0
        %1068 = vmatpush1.bf16.msra.mxu0 0
        %1069 = vmatprep.mubr.bf16.mxu0 0
        %1070 = vmatmul.mubr.bf16.gmra.mrb[0].mxu0 %v467
        %v1071 = vpop.f32.mrb[0].mxu0
        %v1072 = vadd.f32 %v463, %v1071
        %v1073 = vpop.f32.mrb[0].mxu0
        %v1074 = vadd.f32 %v463, %v1073
        %v1075 = vpop.f32.mrb[0].mxu0
        %v1076 = vpop.f32.mrb[0].mxu0
        %1077 = vdwg.mxu0
        %v1078 = vmax.f32 %v1072, 0.0
        %v1079 = vmax.f32 %v1074, 0.0
        %v1080 = vpack.c.bf16 %v1078, %v1078
        %v1081 = vpack.c.bf16 %v1079, %v1079
        %v1083 = vsel %vm469, %v1080, 0
        %v1086 = vsel %vm469, %v1081, 0
        %1088 = vmatprep.subr.bf16.mxu0 %v1086
        %1089 = vmatpush1.bf16.msra.mxu0 %v1083
        %1090 = vmatprep.subr.bf16.mxu0 0
        %1091 = vmatpush1.bf16.msra.mxu0 0
        %1092 = vmatprep.subr.bf16.mxu0 0
        %1093 = vmatpush1.bf16.msra.mxu0 0
        %1094 = vmatprep.subr.bf16.mxu0 0
        %1095 = vmatpush1.bf16.msra.mxu0 0
        %1096 = vmatprep.subr.bf16.mxu0 0
        %1097 = vmatpush1.bf16.msra.mxu0 0
        %1098 = vmatprep.subr.bf16.mxu0 0
        %1099 = vmatpush1.bf16.msra.mxu0 0
        %1100 = vmatprep.subr.bf16.mxu0 0
        %1101 = vmatpush1.bf16.msra.mxu0 0
        %1102 = vmatprep.subr.bf16.mxu0 0
        %1103 = vmatpush1.bf16.msra.mxu0 0
        %1104 = vmatprep.subr.bf16.mxu0 0
        %1105 = vmatpush1.bf16.msra.mxu0 0
        %1106 = vmatprep.subr.bf16.mxu0 0
        %1107 = vmatpush1.bf16.msra.mxu0 0
        %1108 = vmatprep.subr.bf16.mxu0 0
        %1109 = vmatpush1.bf16.msra.mxu0 0
        %1110 = vmatprep.subr.bf16.mxu0 0
        %1111 = vmatpush1.bf16.msra.mxu0 0
        %1112 = vmatprep.subr.bf16.mxu0 0
        %1113 = vmatpush1.bf16.msra.mxu0 0
        %1114 = vmatprep.subr.bf16.mxu0 0
        %1115 = vmatpush1.bf16.msra.mxu0 0
        %1116 = vmatprep.subr.bf16.mxu0 0
        %1117 = vmatpush1.bf16.msra.mxu0 0
        %1118 = vmatprep.subr.bf16.mxu0 0
        %1119 = vmatpush1.bf16.msra.mxu0 0
        %1120 = vmatprep.mubr.bf16.mxu0 0
        %1121 = vmatmul.mubr.bf16.gmra.mrb[0].mxu0 %v537
        %v1122 = vpop.f32.mrb[0].mxu0
        %v1123 = vadd.f32 %v524, %v1122
        %v1124 = vpop.f32.mrb[0].mxu0
        %v1125 = vadd.f32 %v524, %v1124
        %v1126 = vpop.f32.mrb[0].mxu0
        %v1127 = vadd.f32 %v529, %v1126
        %v1128 = vpop.f32.mrb[0].mxu0
        %v1129 = vadd.f32 %v529, %v1128
        %1130 = vdwg.mxu0
        %v1131 = vmax.f32 %v1123, 0.0
        %v1132 = vmax.f32 %v1125, 0.0
        %v1133 = vmax.f32 %v1127, 0.0
        %v1134 = vmax.f32 %v1129, 0.0
        %v1135 = vmul.f32 %v1131, %v965
        %v1136 = vmul.f32 %v1132, %v966
        %v1137 = vmul.f32 %v1133, %v967
        %v1138 = vmul.f32 %v1134, %v968
        %v1139 = vadd.f32 %v958, %v1135
        %v1140 = vadd.f32 %v959, %v1136
        %v1141 = vadd.f32 %v960, %v1137
        %v1142 = vadd.f32 %v961, %v1138
        %s1143 = scalar_lea.vmem %s358, 64
        %v1144 = vld [vmem:[%s1143] sm:$0xff]
        %v1145 = vld [vmem:[%s1143 + $0x8] sm:$0xff]
        %v1146 = vunpack.c.l.bf16 %v1144
        %v1147 = vunpack.c.h.bf16 %v1144
        %v1148 = vunpack.c.l.bf16 %v1145
        %v1149 = vunpack.c.h.bf16 %v1145
        %s1150 = scalar_lea.vmem %s368, 16
        %v1151 = vld [vmem:[%s1150] sm:$0xf]
        %v1154 = vunpack.c.l.s4 1983009808
        %v1155 = vunpack.c.0.s8 %v1154
        %v1156 = vlaneseq
        %v1157 = vshrl.u32 %v1156, 7
        %v1158 = vsub.s32 %v1155, %v1157
        %v1159 = vrot.slane %v1151, %v1158
        %v1160 = vcombine.high %v1159, %v1159
        %v1162 = vand.u32 %v1159, %v408
        %v1165 = vand.u32 %v1160, %v408
        %1167 = vmatprep.subr.bf16.mxu0 %v1165
        %1168 = vmatpush1.bf16.msra.mxu0 %v1162
        %1169 = vmatprep.subr.bf16.mxu0 0
        %1170 = vmatpush1.bf16.msra.mxu0 0
        %1171 = vmatprep.subr.bf16.mxu0 0
        %1172 = vmatpush1.bf16.msra.mxu0 0
        %1173 = vmatprep.subr.bf16.mxu0 0
        %1174 = vmatpush1.bf16.msra.mxu0 0
        %1175 = vmatprep.subr.bf16.mxu0 0
        %1176 = vmatpush1.bf16.msra.mxu0 0
        %1177 = vmatprep.subr.bf16.mxu0 0
        %1178 = vmatpush1.bf16.msra.mxu0 0
        %1179 = vmatprep.subr.bf16.mxu0 0
        %1180 = vmatpush1.bf16.msra.mxu0 0
        %1181 = vmatprep.subr.bf16.mxu0 0
        %1182 = vmatpush1.bf16.msra.mxu0 0
        %1183 = vmatprep.subr.bf16.mxu0 0
        %1184 = vmatpush1.bf16.msra.mxu0 0
        %1185 = vmatprep.subr.bf16.mxu0 0
        %1186 = vmatpush1.bf16.msra.mxu0 0
        %1187 = vmatprep.subr.bf16.mxu0 0
        %1188 = vmatpush1.bf16.msra.mxu0 0
        %1189 = vmatprep.subr.bf16.mxu0 0
        %1190 = vmatpush1.bf16.msra.mxu0 0
        %1191 = vmatprep.subr.bf16.mxu0 0
        %1192 = vmatpush1.bf16.msra.mxu0 0
        %1193 = vmatprep.subr.bf16.mxu0 0
        %1194 = vmatpush1.bf16.msra.mxu0 0
        %1195 = vmatprep.subr.bf16.mxu0 0
        %1196 = vmatpush1.bf16.msra.mxu0 0
        %1197 = vmatprep.subr.bf16.mxu0 0
        %1198 = vmatpush1.bf16.msra.mxu0 0
        %1199 = vmatprep.mubr.bf16.mxu0 0
        %1200 = vmatmul.mubr.bf16.gmra.mrb[0].mxu0 %v403
        %v1201 = vpop.f32.mrb[0].mxu0
        %v1202 = vadd.f32 %v390, %v1201
        %v1203 = vpop.f32.mrb[0].mxu0
        %v1204 = vadd.f32 %v390, %v1203
        %v1205 = vpop.f32.mrb[0].mxu0
        %v1206 = vpop.f32.mrb[0].mxu0
        %1207 = vdwg.mxu0
        %v1208 = vmax.f32 %v1202, 0.0
        %v1209 = vmax.f32 %v1204, 0.0
        %v1210 = vpack.c.bf16 %v1208, %v1208
        %v1211 = vpack.c.bf16 %v1209, %v1209
        %v1213 = vsel %vm469, %v1210, 0
        %v1216 = vsel %vm469, %v1211, 0
        %1218 = vmatprep.subr.bf16.mxu0 %v1216
        %1219 = vmatpush1.bf16.msra.mxu0 %v1213
        %1220 = vmatprep.subr.bf16.mxu0 0
        %1221 = vmatpush1.bf16.msra.mxu0 0
        %1222 = vmatprep.subr.bf16.mxu0 0
        %1223 = vmatpush1.bf16.msra.mxu0 0
        %1224 = vmatprep.subr.bf16.mxu0 0
        %1225 = vmatpush1.bf16.msra.mxu0 0
        %1226 = vmatprep.subr.bf16.mxu0 0
        %1227 = vmatpush1.bf16.msra.mxu0 0
        %1228 = vmatprep.subr.bf16.mxu0 0
        %1229 = vmatpush1.bf16.msra.mxu0 0
        %1230 = vmatprep.subr.bf16.mxu0 0
        %1231 = vmatpush1.bf16.msra.mxu0 0
        %1232 = vmatprep.subr.bf16.mxu0 0
        %1233 = vmatpush1.bf16.msra.mxu0 0
        %1234 = vmatprep.subr.bf16.mxu0 0
        %1235 = vmatpush1.bf16.msra.mxu0 0
        %1236 = vmatprep.subr.bf16.mxu0 0
        %1237 = vmatpush1.bf16.msra.mxu0 0
        %1238 = vmatprep.subr.bf16.mxu0 0
        %1239 = vmatpush1.bf16.msra.mxu0 0
        %1240 = vmatprep.subr.bf16.mxu0 0
        %1241 = vmatpush1.bf16.msra.mxu0 0
        %1242 = vmatprep.subr.bf16.mxu0 0
        %1243 = vmatpush1.bf16.msra.mxu0 0
        %1244 = vmatprep.subr.bf16.mxu0 0
        %1245 = vmatpush1.bf16.msra.mxu0 0
        %1246 = vmatprep.subr.bf16.mxu0 0
        %1247 = vmatpush1.bf16.msra.mxu0 0
        %1248 = vmatprep.subr.bf16.mxu0 0
        %1249 = vmatpush1.bf16.msra.mxu0 0
        %1250 = vmatprep.mubr.bf16.mxu0 0
        %1251 = vmatmul.mubr.bf16.gmra.mrb[0].mxu0 %v467
        %v1252 = vpop.f32.mrb[0].mxu0
        %v1253 = vadd.f32 %v463, %v1252
        %v1254 = vpop.f32.mrb[0].mxu0
        %v1255 = vadd.f32 %v463, %v1254
        %v1256 = vpop.f32.mrb[0].mxu0
        %v1257 = vpop.f32.mrb[0].mxu0
        %1258 = vdwg.mxu0
        %v1259 = vmax.f32 %v1253, 0.0
        %v1260 = vmax.f32 %v1255, 0.0
        %v1261 = vpack.c.bf16 %v1259, %v1259
        %v1262 = vpack.c.bf16 %v1260, %v1260
        %v1264 = vsel %vm469, %v1261, 0
        %v1267 = vsel %vm469, %v1262, 0
        %1269 = vmatprep.subr.bf16.mxu0 %v1267
        %1270 = vmatpush1.bf16.msra.mxu0 %v1264
        %1271 = vmatprep.subr.bf16.mxu0 0
        %1272 = vmatpush1.bf16.msra.mxu0 0
        %1273 = vmatprep.subr.bf16.mxu0 0
        %1274 = vmatpush1.bf16.msra.mxu0 0
        %1275 = vmatprep.subr.bf16.mxu0 0
        %1276 = vmatpush1.bf16.msra.mxu0 0
        %1277 = vmatprep.subr.bf16.mxu0 0
        %1278 = vmatpush1.bf16.msra.mxu0 0
        %1279 = vmatprep.subr.bf16.mxu0 0
        %1280 = vmatpush1.bf16.msra.mxu0 0
        %1281 = vmatprep.subr.bf16.mxu0 0
        %1282 = vmatpush1.bf16.msra.mxu0 0
        %1283 = vmatprep.subr.bf16.mxu0 0
        %1284 = vmatpush1.bf16.msra.mxu0 0
        %1285 = vmatprep.subr.bf16.mxu0 0
        %1286 = vmatpush1.bf16.msra.mxu0 0
        %1287 = vmatprep.subr.bf16.mxu0 0
        %1288 = vmatpush1.bf16.msra.mxu0 0
        %1289 = vmatprep.subr.bf16.mxu0 0
        %1290 = vmatpush1.bf16.msra.mxu0 0
        %1291 = vmatprep.subr.bf16.mxu0 0
        %1292 = vmatpush1.bf16.msra.mxu0 0
        %1293 = vmatprep.subr.bf16.mxu0 0
        %1294 = vmatpush1.bf16.msra.mxu0 0
        %1295 = vmatprep.subr.bf16.mxu0 0
        %1296 = vmatpush1.bf16.msra.mxu0 0
        %1297 = vmatprep.subr.bf16.mxu0 0
        %1298 = vmatpush1.bf16.msra.mxu0 0
        %1299 = vmatprep.subr.bf16.mxu0 0
        %1300 = vmatpush1.bf16.msra.mxu0 0
        %1301 = vmatprep.mubr.bf16.mxu0 0
        %1302 = vmatmul.mubr.bf16.gmra.mrb[0].mxu0 %v537
        %v1303 = vpop.f32.mrb[0].mxu0
        %v1304 = vadd.f32 %v524, %v1303
        %v1305 = vpop.f32.mrb[0].mxu0
        %v1306 = vadd.f32 %v524, %v1305
        %v1307 = vpop.f32.mrb[0].mxu0
        %v1308 = vadd.f32 %v529, %v1307
        %v1309 = vpop.f32.mrb[0].mxu0
        %v1310 = vadd.f32 %v529, %v1309
        %1311 = vdwg.mxu0
        %v1312 = vmax.f32 %v1304, 0.0
        %v1313 = vmax.f32 %v1306, 0.0
        %v1314 = vmax.f32 %v1308, 0.0
        %v1315 = vmax.f32 %v1310, 0.0
        %v1316 = vmul.f32 %v1312, %v1146
        %v1317 = vmul.f32 %v1313, %v1147
        %v1318 = vmul.f32 %v1314, %v1148
        %v1319 = vmul.f32 %v1315, %v1149
        %v1320 = vadd.f32 %v1139, %v1316
        %v1321 = vadd.f32 %v1140, %v1317
        %v1322 = vadd.f32 %v1141, %v1318
        %v1323 = vadd.f32 %v1142, %v1319
        %s1324 = scalar_lea.vmem %s358, 80
        %v1325 = vld [vmem:[%s1324] sm:$0xff]
        %v1326 = vld [vmem:[%s1324 + $0x8] sm:$0xff]
        %v1327 = vunpack.c.l.bf16 %v1325
        %v1328 = vunpack.c.h.bf16 %v1325
        %v1329 = vunpack.c.l.bf16 %v1326
        %v1330 = vunpack.c.h.bf16 %v1326
        %s1331 = scalar_lea.vmem %s368, 20
        %v1332 = vld [vmem:[%s1331] sm:$0xf]
        %v1335 = vunpack.c.l.s4 1983009808
        %v1336 = vunpack.c.0.s8 %v1335
        %v1337 = vlaneseq
        %v1338 = vshrl.u32 %v1337, 7
        %v1339 = vsub.s32 %v1336, %v1338
        %v1340 = vrot.slane %v1332, %v1339
        %v1341 = vcombine.high %v1340, %v1340
        %v1343 = vand.u32 %v1340, %v408
        %v1346 = vand.u32 %v1341, %v408
        %1348 = vmatprep.subr.bf16.mxu0 %v1346
        %1349 = vmatpush1.bf16.msra.mxu0 %v1343
        %1350 = vmatprep.subr.bf16.mxu0 0
        %1351 = vmatpush1.bf16.msra.mxu0 0
        %1352 = vmatprep.subr.bf16.mxu0 0
        %1353 = vmatpush1.bf16.msra.mxu0 0
        %1354 = vmatprep.subr.bf16.mxu0 0
        %1355 = vmatpush1.bf16.msra.mxu0 0
        %1356 = vmatprep.subr.bf16.mxu0 0
        %1357 = vmatpush1.bf16.msra.mxu0 0
        %1358 = vmatprep.subr.bf16.mxu0 0
        %1359 = vmatpush1.bf16.msra.mxu0 0
        %1360 = vmatprep.subr.bf16.mxu0 0
        %1361 = vmatpush1.bf16.msra.mxu0 0
        %1362 = vmatprep.subr.bf16.mxu0 0
        %1363 = vmatpush1.bf16.msra.mxu0 0
        %1364 = vmatprep.subr.bf16.mxu0 0
        %1365 = vmatpush1.bf16.msra.mxu0 0
        %1366 = vmatprep.subr.bf16.mxu0 0
        %1367 = vmatpush1.bf16.msra.mxu0 0
        %1368 = vmatprep.subr.bf16.mxu0 0
        %1369 = vmatpush1.bf16.msra.mxu0 0
        %1370 = vmatprep.subr.bf16.mxu0 0
        %1371 = vmatpush1.bf16.msra.mxu0 0
        %1372 = vmatprep.subr.bf16.mxu0 0
        %1373 = vmatpush1.bf16.msra.mxu0 0
        %1374 = vmatprep.subr.bf16.mxu0 0
        %1375 = vmatpush1.bf16.msra.mxu0 0
        %1376 = vmatprep.subr.bf16.mxu0 0
        %1377 = vmatpush1.bf16.msra.mxu0 0
        %1378 = vmatprep.subr.bf16.mxu0 0
        %1379 = vmatpush1.bf16.msra.mxu0 0
        %1380 = vmatprep.mubr.bf16.mxu0 0
        %1381 = vmatmul.mubr.bf16.gmra.mrb[0].mxu0 %v403
        %v1382 = vpop.f32.mrb[0].mxu0
        %v1383 = vadd.f32 %v390, %v1382
        %v1384 = vpop.f32.mrb[0].mxu0
        %v1385 = vadd.f32 %v390, %v1384
        %v1386 = vpop.f32.mrb[0].mxu0
        %v1387 = vpop.f32.mrb[0].mxu0
        %1388 = vdwg.mxu0
        %v1389 = vmax.f32 %v1383, 0.0
        %v1390 = vmax.f32 %v1385, 0.0
        %v1391 = vpack.c.bf16 %v1389, %v1389
        %v1392 = vpack.c.bf16 %v1390, %v1390
        %v1394 = vsel %vm469, %v1391, 0
        %v1397 = vsel %vm469, %v1392, 0
        %1399 = vmatprep.subr.bf16.mxu0 %v1397
        %1400 = vmatpush1.bf16.msra.mxu0 %v1394
        %1401 = vmatprep.subr.bf16.mxu0 0
        %1402 = vmatpush1.bf16.msra.mxu0 0
        %1403 = vmatprep.subr.bf16.mxu0 0
        %1404 = vmatpush1.bf16.msra.mxu0 0
        %1405 = vmatprep.subr.bf16.mxu0 0
        %1406 = vmatpush1.bf16.msra.mxu0 0
        %1407 = vmatprep.subr.bf16.mxu0 0
        %1408 = vmatpush1.bf16.msra.mxu0 0
        %1409 = vmatprep.subr.bf16.mxu0 0
        %1410 = vmatpush1.bf16.msra.mxu0 0
        %1411 = vmatprep.subr.bf16.mxu0 0
        %1412 = vmatpush1.bf16.msra.mxu0 0
        %1413 = vmatprep.subr.bf16.mxu0 0
        %1414 = vmatpush1.bf16.msra.mxu0 0
        %1415 = vmatprep.subr.bf16.mxu0 0
        %1416 = vmatpush1.bf16.msra.mxu0 0
        %1417 = vmatprep.subr.bf16.mxu0 0
        %1418 = vmatpush1.bf16.msra.mxu0 0
        %1419 = vmatprep.subr.bf16.mxu0 0
        %1420 = vmatpush1.bf16.msra.mxu0 0
        %1421 = vmatprep.subr.bf16.mxu0 0
        %1422 = vmatpush1.bf16.msra.mxu0 0
        %1423 = vmatprep.subr.bf16.mxu0 0
        %1424 = vmatpush1.bf16.msra.mxu0 0
        %1425 = vmatprep.subr.bf16.mxu0 0
        %1426 = vmatpush1.bf16.msra.mxu0 0
        %1427 = vmatprep.subr.bf16.mxu0 0
        %1428 = vmatpush1.bf16.msra.mxu0 0
        %1429 = vmatprep.subr.bf16.mxu0 0
        %1430 = vmatpush1.bf16.msra.mxu0 0
        %1431 = vmatprep.mubr.bf16.mxu0 0
        %1432 = vmatmul.mubr.bf16.gmra.mrb[0].mxu0 %v467
        %v1433 = vpop.f32.mrb[0].mxu0
        %v1434 = vadd.f32 %v463, %v1433
        %v1435 = vpop.f32.mrb[0].mxu0
        %v1436 = vadd.f32 %v463, %v1435
        %v1437 = vpop.f32.mrb[0].mxu0
        %v1438 = vpop.f32.mrb[0].mxu0
        %1439 = vdwg.mxu0
        %v1440 = vmax.f32 %v1434, 0.0
        %v1441 = vmax.f32 %v1436, 0.0
        %v1442 = vpack.c.bf16 %v1440, %v1440
        %v1443 = vpack.c.bf16 %v1441, %v1441
        %v1445 = vsel %vm469, %v1442, 0
        %v1448 = vsel %vm469, %v1443, 0
        %1450 = vmatprep.subr.bf16.mxu0 %v1448
        %1451 = vmatpush1.bf16.msra.mxu0 %v1445
        %1452 = vmatprep.subr.bf16.mxu0 0
        %1453 = vmatpush1.bf16.msra.mxu0 0
        %1454 = vmatprep.subr.bf16.mxu0 0
        %1455 = vmatpush1.bf16.msra.mxu0 0
        %1456 = vmatprep.subr.bf16.mxu0 0
        %1457 = vmatpush1.bf16.msra.mxu0 0
        %1458 = vmatprep.subr.bf16.mxu0 0
        %1459 = vmatpush1.bf16.msra.mxu0 0
        %1460 = vmatprep.subr.bf16.mxu0 0
        %1461 = vmatpush1.bf16.msra.mxu0 0
        %1462 = vmatprep.subr.bf16.mxu0 0
        %1463 = vmatpush1.bf16.msra.mxu0 0
        %1464 = vmatprep.subr.bf16.mxu0 0
        %1465 = vmatpush1.bf16.msra.mxu0 0
        %1466 = vmatprep.subr.bf16.mxu0 0
        %1467 = vmatpush1.bf16.msra.mxu0 0
        %1468 = vmatprep.subr.bf16.mxu0 0
        %1469 = vmatpush1.bf16.msra.mxu0 0
        %1470 = vmatprep.subr.bf16.mxu0 0
        %1471 = vmatpush1.bf16.msra.mxu0 0
        %1472 = vmatprep.subr.bf16.mxu0 0
        %1473 = vmatpush1.bf16.msra.mxu0 0
        %1474 = vmatprep.subr.bf16.mxu0 0
        %1475 = vmatpush1.bf16.msra.mxu0 0
        %1476 = vmatprep.subr.bf16.mxu0 0
        %1477 = vmatpush1.bf16.msra.mxu0 0
        %1478 = vmatprep.subr.bf16.mxu0 0
        %1479 = vmatpush1.bf16.msra.mxu0 0
        %1480 = vmatprep.subr.bf16.mxu0 0
        %1481 = vmatpush1.bf16.msra.mxu0 0
        %1482 = vmatprep.mubr.bf16.mxu0 0
        %1483 = vmatmul.mubr.bf16.gmra.mrb[0].mxu0 %v537
        %v1484 = vpop.f32.mrb[0].mxu0
        %v1485 = vadd.f32 %v524, %v1484
        %v1486 = vpop.f32.mrb[0].mxu0
        %v1487 = vadd.f32 %v524, %v1486
        %v1488 = vpop.f32.mrb[0].mxu0
        %v1489 = vadd.f32 %v529, %v1488
        %v1490 = vpop.f32.mrb[0].mxu0
        %v1491 = vadd.f32 %v529, %v1490
        %1492 = vdwg.mxu0
        %v1493 = vmax.f32 %v1485, 0.0
        %v1494 = vmax.f32 %v1487, 0.0
        %v1495 = vmax.f32 %v1489, 0.0
        %v1496 = vmax.f32 %v1491, 0.0
        %v1497 = vmul.f32 %v1493, %v1327
        %v1498 = vmul.f32 %v1494, %v1328
        %v1499 = vmul.f32 %v1495, %v1329
        %v1500 = vmul.f32 %v1496, %v1330
        %v1501 = vadd.f32 %v1320, %v1497
        %v1502 = vadd.f32 %v1321, %v1498
        %v1503 = vadd.f32 %v1322, %v1499
        %v1504 = vadd.f32 %v1323, %v1500
        %s1505 = scalar_lea.vmem %s358, 96
        %v1506 = vld [vmem:[%s1505] sm:$0xff]
        %v1507 = vld [vmem:[%s1505 + $0x8] sm:$0xff]
        %v1508 = vunpack.c.l.bf16 %v1506
        %v1509 = vunpack.c.h.bf16 %v1506
        %v1510 = vunpack.c.l.bf16 %v1507
        %v1511 = vunpack.c.h.bf16 %v1507
        %s1512 = scalar_lea.vmem %s368, 24
        %v1513 = vld [vmem:[%s1512] sm:$0xf]
        %v1516 = vunpack.c.l.s4 1983009808
        %v1517 = vunpack.c.0.s8 %v1516
        %v1518 = vlaneseq
        %v1519 = vshrl.u32 %v1518, 7
        %v1520 = vsub.s32 %v1517, %v1519
        %v1521 = vrot.slane %v1513, %v1520
        %v1522 = vcombine.high %v1521, %v1521
        %v1524 = vand.u32 %v1521, %v408
        %v1527 = vand.u32 %v1522, %v408
        %1529 = vmatprep.subr.bf16.mxu0 %v1527
        %1530 = vmatpush1.bf16.msra.mxu0 %v1524
        %1531 = vmatprep.subr.bf16.mxu0 0
        %1532 = vmatpush1.bf16.msra.mxu0 0
        %1533 = vmatprep.subr.bf16.mxu0 0
        %1534 = vmatpush1.bf16.msra.mxu0 0
        %1535 = vmatprep.subr.bf16.mxu0 0
        %1536 = vmatpush1.bf16.msra.mxu0 0
        %1537 = vmatprep.subr.bf16.mxu0 0
        %1538 = vmatpush1.bf16.msra.mxu0 0
        %1539 = vmatprep.subr.bf16.mxu0 0
        %1540 = vmatpush1.bf16.msra.mxu0 0
        %1541 = vmatprep.subr.bf16.mxu0 0
        %1542 = vmatpush1.bf16.msra.mxu0 0
        %1543 = vmatprep.subr.bf16.mxu0 0
        %1544 = vmatpush1.bf16.msra.mxu0 0
        %1545 = vmatprep.subr.bf16.mxu0 0
        %1546 = vmatpush1.bf16.msra.mxu0 0
        %1547 = vmatprep.subr.bf16.mxu0 0
        %1548 = vmatpush1.bf16.msra.mxu0 0
        %1549 = vmatprep.subr.bf16.mxu0 0
        %1550 = vmatpush1.bf16.msra.mxu0 0
        %1551 = vmatprep.subr.bf16.mxu0 0
        %1552 = vmatpush1.bf16.msra.mxu0 0
        %1553 = vmatprep.subr.bf16.mxu0 0
        %1554 = vmatpush1.bf16.msra.mxu0 0
        %1555 = vmatprep.subr.bf16.mxu0 0
        %1556 = vmatpush1.bf16.msra.mxu0 0
        %1557 = vmatprep.subr.bf16.mxu0 0
        %1558 = vmatpush1.bf16.msra.mxu0 0
        %1559 = vmatprep.subr.bf16.mxu0 0
        %1560 = vmatpush1.bf16.msra.mxu0 0
        %1561 = vmatprep.mubr.bf16.mxu0 0
        %1562 = vmatmul.mubr.bf16.gmra.mrb[0].mxu0 %v403
        %v1563 = vpop.f32.mrb[0].mxu0
        %v1564 = vadd.f32 %v390, %v1563
        %v1565 = vpop.f32.mrb[0].mxu0
        %v1566 = vadd.f32 %v390, %v1565
        %v1567 = vpop.f32.mrb[0].mxu0
        %v1568 = vpop.f32.mrb[0].mxu0
        %1569 = vdwg.mxu0
        %v1570 = vmax.f32 %v1564, 0.0
        %v1571 = vmax.f32 %v1566, 0.0
        %v1572 = vpack.c.bf16 %v1570, %v1570
        %v1573 = vpack.c.bf16 %v1571, %v1571
        %v1575 = vsel %vm469, %v1572, 0
        %v1578 = vsel %vm469, %v1573, 0
        %1580 = vmatprep.subr.bf16.mxu0 %v1578
        %1581 = vmatpush1.bf16.msra.mxu0 %v1575
        %1582 = vmatprep.subr.bf16.mxu0 0
        %1583 = vmatpush1.bf16.msra.mxu0 0
        %1584 = vmatprep.subr.bf16.mxu0 0
        %1585 = vmatpush1.bf16.msra.mxu0 0
        %1586 = vmatprep.subr.bf16.mxu0 0
        %1587 = vmatpush1.bf16.msra.mxu0 0
        %1588 = vmatprep.subr.bf16.mxu0 0
        %1589 = vmatpush1.bf16.msra.mxu0 0
        %1590 = vmatprep.subr.bf16.mxu0 0
        %1591 = vmatpush1.bf16.msra.mxu0 0
        %1592 = vmatprep.subr.bf16.mxu0 0
        %1593 = vmatpush1.bf16.msra.mxu0 0
        %1594 = vmatprep.subr.bf16.mxu0 0
        %1595 = vmatpush1.bf16.msra.mxu0 0
        %1596 = vmatprep.subr.bf16.mxu0 0
        %1597 = vmatpush1.bf16.msra.mxu0 0
        %1598 = vmatprep.subr.bf16.mxu0 0
        %1599 = vmatpush1.bf16.msra.mxu0 0
        %1600 = vmatprep.subr.bf16.mxu0 0
        %1601 = vmatpush1.bf16.msra.mxu0 0
        %1602 = vmatprep.subr.bf16.mxu0 0
        %1603 = vmatpush1.bf16.msra.mxu0 0
        %1604 = vmatprep.subr.bf16.mxu0 0
        %1605 = vmatpush1.bf16.msra.mxu0 0
        %1606 = vmatprep.subr.bf16.mxu0 0
        %1607 = vmatpush1.bf16.msra.mxu0 0
        %1608 = vmatprep.subr.bf16.mxu0 0
        %1609 = vmatpush1.bf16.msra.mxu0 0
        %1610 = vmatprep.subr.bf16.mxu0 0
        %1611 = vmatpush1.bf16.msra.mxu0 0
        %1612 = vmatprep.mubr.bf16.mxu0 0
        %1613 = vmatmul.mubr.bf16.gmra.mrb[0].mxu0 %v467
        %v1614 = vpop.f32.mrb[0].mxu0
        %v1615 = vadd.f32 %v463, %v1614
        %v1616 = vpop.f32.mrb[0].mxu0
        %v1617 = vadd.f32 %v463, %v1616
        %v1618 = vpop.f32.mrb[0].mxu0
        %v1619 = vpop.f32.mrb[0].mxu0
        %1620 = vdwg.mxu0
        %v1621 = vmax.f32 %v1615, 0.0
        %v1622 = vmax.f32 %v1617, 0.0
        %v1623 = vpack.c.bf16 %v1621, %v1621
        %v1624 = vpack.c.bf16 %v1622, %v1622
        %v1626 = vsel %vm469, %v1623, 0
        %v1629 = vsel %vm469, %v1624, 0
        %1631 = vmatprep.subr.bf16.mxu0 %v1629
        %1632 = vmatpush1.bf16.msra.mxu0 %v1626
        %1633 = vmatprep.subr.bf16.mxu0 0
        %1634 = vmatpush1.bf16.msra.mxu0 0
        %1635 = vmatprep.subr.bf16.mxu0 0
        %1636 = vmatpush1.bf16.msra.mxu0 0
        %1637 = vmatprep.subr.bf16.mxu0 0
        %1638 = vmatpush1.bf16.msra.mxu0 0
        %1639 = vmatprep.subr.bf16.mxu0 0
        %1640 = vmatpush1.bf16.msra.mxu0 0
        %1641 = vmatprep.subr.bf16.mxu0 0
        %1642 = vmatpush1.bf16.msra.mxu0 0
        %1643 = vmatprep.subr.bf16.mxu0 0
        %1644 = vmatpush1.bf16.msra.mxu0 0
        %1645 = vmatprep.subr.bf16.mxu0 0
        %1646 = vmatpush1.bf16.msra.mxu0 0
        %1647 = vmatprep.subr.bf16.mxu0 0
        %1648 = vmatpush1.bf16.msra.mxu0 0
        %1649 = vmatprep.subr.bf16.mxu0 0
        %1650 = vmatpush1.bf16.msra.mxu0 0
        %1651 = vmatprep.subr.bf16.mxu0 0
        %1652 = vmatpush1.bf16.msra.mxu0 0
        %1653 = vmatprep.subr.bf16.mxu0 0
        %1654 = vmatpush1.bf16.msra.mxu0 0
        %1655 = vmatprep.subr.bf16.mxu0 0
        %1656 = vmatpush1.bf16.msra.mxu0 0
        %1657 = vmatprep.subr.bf16.mxu0 0
        %1658 = vmatpush1.bf16.msra.mxu0 0
        %1659 = vmatprep.subr.bf16.mxu0 0
        %1660 = vmatpush1.bf16.msra.mxu0 0
        %1661 = vmatprep.subr.bf16.mxu0 0
        %1662 = vmatpush1.bf16.msra.mxu0 0
        %1663 = vmatprep.mubr.bf16.mxu0 0
        %1664 = vmatmul.mubr.bf16.gmra.mrb[0].mxu0 %v537
        %v1665 = vpop.f32.mrb[0].mxu0
        %v1666 = vadd.f32 %v524, %v1665
        %v1667 = vpop.f32.mrb[0].mxu0
        %v1668 = vadd.f32 %v524, %v1667
        %v1669 = vpop.f32.mrb[0].mxu0
        %v1670 = vadd.f32 %v529, %v1669
        %v1671 = vpop.f32.mrb[0].mxu0
        %v1672 = vadd.f32 %v529, %v1671
        %1673 = vdwg.mxu0
        %v1674 = vmax.f32 %v1666, 0.0
        %v1675 = vmax.f32 %v1668, 0.0
        %v1676 = vmax.f32 %v1670, 0.0
        %v1677 = vmax.f32 %v1672, 0.0
        %v1678 = vmul.f32 %v1674, %v1508
        %v1679 = vmul.f32 %v1675, %v1509
        %v1680 = vmul.f32 %v1676, %v1510
        %v1681 = vmul.f32 %v1677, %v1511
        %v1682 = vadd.f32 %v1501, %v1678
        %v1683 = vadd.f32 %v1502, %v1679
        %v1684 = vadd.f32 %v1503, %v1680
        %v1685 = vadd.f32 %v1504, %v1681
        %s1686 = scalar_lea.vmem %s358, 112
        %v1687 = vld [vmem:[%s1686] sm:$0xff]
        %v1688 = vld [vmem:[%s1686 + $0x8] sm:$0xff]
        %v1689 = vunpack.c.l.bf16 %v1687
        %v1690 = vunpack.c.h.bf16 %v1687
        %v1691 = vunpack.c.l.bf16 %v1688
        %v1692 = vunpack.c.h.bf16 %v1688
        %s1693 = scalar_lea.vmem %s368, 28
        %v1694 = vld [vmem:[%s1693] sm:$0xf]
        %v1697 = vunpack.c.l.s4 1983009808
        %v1698 = vunpack.c.0.s8 %v1697
        %v1699 = vlaneseq
        %v1700 = vshrl.u32 %v1699, 7
        %v1701 = vsub.s32 %v1698, %v1700
        %v1702 = vrot.slane %v1694, %v1701
        %v1703 = vcombine.high %v1702, %v1702
        %v1705 = vand.u32 %v1702, %v408
        %v1708 = vand.u32 %v1703, %v408
        %1710 = vmatprep.subr.bf16.mxu0 %v1708
        %1711 = vmatpush1.bf16.msra.mxu0 %v1705
        %1712 = vmatprep.subr.bf16.mxu0 0
        %1713 = vmatpush1.bf16.msra.mxu0 0
        %1714 = vmatprep.subr.bf16.mxu0 0
        %1715 = vmatpush1.bf16.msra.mxu0 0
        %1716 = vmatprep.subr.bf16.mxu0 0
        %1717 = vmatpush1.bf16.msra.mxu0 0
        %1718 = vmatprep.subr.bf16.mxu0 0
        %1719 = vmatpush1.bf16.msra.mxu0 0
        %1720 = vmatprep.subr.bf16.mxu0 0
        %1721 = vmatpush1.bf16.msra.mxu0 0
        %1722 = vmatprep.subr.bf16.mxu0 0
        %1723 = vmatpush1.bf16.msra.mxu0 0
        %1724 = vmatprep.subr.bf16.mxu0 0
        %1725 = vmatpush1.bf16.msra.mxu0 0
        %1726 = vmatprep.subr.bf16.mxu0 0
        %1727 = vmatpush1.bf16.msra.mxu0 0
        %1728 = vmatprep.subr.bf16.mxu0 0
        %1729 = vmatpush1.bf16.msra.mxu0 0
        %1730 = vmatprep.subr.bf16.mxu0 0
        %1731 = vmatpush1.bf16.msra.mxu0 0
        %1732 = vmatprep.subr.bf16.mxu0 0
        %1733 = vmatpush1.bf16.msra.mxu0 0
        %1734 = vmatprep.subr.bf16.mxu0 0
        %1735 = vmatpush1.bf16.msra.mxu0 0
        %1736 = vmatprep.subr.bf16.mxu0 0
        %1737 = vmatpush1.bf16.msra.mxu0 0
        %1738 = vmatprep.subr.bf16.mxu0 0
        %1739 = vmatpush1.bf16.msra.mxu0 0
        %1740 = vmatprep.subr.bf16.mxu0 0
        %1741 = vmatpush1.bf16.msra.mxu0 0
        %1742 = vmatprep.mubr.bf16.mxu0 0
        %1743 = vmatmul.mubr.bf16.gmra.mrb[0].mxu0 %v403
        %v1744 = vpop.f32.mrb[0].mxu0
        %v1745 = vadd.f32 %v390, %v1744
        %v1746 = vpop.f32.mrb[0].mxu0
        %v1747 = vadd.f32 %v390, %v1746
        %v1748 = vpop.f32.mrb[0].mxu0
        %v1749 = vpop.f32.mrb[0].mxu0
        %1750 = vdwg.mxu0
        %v1751 = vmax.f32 %v1745, 0.0
        %v1752 = vmax.f32 %v1747, 0.0
        %v1753 = vpack.c.bf16 %v1751, %v1751
        %v1754 = vpack.c.bf16 %v1752, %v1752
        %v1756 = vsel %vm469, %v1753, 0
        %v1759 = vsel %vm469, %v1754, 0
        %1761 = vmatprep.subr.bf16.mxu0 %v1759
        %1762 = vmatpush1.bf16.msra.mxu0 %v1756
        %1763 = vmatprep.subr.bf16.mxu0 0
        %1764 = vmatpush1.bf16.msra.mxu0 0
        %1765 = vmatprep.subr.bf16.mxu0 0
        %1766 = vmatpush1.bf16.msra.mxu0 0
        %1767 = vmatprep.subr.bf16.mxu0 0
        %1768 = vmatpush1.bf16.msra.mxu0 0
        %1769 = vmatprep.subr.bf16.mxu0 0
        %1770 = vmatpush1.bf16.msra.mxu0 0
        %1771 = vmatprep.subr.bf16.mxu0 0
        %1772 = vmatpush1.bf16.msra.mxu0 0
        %1773 = vmatprep.subr.bf16.mxu0 0
        %1774 = vmatpush1.bf16.msra.mxu0 0
        %1775 = vmatprep.subr.bf16.mxu0 0
        %1776 = vmatpush1.bf16.msra.mxu0 0
        %1777 = vmatprep.subr.bf16.mxu0 0
        %1778 = vmatpush1.bf16.msra.mxu0 0
        %1779 = vmatprep.subr.bf16.mxu0 0
        %1780 = vmatpush1.bf16.msra.mxu0 0
        %1781 = vmatprep.subr.bf16.mxu0 0
        %1782 = vmatpush1.bf16.msra.mxu0 0
        %1783 = vmatprep.subr.bf16.mxu0 0
        %1784 = vmatpush1.bf16.msra.mxu0 0
        %1785 = vmatprep.subr.bf16.mxu0 0
        %1786 = vmatpush1.bf16.msra.mxu0 0
        %1787 = vmatprep.subr.bf16.mxu0 0
        %1788 = vmatpush1.bf16.msra.mxu0 0
        %1789 = vmatprep.subr.bf16.mxu0 0
        %1790 = vmatpush1.bf16.msra.mxu0 0
        %1791 = vmatprep.subr.bf16.mxu0 0
        %1792 = vmatpush1.bf16.msra.mxu0 0
        %1793 = vmatprep.mubr.bf16.mxu0 0
        %1794 = vmatmul.mubr.bf16.gmra.mrb[0].mxu0 %v467
        %v1795 = vpop.f32.mrb[0].mxu0
        %v1796 = vadd.f32 %v463, %v1795
        %v1797 = vpop.f32.mrb[0].mxu0
        %v1798 = vadd.f32 %v463, %v1797
        %v1799 = vpop.f32.mrb[0].mxu0
        %v1800 = vpop.f32.mrb[0].mxu0
        %1801 = vdwg.mxu0
        %v1802 = vmax.f32 %v1796, 0.0
        %v1803 = vmax.f32 %v1798, 0.0
        %v1804 = vpack.c.bf16 %v1802, %v1802
        %v1805 = vpack.c.bf16 %v1803, %v1803
        %v1807 = vsel %vm469, %v1804, 0
        %v1810 = vsel %vm469, %v1805, 0
        %1812 = vmatprep.subr.bf16.mxu0 %v1810
        %1813 = vmatpush1.bf16.msra.mxu0 %v1807
        %1814 = vmatprep.subr.bf16.mxu0 0
        %1815 = vmatpush1.bf16.msra.mxu0 0
        %1816 = vmatprep.subr.bf16.mxu0 0
        %1817 = vmatpush1.bf16.msra.mxu0 0
        %1818 = vmatprep.subr.bf16.mxu0 0
        %1819 = vmatpush1.bf16.msra.mxu0 0
        %1820 = vmatprep.subr.bf16.mxu0 0
        %1821 = vmatpush1.bf16.msra.mxu0 0
        %1822 = vmatprep.subr.bf16.mxu0 0
        %1823 = vmatpush1.bf16.msra.mxu0 0
        %1824 = vmatprep.subr.bf16.mxu0 0
        %1825 = vmatpush1.bf16.msra.mxu0 0
        %1826 = vmatprep.subr.bf16.mxu0 0
        %1827 = vmatpush1.bf16.msra.mxu0 0
        %1828 = vmatprep.subr.bf16.mxu0 0
        %1829 = vmatpush1.bf16.msra.mxu0 0
        %1830 = vmatprep.subr.bf16.mxu0 0
        %1831 = vmatpush1.bf16.msra.mxu0 0
        %1832 = vmatprep.subr.bf16.mxu0 0
        %1833 = vmatpush1.bf16.msra.mxu0 0
        %1834 = vmatprep.subr.bf16.mxu0 0
        %1835 = vmatpush1.bf16.msra.mxu0 0
        %1836 = vmatprep.subr.bf16.mxu0 0
        %1837 = vmatpush1.bf16.msra.mxu0 0
        %1838 = vmatprep.subr.bf16.mxu0 0
        %1839 = vmatpush1.bf16.msra.mxu0 0
        %1840 = vmatprep.subr.bf16.mxu0 0
        %1841 = vmatpush1.bf16.msra.mxu0 0
        %1842 = vmatprep.subr.bf16.mxu0 0
        %1843 = vmatpush1.bf16.msra.mxu0 0
        %1844 = vmatprep.mubr.bf16.mxu0 0
        %1845 = vmatmul.mubr.bf16.gmra.mrb[0].mxu0 %v537
        %v1846 = vpop.f32.mrb[0].mxu0
        %v1847 = vadd.f32 %v524, %v1846
        %v1848 = vpop.f32.mrb[0].mxu0
        %v1849 = vadd.f32 %v524, %v1848
        %v1850 = vpop.f32.mrb[0].mxu0
        %v1851 = vadd.f32 %v529, %v1850
        %v1852 = vpop.f32.mrb[0].mxu0
        %v1853 = vadd.f32 %v529, %v1852
        %1854 = vdwg.mxu0
        %v1855 = vmax.f32 %v1847, 0.0
        %v1856 = vmax.f32 %v1849, 0.0
        %v1857 = vmax.f32 %v1851, 0.0
        %v1858 = vmax.f32 %v1853, 0.0
        %v1859 = vmul.f32 %v1855, %v1689
        %v1860 = vmul.f32 %v1856, %v1690
        %v1861 = vmul.f32 %v1857, %v1691
        %v1862 = vmul.f32 %v1858, %v1692
        %v1863 = vadd.f32 %v1682, %v1859
        %v1864 = vadd.f32 %v1683, %v1860
        %v1865 = vadd.f32 %v1684, %v1861
        %v1866 = vadd.f32 %v1685, %v1862
        %1867 = vst [vmem:[%s349] sm:$0xff] %v1863
        %1868 = vst [vmem:[%s349 + $0x8] sm:$0xff] %v1864
        %1869 = vst [vmem:[%s349 + $0x10] sm:$0xff] %v1865
        %1870 = vst [vmem:[%s349 + $0x18] sm:$0xff] %v1866
        %s1871 = sand.u32 %s226, 1
        %s1872 = scalar_lea.sflag [#allocation3], %s1871
        %s1873 = sand.u32 %s226, 1
        %s1874 = smul.addr %s1873, 32
        %s1875 = scalar_lea.vmem [#allocation2], %s1874
        // Predicated region
        $region53: #{feature_correlator_forward.3} parent=51 // pred_check
          %p1876 = pneg %p236
        $region54: #{feature_correlator_forward.3} parent=51 // pred_check_branch
          %1878 = sbr.rel (%p1876) target = $region56
        $region55: #{feature_correlator_forward.3} parent=51 // pred_region
          %s1879 = smul.u32 2, %s26
          %s1881 = ssub.s32 512, 512
          %1882 = vsyncadd %s1872, %s1881
          %s1883 = smul.addr %s27, 4
          %s1884 = sadd.s32 %s1879, %s1883
          %s1885 = smul.addr %s1884, 128
          %s1886 = scalar_lea.hbm %s8, %s1885
          %s1887 = sshll.u32 %s1875, 4
          %s1888 = int_to_ptr.vmem [resolvable:$true] %s1887
          %1893 = dma.vmem_to_hbm [thread:$0]  %s1888, 512, %s1886, %s1872, 256, 256, 16
        $region56: #{feature_correlator_forward.3} parent=51 // pred_fallthru
          _
      $region52: #{feature_correlator_forward.3} parent=5 // pred_fallthru
        _
      %p1894 = scmp.le.s32.totalorder 2, %s17
      // Predicated region
      $region57: #{feature_correlator_forward.3} parent=5 // pred_check
        %p1895 = pneg %p1894
      $region58: #{feature_correlator_forward.3} parent=5 // pred_check_branch
        %1897 = sbr.rel (%p1895) target = $region60
      $region59: #{feature_correlator_forward.3} parent=5 // pred_region
        %s1898 = ssub.s32 %s17, 2
        // Predicated region
        $region61: #{feature_correlator_forward.3} parent=59 // pred_check
          %p1899 = pneg %p242
        $region62: #{feature_correlator_forward.3} parent=59 // pred_check_branch
          %1901 = sbr.rel (%p1899) target = $region64
        $region63: #{feature_correlator_forward.3} parent=59 // pred_region
          %s1902 = sand.u32 %s227, 1
          %s1903 = scalar_lea.sflag [#allocation3], %s1902
          %s1904 = sand.u32 %s227, 1
          %s1905 = smul.addr %s1904, 32
          %s1906 = scalar_lea.vmem [#allocation2], %s1905
          %1907 = dma.done %s1903, 512
        $region64: #{feature_correlator_forward.3} parent=59 // pred_fallthru
          _
      $region60: #{feature_correlator_forward.3} parent=5 // pred_fallthru
        _
    $region6: #{feature_correlator_forward.3} parent=1 // loop_footer
      %s21 = sadd.s32 1, %s17
    $region7: #{feature_correlator_forward.3} parent=1 // loop_footer_branch
      %16 = sbr.rel target = $region3
    $region8: #{feature_correlator_forward.3} parent=1 // loop_exit
      _
    %1908 = vsyncpa [#allocation3], 1
    %s1909 = scalar_lea.sflag [#allocation3], 1
    %1910 = vsyncpa %s1909, 1

</llo_original>
